<compile_context>
chip_gen: v7x
topology: tpu7x:2x2x1
jax: 0.10.0
libtpu: 0.0.40
codegen_flags: <defaults>
</compile_context>

<pallas_src>
import functools
import math

import jax
import jax.numpy as jnp
from jax.experimental import pallas as pl
from jax.experimental.pallas import tpu as pltpu


# ----------------------------------------------------------------------------
# Pallas kernels
# ----------------------------------------------------------------------------

def _mm_kernel(a_ref, b_ref, scale_ref, shift_ref, o_ref, acc_ref, *, act):
    """K-tiled matmul with fused scale/shift + activation epilogue."""
    @pl.when(pl.program_id(2) == 0)
    def _():
        acc_ref[...] = jnp.zeros_like(acc_ref)

    acc_ref[...] += jnp.dot(a_ref[...], b_ref[...],
                            preferred_element_type=jnp.float32)

    @pl.when(pl.program_id(2) == pl.num_programs(2) - 1)
    def _():
        y = acc_ref[...] * scale_ref[...] + shift_ref[...]
        if act == "leaky_relu":
            y = jnp.where(y >= 0, y, 0.01 * y)
        elif act == "relu":
            y = jnp.maximum(y, 0.0)
        elif act == "sigmoid":
            y = jax.nn.sigmoid(y)
        o_ref[...] = y


def pallas_matmul(a, b, scale=None, shift=None, act="none", scale_axis="col",
                  tm=256, tn=256, tk=512):
    """act((a @ b) * scale + shift).

    scale/shift broadcast over rows (scale_axis="col", length N) or over
    columns (scale_axis="row", length M — used by the transposed conv GEMM).
    Operands are cast to bf16 (MXU native); accumulation is f32.
    No host-side padding: dims smaller than a tile (or not divisible) use the
    full array extent as the block, which the (8,128) rule allows.
    """
    M, K = a.shape
    K2, N = b.shape
    assert K == K2
    a = a.astype(jnp.bfloat16)
    b = b.astype(jnp.bfloat16)

    if scale_axis == "col":
        if scale is None:
            scale = jnp.ones((N,), jnp.float32)
        if shift is None:
            shift = jnp.zeros((N,), jnp.float32)
        scale2 = scale.reshape(1, N).astype(jnp.float32)
        shift2 = shift.reshape(1, N).astype(jnp.float32)
    else:
        if scale is None:
            scale = jnp.ones((M,), jnp.float32)
        if shift is None:
            shift = jnp.zeros((M,), jnp.float32)
        scale2 = scale.reshape(M, 1).astype(jnp.float32)
        shift2 = shift.reshape(M, 1).astype(jnp.float32)

    bm = tm if (M > tm and M % tm == 0) else M
    bn = tn if (N > tn and N % tn == 0) else N
    bk = tk if (K > tk and K % tk == 0) else K
    gm, gn, gk = M // bm, N // bn, K // bk

    if scale_axis == "col":
        s_spec = pl.BlockSpec((1, bn), lambda i, j, k: (0, j))
    else:
        s_spec = pl.BlockSpec((bm, 1), lambda i, j, k: (i, 0))

    return pl.pallas_call(
        functools.partial(_mm_kernel, act=act),
        out_shape=jax.ShapeDtypeStruct((M, N), jnp.float32),
        grid=(gm, gn, gk),
        in_specs=[
            pl.BlockSpec((bm, bk), lambda i, j, k: (i, k)),
            pl.BlockSpec((bk, bn), lambda i, j, k: (k, j)),
            s_spec,
            s_spec,
        ],
        out_specs=pl.BlockSpec((bm, bn), lambda i, j, k: (i, j)),
        scratch_shapes=[pltpu.VMEM((bm, bn), jnp.float32)],
        compiler_params=pltpu.CompilerParams(
            dimension_semantics=("parallel", "parallel", "arbitrary")),
    )(a, b, scale2, shift2)


def _attn_kernel(q_ref, k_ref, v_ref, mask_ref, o_ref, *, scale):
    """All heads of one batch row per grid step (leading-batch einsums)."""
    q = q_ref[0]                                       # (H, Tq, dh) bf16
    k = k_ref[0]                                       # (H, Tk, dh)
    v = v_ref[0]
    s = jnp.einsum('hqd,hkd->hqk', q, k,
                   preferred_element_type=jnp.float32)
    s = s * scale + mask_ref[...][None, :, :]
    m = jnp.max(s, axis=-1, keepdims=True)
    p = jnp.exp(s - m)
    denom = jnp.sum(p, axis=-1, keepdims=True)
    p = p * pl.reciprocal(denom, approx=True)
    o_ref[0] = jnp.einsum('hqk,hkd->hqd', p.astype(v.dtype), v,
                          preferred_element_type=jnp.float32)


def pallas_attention(q, k, v, mask, scale):
    """q,k,v: (B, H, T, dh) bf16-castable; mask: additive (Tq, Tk)."""
    B, H, Tq, dh = q.shape
    Tk = k.shape[2]
    return pl.pallas_call(
        functools.partial(_attn_kernel, scale=scale),
        out_shape=jax.ShapeDtypeStruct((B, H, Tq, dh), jnp.float32),
        grid=(B,),
        in_specs=[
            pl.BlockSpec((1, H, Tq, dh), lambda b: (b, 0, 0, 0)),
            pl.BlockSpec((1, H, Tk, dh), lambda b: (b, 0, 0, 0)),
            pl.BlockSpec((1, H, Tk, dh), lambda b: (b, 0, 0, 0)),
            pl.BlockSpec((Tq, Tk), lambda b: (0, 0)),
        ],
        out_specs=pl.BlockSpec((1, H, Tq, dh), lambda b: (b, 0, 0, 0)),
        compiler_params=pltpu.CompilerParams(dimension_semantics=("parallel",)),
    )(q.astype(jnp.bfloat16), k.astype(jnp.bfloat16),
      v.astype(jnp.bfloat16), mask.astype(jnp.float32))


def _add_ln_kernel(x_ref, r_ref, g_ref, b_ref, o_ref, *, eps):
    x = x_ref[...] + r_ref[...]                        # fused residual add
    mu = jnp.mean(x, axis=-1, keepdims=True)
    xc = x - mu
    var = jnp.mean(xc * xc, axis=-1, keepdims=True)
    o_ref[...] = xc * jax.lax.rsqrt(var + eps) * g_ref[...] + b_ref[...]


def pallas_add_layernorm(x, resid, gamma, beta, eps=1e-5, tm=256):
    """LayerNorm(x + resid), row-tiled grid."""
    shp = x.shape
    d = shp[-1]
    x2 = x.reshape(-1, d).astype(jnp.float32)
    r2 = resid.reshape(-1, d).astype(jnp.float32)
    R = x2.shape[0]
    bm = tm if (R > tm and R % tm == 0) else R
    out = pl.pallas_call(
        functools.partial(_add_ln_kernel, eps=eps),
        out_shape=jax.ShapeDtypeStruct((R, d), jnp.float32),
        grid=(R // bm,),
        in_specs=[
            pl.BlockSpec((bm, d), lambda i: (i, 0)),
            pl.BlockSpec((bm, d), lambda i: (i, 0)),
            pl.BlockSpec((1, d), lambda i: (0, 0)),
            pl.BlockSpec((1, d), lambda i: (0, 0)),
        ],
        out_specs=pl.BlockSpec((bm, d), lambda i: (i, 0)),
        compiler_params=pltpu.CompilerParams(dimension_semantics=("parallel",)),
    )(x2, r2, gamma.reshape(1, d).astype(jnp.float32),
      beta.reshape(1, d).astype(jnp.float32))
    return out.reshape(shp)


# ----------------------------------------------------------------------------
# Model pieces built on the kernels
# ----------------------------------------------------------------------------

def mha_self(x, p, mask, nhead):
    """Self-attention with fused QKV projection (one matmul)."""
    B, T, d = x.shape
    dh = d // nhead
    qkv = pallas_matmul(x.reshape(B * T, d), p["w_qkv"], shift=p["b_qkv"])
    qkv = qkv.reshape(B, T, 3, nhead, dh).transpose(2, 0, 3, 1, 4)  # (3,B,H,T,dh)
    q, k, v = qkv[0], qkv[1], qkv[2]
    o = pallas_attention(q, k, v, mask, 1.0 / math.sqrt(dh))        # (B,H,T,dh)
    o = o.transpose(0, 2, 1, 3).reshape(B * T, d)
    y = pallas_matmul(o, p["wo_t"], shift=p["bo"])
    return y.reshape(B, T, d)


def mha_cross(x, memory, p, mask, nhead):
    """Cross-attention with fused KV projection."""
    B, Tq, d = x.shape
    Tk = memory.shape[1]
    dh = d // nhead
    q = pallas_matmul(x.reshape(B * Tq, d), p["wq_t"], shift=p["bq"])
    kv = pallas_matmul(memory.reshape(B * Tk, d), p["w_kv"], shift=p["b_kv"])
    q = q.reshape(B, Tq, nhead, dh).transpose(0, 2, 1, 3)
    kv = kv.reshape(B, Tk, 2, nhead, dh).transpose(2, 0, 3, 1, 4)
    k, v = kv[0], kv[1]
    o = pallas_attention(q, k, v, mask, 1.0 / math.sqrt(dh))
    o = o.transpose(0, 2, 1, 3).reshape(B * Tq, d)
    y = pallas_matmul(o, p["wo_t"], shift=p["bo"])
    return y.reshape(B, Tq, d)


def decoder_layer(x, memory, lp, tgt_mask, mem_mask, nhead):
    """nn.TransformerDecoderLayer, norm_first=False, activation=relu, eval."""
    sa = mha_self(x, lp["self_attn"], tgt_mask, nhead)
    x = pallas_add_layernorm(x, sa, lp["ln1_g"], lp["ln1_b"])
    ca = mha_cross(x, memory, lp["cross_attn"], mem_mask, nhead)
    x = pallas_add_layernorm(x, ca, lp["ln2_g"], lp["ln2_b"])
    B, T, d = x.shape
    h = pallas_matmul(x.reshape(B * T, d), lp["ff_w1_t"], shift=lp["ff_b1"],
                      act="relu")
    h = pallas_matmul(h, lp["ff_w2_t"], shift=lp["ff_b2"])
    x = pallas_add_layernorm(x, h.reshape(B, T, d), lp["ln3_g"], lp["ln3_b"])
    return x


def conv_transpose3d_bn_act(x, cp, stride, padding, act, eps=1e-5):
    """ConvTranspose3d + BatchNorm3d(eval) + activation, via sub-pixel phases.

    x: (N, Cin, D, H, W); weight: (Cin, Cout, k, k, k) (PyTorch layout).
    The output is split into stride^3 interleaved phases; each phase is a
    dense GEMM over the original input (no zero-upsampling), executed as
    out^T = W_phase^T @ patches^T so the big spatial dim is lane-dense.
    Bias + BN(eval) + activation are folded into the per-row epilogue.
    """
    W = cp["w"]
    N, Cin, D, H, Wd = x.shape
    k = W.shape[2]
    Cout = W.shape[1]
    s, p = stride, padding
    Dout = (D - 1) * s - 2 * p + k
    Hout = (H - 1) * s - 2 * p + k
    Wout = (Wd - 1) * s - 2 * p + k

    bn_scale = (cp["bn_gamma"] / jnp.sqrt(cp["bn_var"] + eps)).astype(jnp.float32)
    shift = ((cp["b"] - cp["bn_mean"]) * bn_scale + cp["bn_beta"]).astype(jnp.float32)

    x = x.astype(jnp.bfloat16)                       # bf16 patches -> half the glue bytes
    out = jnp.zeros((N, Cout, Dout, Hout, Wout), jnp.float32)

    def geom(r, din, dout):
        # outputs of this phase: od = s*q + r - p, q in [q_lo, q_hi]
        taps = list(range(r, k, s))                  # kernel taps hitting phase r
        q_lo = -((r - p) // s)                       # ceil((p - r) / s) >= 0
        q_hi = (dout - 1 + p - r) // s
        nq = q_hi - q_lo + 1
        nt = len(taps)
        pad_lo = max(0, (nt - 1) - q_lo)             # input index id = q - a
        pad_hi = max(0, q_hi - (din - 1))
        return q_lo, nq, nt, pad_lo, pad_hi

    for rd in range(s):
        qd, nqd, ntd, pld, phd = geom(rd, D, Dout)
        for rh in range(s):
            qh, nqh, nth, plh, phh = geom(rh, H, Hout)
            for rw in range(s):
                qw, nqw, ntw, plw, phw = geom(rw, Wd, Wout)
                if nqd <= 0 or nqh <= 0 or nqw <= 0:
                    continue
                od0 = s * qd + rd - p
                oh0 = s * qh + rh - p
                ow0 = s * qw + rw - p

                if ntd == 0 or nth == 0 or ntw == 0:
                    # no kernel tap reaches this phase: output = act(BN(bias))
                    val = shift
                    if act == "leaky_relu":
                        val = jnp.where(val >= 0, val, 0.01 * val)
                    elif act == "sigmoid":
                        val = jax.nn.sigmoid(val)
                    blk = jnp.broadcast_to(val[None, :, None, None, None],
                                           (N, Cout, nqd, nqh, nqw))
                    out = out.at[:, :, od0::s, oh0::s, ow0::s].set(blk)
                    continue

                if pld or phd or plh or phh or plw or phw:
                    xp = jnp.pad(x, ((0, 0), (0, 0), (pld, phd),
                                     (plh, phh), (plw, phw)))
                else:
                    xp = x

                # gather the few shifted views feeding this phase (data movement only)
                cols = []
                for ad in range(ntd):
                    for ah in range(nth):
                        for aw in range(ntw):
                            d0 = qd - ad + pld
                            h0 = qh - ah + plh
                            w0 = qw - aw + plw
                            cols.append(xp[:, :, d0:d0 + nqd,
                                           h0:h0 + nqh, w0:w0 + nqw])
                pat = jnp.stack(cols, axis=0)        # (nt, N, Cin, nqd, nqh, nqw)
                Ksz = ntd * nth * ntw * Cin
                Msp = N * nqd * nqh * nqw
                pat = pat.transpose(0, 2, 1, 3, 4, 5).reshape(Ksz, Msp)

                w_sub = W[:, :, rd::s, rh::s, rw::s]                 # (Cin,Cout,ntd,nth,ntw)
                A = w_sub.transpose(1, 2, 3, 4, 0).reshape(Cout, Ksz)

                # transposed GEMM: spatial dim (Msp) on the 128-lane axis
                y = pallas_matmul(A, pat, scale=bn_scale, shift=shift,
                                  act=act, scale_axis="row")         # (Cout, Msp)
                blk = y.reshape(Cout, N, nqd, nqh, nqw).transpose(1, 0, 2, 3, 4)
                out = out.at[:, :, od0::s, oh0::s, ow0::s].set(blk)
    return out


# ----------------------------------------------------------------------------
# Parameter init (deterministic, synthetic).  Dense weights are stored
# pre-transposed to (in, out) so every kernel computes x @ W directly.
# ----------------------------------------------------------------------------

def init_params(key, cfg):
    d = cfg["d_model"]
    L = cfg["latent_dim"]
    dff = cfg["dff"]
    Cr = cfg["cnn_filters"][-1]
    fc3_out = Cr * cfg["input_size"] ** 2
    keys = iter(jax.random.split(key, 256))

    def kaiming(shape, fan_in):
        return jax.random.normal(next(keys), shape, jnp.float32) * math.sqrt(2.0 / fan_in)

    def unif_bias(n, fan_in):
        b = 1.0 / math.sqrt(fan_in)
        return jax.random.uniform(next(keys), (n,), jnp.float32, -b, b)

    params = {
        "fc1_w_t": kaiming((L, d), L), "fc1_b": unif_bias(d, L),
        "fc3_w_t": kaiming((d, fc3_out), d), "fc3_b": unif_bias(fc3_out, d),
        "layers": [], "convs": [],
    }

    for _ in range(cfg["num_layers"]):
        params["layers"].append({
            "self_attn": {
                "w_qkv": kaiming((d, 3 * d), d),
                "b_qkv": jnp.zeros((3 * d,), jnp.float32),
                "wo_t": kaiming((d, d), d), "bo": jnp.zeros((d,), jnp.float32)},
            "cross_attn": {
                "wq_t": kaiming((d, d), d), "bq": jnp.zeros((d,), jnp.float32),
                "w_kv": kaiming((d, 2 * d), d),
                "b_kv": jnp.zeros((2 * d,), jnp.float32),
                "wo_t": kaiming((d, d), d), "bo": jnp.zeros((d,), jnp.float32)},
            "ff_w1_t": kaiming((d, dff), d), "ff_b1": jnp.zeros((dff,), jnp.float32),
            "ff_w2_t": kaiming((dff, d), dff), "ff_b2": jnp.zeros((d,), jnp.float32),
            "ln1_g": jnp.ones((d,), jnp.float32), "ln1_b": jnp.zeros((d,), jnp.float32),
            "ln2_g": jnp.ones((d,), jnp.float32), "ln2_b": jnp.zeros((d,), jnp.float32),
            "ln3_g": jnp.ones((d,), jnp.float32), "ln3_b": jnp.zeros((d,), jnp.float32),
        })

    # decoder CNN channel plan, same manipulation as the PyTorch __init__
    cnn_filters = list(cfg["cnn_filters"])
    in_ch = cnn_filters[-1]
    outs = cnn_filters[:-1]
    outs.reverse()
    outs.append(3)
    k = cfg["kernel_size"]
    for out_ch in outs:
        params["convs"].append({
            "w": kaiming((in_ch, out_ch, k, k, k), in_ch * k ** 3),
            "b": jnp.zeros((out_ch,), jnp.float32),
            "bn_gamma": jnp.ones((out_ch,), jnp.float32),
            "bn_beta": jnp.zeros((out_ch,), jnp.float32),
            "bn_mean": jnp.zeros((out_ch,), jnp.float32),
            "bn_var": jnp.ones((out_ch,), jnp.float32),
        })
        in_ch = out_ch
    return params


# ----------------------------------------------------------------------------
# Forward pass
# ----------------------------------------------------------------------------

def videobert_decoder_forward(params, x, memory, cfg):
    B = x.shape[0]
    T = cfg["num_predicted_frames"]
    d = cfg["d_model"]
    nhead = cfg["nhead"]
    Cr = cfg["cnn_filters"][-1]
    S = cfg["input_size"]

    # fc1 + LeakyReLU, then expand over the predicted-frame axis
    h = pallas_matmul(x, params["fc1_w_t"], shift=params["fc1_b"], act="leaky_relu")
    tgt = jnp.broadcast_to(h[:, None, :], (B, T, d))

    # causal tgt_mask (-inf strictly above the diagonal).  PyTorch repeats the
    # identical mask B*nhead times, so a single 2-D mask per head is exact.
    neg = jnp.float32(-1e30)
    tgt_mask = jnp.where(jnp.triu(jnp.ones((T, T), jnp.float32), k=1) > 0, neg, 0.0)
    mem_mask = jnp.zeros((T, memory.shape[1]), jnp.float32)

    # TODO(synk): Dropout and BatchNorm run in inference mode (dropout =
    # identity, BN uses running stats); train-mode behaviour is not modeled.
    xt = tgt
    for lp in params["layers"]:
        xt = decoder_layer(xt, memory, lp, tgt_mask, mem_mask, nhead)

    # fc3 + LeakyReLU, then the PyTorch .view(B, Cr, T, S, S)
    dec = pallas_matmul(xt.reshape(B * T, d), params["fc3_w_t"],
                        shift=params["fc3_b"], act="leaky_relu")
    vol = dec.reshape(B, Cr, T, S, S)

    y = vol
    n_conv = len(params["convs"])
    for i, cp in enumerate(params["convs"]):
        act = "sigmoid" if i == n_conv - 1 else "leaky_relu"
        y = conv_transpose3d_bn_act(y, cp, cfg["stride"], cfg["padding"], act)
    return y


if __name__ == "__main__":
    cfg = dict(d_model=32, latent_dim=16, num_predicted_frames=4,
               cnn_filters=[8, 16], kernel_size=3, stride=2, padding=1,
               input_size=4, dropout=0.1, nhead=8, num_layers=2, dff=2048)
    key = jax.random.PRNGKey(0)
    kp, kx, km = jax.random.split(key, 3)
    params = init_params(kp, cfg)

    B = 2
    x = jax.random.normal(kx, (B, cfg["latent_dim"]), jnp.float32)
    memory = jax.random.normal(km, (B, 6, cfg["d_model"]), jnp.float32)

    fwd = jax.jit(functools.partial(videobert_decoder_forward, cfg=cfg))
    out = fwd(params, x, memory)
    out = jax.block_until_ready(out)

    # (B, 3, 13, 13, 13) for these hyperparameters
    assert out.shape == (B, 3, 13, 13, 13)
    assert bool(jnp.all(jnp.isfinite(out)))
    print("KERNEL_OK")
</pallas_src>

<mosaic_0001>
module attributes {stable_mosaic.version = 11 : i64} {
  func.func @_mm_kernel(%arg0: i32, %arg1: i32, %arg2: i32, %arg3: memref<2x16xbf16, #tpu.memory_space<vmem>>, %arg4: memref<16x32xbf16, #tpu.memory_space<vmem>>, %arg5: memref<1x32xf32, #tpu.memory_space<vmem>>, %arg6: memref<1x32xf32, #tpu.memory_space<vmem>>, %arg7: memref<2x32xf32, #tpu.memory_space<vmem>>, %arg8: memref<2x32xf32, #tpu.memory_space<vmem>>) attributes {dimension_semantics = [#tpu.dimension_semantics<parallel>, #tpu.dimension_semantics<parallel>, #tpu.dimension_semantics<arbitrary>], iteration_bounds = array<i64: 1, 1, 1>, scalar_prefetch = 0 : i64, scratch_operands = 1 : i64, tpu.core_type = #tpu.core_type<tc>, window_params = [{transform_indices = @transform_0, window_bounds = array<i64: 2, 16>}, {transform_indices = @transform_1, window_bounds = array<i64: 16, 32>}, {transform_indices = @transform_2, window_bounds = array<i64: 1, 32>}, {transform_indices = @transform_3, window_bounds = array<i64: 1, 32>}, {transform_indices = @transform_4, window_bounds = array<i64: 2, 32>}]} {
    %c0_i32 = arith.constant 0 : i32
    %0 = arith.cmpi eq, %arg2, %c0_i32 : i32
    %1 = arith.extui %0 : i1 to i32
    %c0_i32_0 = arith.constant 0 : i32
    %2 = arith.cmpi ne, %1, %c0_i32_0 : i32
    scf.if %2 {
      %cst_10 = arith.constant 0.000000e+00 : f32
      %12 = vector.broadcast %cst_10 : f32 to vector<2x32xf32>
      %c0_11 = arith.constant 0 : index
      %c0_12 = arith.constant 0 : index
      %13 = vector.load %arg8[%c0_11, %c0_12] : memref<2x32xf32, #tpu.memory_space<vmem>>, vector<2x32xf32>
      tpu.vector_store %arg8[%c0_11, %c0_12], %12 {strides = array<i32>} : memref<2x32xf32, #tpu.memory_space<vmem>>, vector<2x32xf32>,
    } else {
    }
    %c0 = arith.constant 0 : index
    %c0_1 = arith.constant 0 : index
    %3 = vector.load %arg8[%c0, %c0_1] : memref<2x32xf32, #tpu.memory_space<vmem>>, vector<2x32xf32>
    %c0_2 = arith.constant 0 : index
    %c0_3 = arith.constant 0 : index
    %4 = vector.load %arg3[%c0_2, %c0_3] : memref<2x16xbf16, #tpu.memory_space<vmem>>, vector<2x16xbf16>
    %c0_4 = arith.constant 0 : index
    %c0_5 = arith.constant 0 : index
    %5 = vector.load %arg4[%c0_4, %c0_5] : memref<16x32xbf16, #tpu.memory_space<vmem>>, vector<16x32xbf16>
    %cst = arith.constant dense<0.000000e+00> : vector<2x32xf32>
    %6 = tpu.matmul %4, %5, %cst {dimension_numbers = #tpu.dot_dimension_numbers<[1], [0], [0], [1], [0, 0, 1, 1], [], []>} : vector<2x16xbf16>, vector<16x32xbf16>, vector<2x32xf32> -> vector<2x32xf32>
    %7 = arith.addf %3, %6 : vector<2x32xf32>
    %c0_6 = arith.constant 0 : index
    %c0_7 = arith.constant 0 : index
    %8 = vector.load %arg8[%c0_6, %c0_7] : memref<2x32xf32, #tpu.memory_space<vmem>>, vector<2x32xf32>
    tpu.vector_store %arg8[%c0_6, %c0_7], %7 {strides = array<i32>} : memref<2x32xf32, #tpu.memory_space<vmem>>, vector<2x32xf32>,
    %c0_i32_8 = arith.constant 0 : i32
    %9 = arith.cmpi eq, %arg2, %c0_i32_8 : i32
    %10 = arith.extui %9 : i1 to i32
    %c0_i32_9 = arith.constant 0 : i32
    %11 = arith.cmpi ne, %10, %c0_i32_9 : i32
    scf.if %11 {
      %c0_10 = arith.constant 0 : index
      %c0_11 = arith.constant 0 : index
      %12 = vector.load %arg8[%c0_10, %c0_11] : memref<2x32xf32, #tpu.memory_space<vmem>>, vector<2x32xf32>
      %c0_12 = arith.constant 0 : index
      %c0_13 = arith.constant 0 : index
      %13 = vector.load %arg5[%c0_12, %c0_13] : memref<1x32xf32, #tpu.memory_space<vmem>>, vector<1x32xf32>
      %14 = vector.broadcast %13 : vector<1x32xf32> to vector<2x32xf32>
      %15 = arith.mulf %12, %14 : vector<2x32xf32>
      %c0_14 = arith.constant 0 : index
      %c0_15 = arith.constant 0 : index
      %16 = vector.load %arg6[%c0_14, %c0_15] : memref<1x32xf32, #tpu.memory_space<vmem>>, vector<1x32xf32>
      %17 = vector.broadcast %16 : vector<1x32xf32> to vector<2x32xf32>
      %18 = arith.addf %15, %17 : vector<2x32xf32>
      %cst_16 = arith.constant 0.000000e+00 : f32
      %19 = vector.broadcast %cst_16 : f32 to vector<2x32xf32>
      %20 = arith.cmpf oge, %18, %19 : vector<2x32xf32>
      %cst_17 = arith.constant 0.00999999977 : f32
      %21 = vector.broadcast %cst_17 : f32 to vector<2x32xf32>
      %22 = arith.mulf %21, %18 : vector<2x32xf32>
      %23 = arith.select %20, %18, %22 : vector<2x32xi1>, vector<2x32xf32>
      %c0_18 = arith.constant 0 : index
      %c0_19 = arith.constant 0 : index
      %24 = vector.load %arg7[%c0_18, %c0_19] : memref<2x32xf32, #tpu.memory_space<vmem>>, vector<2x32xf32>
      tpu.vector_store %arg7[%c0_18, %c0_19], %23 {strides = array<i32>} : memref<2x32xf32, #tpu.memory_space<vmem>>, vector<2x32xf32>,
    } else {
    }
    return
  }
  func.func @transform_0(%arg0: i32, %arg1: i32, %arg2: i32) -> (i32, i32) {
    %c0_i32 = arith.constant 0 : i32
    return %arg0, %arg2 : i32, i32
  }
  func.func @transform_1(%arg0: i32, %arg1: i32, %arg2: i32) -> (i32, i32) {
    %c0_i32 = arith.constant 0 : i32
    return %arg2, %arg1 : i32, i32
  }
  func.func @transform_2(%arg0: i32, %arg1: i32, %arg2: i32) -> (i32, i32) {
    %c0_i32 = arith.constant 0 : i32
    %c0_i32_0 = arith.constant 0 : i32
    return %c0_i32, %arg1 : i32, i32
  }
  func.func @transform_3(%arg0: i32, %arg1: i32, %arg2: i32) -> (i32, i32) {
    %c0_i32 = arith.constant 0 : i32
    %c0_i32_0 = arith.constant 0 : i32
    return %c0_i32, %arg1 : i32, i32
  }
  func.func @transform_4(%arg0: i32, %arg1: i32, %arg2: i32) -> (i32, i32) {
    %c0_i32 = arith.constant 0 : i32
    return %arg0, %arg1 : i32, i32
  }
}

module attributes {stable_mosaic.version = 11 : i64} {
  func.func @_mm_kernel(%arg0: i32, %arg1: i32, %arg2: i32, %arg3: memref<8x32xbf16, #tpu.memory_space<vmem>>, %arg4: memref<32x96xbf16, #tpu.memory_space<vmem>>, %arg5: memref<1x96xf32, #tpu.memory_space<vmem>>, %arg6: memref<1x96xf32, #tpu.memory_space<vmem>>, %arg7: memref<8x96xf32, #tpu.memory_space<vmem>>, %arg8: memref<8x96xf32, #tpu.memory_space<vmem>>) attributes {dimension_semantics = [#tpu.dimension_semantics<parallel>, #tpu.dimension_semantics<parallel>, #tpu.dimension_semantics<arbitrary>], iteration_bounds = array<i64: 1, 1, 1>, scalar_prefetch = 0 : i64, scratch_operands = 1 : i64, tpu.core_type = #tpu.core_type<tc>, window_params = [{transform_indices = @transform_0, window_bounds = array<i64: 8, 32>}, {transform_indices = @transform_1, window_bounds = array<i64: 32, 96>}, {transform_indices = @transform_2, window_bounds = array<i64: 1, 96>}, {transform_indices = @transform_3, window_bounds = array<i64: 1, 96>}, {transform_indices = @transform_4, window_bounds = array<i64: 8, 96>}]} {
    %c0_i32 = arith.constant 0 : i32
    %0 = arith.cmpi eq, %arg2, %c0_i32 : i32
    %1 = arith.extui %0 : i1 to i32
    %c0_i32_0 = arith.constant 0 : i32
    %2 = arith.cmpi ne, %1, %c0_i32_0 : i32
    scf.if %2 {
      %cst_10 = arith.constant 0.000000e+00 : f32
      %12 = vector.broadcast %cst_10 : f32 to vector<8x96xf32>
      %c0_11 = arith.constant 0 : index
      %c0_12 = arith.constant 0 : index
      %13 = vector.load %arg8[%c0_11, %c0_12] : memref<8x96xf32, #tpu.memory_space<vmem>>, vector<8x96xf32>
      tpu.vector_store %arg8[%c0_11, %c0_12], %12 {strides = array<i32>} : memref<8x96xf32, #tpu.memory_space<vmem>>, vector<8x96xf32>,
    } else {
    }
    %c0 = arith.constant 0 : index
    %c0_1 = arith.constant 0 : index
    %3 = vector.load %arg8[%c0, %c0_1] : memref<8x96xf32, #tpu.memory_space<vmem>>, vector<8x96xf32>
    %c0_2 = arith.constant 0 : index
    %c0_3 = arith.constant 0 : index
    %4 = vector.load %arg3[%c0_2, %c0_3] : memref<8x32xbf16, #tpu.memory_space<vmem>>, vector<8x32xbf16>
    %c0_4 = arith.constant 0 : index
    %c0_5 = arith.constant 0 : index
    %5 = vector.load %arg4[%c0_4, %c0_5] : memref<32x96xbf16, #tpu.memory_space<vmem>>, vector<32x96xbf16>
    %cst = arith.constant dense<0.000000e+00> : vector<8x96xf32>
    %6 = tpu.matmul %4, %5, %cst {dimension_numbers = #tpu.dot_dimension_numbers<[1], [0], [0], [1], [0, 0, 1, 1], [], []>} : vector<8x32xbf16>, vector<32x96xbf16>, vector<8x96xf32> -> vector<8x96xf32>
    %7 = arith.addf %3, %6 : vector<8x96xf32>
    %c0_6 = arith.constant 0 : index
    %c0_7 = arith.constant 0 : index
    %8 = vector.load %arg8[%c0_6, %c0_7] : memref<8x96xf32, #tpu.memory_space<vmem>>, vector<8x96xf32>
    tpu.vector_store %arg8[%c0_6, %c0_7], %7 {strides = array<i32>} : memref<8x96xf32, #tpu.memory_space<vmem>>, vector<8x96xf32>,
    %c0_i32_8 = arith.constant 0 : i32
    %9 = arith.cmpi eq, %arg2, %c0_i32_8 : i32
    %10 = arith.extui %9 : i1 to i32
    %c0_i32_9 = arith.constant 0 : i32
    %11 = arith.cmpi ne, %10, %c0_i32_9 : i32
    scf.if %11 {
      %c0_10 = arith.constant 0 : index
      %c0_11 = arith.constant 0 : index
      %12 = vector.load %arg8[%c0_10, %c0_11] : memref<8x96xf32, #tpu.memory_space<vmem>>, vector<8x96xf32>
      %c0_12 = arith.constant 0 : index
      %c0_13 = arith.constant 0 : index
      %13 = vector.load %arg5[%c0_12, %c0_13] : memref<1x96xf32, #tpu.memory_space<vmem>>, vector<1x96xf32>
      %14 = vector.broadcast %13 : vector<1x96xf32> to vector<8x96xf32>
      %15 = arith.mulf %12, %14 : vector<8x96xf32>
      %c0_14 = arith.constant 0 : index
      %c0_15 = arith.constant 0 : index
      %16 = vector.load %arg6[%c0_14, %c0_15] : memref<1x96xf32, #tpu.memory_space<vmem>>, vector<1x96xf32>
      %17 = vector.broadcast %16 : vector<1x96xf32> to vector<8x96xf32>
      %18 = arith.addf %15, %17 : vector<8x96xf32>
      %c0_16 = arith.constant 0 : index
      %c0_17 = arith.constant 0 : index
      %19 = vector.load %arg7[%c0_16, %c0_17] : memref<8x96xf32, #tpu.memory_space<vmem>>, vector<8x96xf32>
      tpu.vector_store %arg7[%c0_16, %c0_17], %18 {strides = array<i32>} : memref<8x96xf32, #tpu.memory_space<vmem>>, vector<8x96xf32>,
    } else {
    }
    return
  }
  func.func @transform_0(%arg0: i32, %arg1: i32, %arg2: i32) -> (i32, i32) {
    %c0_i32 = arith.constant 0 : i32
    return %arg0, %arg2 : i32, i32
  }
  func.func @transform_1(%arg0: i32, %arg1: i32, %arg2: i32) -> (i32, i32) {
    %c0_i32 = arith.constant 0 : i32
    return %arg2, %arg1 : i32, i32
  }
  func.func @transform_2(%arg0: i32, %arg1: i32, %arg2: i32) -> (i32, i32) {
    %c0_i32 = arith.constant 0 : i32
    %c0_i32_0 = arith.constant 0 : i32
    return %c0_i32, %arg1 : i32, i32
  }
  func.func @transform_3(%arg0: i32, %arg1: i32, %arg2: i32) -> (i32, i32) {
    %c0_i32 = arith.constant 0 : i32
    %c0_i32_0 = arith.constant 0 : i32
    return %c0_i32, %arg1 : i32, i32
  }
  func.func @transform_4(%arg0: i32, %arg1: i32, %arg2: i32) -> (i32, i32) {
    %c0_i32 = arith.constant 0 : i32
    return %arg0, %arg1 : i32, i32
  }
}

module attributes {stable_mosaic.version = 11 : i64} {
  func.func @_attn_kernel(%arg0: i32, %arg1: memref<1x8x4x4xbf16, #tpu.memory_space<vmem>>, %arg2: memref<1x8x4x4xbf16, #tpu.memory_space<vmem>>, %arg3: memref<1x8x4x4xbf16, #tpu.memory_space<vmem>>, %arg4: memref<4x4xf32, #tpu.memory_space<vmem>>, %arg5: memref<1x8x4x4xf32, #tpu.memory_space<vmem>>) attributes {dimension_semantics = [#tpu.dimension_semantics<parallel>], iteration_bounds = array<i64: 2>, scalar_prefetch = 0 : i64, scratch_operands = 0 : i64, tpu.core_type = #tpu.core_type<tc>, window_params = [{transform_indices = @transform_0, window_bounds = array<i64: 1, 8, 4, 4>}, {transform_indices = @transform_1, window_bounds = array<i64: 1, 8, 4, 4>}, {transform_indices = @transform_2, window_bounds = array<i64: 1, 8, 4, 4>}, {pipeline_mode = #tpu.pipeline_mode<synchronous>, transform_indices = @transform_3, window_bounds = array<i64: 4, 4>}, {transform_indices = @transform_4, window_bounds = array<i64: 1, 8, 4, 4>}]} {
    %c0 = arith.constant 0 : index
    %c0_0 = arith.constant 0 : index
    %c0_1 = arith.constant 0 : index
    %c0_2 = arith.constant 0 : index
    %0 = vector.load %arg1[%c0, %c0_0, %c0_1, %c0_2] : memref<1x8x4x4xbf16, #tpu.memory_space<vmem>>, vector<1x8x4x4xbf16>
    %1 = vector.shape_cast %0 : vector<1x8x4x4xbf16> to vector<8x4x4xbf16>
    %c0_3 = arith.constant 0 : index
    %c0_4 = arith.constant 0 : index
    %c0_5 = arith.constant 0 : index
    %c0_6 = arith.constant 0 : index
    %2 = vector.load %arg2[%c0_3, %c0_4, %c0_5, %c0_6] : memref<1x8x4x4xbf16, #tpu.memory_space<vmem>>, vector<1x8x4x4xbf16>
    %3 = vector.shape_cast %2 : vector<1x8x4x4xbf16> to vector<8x4x4xbf16>
    %c0_7 = arith.constant 0 : index
    %c0_8 = arith.constant 0 : index
    %c0_9 = arith.constant 0 : index
    %c0_10 = arith.constant 0 : index
    %4 = vector.load %arg3[%c0_7, %c0_8, %c0_9, %c0_10] : memref<1x8x4x4xbf16, #tpu.memory_space<vmem>>, vector<1x8x4x4xbf16>
    %5 = vector.shape_cast %4 : vector<1x8x4x4xbf16> to vector<8x4x4xbf16>
    "tpu.trace_start"() <{level = 10 : i32, message = "hqd,hkd->hqk"}> : () -> ()
    %cst = arith.constant dense<0.000000e+00> : vector<8x4x4xf32>
    %6 = tpu.matmul %1, %3, %cst {dimension_numbers = #tpu.dot_dimension_numbers<[2], [2], [1], [1], [0, 0, 0, 1, 1, 1], [0], [0]>} : vector<8x4x4xbf16>, vector<8x4x4xbf16>, vector<8x4x4xf32> -> vector<8x4x4xf32>
    "tpu.trace_stop"() : () -> ()
    %cst_11 = arith.constant 5.000000e-01 : f32
    %7 = vector.broadcast %cst_11 : f32 to vector<8x4x4xf32>
    %8 = arith.mulf %6, %7 : vector<8x4x4xf32>
    %c0_12 = arith.constant 0 : index
    %c0_13 = arith.constant 0 : index
    %9 = vector.load %arg4[%c0_12, %c0_13] : memref<4x4xf32, #tpu.memory_space<vmem>>, vector<4x4xf32>
    %10 = vector.shape_cast %9 : vector<4x4xf32> to vector<1x4x4xf32>
    %11 = vector.broadcast %10 : vector<1x4x4xf32> to vector<8x4x4xf32>
    %12 = arith.addf %8, %11 : vector<8x4x4xf32>
    %cst_14 = arith.constant dense<0xFF800000> : vector<8x4xf32>
    %13 = vector.multi_reduction <maximumf>, %12, %cst_14 [2] : vector<8x4x4xf32> to vector<8x4xf32>
    %14 = vector.shape_cast %13 : vector<8x4xf32> to vector<8x4x1xf32>
    %15 = vector.broadcast %14 : vector<8x4x1xf32> to vector<8x4x4xf32>
    %16 = arith.subf %12, %15 : vector<8x4x4xf32>
    %17 = math.exp %16 : vector<8x4x4xf32>
    %cst_15 = arith.constant dense<0.000000e+00> : vector<8x4xf32>
    %18 = vector.multi_reduction <add>, %17, %cst_15 [2] : vector<8x4x4xf32> to vector<8x4xf32>
    %19 = vector.shape_cast %18 : vector<8x4xf32> to vector<8x4x1xf32>
    %20 = tpu.reciprocal %19 {approx = true} : vector<8x4x1xf32> -> vector<8x4x1xf32>
    %21 = vector.broadcast %20 : vector<8x4x1xf32> to vector<8x4x4xf32>
    %22 = arith.mulf %17, %21 : vector<8x4x4xf32>
    %23 = arith.truncf %22 : vector<8x4x4xf32> to vector<8x4x4xbf16>
    "tpu.trace_start"() <{level = 10 : i32, message = "hqk,hkd->hqd"}> : () -> ()
    %cst_16 = arith.constant dense<0.000000e+00> : vector<8x4x4xf32>
    %24 = tpu.matmul %23, %5, %cst_16 {dimension_numbers = #tpu.dot_dimension_numbers<[2], [1], [1], [2], [0, 0, 0, 1, 1, 2], [0], [0]>} : vector<8x4x4xbf16>, vector<8x4x4xbf16>, vector<8x4x4xf32> -> vector<8x4x4xf32>
    "tpu.trace_stop"() : () -> ()
    %c0_17 = arith.constant 0 : index
    %c0_18 = arith.constant 0 : index
    %c0_19 = arith.constant 0 : index
    %c0_20 = arith.constant 0 : index
    %25 = vector.load %arg5[%c0_17, %c0_18, %c0_19, %c0_20] : memref<1x8x4x4xf32, #tpu.memory_space<vmem>>, vector<1x8x4x4xf32>
    %26 = vector.shape_cast %25 : vector<1x8x4x4xf32> to vector<8x4x4xf32>
    %27 = vector.shape_cast %24 : vector<8x4x4xf32> to vector<1x8x4x4xf32>
    tpu.vector_store %arg5[%c0_17, %c0_18, %c0_19, %c0_20], %27 {strides = array<i32>} : memref<1x8x4x4xf32, #tpu.memory_space<vmem>>, vector<1x8x4x4xf32>,
    return
  }
  func.func @transform_0(%arg0: i32) -> (i32, i32, i32, i32) {
    %c0_i32 = arith.constant 0 : i32
    %c0_i32_0 = arith.constant 0 : i32
    %c0_i32_1 = arith.constant 0 : i32
    %c0_i32_2 = arith.constant 0 : i32
    return %arg0, %c0_i32, %c0_i32_0, %c0_i32_1 : i32, i32, i32, i32
  }
  func.func @transform_1(%arg0: i32) -> (i32, i32, i32, i32) {
    %c0_i32 = arith.constant 0 : i32
    %c0_i32_0 = arith.constant 0 : i32
    %c0_i32_1 = arith.constant 0 : i32
    %c0_i32_2 = arith.constant 0 : i32
    return %arg0, %c0_i32, %c0_i32_0, %c0_i32_1 : i32, i32, i32, i32
  }
  func.func @transform_2(%arg0: i32) -> (i32, i32, i32, i32) {
    %c0_i32 = arith.constant 0 : i32
    %c0_i32_0 = arith.constant 0 : i32
    %c0_i32_1 = arith.constant 0 : i32
    %c0_i32_2 = arith.constant 0 : i32
    return %arg0, %c0_i32, %c0_i32_0, %c0_i32_1 : i32, i32, i32, i32
  }
  func.func @transform_3(%arg0: i32) -> (i32, i32) {
    %c0_i32 = arith.constant 0 : i32
    %c0_i32_0 = arith.constant 0 : i32
    %c0_i32_1 = arith.constant 0 : i32
    return %c0_i32, %c0_i32_0 : i32, i32
  }
  func.func @transform_4(%arg0: i32) -> (i32, i32, i32, i32) {
    %c0_i32 = arith.constant 0 : i32
    %c0_i32_0 = arith.constant 0 : i32
    %c0_i32_1 = arith.constant 0 : i32
    %c0_i32_2 = arith.constant 0 : i32
    return %arg0, %c0_i32, %c0_i32_0, %c0_i32_1 : i32, i32, i32, i32
  }
}

module attributes {stable_mosaic.version = 11 : i64} {
  func.func @_mm_kernel(%arg0: i32, %arg1: i32, %arg2: i32, %arg3: memref<8x32xbf16, #tpu.memory_space<vmem>>, %arg4: memref<32x32xbf16, #tpu.memory_space<vmem>>, %arg5: memref<1x32xf32, #tpu.memory_space<vmem>>, %arg6: memref<1x32xf32, #tpu.memory_space<vmem>>, %arg7: memref<8x32xf32, #tpu.memory_space<vmem>>, %arg8: memref<8x32xf32, #tpu.memory_space<vmem>>) attributes {dimension_semantics = [#tpu.dimension_semantics<parallel>, #tpu.dimension_semantics<parallel>, #tpu.dimension_semantics<arbitrary>], iteration_bounds = array<i64: 1, 1, 1>, scalar_prefetch = 0 : i64, scratch_operands = 1 : i64, tpu.core_type = #tpu.core_type<tc>, window_params = [{transform_indices = @transform_0, window_bounds = array<i64: 8, 32>}, {transform_indices = @transform_1, window_bounds = array<i64: 32, 32>}, {transform_indices = @transform_2, window_bounds = array<i64: 1, 32>}, {transform_indices = @transform_3, window_bounds = array<i64: 1, 32>}, {transform_indices = @transform_4, window_bounds = array<i64: 8, 32>}]} {
    %c0_i32 = arith.constant 0 : i32
    %0 = arith.cmpi eq, %arg2, %c0_i32 : i32
    %1 = arith.extui %0 : i1 to i32
    %c0_i32_0 = arith.constant 0 : i32
    %2 = arith.cmpi ne, %1, %c0_i32_0 : i32
    scf.if %2 {
      %cst_10 = arith.constant 0.000000e+00 : f32
      %12 = vector.broadcast %cst_10 : f32 to vector<8x32xf32>
      %c0_11 = arith.constant 0 : index
      %c0_12 = arith.constant 0 : index
      %13 = vector.load %arg8[%c0_11, %c0_12] : memref<8x32xf32, #tpu.memory_space<vmem>>, vector<8x32xf32>
      tpu.vector_store %arg8[%c0_11, %c0_12], %12 {strides = array<i32>} : memref<8x32xf32, #tpu.memory_space<vmem>>, vector<8x32xf32>,
    } else {
    }
    %c0 = arith.constant 0 : index
    %c0_1 = arith.constant 0 : index
    %3 = vector.load %arg8[%c0, %c0_1] : memref<8x32xf32, #tpu.memory_space<vmem>>, vector<8x32xf32>
    %c0_2 = arith.constant 0 : index
    %c0_3 = arith.constant 0 : index
    %4 = vector.load %arg3[%c0_2, %c0_3] : memref<8x32xbf16, #tpu.memory_space<vmem>>, vector<8x32xbf16>
    %c0_4 = arith.constant 0 : index
    %c0_5 = arith.constant 0 : index
    %5 = vector.load %arg4[%c0_4, %c0_5] : memref<32x32xbf16, #tpu.memory_space<vmem>>, vector<32x32xbf16>
    %cst = arith.constant dense<0.000000e+00> : vector<8x32xf32>
    %6 = tpu.matmul %4, %5, %cst {dimension_numbers = #tpu.dot_dimension_numbers<[1], [0], [0], [1], [0, 0, 1, 1], [], []>} : vector<8x32xbf16>, vector<32x32xbf16>, vector<8x32xf32> -> vector<8x32xf32>
    %7 = arith.addf %3, %6 : vector<8x32xf32>
    %c0_6 = arith.constant 0 : index
    %c0_7 = arith.constant 0 : index
    %8 = vector.load %arg8[%c0_6, %c0_7] : memref<8x32xf32, #tpu.memory_space<vmem>>, vector<8x32xf32>
    tpu.vector_store %arg8[%c0_6, %c0_7], %7 {strides = array<i32>} : memref<8x32xf32, #tpu.memory_space<vmem>>, vector<8x32xf32>,
    %c0_i32_8 = arith.constant 0 : i32
    %9 = arith.cmpi eq, %arg2, %c0_i32_8 : i32
    %10 = arith.extui %9 : i1 to i32
    %c0_i32_9 = arith.constant 0 : i32
    %11 = arith.cmpi ne, %10, %c0_i32_9 : i32
    scf.if %11 {
      %c0_10 = arith.constant 0 : index
      %c0_11 = arith.constant 0 : index
      %12 = vector.load %arg8[%c0_10, %c0_11] : memref<8x32xf32, #tpu.memory_space<vmem>>, vector<8x32xf32>
      %c0_12 = arith.constant 0 : index
      %c0_13 = arith.constant 0 : index
      %13 = vector.load %arg5[%c0_12, %c0_13] : memref<1x32xf32, #tpu.memory_space<vmem>>, vector<1x32xf32>
      %14 = vector.broadcast %13 : vector<1x32xf32> to vector<8x32xf32>
      %15 = arith.mulf %12, %14 : vector<8x32xf32>
      %c0_14 = arith.constant 0 : index
      %c0_15 = arith.constant 0 : index
      %16 = vector.load %arg6[%c0_14, %c0_15] : memref<1x32xf32, #tpu.memory_space<vmem>>, vector<1x32xf32>
      %17 = vector.broadcast %16 : vector<1x32xf32> to vector<8x32xf32>
      %18 = arith.addf %15, %17 : vector<8x32xf32>
      %c0_16 = arith.constant 0 : index
      %c0_17 = arith.constant 0 : index
      %19 = vector.load %arg7[%c0_16, %c0_17] : memref<8x32xf32, #tpu.memory_space<vmem>>, vector<8x32xf32>
      tpu.vector_store %arg7[%c0_16, %c0_17], %18 {strides = array<i32>} : memref<8x32xf32, #tpu.memory_space<vmem>>, vector<8x32xf32>,
    } else {
    }
    return
  }
  func.func @transform_0(%arg0: i32, %arg1: i32, %arg2: i32) -> (i32, i32) {
    %c0_i32 = arith.constant 0 : i32
    return %arg0, %arg2 : i32, i32
  }
  func.func @transform_1(%arg0: i32, %arg1: i32, %arg2: i32) -> (i32, i32) {
    %c0_i32 = arith.constant 0 : i32
    return %arg2, %arg1 : i32, i32
  }
  func.func @transform_2(%arg0: i32, %arg1: i32, %arg2: i32) -> (i32, i32) {
    %c0_i32 = arith.constant 0 : i32
    %c0_i32_0 = arith.constant 0 : i32
    return %c0_i32, %arg1 : i32, i32
  }
  func.func @transform_3(%arg0: i32, %arg1: i32, %arg2: i32) -> (i32, i32) {
    %c0_i32 = arith.constant 0 : i32
    %c0_i32_0 = arith.constant 0 : i32
    return %c0_i32, %arg1 : i32, i32
  }
  func.func @transform_4(%arg0: i32, %arg1: i32, %arg2: i32) -> (i32, i32) {
    %c0_i32 = arith.constant 0 : i32
    return %arg0, %arg1 : i32, i32
  }
}

module attributes {stable_mosaic.version = 11 : i64} {
  func.func @_add_ln_kernel(%arg0: i32, %arg1: memref<8x32xf32, #tpu.memory_space<vmem>>, %arg2: memref<8x32xf32, #tpu.memory_space<vmem>>, %arg3: memref<1x32xf32, #tpu.memory_space<vmem>>, %arg4: memref<1x32xf32, #tpu.memory_space<vmem>>, %arg5: memref<8x32xf32, #tpu.memory_space<vmem>>) attributes {dimension_semantics = [#tpu.dimension_semantics<parallel>], iteration_bounds = array<i64: 1>, scalar_prefetch = 0 : i64, scratch_operands = 0 : i64, tpu.core_type = #tpu.core_type<tc>, window_params = [{transform_indices = @transform_0, window_bounds = array<i64: 8, 32>}, {transform_indices = @transform_1, window_bounds = array<i64: 8, 32>}, {pipeline_mode = #tpu.pipeline_mode<synchronous>, transform_indices = @transform_2, window_bounds = array<i64: 1, 32>}, {pipeline_mode = #tpu.pipeline_mode<synchronous>, transform_indices = @transform_3, window_bounds = array<i64: 1, 32>}, {transform_indices = @transform_4, window_bounds = array<i64: 8, 32>}]} {
    %c0 = arith.constant 0 : index
    %c0_0 = arith.constant 0 : index
    %0 = vector.load %arg1[%c0, %c0_0] : memref<8x32xf32, #tpu.memory_space<vmem>>, vector<8x32xf32>
    %c0_1 = arith.constant 0 : index
    %c0_2 = arith.constant 0 : index
    %1 = vector.load %arg2[%c0_1, %c0_2] : memref<8x32xf32, #tpu.memory_space<vmem>>, vector<8x32xf32>
    %2 = arith.addf %0, %1 : vector<8x32xf32>
    %cst = arith.constant dense<0.000000e+00> : vector<8xf32>
    %3 = vector.multi_reduction <add>, %2, %cst [1] : vector<8x32xf32> to vector<8xf32>
    %4 = vector.shape_cast %3 : vector<8xf32> to vector<8x1xf32>
    %cst_3 = arith.constant 3.200000e+01 : f32
    %5 = vector.broadcast %cst_3 : f32 to vector<8x1xf32>
    %6 = arith.divf %4, %5 : vector<8x1xf32>
    %7 = vector.broadcast %6 : vector<8x1xf32> to vector<8x32xf32>
    %8 = arith.subf %2, %7 : vector<8x32xf32>
    %9 = arith.mulf %8, %8 : vector<8x32xf32>
    %cst_4 = arith.constant dense<0.000000e+00> : vector<8xf32>
    %10 = vector.multi_reduction <add>, %9, %cst_4 [1] : vector<8x32xf32> to vector<8xf32>
    %11 = vector.shape_cast %10 : vector<8xf32> to vector<8x1xf32>
    %cst_5 = arith.constant 3.200000e+01 : f32
    %12 = vector.broadcast %cst_5 : f32 to vector<8x1xf32>
    %13 = arith.divf %11, %12 : vector<8x1xf32>
    %cst_6 = arith.constant 9.99999974E-6 : f32
    %14 = vector.broadcast %cst_6 : f32 to vector<8x1xf32>
    %15 = arith.addf %13, %14 : vector<8x1xf32>
    %16 = math.rsqrt %15 : vector<8x1xf32>
    %17 = vector.broadcast %16 : vector<8x1xf32> to vector<8x32xf32>
    %18 = arith.mulf %8, %17 : vector<8x32xf32>
    %c0_7 = arith.constant 0 : index
    %c0_8 = arith.constant 0 : index
    %19 = vector.load %arg3[%c0_7, %c0_8] : memref<1x32xf32, #tpu.memory_space<vmem>>, vector<1x32xf32>
    %20 = vector.broadcast %19 : vector<1x32xf32> to vector<8x32xf32>
    %21 = arith.mulf %18, %20 : vector<8x32xf32>
    %c0_9 = arith.constant 0 : index
    %c0_10 = arith.constant 0 : index
    %22 = vector.load %arg4[%c0_9, %c0_10] : memref<1x32xf32, #tpu.memory_space<vmem>>, vector<1x32xf32>
    %23 = vector.broadcast %22 : vector<1x32xf32> to vector<8x32xf32>
    %24 = arith.addf %21, %23 : vector<8x32xf32>
    %c0_11 = arith.constant 0 : index
    %c0_12 = arith.constant 0 : index
    %25 = vector.load %arg5[%c0_11, %c0_12] : memref<8x32xf32, #tpu.memory_space<vmem>>, vector<8x32xf32>
    tpu.vector_store %arg5[%c0_11, %c0_12], %24 {strides = array<i32>} : memref<8x32xf32, #tpu.memory_space<vmem>>, vector<8x32xf32>,
    return
  }
  func.func @transform_0(%arg0: i32) -> (i32, i32) {
    %c0_i32 = arith.constant 0 : i32
    %c0_i32_0 = arith.constant 0 : i32
    return %arg0, %c0_i32 : i32, i32
  }
  func.func @transform_1(%arg0: i32) -> (i32, i32) {
    %c0_i32 = arith.constant 0 : i32
    %c0_i32_0 = arith.constant 0 : i32
    return %arg0, %c0_i32 : i32, i32
  }
  func.func @transform_2(%arg0: i32) -> (i32, i32) {
    %c0_i32 = arith.constant 0 : i32
    %c0_i32_0 = arith.constant 0 : i32
    %c0_i32_1 = arith.constant 0 : i32
    return %c0_i32, %c0_i32_0 : i32, i32
  }
  func.func @transform_3(%arg0: i32) -> (i32, i32) {
    %c0_i32 = arith.constant 0 : i32
    %c0_i32_0 = arith.constant 0 : i32
    %c0_i32_1 = arith.constant 0 : i32
    return %c0_i32, %c0_i32_0 : i32, i32
  }
  func.func @transform_4(%arg0: i32) -> (i32, i32) {
    %c0_i32 = arith.constant 0 : i32
    %c0_i32_0 = arith.constant 0 : i32
    return %arg0, %c0_i32 : i32, i32
  }
}

module attributes {stable_mosaic.version = 11 : i64} {
  func.func @_mm_kernel(%arg0: i32, %arg1: i32, %arg2: i32, %arg3: memref<12x32xbf16, #tpu.memory_space<vmem>>, %arg4: memref<32x64xbf16, #tpu.memory_space<vmem>>, %arg5: memref<1x64xf32, #tpu.memory_space<vmem>>, %arg6: memref<1x64xf32, #tpu.memory_space<vmem>>, %arg7: memref<12x64xf32, #tpu.memory_space<vmem>>, %arg8: memref<12x64xf32, #tpu.memory_space<vmem>>) attributes {dimension_semantics = [#tpu.dimension_semantics<parallel>, #tpu.dimension_semantics<parallel>, #tpu.dimension_semantics<arbitrary>], iteration_bounds = array<i64: 1, 1, 1>, scalar_prefetch = 0 : i64, scratch_operands = 1 : i64, tpu.core_type = #tpu.core_type<tc>, window_params = [{transform_indices = @transform_0, window_bounds = array<i64: 12, 32>}, {transform_indices = @transform_1, window_bounds = array<i64: 32, 64>}, {transform_indices = @transform_2, window_bounds = array<i64: 1, 64>}, {transform_indices = @transform_3, window_bounds = array<i64: 1, 64>}, {transform_indices = @transform_4, window_bounds = array<i64: 12, 64>}]} {
    %c0_i32 = arith.constant 0 : i32
    %0 = arith.cmpi eq, %arg2, %c0_i32 : i32
    %1 = arith.extui %0 : i1 to i32
    %c0_i32_0 = arith.constant 0 : i32
    %2 = arith.cmpi ne, %1, %c0_i32_0 : i32
    scf.if %2 {
      %cst_10 = arith.constant 0.000000e+00 : f32
      %12 = vector.broadcast %cst_10 : f32 to vector<12x64xf32>
      %c0_11 = arith.constant 0 : index
      %c0_12 = arith.constant 0 : index
      %13 = vector.load %arg8[%c0_11, %c0_12] : memref<12x64xf32, #tpu.memory_space<vmem>>, vector<12x64xf32>
      tpu.vector_store %arg8[%c0_11, %c0_12], %12 {strides = array<i32>} : memref<12x64xf32, #tpu.memory_space<vmem>>, vector<12x64xf32>,
    } else {
    }
    %c0 = arith.constant 0 : index
    %c0_1 = arith.constant 0 : index
    %3 = vector.load %arg8[%c0, %c0_1] : memref<12x64xf32, #tpu.memory_space<vmem>>, vector<12x64xf32>
    %c0_2 = arith.constant 0 : index
    %c0_3 = arith.constant 0 : index
    %4 = vector.load %arg3[%c0_2, %c0_3] : memref<12x32xbf16, #tpu.memory_space<vmem>>, vector<12x32xbf16>
    %c0_4 = arith.constant 0 : index
    %c0_5 = arith.constant 0 : index
    %5 = vector.load %arg4[%c0_4, %c0_5] : memref<32x64xbf16, #tpu.memory_space<vmem>>, vector<32x64xbf16>
    %cst = arith.constant dense<0.000000e+00> : vector<12x64xf32>
    %6 = tpu.matmul %4, %5, %cst {dimension_numbers = #tpu.dot_dimension_numbers<[1], [0], [0], [1], [0, 0, 1, 1], [], []>} : vector<12x32xbf16>, vector<32x64xbf16>, vector<12x64xf32> -> vector<12x64xf32>
    %7 = arith.addf %3, %6 : vector<12x64xf32>
    %c0_6 = arith.constant 0 : index
    %c0_7 = arith.constant 0 : index
    %8 = vector.load %arg8[%c0_6, %c0_7] : memref<12x64xf32, #tpu.memory_space<vmem>>, vector<12x64xf32>
    tpu.vector_store %arg8[%c0_6, %c0_7], %7 {strides = array<i32>} : memref<12x64xf32, #tpu.memory_space<vmem>>, vector<12x64xf32>,
    %c0_i32_8 = arith.constant 0 : i32
    %9 = arith.cmpi eq, %arg2, %c0_i32_8 : i32
    %10 = arith.extui %9 : i1 to i32
    %c0_i32_9 = arith.constant 0 : i32
    %11 = arith.cmpi ne, %10, %c0_i32_9 : i32
    scf.if %11 {
      %c0_10 = arith.constant 0 : index
      %c0_11 = arith.constant 0 : index
      %12 = vector.load %arg8[%c0_10, %c0_11] : memref<12x64xf32, #tpu.memory_space<vmem>>, vector<12x64xf32>
      %c0_12 = arith.constant 0 : index
      %c0_13 = arith.constant 0 : index
      %13 = vector.load %arg5[%c0_12, %c0_13] : memref<1x64xf32, #tpu.memory_space<vmem>>, vector<1x64xf32>
      %14 = vector.broadcast %13 : vector<1x64xf32> to vector<12x64xf32>
      %15 = arith.mulf %12, %14 : vector<12x64xf32>
      %c0_14 = arith.constant 0 : index
      %c0_15 = arith.constant 0 : index
      %16 = vector.load %arg6[%c0_14, %c0_15] : memref<1x64xf32, #tpu.memory_space<vmem>>, vector<1x64xf32>
      %17 = vector.broadcast %16 : vector<1x64xf32> to vector<12x64xf32>
      %18 = arith.addf %15, %17 : vector<12x64xf32>
      %c0_16 = arith.constant 0 : index
      %c0_17 = arith.constant 0 : index
      %19 = vector.load %arg7[%c0_16, %c0_17] : memref<12x64xf32, #tpu.memory_space<vmem>>, vector<12x64xf32>
      tpu.vector_store %arg7[%c0_16, %c0_17], %18 {strides = array<i32>} : memref<12x64xf32, #tpu.memory_space<vmem>>, vector<12x64xf32>,
    } else {
    }
    return
  }
  func.func @transform_0(%arg0: i32, %arg1: i32, %arg2: i32) -> (i32, i32) {
    %c0_i32 = arith.constant 0 : i32
    return %arg0, %arg2 : i32, i32
  }
  func.func @transform_1(%arg0: i32, %arg1: i32, %arg2: i32) -> (i32, i32) {
    %c0_i32 = arith.constant 0 : i32
    return %arg2, %arg1 : i32, i32
  }
  func.func @transform_2(%arg0: i32, %arg1: i32, %arg2: i32) -> (i32, i32) {
    %c0_i32 = arith.constant 0 : i32
    %c0_i32_0 = arith.constant 0 : i32
    return %c0_i32, %arg1 : i32, i32
  }
  func.func @transform_3(%arg0: i32, %arg1: i32, %arg2: i32) -> (i32, i32) {
    %c0_i32 = arith.constant 0 : i32
    %c0_i32_0 = arith.constant 0 : i32
    return %c0_i32, %arg1 : i32, i32
  }
  func.func @transform_4(%arg0: i32, %arg1: i32, %arg2: i32) -> (i32, i32) {
    %c0_i32 = arith.constant 0 : i32
    return %arg0, %arg1 : i32, i32
  }
}

module attributes {stable_mosaic.version = 11 : i64} {
  func.func @_attn_kernel(%arg0: i32, %arg1: memref<1x8x4x4xbf16, #tpu.memory_space<vmem>>, %arg2: memref<1x8x6x4xbf16, #tpu.memory_space<vmem>>, %arg3: memref<1x8x6x4xbf16, #tpu.memory_space<vmem>>, %arg4: memref<4x6xf32, #tpu.memory_space<vmem>>, %arg5: memref<1x8x4x4xf32, #tpu.memory_space<vmem>>) attributes {dimension_semantics = [#tpu.dimension_semantics<parallel>], iteration_bounds = array<i64: 2>, scalar_prefetch = 0 : i64, scratch_operands = 0 : i64, tpu.core_type = #tpu.core_type<tc>, window_params = [{transform_indices = @transform_0, window_bounds = array<i64: 1, 8, 4, 4>}, {transform_indices = @transform_1, window_bounds = array<i64: 1, 8, 6, 4>}, {transform_indices = @transform_2, window_bounds = array<i64: 1, 8, 6, 4>}, {pipeline_mode = #tpu.pipeline_mode<synchronous>, transform_indices = @transform_3, window_bounds = array<i64: 4, 6>}, {transform_indices = @transform_4, window_bounds = array<i64: 1, 8, 4, 4>}]} {
    %c0 = arith.constant 0 : index
    %c0_0 = arith.constant 0 : index
    %c0_1 = arith.constant 0 : index
    %c0_2 = arith.constant 0 : index
    %0 = vector.load %arg1[%c0, %c0_0, %c0_1, %c0_2] : memref<1x8x4x4xbf16, #tpu.memory_space<vmem>>, vector<1x8x4x4xbf16>
    %1 = vector.shape_cast %0 : vector<1x8x4x4xbf16> to vector<8x4x4xbf16>
    %c0_3 = arith.constant 0 : index
    %c0_4 = arith.constant 0 : index
    %c0_5 = arith.constant 0 : index
    %c0_6 = arith.constant 0 : index
    %2 = vector.load %arg2[%c0_3, %c0_4, %c0_5, %c0_6] : memref<1x8x6x4xbf16, #tpu.memory_space<vmem>>, vector<1x8x6x4xbf16>
    %3 = vector.shape_cast %2 : vector<1x8x6x4xbf16> to vector<8x6x4xbf16>
    %c0_7 = arith.constant 0 : index
    %c0_8 = arith.constant 0 : index
    %c0_9 = arith.constant 0 : index
    %c0_10 = arith.constant 0 : index
    %4 = vector.load %arg3[%c0_7, %c0_8, %c0_9, %c0_10] : memref<1x8x6x4xbf16, #tpu.memory_space<vmem>>, vector<1x8x6x4xbf16>
    %5 = vector.shape_cast %4 : vector<1x8x6x4xbf16> to vector<8x6x4xbf16>
    "tpu.trace_start"() <{level = 10 : i32, message = "hqd,hkd->hqk"}> : () -> ()
    %cst = arith.constant dense<0.000000e+00> : vector<8x4x6xf32>
    %6 = tpu.matmul %1, %3, %cst {dimension_numbers = #tpu.dot_dimension_numbers<[2], [2], [1], [1], [0, 0, 0, 1, 1, 1], [0], [0]>} : vector<8x4x4xbf16>, vector<8x6x4xbf16>, vector<8x4x6xf32> -> vector<8x4x6xf32>
    "tpu.trace_stop"() : () -> ()
    %cst_11 = arith.constant 5.000000e-01 : f32
    %7 = vector.broadcast %cst_11 : f32 to vector<8x4x6xf32>
    %8 = arith.mulf %6, %7 : vector<8x4x6xf32>
    %c0_12 = arith.constant 0 : index
    %c0_13 = arith.constant 0 : index
    %9 = vector.load %arg4[%c0_12, %c0_13] : memref<4x6xf32, #tpu.memory_space<vmem>>, vector<4x6xf32>
    %10 = vector.shape_cast %9 : vector<4x6xf32> to vector<1x4x6xf32>
    %11 = vector.broadcast %10 : vector<1x4x6xf32> to vector<8x4x6xf32>
    %12 = arith.addf %8, %11 : vector<8x4x6xf32>
    %cst_14 = arith.constant dense<0xFF800000> : vector<8x4xf32>
    %13 = vector.multi_reduction <maximumf>, %12, %cst_14 [2] : vector<8x4x6xf32> to vector<8x4xf32>
    %14 = vector.shape_cast %13 : vector<8x4xf32> to vector<8x4x1xf32>
    %15 = vector.broadcast %14 : vector<8x4x1xf32> to vector<8x4x6xf32>
    %16 = arith.subf %12, %15 : vector<8x4x6xf32>
    %17 = math.exp %16 : vector<8x4x6xf32>
    %cst_15 = arith.constant dense<0.000000e+00> : vector<8x4xf32>
    %18 = vector.multi_reduction <add>, %17, %cst_15 [2] : vector<8x4x6xf32> to vector<8x4xf32>
    %19 = vector.shape_cast %18 : vector<8x4xf32> to vector<8x4x1xf32>
    %20 = tpu.reciprocal %19 {approx = true} : vector<8x4x1xf32> -> vector<8x4x1xf32>
    %21 = vector.broadcast %20 : vector<8x4x1xf32> to vector<8x4x6xf32>
    %22 = arith.mulf %17, %21 : vector<8x4x6xf32>
    %23 = arith.truncf %22 : vector<8x4x6xf32> to vector<8x4x6xbf16>
    "tpu.trace_start"() <{level = 10 : i32, message = "hqk,hkd->hqd"}> : () -> ()
    %cst_16 = arith.constant dense<0.000000e+00> : vector<8x4x4xf32>
    %24 = tpu.matmul %23, %5, %cst_16 {dimension_numbers = #tpu.dot_dimension_numbers<[2], [1], [1], [2], [0, 0, 0, 1, 1, 2], [0], [0]>} : vector<8x4x6xbf16>, vector<8x6x4xbf16>, vector<8x4x4xf32> -> vector<8x4x4xf32>
    "tpu.trace_stop"() : () -> ()
    %c0_17 = arith.constant 0 : index
    %c0_18 = arith.constant 0 : index
    %c0_19 = arith.constant 0 : index
    %c0_20 = arith.constant 0 : index
    %25 = vector.load %arg5[%c0_17, %c0_18, %c0_19, %c0_20] : memref<1x8x4x4xf32, #tpu.memory_space<vmem>>, vector<1x8x4x4xf32>
    %26 = vector.shape_cast %25 : vector<1x8x4x4xf32> to vector<8x4x4xf32>
    %27 = vector.shape_cast %24 : vector<8x4x4xf32> to vector<1x8x4x4xf32>
    tpu.vector_store %arg5[%c0_17, %c0_18, %c0_19, %c0_20], %27 {strides = array<i32>} : memref<1x8x4x4xf32, #tpu.memory_space<vmem>>, vector<1x8x4x4xf32>,
    return
  }
  func.func @transform_0(%arg0: i32) -> (i32, i32, i32, i32) {
    %c0_i32 = arith.constant 0 : i32
    %c0_i32_0 = arith.constant 0 : i32
    %c0_i32_1 = arith.constant 0 : i32
    %c0_i32_2 = arith.constant 0 : i32
    return %arg0, %c0_i32, %c0_i32_0, %c0_i32_1 : i32, i32, i32, i32
  }
  func.func @transform_1(%arg0: i32) -> (i32, i32, i32, i32) {
    %c0_i32 = arith.constant 0 : i32
    %c0_i32_0 = arith.constant 0 : i32
    %c0_i32_1 = arith.constant 0 : i32
    %c0_i32_2 = arith.constant 0 : i32
    return %arg0, %c0_i32, %c0_i32_0, %c0_i32_1 : i32, i32, i32, i32
  }
  func.func @transform_2(%arg0: i32) -> (i32, i32, i32, i32) {
    %c0_i32 = arith.constant 0 : i32
    %c0_i32_0 = arith.constant 0 : i32
    %c0_i32_1 = arith.constant 0 : i32
    %c0_i32_2 = arith.constant 0 : i32
    return %arg0, %c0_i32, %c0_i32_0, %c0_i32_1 : i32, i32, i32, i32
  }
  func.func @transform_3(%arg0: i32) -> (i32, i32) {
    %c0_i32 = arith.constant 0 : i32
    %c0_i32_0 = arith.constant 0 : i32
    %c0_i32_1 = arith.constant 0 : i32
    return %c0_i32, %c0_i32_0 : i32, i32
  }
  func.func @transform_4(%arg0: i32) -> (i32, i32, i32, i32) {
    %c0_i32 = arith.constant 0 : i32
    %c0_i32_0 = arith.constant 0 : i32
    %c0_i32_1 = arith.constant 0 : i32
    %c0_i32_2 = arith.constant 0 : i32
    return %arg0, %c0_i32, %c0_i32_0, %c0_i32_1 : i32, i32, i32, i32
  }
}

module attributes {stable_mosaic.version = 11 : i64} {
  func.func @_mm_kernel(%arg0: i32, %arg1: i32, %arg2: i32, %arg3: memref<8x32xbf16, #tpu.memory_space<vmem>>, %arg4: memref<32x256xbf16, #tpu.memory_space<vmem>>, %arg5: memref<1x256xf32, #tpu.memory_space<vmem>>, %arg6: memref<1x256xf32, #tpu.memory_space<vmem>>, %arg7: memref<8x256xf32, #tpu.memory_space<vmem>>, %arg8: memref<8x256xf32, #tpu.memory_space<vmem>>) attributes {dimension_semantics = [#tpu.dimension_semantics<parallel>, #tpu.dimension_semantics<parallel>, #tpu.dimension_semantics<arbitrary>], iteration_bounds = array<i64: 1, 8, 1>, scalar_prefetch = 0 : i64, scratch_operands = 1 : i64, tpu.core_type = #tpu.core_type<tc>, window_params = [{transform_indices = @transform_0, window_bounds = array<i64: 8, 32>}, {transform_indices = @transform_1, window_bounds = array<i64: 32, 256>}, {transform_indices = @transform_2, window_bounds = array<i64: 1, 256>}, {transform_indices = @transform_3, window_bounds = array<i64: 1, 256>}, {transform_indices = @transform_4, window_bounds = array<i64: 8, 256>}]} {
    %c0_i32 = arith.constant 0 : i32
    %0 = arith.cmpi eq, %arg2, %c0_i32 : i32
    %1 = arith.extui %0 : i1 to i32
    %c0_i32_0 = arith.constant 0 : i32
    %2 = arith.cmpi ne, %1, %c0_i32_0 : i32
    scf.if %2 {
      %cst_10 = arith.constant 0.000000e+00 : f32
      %12 = vector.broadcast %cst_10 : f32 to vector<8x256xf32>
      %c0_11 = arith.constant 0 : index
      %c0_12 = arith.constant 0 : index
      %13 = vector.load %arg8[%c0_11, %c0_12] : memref<8x256xf32, #tpu.memory_space<vmem>>, vector<8x256xf32>
      tpu.vector_store %arg8[%c0_11, %c0_12], %12 {strides = array<i32>} : memref<8x256xf32, #tpu.memory_space<vmem>>, vector<8x256xf32>,
    } else {
    }
    %c0 = arith.constant 0 : index
    %c0_1 = arith.constant 0 : index
    %3 = vector.load %arg8[%c0, %c0_1] : memref<8x256xf32, #tpu.memory_space<vmem>>, vector<8x256xf32>
    %c0_2 = arith.constant 0 : index
    %c0_3 = arith.constant 0 : index
    %4 = vector.load %arg3[%c0_2, %c0_3] : memref<8x32xbf16, #tpu.memory_space<vmem>>, vector<8x32xbf16>
    %c0_4 = arith.constant 0 : index
    %c0_5 = arith.constant 0 : index
    %5 = vector.load %arg4[%c0_4, %c0_5] : memref<32x256xbf16, #tpu.memory_space<vmem>>, vector<32x256xbf16>
    %cst = arith.constant dense<0.000000e+00> : vector<8x256xf32>
    %6 = tpu.matmul %4, %5, %cst {dimension_numbers = #tpu.dot_dimension_numbers<[1], [0], [0], [1], [0, 0, 1, 1], [], []>} : vector<8x32xbf16>, vector<32x256xbf16>, vector<8x256xf32> -> vector<8x256xf32>
    %7 = arith.addf %3, %6 : vector<8x256xf32>
    %c0_6 = arith.constant 0 : index
    %c0_7 = arith.constant 0 : index
    %8 = vector.load %arg8[%c0_6, %c0_7] : memref<8x256xf32, #tpu.memory_space<vmem>>, vector<8x256xf32>
    tpu.vector_store %arg8[%c0_6, %c0_7], %7 {strides = array<i32>} : memref<8x256xf32, #tpu.memory_space<vmem>>, vector<8x256xf32>,
    %c0_i32_8 = arith.constant 0 : i32
    %9 = arith.cmpi eq, %arg2, %c0_i32_8 : i32
    %10 = arith.extui %9 : i1 to i32
    %c0_i32_9 = arith.constant 0 : i32
    %11 = arith.cmpi ne, %10, %c0_i32_9 : i32
    scf.if %11 {
      %c0_10 = arith.constant 0 : index
      %c0_11 = arith.constant 0 : index
      %12 = vector.load %arg8[%c0_10, %c0_11] : memref<8x256xf32, #tpu.memory_space<vmem>>, vector<8x256xf32>
      %c0_12 = arith.constant 0 : index
      %c0_13 = arith.constant 0 : index
      %13 = vector.load %arg5[%c0_12, %c0_13] : memref<1x256xf32, #tpu.memory_space<vmem>>, vector<1x256xf32>
      %14 = vector.broadcast %13 : vector<1x256xf32> to vector<8x256xf32>
      %15 = arith.mulf %12, %14 : vector<8x256xf32>
      %c0_14 = arith.constant 0 : index
      %c0_15 = arith.constant 0 : index
      %16 = vector.load %arg6[%c0_14, %c0_15] : memref<1x256xf32, #tpu.memory_space<vmem>>, vector<1x256xf32>
      %17 = vector.broadcast %16 : vector<1x256xf32> to vector<8x256xf32>
      %18 = arith.addf %15, %17 : vector<8x256xf32>
      %cst_16 = arith.constant 0.000000e+00 : f32
      %19 = vector.broadcast %cst_16 : f32 to vector<8x256xf32>
      %20 = arith.maximumf %18, %19 : vector<8x256xf32>
      %c0_17 = arith.constant 0 : index
      %c0_18 = arith.constant 0 : index
      %21 = vector.load %arg7[%c0_17, %c0_18] : memref<8x256xf32, #tpu.memory_space<vmem>>, vector<8x256xf32>
      tpu.vector_store %arg7[%c0_17, %c0_18], %20 {strides = array<i32>} : memref<8x256xf32, #tpu.memory_space<vmem>>, vector<8x256xf32>,
    } else {
    }
    return
  }
  func.func @transform_0(%arg0: i32, %arg1: i32, %arg2: i32) -> (i32, i32) {
    %c0_i32 = arith.constant 0 : i32
    return %arg0, %arg2 : i32, i32
  }
  func.func @transform_1(%arg0: i32, %arg1: i32, %arg2: i32) -> (i32, i32) {
    %c0_i32 = arith.constant 0 : i32
    return %arg2, %arg1 : i32, i32
  }
  func.func @transform_2(%arg0: i32, %arg1: i32, %arg2: i32) -> (i32, i32) {
    %c0_i32 = arith.constant 0 : i32
    %c0_i32_0 = arith.constant 0 : i32
    return %c0_i32, %arg1 : i32, i32
  }
  func.func @transform_3(%arg0: i32, %arg1: i32, %arg2: i32) -> (i32, i32) {
    %c0_i32 = arith.constant 0 : i32
    %c0_i32_0 = arith.constant 0 : i32
    return %c0_i32, %arg1 : i32, i32
  }
  func.func @transform_4(%arg0: i32, %arg1: i32, %arg2: i32) -> (i32, i32) {
    %c0_i32 = arith.constant 0 : i32
    return %arg0, %arg1 : i32, i32
  }
}

module attributes {stable_mosaic.version = 11 : i64} {
  func.func @_mm_kernel(%arg0: i32, %arg1: i32, %arg2: i32, %arg3: memref<8x512xbf16, #tpu.memory_space<vmem>>, %arg4: memref<512x32xbf16, #tpu.memory_space<vmem>>, %arg5: memref<1x32xf32, #tpu.memory_space<vmem>>, %arg6: memref<1x32xf32, #tpu.memory_space<vmem>>, %arg7: memref<8x32xf32, #tpu.memory_space<vmem>>, %arg8: memref<8x32xf32, #tpu.memory_space<vmem>>) attributes {dimension_semantics = [#tpu.dimension_semantics<parallel>, #tpu.dimension_semantics<parallel>, #tpu.dimension_semantics<arbitrary>], iteration_bounds = array<i64: 1, 1, 4>, scalar_prefetch = 0 : i64, scratch_operands = 1 : i64, tpu.core_type = #tpu.core_type<tc>, window_params = [{transform_indices = @transform_0, window_bounds = array<i64: 8, 512>}, {transform_indices = @transform_1, window_bounds = array<i64: 512, 32>}, {transform_indices = @transform_2, window_bounds = array<i64: 1, 32>}, {transform_indices = @transform_3, window_bounds = array<i64: 1, 32>}, {transform_indices = @transform_4, window_bounds = array<i64: 8, 32>}]} {
    %c0_i32 = arith.constant 0 : i32
    %0 = arith.cmpi eq, %arg2, %c0_i32 : i32
    %1 = arith.extui %0 : i1 to i32
    %c0_i32_0 = arith.constant 0 : i32
    %2 = arith.cmpi ne, %1, %c0_i32_0 : i32
    scf.if %2 {
      %cst_9 = arith.constant 0.000000e+00 : f32
      %12 = vector.broadcast %cst_9 : f32 to vector<8x32xf32>
      %c0_10 = arith.constant 0 : index
      %c0_11 = arith.constant 0 : index
      %13 = vector.load %arg8[%c0_10, %c0_11] : memref<8x32xf32, #tpu.memory_space<vmem>>, vector<8x32xf32>
      tpu.vector_store %arg8[%c0_10, %c0_11], %12 {strides = array<i32>} : memref<8x32xf32, #tpu.memory_space<vmem>>, vector<8x32xf32>,
    } else {
    }
    %c0 = arith.constant 0 : index
    %c0_1 = arith.constant 0 : index
    %3 = vector.load %arg8[%c0, %c0_1] : memref<8x32xf32, #tpu.memory_space<vmem>>, vector<8x32xf32>
    %c0_2 = arith.constant 0 : index
    %c0_3 = arith.constant 0 : index
    %4 = vector.load %arg3[%c0_2, %c0_3] : memref<8x512xbf16, #tpu.memory_space<vmem>>, vector<8x512xbf16>
    %c0_4 = arith.constant 0 : index
    %c0_5 = arith.constant 0 : index
    %5 = vector.load %arg4[%c0_4, %c0_5] : memref<512x32xbf16, #tpu.memory_space<vmem>>, vector<512x32xbf16>
    %cst = arith.constant dense<0.000000e+00> : vector<8x32xf32>
    %6 = tpu.matmul %4, %5, %cst {dimension_numbers = #tpu.dot_dimension_numbers<[1], [0], [0], [1], [0, 0, 1, 1], [], []>} : vector<8x512xbf16>, vector<512x32xbf16>, vector<8x32xf32> -> vector<8x32xf32>
    %7 = arith.addf %3, %6 : vector<8x32xf32>
    %c0_6 = arith.constant 0 : index
    %c0_7 = arith.constant 0 : index
    %8 = vector.load %arg8[%c0_6, %c0_7] : memref<8x32xf32, #tpu.memory_space<vmem>>, vector<8x32xf32>
    tpu.vector_store %arg8[%c0_6, %c0_7], %7 {strides = array<i32>} : memref<8x32xf32, #tpu.memory_space<vmem>>, vector<8x32xf32>,
    %c3_i32 = arith.constant 3 : i32
    %9 = arith.cmpi eq, %arg2, %c3_i32 : i32
    %10 = arith.extui %9 : i1 to i32
    %c0_i32_8 = arith.constant 0 : i32
    %11 = arith.cmpi ne, %10, %c0_i32_8 : i32
    scf.if %11 {
      %c0_9 = arith.constant 0 : index
      %c0_10 = arith.constant 0 : index
      %12 = vector.load %arg8[%c0_9, %c0_10] : memref<8x32xf32, #tpu.memory_space<vmem>>, vector<8x32xf32>
      %c0_11 = arith.constant 0 : index
      %c0_12 = arith.constant 0 : index
      %13 = vector.load %arg5[%c0_11, %c0_12] : memref<1x32xf32, #tpu.memory_space<vmem>>, vector<1x32xf32>
      %14 = vector.broadcast %13 : vector<1x32xf32> to vector<8x32xf32>
      %15 = arith.mulf %12, %14 : vector<8x32xf32>
      %c0_13 = arith.constant 0 : index
      %c0_14 = arith.constant 0 : index
      %16 = vector.load %arg6[%c0_13, %c0_14] : memref<1x32xf32, #tpu.memory_space<vmem>>, vector<1x32xf32>
      %17 = vector.broadcast %16 : vector<1x32xf32> to vector<8x32xf32>
      %18 = arith.addf %15, %17 : vector<8x32xf32>
      %c0_15 = arith.constant 0 : index
      %c0_16 = arith.constant 0 : index
      %19 = vector.load %arg7[%c0_15, %c0_16] : memref<8x32xf32, #tpu.memory_space<vmem>>, vector<8x32xf32>
      tpu.vector_store %arg7[%c0_15, %c0_16], %18 {strides = array<i32>} : memref<8x32xf32, #tpu.memory_space<vmem>>, vector<8x32xf32>,
    } else {
    }
    return
  }
  func.func @transform_0(%arg0: i32, %arg1: i32, %arg2: i32) -> (i32, i32) {
    %c0_i32 = arith.constant 0 : i32
    return %arg0, %arg2 : i32, i32
  }
  func.func @transform_1(%arg0: i32, %arg1: i32, %arg2: i32) -> (i32, i32) {
    %c0_i32 = arith.constant 0 : i32
    return %arg2, %arg1 : i32, i32
  }
  func.func @transform_2(%arg0: i32, %arg1: i32, %arg2: i32) -> (i32, i32) {
    %c0_i32 = arith.constant 0 : i32
    %c0_i32_0 = arith.constant 0 : i32
    return %c0_i32, %arg1 : i32, i32
  }
  func.func @transform_3(%arg0: i32, %arg1: i32, %arg2: i32) -> (i32, i32) {
    %c0_i32 = arith.constant 0 : i32
    %c0_i32_0 = arith.constant 0 : i32
    return %c0_i32, %arg1 : i32, i32
  }
  func.func @transform_4(%arg0: i32, %arg1: i32, %arg2: i32) -> (i32, i32) {
    %c0_i32 = arith.constant 0 : i32
    return %arg0, %arg1 : i32, i32
  }
}

module attributes {stable_mosaic.version = 11 : i64} {
  func.func @_add_ln_kernel(%arg0: i32, %arg1: memref<8x32xf32, #tpu.memory_space<vmem>>, %arg2: memref<8x32xf32, #tpu.memory_space<vmem>>, %arg3: memref<1x32xf32, #tpu.memory_space<vmem>>, %arg4: memref<1x32xf32, #tpu.memory_space<vmem>>, %arg5: memref<8x32xf32, #tpu.memory_space<vmem>>) attributes {dimension_semantics = [#tpu.dimension_semantics<parallel>], iteration_bounds = array<i64: 1>, scalar_prefetch = 0 : i64, scratch_operands = 0 : i64, tpu.core_type = #tpu.core_type<tc>, window_params = [{transform_indices = @transform_0, window_bounds = array<i64: 8, 32>}, {transform_indices = @transform_1, window_bounds = array<i64: 8, 32>}, {pipeline_mode = #tpu.pipeline_mode<synchronous>, transform_indices = @transform_2, window_bounds = array<i64: 1, 32>}, {pipeline_mode = #tpu.pipeline_mode<synchronous>, transform_indices = @transform_3, window_bounds = array<i64: 1, 32>}, {transform_indices = @transform_4, window_bounds = array<i64: 8, 32>}]} {
    %c0 = arith.constant 0 : index
    %c0_0 = arith.constant 0 : index
    %0 = vector.load %arg1[%c0, %c0_0] : memref<8x32xf32, #tpu.memory_space<vmem>>, vector<8x32xf32>
    %c0_1 = arith.constant 0 : index
    %c0_2 = arith.constant 0 : index
    %1 = vector.load %arg2[%c0_1, %c0_2] : memref<8x32xf32, #tpu.memory_space<vmem>>, vector<8x32xf32>
    %2 = arith.addf %0, %1 : vector<8x32xf32>
    %cst = arith.constant dense<0.000000e+00> : vector<8xf32>
    %3 = vector.multi_reduction <add>, %2, %cst [1] : vector<8x32xf32> to vector<8xf32>
    %4 = vector.shape_cast %3 : vector<8xf32> to vector<8x1xf32>
    %cst_3 = arith.constant 3.200000e+01 : f32
    %5 = vector.broadcast %cst_3 : f32 to vector<8x1xf32>
    %6 = arith.divf %4, %5 : vector<8x1xf32>
    %7 = vector.broadcast %6 : vector<8x1xf32> to vector<8x32xf32>
    %8 = arith.subf %2, %7 : vector<8x32xf32>
    %9 = arith.mulf %8, %8 : vector<8x32xf32>
    %cst_4 = arith.constant dense<0.000000e+00> : vector<8xf32>
    %10 = vector.multi_reduction <add>, %9, %cst_4 [1] : vector<8x32xf32> to vector<8xf32>
    %11 = vector.shape_cast %10 : vector<8xf32> to vector<8x1xf32>
    %cst_5 = arith.constant 3.200000e+01 : f32
    %12 = vector.broadcast %cst_5 : f32 to vector<8x1xf32>
    %13 = arith.divf %11, %12 : vector<8x1xf32>
    %cst_6 = arith.constant 9.99999974E-6 : f32
    %14 = vector.broadcast %cst_6 : f32 to vector<8x1xf32>
    %15 = arith.addf %13, %14 : vector<8x1xf32>
    %16 = math.rsqrt %15 : vector<8x1xf32>
    %17 = vector.broadcast %16 : vector<8x1xf32> to vector<8x32xf32>
    %18 = arith.mulf %8, %17 : vector<8x32xf32>
    %c0_7 = arith.constant 0 : index
    %c0_8 = arith.constant 0 : index
    %19 = vector.load %arg3[%c0_7, %c0_8] : memref<1x32xf32, #tpu.memory_space<vmem>>, vector<1x32xf32>
    %20 = vector.broadcast %19 : vector<1x32xf32> to vector<8x32xf32>
    %21 = arith.mulf %18, %20 : vector<8x32xf32>
    %c0_9 = arith.constant 0 : index
    %c0_10 = arith.constant 0 : index
    %22 = vector.load %arg4[%c0_9, %c0_10] : memref<1x32xf32, #tpu.memory_space<vmem>>, vector<1x32xf32>
    %23 = vector.broadcast %22 : vector<1x32xf32> to vector<8x32xf32>
    %24 = arith.addf %21, %23 : vector<8x32xf32>
    %c0_11 = arith.constant 0 : index
    %c0_12 = arith.constant 0 : index
    %25 = vector.load %arg5[%c0_11, %c0_12] : memref<8x32xf32, #tpu.memory_space<vmem>>, vector<8x32xf32>
    tpu.vector_store %arg5[%c0_11, %c0_12], %24 {strides = array<i32>} : memref<8x32xf32, #tpu.memory_space<vmem>>, vector<8x32xf32>,
    return
  }
  func.func @transform_0(%arg0: i32) -> (i32, i32) {
    %c0_i32 = arith.constant 0 : i32
    %c0_i32_0 = arith.constant 0 : i32
    return %arg0, %c0_i32 : i32, i32
  }
  func.func @transform_1(%arg0: i32) -> (i32, i32) {
    %c0_i32 = arith.constant 0 : i32
    %c0_i32_0 = arith.constant 0 : i32
    return %arg0, %c0_i32 : i32, i32
  }
  func.func @transform_2(%arg0: i32) -> (i32, i32) {
    %c0_i32 = arith.constant 0 : i32
    %c0_i32_0 = arith.constant 0 : i32
    %c0_i32_1 = arith.constant 0 : i32
    return %c0_i32, %c0_i32_0 : i32, i32
  }
  func.func @transform_3(%arg0: i32) -> (i32, i32) {
    %c0_i32 = arith.constant 0 : i32
    %c0_i32_0 = arith.constant 0 : i32
    %c0_i32_1 = arith.constant 0 : i32
    return %c0_i32, %c0_i32_0 : i32, i32
  }
  func.func @transform_4(%arg0: i32) -> (i32, i32) {
    %c0_i32 = arith.constant 0 : i32
    %c0_i32_0 = arith.constant 0 : i32
    return %arg0, %c0_i32 : i32, i32
  }
}

module attributes {stable_mosaic.version = 11 : i64} {
  func.func @_mm_kernel(%arg0: i32, %arg1: i32, %arg2: i32, %arg3: memref<8x32xbf16, #tpu.memory_space<vmem>>, %arg4: memref<32x96xbf16, #tpu.memory_space<vmem>>, %arg5: memref<1x96xf32, #tpu.memory_space<vmem>>, %arg6: memref<1x96xf32, #tpu.memory_space<vmem>>, %arg7: memref<8x96xf32, #tpu.memory_space<vmem>>, %arg8: memref<8x96xf32, #tpu.memory_space<vmem>>) attributes {dimension_semantics = [#tpu.dimension_semantics<parallel>, #tpu.dimension_semantics<parallel>, #tpu.dimension_semantics<arbitrary>], iteration_bounds = array<i64: 1, 1, 1>, scalar_prefetch = 0 : i64, scratch_operands = 1 : i64, tpu.core_type = #tpu.core_type<tc>, window_params = [{transform_indices = @transform_0, window_bounds = array<i64: 8, 32>}, {transform_indices = @transform_1, window_bounds = array<i64: 32, 96>}, {transform_indices = @transform_2, window_bounds = array<i64: 1, 96>}, {transform_indices = @transform_3, window_bounds = array<i64: 1, 96>}, {transform_indices = @transform_4, window_bounds = array<i64: 8, 96>}]} {
    %c0_i32 = arith.constant 0 : i32
    %0 = arith.cmpi eq, %arg2, %c0_i32 : i32
    %1 = arith.extui %0 : i1 to i32
    %c0_i32_0 = arith.constant 0 : i32
    %2 = arith.cmpi ne, %1, %c0_i32_0 : i32
    scf.if %2 {
      %cst_10 = arith.constant 0.000000e+00 : f32
      %12 = vector.broadcast %cst_10 : f32 to vector<8x96xf32>
      %c0_11 = arith.constant 0 : index
      %c0_12 = arith.constant 0 : index
      %13 = vector.load %arg8[%c0_11, %c0_12] : memref<8x96xf32, #tpu.memory_space<vmem>>, vector<8x96xf32>
      tpu.vector_store %arg8[%c0_11, %c0_12], %12 {strides = array<i32>} : memref<8x96xf32, #tpu.memory_space<vmem>>, vector<8x96xf32>,
    } else {
    }
    %c0 = arith.constant 0 : index
    %c0_1 = arith.constant 0 : index
    %3 = vector.load %arg8[%c0, %c0_1] : memref<8x96xf32, #tpu.memory_space<vmem>>, vector<8x96xf32>
    %c0_2 = arith.constant 0 : index
    %c0_3 = arith.constant 0 : index
    %4 = vector.load %arg3[%c0_2, %c0_3] : memref<8x32xbf16, #tpu.memory_space<vmem>>, vector<8x32xbf16>
    %c0_4 = arith.constant 0 : index
    %c0_5 = arith.constant 0 : index
    %5 = vector.load %arg4[%c0_4, %c0_5] : memref<32x96xbf16, #tpu.memory_space<vmem>>, vector<32x96xbf16>
    %cst = arith.constant dense<0.000000e+00> : vector<8x96xf32>
    %6 = tpu.matmul %4, %5, %cst {dimension_numbers = #tpu.dot_dimension_numbers<[1], [0], [0], [1], [0, 0, 1, 1], [], []>} : vector<8x32xbf16>, vector<32x96xbf16>, vector<8x96xf32> -> vector<8x96xf32>
    %7 = arith.addf %3, %6 : vector<8x96xf32>
    %c0_6 = arith.constant 0 : index
    %c0_7 = arith.constant 0 : index
    %8 = vector.load %arg8[%c0_6, %c0_7] : memref<8x96xf32, #tpu.memory_space<vmem>>, vector<8x96xf32>
    tpu.vector_store %arg8[%c0_6, %c0_7], %7 {strides = array<i32>} : memref<8x96xf32, #tpu.memory_space<vmem>>, vector<8x96xf32>,
    %c0_i32_8 = arith.constant 0 : i32
    %9 = arith.cmpi eq, %arg2, %c0_i32_8 : i32
    %10 = arith.extui %9 : i1 to i32
    %c0_i32_9 = arith.constant 0 : i32
    %11 = arith.cmpi ne, %10, %c0_i32_9 : i32
    scf.if %11 {
      %c0_10 = arith.constant 0 : index
      %c0_11 = arith.constant 0 : index
      %12 = vector.load %arg8[%c0_10, %c0_11] : memref<8x96xf32, #tpu.memory_space<vmem>>, vector<8x96xf32>
      %c0_12 = arith.constant 0 : index
      %c0_13 = arith.constant 0 : index
      %13 = vector.load %arg5[%c0_12, %c0_13] : memref<1x96xf32, #tpu.memory_space<vmem>>, vector<1x96xf32>
      %14 = vector.broadcast %13 : vector<1x96xf32> to vector<8x96xf32>
      %15 = arith.mulf %12, %14 : vector<8x96xf32>
      %c0_14 = arith.constant 0 : index
      %c0_15 = arith.constant 0 : index
      %16 = vector.load %arg6[%c0_14, %c0_15] : memref<1x96xf32, #tpu.memory_space<vmem>>, vector<1x96xf32>
      %17 = vector.broadcast %16 : vector<1x96xf32> to vector<8x96xf32>
      %18 = arith.addf %15, %17 : vector<8x96xf32>
      %c0_16 = arith.constant 0 : index
      %c0_17 = arith.constant 0 : index
      %19 = vector.load %arg7[%c0_16, %c0_17] : memref<8x96xf32, #tpu.memory_space<vmem>>, vector<8x96xf32>
      tpu.vector_store %arg7[%c0_16, %c0_17], %18 {strides = array<i32>} : memref<8x96xf32, #tpu.memory_space<vmem>>, vector<8x96xf32>,
    } else {
    }
    return
  }
  func.func @transform_0(%arg0: i32, %arg1: i32, %arg2: i32) -> (i32, i32) {
    %c0_i32 = arith.constant 0 : i32
    return %arg0, %arg2 : i32, i32
  }
  func.func @transform_1(%arg0: i32, %arg1: i32, %arg2: i32) -> (i32, i32) {
    %c0_i32 = arith.constant 0 : i32
    return %arg2, %arg1 : i32, i32
  }
  func.func @transform_2(%arg0: i32, %arg1: i32, %arg2: i32) -> (i32, i32) {
    %c0_i32 = arith.constant 0 : i32
    %c0_i32_0 = arith.constant 0 : i32
    return %c0_i32, %arg1 : i32, i32
  }
  func.func @transform_3(%arg0: i32, %arg1: i32, %arg2: i32) -> (i32, i32) {
    %c0_i32 = arith.constant 0 : i32
    %c0_i32_0 = arith.constant 0 : i32
    return %c0_i32, %arg1 : i32, i32
  }
  func.func @transform_4(%arg0: i32, %arg1: i32, %arg2: i32) -> (i32, i32) {
    %c0_i32 = arith.constant 0 : i32
    return %arg0, %arg1 : i32, i32
  }
}

module attributes {stable_mosaic.version = 11 : i64} {
  func.func @_mm_kernel(%arg0: i32, %arg1: i32, %arg2: i32, %arg3: memref<8x32xbf16, #tpu.memory_space<vmem>>, %arg4: memref<32x32xbf16, #tpu.memory_space<vmem>>, %arg5: memref<1x32xf32, #tpu.memory_space<vmem>>, %arg6: memref<1x32xf32, #tpu.memory_space<vmem>>, %arg7: memref<8x32xf32, #tpu.memory_space<vmem>>, %arg8: memref<8x32xf32, #tpu.memory_space<vmem>>) attributes {dimension_semantics = [#tpu.dimension_semantics<parallel>, #tpu.dimension_semantics<parallel>, #tpu.dimension_semantics<arbitrary>], iteration_bounds = array<i64: 1, 1, 1>, scalar_prefetch = 0 : i64, scratch_operands = 1 : i64, tpu.core_type = #tpu.core_type<tc>, window_params = [{transform_indices = @transform_0, window_bounds = array<i64: 8, 32>}, {transform_indices = @transform_1, window_bounds = array<i64: 32, 32>}, {transform_indices = @transform_2, window_bounds = array<i64: 1, 32>}, {transform_indices = @transform_3, window_bounds = array<i64: 1, 32>}, {transform_indices = @transform_4, window_bounds = array<i64: 8, 32>}]} {
    %c0_i32 = arith.constant 0 : i32
    %0 = arith.cmpi eq, %arg2, %c0_i32 : i32
    %1 = arith.extui %0 : i1 to i32
    %c0_i32_0 = arith.constant 0 : i32
    %2 = arith.cmpi ne, %1, %c0_i32_0 : i32
    scf.if %2 {
      %cst_10 = arith.constant 0.000000e+00 : f32
      %12 = vector.broadcast %cst_10 : f32 to vector<8x32xf32>
      %c0_11 = arith.constant 0 : index
      %c0_12 = arith.constant 0 : index
      %13 = vector.load %arg8[%c0_11, %c0_12] : memref<8x32xf32, #tpu.memory_space<vmem>>, vector<8x32xf32>
      tpu.vector_store %arg8[%c0_11, %c0_12], %12 {strides = array<i32>} : memref<8x32xf32, #tpu.memory_space<vmem>>, vector<8x32xf32>,
    } else {
    }
    %c0 = arith.constant 0 : index
    %c0_1 = arith.constant 0 : index
    %3 = vector.load %arg8[%c0, %c0_1] : memref<8x32xf32, #tpu.memory_space<vmem>>, vector<8x32xf32>
    %c0_2 = arith.constant 0 : index
    %c0_3 = arith.constant 0 : index
    %4 = vector.load %arg3[%c0_2, %c0_3] : memref<8x32xbf16, #tpu.memory_space<vmem>>, vector<8x32xbf16>
    %c0_4 = arith.constant 0 : index
    %c0_5 = arith.constant 0 : index
    %5 = vector.load %arg4[%c0_4, %c0_5] : memref<32x32xbf16, #tpu.memory_space<vmem>>, vector<32x32xbf16>
    %cst = arith.constant dense<0.000000e+00> : vector<8x32xf32>
    %6 = tpu.matmul %4, %5, %cst {dimension_numbers = #tpu.dot_dimension_numbers<[1], [0], [0], [1], [0, 0, 1, 1], [], []>} : vector<8x32xbf16>, vector<32x32xbf16>, vector<8x32xf32> -> vector<8x32xf32>
    %7 = arith.addf %3, %6 : vector<8x32xf32>
    %c0_6 = arith.constant 0 : index
    %c0_7 = arith.constant 0 : index
    %8 = vector.load %arg8[%c0_6, %c0_7] : memref<8x32xf32, #tpu.memory_space<vmem>>, vector<8x32xf32>
    tpu.vector_store %arg8[%c0_6, %c0_7], %7 {strides = array<i32>} : memref<8x32xf32, #tpu.memory_space<vmem>>, vector<8x32xf32>,
    %c0_i32_8 = arith.constant 0 : i32
    %9 = arith.cmpi eq, %arg2, %c0_i32_8 : i32
    %10 = arith.extui %9 : i1 to i32
    %c0_i32_9 = arith.constant 0 : i32
    %11 = arith.cmpi ne, %10, %c0_i32_9 : i32
    scf.if %11 {
      %c0_10 = arith.constant 0 : index
      %c0_11 = arith.constant 0 : index
      %12 = vector.load %arg8[%c0_10, %c0_11] : memref<8x32xf32, #tpu.memory_space<vmem>>, vector<8x32xf32>
      %c0_12 = arith.constant 0 : index
      %c0_13 = arith.constant 0 : index
      %13 = vector.load %arg5[%c0_12, %c0_13] : memref<1x32xf32, #tpu.memory_space<vmem>>, vector<1x32xf32>
      %14 = vector.broadcast %13 : vector<1x32xf32> to vector<8x32xf32>
      %15 = arith.mulf %12, %14 : vector<8x32xf32>
      %c0_14 = arith.constant 0 : index
      %c0_15 = arith.constant 0 : index
      %16 = vector.load %arg6[%c0_14, %c0_15] : memref<1x32xf32, #tpu.memory_space<vmem>>, vector<1x32xf32>
      %17 = vector.broadcast %16 : vector<1x32xf32> to vector<8x32xf32>
      %18 = arith.addf %15, %17 : vector<8x32xf32>
      %c0_16 = arith.constant 0 : index
      %c0_17 = arith.constant 0 : index
      %19 = vector.load %arg7[%c0_16, %c0_17] : memref<8x32xf32, #tpu.memory_space<vmem>>, vector<8x32xf32>
      tpu.vector_store %arg7[%c0_16, %c0_17], %18 {strides = array<i32>} : memref<8x32xf32, #tpu.memory_space<vmem>>, vector<8x32xf32>,
    } else {
    }
    return
  }
  func.func @transform_0(%arg0: i32, %arg1: i32, %arg2: i32) -> (i32, i32) {
    %c0_i32 = arith.constant 0 : i32
    return %arg0, %arg2 : i32, i32
  }
  func.func @transform_1(%arg0: i32, %arg1: i32, %arg2: i32) -> (i32, i32) {
    %c0_i32 = arith.constant 0 : i32
    return %arg2, %arg1 : i32, i32
  }
  func.func @transform_2(%arg0: i32, %arg1: i32, %arg2: i32) -> (i32, i32) {
    %c0_i32 = arith.constant 0 : i32
    %c0_i32_0 = arith.constant 0 : i32
    return %c0_i32, %arg1 : i32, i32
  }
  func.func @transform_3(%arg0: i32, %arg1: i32, %arg2: i32) -> (i32, i32) {
    %c0_i32 = arith.constant 0 : i32
    %c0_i32_0 = arith.constant 0 : i32
    return %c0_i32, %arg1 : i32, i32
  }
  func.func @transform_4(%arg0: i32, %arg1: i32, %arg2: i32) -> (i32, i32) {
    %c0_i32 = arith.constant 0 : i32
    return %arg0, %arg1 : i32, i32
  }
}

module attributes {stable_mosaic.version = 11 : i64} {
  func.func @_mm_kernel(%arg0: i32, %arg1: i32, %arg2: i32, %arg3: memref<12x32xbf16, #tpu.memory_space<vmem>>, %arg4: memref<32x64xbf16, #tpu.memory_space<vmem>>, %arg5: memref<1x64xf32, #tpu.memory_space<vmem>>, %arg6: memref<1x64xf32, #tpu.memory_space<vmem>>, %arg7: memref<12x64xf32, #tpu.memory_space<vmem>>, %arg8: memref<12x64xf32, #tpu.memory_space<vmem>>) attributes {dimension_semantics = [#tpu.dimension_semantics<parallel>, #tpu.dimension_semantics<parallel>, #tpu.dimension_semantics<arbitrary>], iteration_bounds = array<i64: 1, 1, 1>, scalar_prefetch = 0 : i64, scratch_operands = 1 : i64, tpu.core_type = #tpu.core_type<tc>, window_params = [{transform_indices = @transform_0, window_bounds = array<i64: 12, 32>}, {transform_indices = @transform_1, window_bounds = array<i64: 32, 64>}, {transform_indices = @transform_2, window_bounds = array<i64: 1, 64>}, {transform_indices = @transform_3, window_bounds = array<i64: 1, 64>}, {transform_indices = @transform_4, window_bounds = array<i64: 12, 64>}]} {
    %c0_i32 = arith.constant 0 : i32
    %0 = arith.cmpi eq, %arg2, %c0_i32 : i32
    %1 = arith.extui %0 : i1 to i32
    %c0_i32_0 = arith.constant 0 : i32
    %2 = arith.cmpi ne, %1, %c0_i32_0 : i32
    scf.if %2 {
      %cst_10 = arith.constant 0.000000e+00 : f32
      %12 = vector.broadcast %cst_10 : f32 to vector<12x64xf32>
      %c0_11 = arith.constant 0 : index
      %c0_12 = arith.constant 0 : index
      %13 = vector.load %arg8[%c0_11, %c0_12] : memref<12x64xf32, #tpu.memory_space<vmem>>, vector<12x64xf32>
      tpu.vector_store %arg8[%c0_11, %c0_12], %12 {strides = array<i32>} : memref<12x64xf32, #tpu.memory_space<vmem>>, vector<12x64xf32>,
    } else {
    }
    %c0 = arith.constant 0 : index
    %c0_1 = arith.constant 0 : index
    %3 = vector.load %arg8[%c0, %c0_1] : memref<12x64xf32, #tpu.memory_space<vmem>>, vector<12x64xf32>
    %c0_2 = arith.constant 0 : index
    %c0_3 = arith.constant 0 : index
    %4 = vector.load %arg3[%c0_2, %c0_3] : memref<12x32xbf16, #tpu.memory_space<vmem>>, vector<12x32xbf16>
    %c0_4 = arith.constant 0 : index
    %c0_5 = arith.constant 0 : index
    %5 = vector.load %arg4[%c0_4, %c0_5] : memref<32x64xbf16, #tpu.memory_space<vmem>>, vector<32x64xbf16>
    %cst = arith.constant dense<0.000000e+00> : vector<12x64xf32>
    %6 = tpu.matmul %4, %5, %cst {dimension_numbers = #tpu.dot_dimension_numbers<[1], [0], [0], [1], [0, 0, 1, 1], [], []>} : vector<12x32xbf16>, vector<32x64xbf16>, vector<12x64xf32> -> vector<12x64xf32>
    %7 = arith.addf %3, %6 : vector<12x64xf32>
    %c0_6 = arith.constant 0 : index
    %c0_7 = arith.constant 0 : index
    %8 = vector.load %arg8[%c0_6, %c0_7] : memref<12x64xf32, #tpu.memory_space<vmem>>, vector<12x64xf32>
    tpu.vector_store %arg8[%c0_6, %c0_7], %7 {strides = array<i32>} : memref<12x64xf32, #tpu.memory_space<vmem>>, vector<12x64xf32>,
    %c0_i32_8 = arith.constant 0 : i32
    %9 = arith.cmpi eq, %arg2, %c0_i32_8 : i32
    %10 = arith.extui %9 : i1 to i32
    %c0_i32_9 = arith.constant 0 : i32
    %11 = arith.cmpi ne, %10, %c0_i32_9 : i32
    scf.if %11 {
      %c0_10 = arith.constant 0 : index
      %c0_11 = arith.constant 0 : index
      %12 = vector.load %arg8[%c0_10, %c0_11] : memref<12x64xf32, #tpu.memory_space<vmem>>, vector<12x64xf32>
      %c0_12 = arith.constant 0 : index
      %c0_13 = arith.constant 0 : index
      %13 = vector.load %arg5[%c0_12, %c0_13] : memref<1x64xf32, #tpu.memory_space<vmem>>, vector<1x64xf32>
      %14 = vector.broadcast %13 : vector<1x64xf32> to vector<12x64xf32>
      %15 = arith.mulf %12, %14 : vector<12x64xf32>
      %c0_14 = arith.constant 0 : index
      %c0_15 = arith.constant 0 : index
      %16 = vector.load %arg6[%c0_14, %c0_15] : memref<1x64xf32, #tpu.memory_space<vmem>>, vector<1x64xf32>
      %17 = vector.broadcast %16 : vector<1x64xf32> to vector<12x64xf32>
      %18 = arith.addf %15, %17 : vector<12x64xf32>
      %c0_16 = arith.constant 0 : index
      %c0_17 = arith.constant 0 : index
      %19 = vector.load %arg7[%c0_16, %c0_17] : memref<12x64xf32, #tpu.memory_space<vmem>>, vector<12x64xf32>
      tpu.vector_store %arg7[%c0_16, %c0_17], %18 {strides = array<i32>} : memref<12x64xf32, #tpu.memory_space<vmem>>, vector<12x64xf32>,
    } else {
    }
    return
  }
  func.func @transform_0(%arg0: i32, %arg1: i32, %arg2: i32) -> (i32, i32) {
    %c0_i32 = arith.constant 0 : i32
    return %arg0, %arg2 : i32, i32
  }
  func.func @transform_1(%arg0: i32, %arg1: i32, %arg2: i32) -> (i32, i32) {
    %c0_i32 = arith.constant 0 : i32
    return %arg2, %arg1 : i32, i32
  }
  func.func @transform_2(%arg0: i32, %arg1: i32, %arg2: i32) -> (i32, i32) {
    %c0_i32 = arith.constant 0 : i32
    %c0_i32_0 = arith.constant 0 : i32
    return %c0_i32, %arg1 : i32, i32
  }
  func.func @transform_3(%arg0: i32, %arg1: i32, %arg2: i32) -> (i32, i32) {
    %c0_i32 = arith.constant 0 : i32
    %c0_i32_0 = arith.constant 0 : i32
    return %c0_i32, %arg1 : i32, i32
  }
  func.func @transform_4(%arg0: i32, %arg1: i32, %arg2: i32) -> (i32, i32) {
    %c0_i32 = arith.constant 0 : i32
    return %arg0, %arg1 : i32, i32
  }
}

module attributes {stable_mosaic.version = 11 : i64} {
  func.func @_mm_kernel(%arg0: i32, %arg1: i32, %arg2: i32, %arg3: memref<8x32xbf16, #tpu.memory_space<vmem>>, %arg4: memref<32x256xbf16, #tpu.memory_space<vmem>>, %arg5: memref<1x256xf32, #tpu.memory_space<vmem>>, %arg6: memref<1x256xf32, #tpu.memory_space<vmem>>, %arg7: memref<8x256xf32, #tpu.memory_space<vmem>>, %arg8: memref<8x256xf32, #tpu.memory_space<vmem>>) attributes {dimension_semantics = [#tpu.dimension_semantics<parallel>, #tpu.dimension_semantics<parallel>, #tpu.dimension_semantics<arbitrary>], iteration_bounds = array<i64: 1, 1, 1>, scalar_prefetch = 0 : i64, scratch_operands = 1 : i64, tpu.core_type = #tpu.core_type<tc>, window_params = [{transform_indices = @transform_0, window_bounds = array<i64: 8, 32>}, {transform_indices = @transform_1, window_bounds = array<i64: 32, 256>}, {transform_indices = @transform_2, window_bounds = array<i64: 1, 256>}, {transform_indices = @transform_3, window_bounds = array<i64: 1, 256>}, {transform_indices = @transform_4, window_bounds = array<i64: 8, 256>}]} {
    %c0_i32 = arith.constant 0 : i32
    %0 = arith.cmpi eq, %arg2, %c0_i32 : i32
    %1 = arith.extui %0 : i1 to i32
    %c0_i32_0 = arith.constant 0 : i32
    %2 = arith.cmpi ne, %1, %c0_i32_0 : i32
    scf.if %2 {
      %cst_10 = arith.constant 0.000000e+00 : f32
      %12 = vector.broadcast %cst_10 : f32 to vector<8x256xf32>
      %c0_11 = arith.constant 0 : index
      %c0_12 = arith.constant 0 : index
      %13 = vector.load %arg8[%c0_11, %c0_12] : memref<8x256xf32, #tpu.memory_space<vmem>>, vector<8x256xf32>
      tpu.vector_store %arg8[%c0_11, %c0_12], %12 {strides = array<i32>} : memref<8x256xf32, #tpu.memory_space<vmem>>, vector<8x256xf32>,
    } else {
    }
    %c0 = arith.constant 0 : index
    %c0_1 = arith.constant 0 : index
    %3 = vector.load %arg8[%c0, %c0_1] : memref<8x256xf32, #tpu.memory_space<vmem>>, vector<8x256xf32>
    %c0_2 = arith.constant 0 : index
    %c0_3 = arith.constant 0 : index
    %4 = vector.load %arg3[%c0_2, %c0_3] : memref<8x32xbf16, #tpu.memory_space<vmem>>, vector<8x32xbf16>
    %c0_4 = arith.constant 0 : index
    %c0_5 = arith.constant 0 : index
    %5 = vector.load %arg4[%c0_4, %c0_5] : memref<32x256xbf16, #tpu.memory_space<vmem>>, vector<32x256xbf16>
    %cst = arith.constant dense<0.000000e+00> : vector<8x256xf32>
    %6 = tpu.matmul %4, %5, %cst {dimension_numbers = #tpu.dot_dimension_numbers<[1], [0], [0], [1], [0, 0, 1, 1], [], []>} : vector<8x32xbf16>, vector<32x256xbf16>, vector<8x256xf32> -> vector<8x256xf32>
    %7 = arith.addf %3, %6 : vector<8x256xf32>
    %c0_6 = arith.constant 0 : index
    %c0_7 = arith.constant 0 : index
    %8 = vector.load %arg8[%c0_6, %c0_7] : memref<8x256xf32, #tpu.memory_space<vmem>>, vector<8x256xf32>
    tpu.vector_store %arg8[%c0_6, %c0_7], %7 {strides = array<i32>} : memref<8x256xf32, #tpu.memory_space<vmem>>, vector<8x256xf32>,
    %c0_i32_8 = arith.constant 0 : i32
    %9 = arith.cmpi eq, %arg2, %c0_i32_8 : i32
    %10 = arith.extui %9 : i1 to i32
    %c0_i32_9 = arith.constant 0 : i32
    %11 = arith.cmpi ne, %10, %c0_i32_9 : i32
    scf.if %11 {
      %c0_10 = arith.constant 0 : index
      %c0_11 = arith.constant 0 : index
      %12 = vector.load %arg8[%c0_10, %c0_11] : memref<8x256xf32, #tpu.memory_space<vmem>>, vector<8x256xf32>
      %c0_12 = arith.constant 0 : index
      %c0_13 = arith.constant 0 : index
      %13 = vector.load %arg5[%c0_12, %c0_13] : memref<1x256xf32, #tpu.memory_space<vmem>>, vector<1x256xf32>
      %14 = vector.broadcast %13 : vector<1x256xf32> to vector<8x256xf32>
      %15 = arith.mulf %12, %14 : vector<8x256xf32>
      %c0_14 = arith.constant 0 : index
      %c0_15 = arith.constant 0 : index
      %16 = vector.load %arg6[%c0_14, %c0_15] : memref<1x256xf32, #tpu.memory_space<vmem>>, vector<1x256xf32>
      %17 = vector.broadcast %16 : vector<1x256xf32> to vector<8x256xf32>
      %18 = arith.addf %15, %17 : vector<8x256xf32>
      %cst_16 = arith.constant 0.000000e+00 : f32
      %19 = vector.broadcast %cst_16 : f32 to vector<8x256xf32>
      %20 = arith.cmpf oge, %18, %19 : vector<8x256xf32>
      %cst_17 = arith.constant 0.00999999977 : f32
      %21 = vector.broadcast %cst_17 : f32 to vector<8x256xf32>
      %22 = arith.mulf %21, %18 : vector<8x256xf32>
      %23 = arith.select %20, %18, %22 : vector<8x256xi1>, vector<8x256xf32>
      %c0_18 = arith.constant 0 : index
      %c0_19 = arith.constant 0 : index
      %24 = vector.load %arg7[%c0_18, %c0_19] : memref<8x256xf32, #tpu.memory_space<vmem>>, vector<8x256xf32>
      tpu.vector_store %arg7[%c0_18, %c0_19], %23 {strides = array<i32>} : memref<8x256xf32, #tpu.memory_space<vmem>>, vector<8x256xf32>,
    } else {
    }
    return
  }
  func.func @transform_0(%arg0: i32, %arg1: i32, %arg2: i32) -> (i32, i32) {
    %c0_i32 = arith.constant 0 : i32
    return %arg0, %arg2 : i32, i32
  }
  func.func @transform_1(%arg0: i32, %arg1: i32, %arg2: i32) -> (i32, i32) {
    %c0_i32 = arith.constant 0 : i32
    return %arg2, %arg1 : i32, i32
  }
  func.func @transform_2(%arg0: i32, %arg1: i32, %arg2: i32) -> (i32, i32) {
    %c0_i32 = arith.constant 0 : i32
    %c0_i32_0 = arith.constant 0 : i32
    return %c0_i32, %arg1 : i32, i32
  }
  func.func @transform_3(%arg0: i32, %arg1: i32, %arg2: i32) -> (i32, i32) {
    %c0_i32 = arith.constant 0 : i32
    %c0_i32_0 = arith.constant 0 : i32
    return %c0_i32, %arg1 : i32, i32
  }
  func.func @transform_4(%arg0: i32, %arg1: i32, %arg2: i32) -> (i32, i32) {
    %c0_i32 = arith.constant 0 : i32
    return %arg0, %arg1 : i32, i32
  }
}

module attributes {stable_mosaic.version = 11 : i64} {
  func.func @_mm_kernel(%arg0: i32, %arg1: i32, %arg2: i32, %arg3: memref<8x128xbf16, #tpu.memory_space<vmem>>, %arg4: memref<128x54xbf16, #tpu.memory_space<vmem>>, %arg5: memref<8x1xf32, #tpu.memory_space<vmem>>, %arg6: memref<8x1xf32, #tpu.memory_space<vmem>>, %arg7: memref<8x54xf32, #tpu.memory_space<vmem>>, %arg8: memref<8x54xf32, #tpu.memory_space<vmem>>) attributes {dimension_semantics = [#tpu.dimension_semantics<parallel>, #tpu.dimension_semantics<parallel>, #tpu.dimension_semantics<arbitrary>], iteration_bounds = array<i64: 1, 1, 1>, scalar_prefetch = 0 : i64, scratch_operands = 1 : i64, tpu.core_type = #tpu.core_type<tc>, window_params = [{transform_indices = @transform_0, window_bounds = array<i64: 8, 128>}, {transform_indices = @transform_1, window_bounds = array<i64: 128, 54>}, {transform_indices = @transform_2, window_bounds = array<i64: 8, 1>}, {transform_indices = @transform_3, window_bounds = array<i64: 8, 1>}, {transform_indices = @transform_4, window_bounds = array<i64: 8, 54>}]} {
    %c0_i32 = arith.constant 0 : i32
    %0 = arith.cmpi eq, %arg2, %c0_i32 : i32
    %1 = arith.extui %0 : i1 to i32
    %c0_i32_0 = arith.constant 0 : i32
    %2 = arith.cmpi ne, %1, %c0_i32_0 : i32
    scf.if %2 {
      %cst_10 = arith.constant 0.000000e+00 : f32
      %12 = vector.broadcast %cst_10 : f32 to vector<8x54xf32>
      %c0_11 = arith.constant 0 : index
      %c0_12 = arith.constant 0 : index
      %13 = vector.load %arg8[%c0_11, %c0_12] : memref<8x54xf32, #tpu.memory_space<vmem>>, vector<8x54xf32>
      tpu.vector_store %arg8[%c0_11, %c0_12], %12 {strides = array<i32>} : memref<8x54xf32, #tpu.memory_space<vmem>>, vector<8x54xf32>,
    } else {
    }
    %c0 = arith.constant 0 : index
    %c0_1 = arith.constant 0 : index
    %3 = vector.load %arg8[%c0, %c0_1] : memref<8x54xf32, #tpu.memory_space<vmem>>, vector<8x54xf32>
    %c0_2 = arith.constant 0 : index
    %c0_3 = arith.constant 0 : index
    %4 = vector.load %arg3[%c0_2, %c0_3] : memref<8x128xbf16, #tpu.memory_space<vmem>>, vector<8x128xbf16>
    %c0_4 = arith.constant 0 : index
    %c0_5 = arith.constant 0 : index
    %5 = vector.load %arg4[%c0_4, %c0_5] : memref<128x54xbf16, #tpu.memory_space<vmem>>, vector<128x54xbf16>
    %cst = arith.constant dense<0.000000e+00> : vector<8x54xf32>
    %6 = tpu.matmul %4, %5, %cst {dimension_numbers = #tpu.dot_dimension_numbers<[1], [0], [0], [1], [0, 0, 1, 1], [], []>} : vector<8x128xbf16>, vector<128x54xbf16>, vector<8x54xf32> -> vector<8x54xf32>
    %7 = arith.addf %3, %6 : vector<8x54xf32>
    %c0_6 = arith.constant 0 : index
    %c0_7 = arith.constant 0 : index
    %8 = vector.load %arg8[%c0_6, %c0_7] : memref<8x54xf32, #tpu.memory_space<vmem>>, vector<8x54xf32>
    tpu.vector_store %arg8[%c0_6, %c0_7], %7 {strides = array<i32>} : memref<8x54xf32, #tpu.memory_space<vmem>>, vector<8x54xf32>,
    %c0_i32_8 = arith.constant 0 : i32
    %9 = arith.cmpi eq, %arg2, %c0_i32_8 : i32
    %10 = arith.extui %9 : i1 to i32
    %c0_i32_9 = arith.constant 0 : i32
    %11 = arith.cmpi ne, %10, %c0_i32_9 : i32
    scf.if %11 {
      %c0_10 = arith.constant 0 : index
      %c0_11 = arith.constant 0 : index
      %12 = vector.load %arg8[%c0_10, %c0_11] : memref<8x54xf32, #tpu.memory_space<vmem>>, vector<8x54xf32>
      %c0_12 = arith.constant 0 : index
      %c0_13 = arith.constant 0 : index
      %13 = vector.load %arg5[%c0_12, %c0_13] : memref<8x1xf32, #tpu.memory_space<vmem>>, vector<8x1xf32>
      %14 = vector.broadcast %13 : vector<8x1xf32> to vector<8x54xf32>
      %15 = arith.mulf %12, %14 : vector<8x54xf32>
      %c0_14 = arith.constant 0 : index
      %c0_15 = arith.constant 0 : index
      %16 = vector.load %arg6[%c0_14, %c0_15] : memref<8x1xf32, #tpu.memory_space<vmem>>, vector<8x1xf32>
      %17 = vector.broadcast %16 : vector<8x1xf32> to vector<8x54xf32>
      %18 = arith.addf %15, %17 : vector<8x54xf32>
      %cst_16 = arith.constant 0.000000e+00 : f32
      %19 = vector.broadcast %cst_16 : f32 to vector<8x54xf32>
      %20 = arith.cmpf oge, %18, %19 : vector<8x54xf32>
      %cst_17 = arith.constant 0.00999999977 : f32
      %21 = vector.broadcast %cst_17 : f32 to vector<8x54xf32>
      %22 = arith.mulf %21, %18 : vector<8x54xf32>
      %23 = arith.select %20, %18, %22 : vector<8x54xi1>, vector<8x54xf32>
      %c0_18 = arith.constant 0 : index
      %c0_19 = arith.constant 0 : index
      %24 = vector.load %arg7[%c0_18, %c0_19] : memref<8x54xf32, #tpu.memory_space<vmem>>, vector<8x54xf32>
      tpu.vector_store %arg7[%c0_18, %c0_19], %23 {strides = array<i32>} : memref<8x54xf32, #tpu.memory_space<vmem>>, vector<8x54xf32>,
    } else {
    }
    return
  }
  func.func @transform_0(%arg0: i32, %arg1: i32, %arg2: i32) -> (i32, i32) {
    %c0_i32 = arith.constant 0 : i32
    return %arg0, %arg2 : i32, i32
  }
  func.func @transform_1(%arg0: i32, %arg1: i32, %arg2: i32) -> (i32, i32) {
    %c0_i32 = arith.constant 0 : i32
    return %arg2, %arg1 : i32, i32
  }
  func.func @transform_2(%arg0: i32, %arg1: i32, %arg2: i32) -> (i32, i32) {
    %c0_i32 = arith.constant 0 : i32
    %c0_i32_0 = arith.constant 0 : i32
    return %arg0, %c0_i32 : i32, i32
  }
  func.func @transform_3(%arg0: i32, %arg1: i32, %arg2: i32) -> (i32, i32) {
    %c0_i32 = arith.constant 0 : i32
    %c0_i32_0 = arith.constant 0 : i32
    return %arg0, %c0_i32 : i32, i32
  }
  func.func @transform_4(%arg0: i32, %arg1: i32, %arg2: i32) -> (i32, i32) {
    %c0_i32 = arith.constant 0 : i32
    return %arg0, %arg1 : i32, i32
  }
}

module attributes {stable_mosaic.version = 11 : i64} {
  func.func @_mm_kernel(%arg0: i32, %arg1: i32, %arg2: i32, %arg3: memref<8x64xbf16, #tpu.memory_space<vmem>>, %arg4: memref<64x72xbf16, #tpu.memory_space<vmem>>, %arg5: memref<8x1xf32, #tpu.memory_space<vmem>>, %arg6: memref<8x1xf32, #tpu.memory_space<vmem>>, %arg7: memref<8x72xf32, #tpu.memory_space<vmem>>, %arg8: memref<8x72xf32, #tpu.memory_space<vmem>>) attributes {dimension_semantics = [#tpu.dimension_semantics<parallel>, #tpu.dimension_semantics<parallel>, #tpu.dimension_semantics<arbitrary>], iteration_bounds = array<i64: 1, 1, 1>, scalar_prefetch = 0 : i64, scratch_operands = 1 : i64, tpu.core_type = #tpu.core_type<tc>, window_params = [{transform_indices = @transform_0, window_bounds = array<i64: 8, 64>}, {transform_indices = @transform_1, window_bounds = array<i64: 64, 72>}, {transform_indices = @transform_2, window_bounds = array<i64: 8, 1>}, {transform_indices = @transform_3, window_bounds = array<i64: 8, 1>}, {transform_indices = @transform_4, window_bounds = array<i64: 8, 72>}]} {
    %c0_i32 = arith.constant 0 : i32
    %0 = arith.cmpi eq, %arg2, %c0_i32 : i32
    %1 = arith.extui %0 : i1 to i32
    %c0_i32_0 = arith.constant 0 : i32
    %2 = arith.cmpi ne, %1, %c0_i32_0 : i32
    scf.if %2 {
      %cst_10 = arith.constant 0.000000e+00 : f32
      %12 = vector.broadcast %cst_10 : f32 to vector<8x72xf32>
      %c0_11 = arith.constant 0 : index
      %c0_12 = arith.constant 0 : index
      %13 = vector.load %arg8[%c0_11, %c0_12] : memref<8x72xf32, #tpu.memory_space<vmem>>, vector<8x72xf32>
      tpu.vector_store %arg8[%c0_11, %c0_12], %12 {strides = array<i32>} : memref<8x72xf32, #tpu.memory_space<vmem>>, vector<8x72xf32>,
    } else {
    }
    %c0 = arith.constant 0 : index
    %c0_1 = arith.constant 0 : index
    %3 = vector.load %arg8[%c0, %c0_1] : memref<8x72xf32, #tpu.memory_space<vmem>>, vector<8x72xf32>
    %c0_2 = arith.constant 0 : index
    %c0_3 = arith.constant 0 : index
    %4 = vector.load %arg3[%c0_2, %c0_3] : memref<8x64xbf16, #tpu.memory_space<vmem>>, vector<8x64xbf16>
    %c0_4 = arith.constant 0 : index
    %c0_5 = arith.constant 0 : index
    %5 = vector.load %arg4[%c0_4, %c0_5] : memref<64x72xbf16, #tpu.memory_space<vmem>>, vector<64x72xbf16>
    %cst = arith.constant dense<0.000000e+00> : vector<8x72xf32>
    %6 = tpu.matmul %4, %5, %cst {dimension_numbers = #tpu.dot_dimension_numbers<[1], [0], [0], [1], [0, 0, 1, 1], [], []>} : vector<8x64xbf16>, vector<64x72xbf16>, vector<8x72xf32> -> vector<8x72xf32>
    %7 = arith.addf %3, %6 : vector<8x72xf32>
    %c0_6 = arith.constant 0 : index
    %c0_7 = arith.constant 0 : index
    %8 = vector.load %arg8[%c0_6, %c0_7] : memref<8x72xf32, #tpu.memory_space<vmem>>, vector<8x72xf32>
    tpu.vector_store %arg8[%c0_6, %c0_7], %7 {strides = array<i32>} : memref<8x72xf32, #tpu.memory_space<vmem>>, vector<8x72xf32>,
    %c0_i32_8 = arith.constant 0 : i32
    %9 = arith.cmpi eq, %arg2, %c0_i32_8 : i32
    %10 = arith.extui %9 : i1 to i32
    %c0_i32_9 = arith.constant 0 : i32
    %11 = arith.cmpi ne, %10, %c0_i32_9 : i32
    scf.if %11 {
      %c0_10 = arith.constant 0 : index
      %c0_11 = arith.constant 0 : index
      %12 = vector.load %arg8[%c0_10, %c0_11] : memref<8x72xf32, #tpu.memory_space<vmem>>, vector<8x72xf32>
      %c0_12 = arith.constant 0 : index
      %c0_13 = arith.constant 0 : index
      %13 = vector.load %arg5[%c0_12, %c0_13] : memref<8x1xf32, #tpu.memory_space<vmem>>, vector<8x1xf32>
      %14 = vector.broadcast %13 : vector<8x1xf32> to vector<8x72xf32>
      %15 = arith.mulf %12, %14 : vector<8x72xf32>
      %c0_14 = arith.constant 0 : index
      %c0_15 = arith.constant 0 : index
      %16 = vector.load %arg6[%c0_14, %c0_15] : memref<8x1xf32, #tpu.memory_space<vmem>>, vector<8x1xf32>
      %17 = vector.broadcast %16 : vector<8x1xf32> to vector<8x72xf32>
      %18 = arith.addf %15, %17 : vector<8x72xf32>
      %cst_16 = arith.constant 0.000000e+00 : f32
      %19 = vector.broadcast %cst_16 : f32 to vector<8x72xf32>
      %20 = arith.cmpf oge, %18, %19 : vector<8x72xf32>
      %cst_17 = arith.constant 0.00999999977 : f32
      %21 = vector.broadcast %cst_17 : f32 to vector<8x72xf32>
      %22 = arith.mulf %21, %18 : vector<8x72xf32>
      %23 = arith.select %20, %18, %22 : vector<8x72xi1>, vector<8x72xf32>
      %c0_18 = arith.constant 0 : index
      %c0_19 = arith.constant 0 : index
      %24 = vector.load %arg7[%c0_18, %c0_19] : memref<8x72xf32, #tpu.memory_space<vmem>>, vector<8x72xf32>
      tpu.vector_store %arg7[%c0_18, %c0_19], %23 {strides = array<i32>} : memref<8x72xf32, #tpu.memory_space<vmem>>, vector<8x72xf32>,
    } else {
    }
    return
  }
  func.func @transform_0(%arg0: i32, %arg1: i32, %arg2: i32) -> (i32, i32) {
    %c0_i32 = arith.constant 0 : i32
    return %arg0, %arg2 : i32, i32
  }
  func.func @transform_1(%arg0: i32, %arg1: i32, %arg2: i32) -> (i32, i32) {
    %c0_i32 = arith.constant 0 : i32
    return %arg2, %arg1 : i32, i32
  }
  func.func @transform_2(%arg0: i32, %arg1: i32, %arg2: i32) -> (i32, i32) {
    %c0_i32 = arith.constant 0 : i32
    %c0_i32_0 = arith.constant 0 : i32
    return %arg0, %c0_i32 : i32, i32
  }
  func.func @transform_3(%arg0: i32, %arg1: i32, %arg2: i32) -> (i32, i32) {
    %c0_i32 = arith.constant 0 : i32
    %c0_i32_0 = arith.constant 0 : i32
    return %arg0, %c0_i32 : i32, i32
  }
  func.func @transform_4(%arg0: i32, %arg1: i32, %arg2: i32) -> (i32, i32) {
    %c0_i32 = arith.constant 0 : i32
    return %arg0, %arg1 : i32, i32
  }
}

module attributes {stable_mosaic.version = 11 : i64} {
  func.func @_mm_kernel(%arg0: i32, %arg1: i32, %arg2: i32, %arg3: memref<8x32xbf16, #tpu.memory_space<vmem>>, %arg4: memref<32x96xbf16, #tpu.memory_space<vmem>>, %arg5: memref<8x1xf32, #tpu.memory_space<vmem>>, %arg6: memref<8x1xf32, #tpu.memory_space<vmem>>, %arg7: memref<8x96xf32, #tpu.memory_space<vmem>>, %arg8: memref<8x96xf32, #tpu.memory_space<vmem>>) attributes {dimension_semantics = [#tpu.dimension_semantics<parallel>, #tpu.dimension_semantics<parallel>, #tpu.dimension_semantics<arbitrary>], iteration_bounds = array<i64: 1, 1, 1>, scalar_prefetch = 0 : i64, scratch_operands = 1 : i64, tpu.core_type = #tpu.core_type<tc>, window_params = [{transform_indices = @transform_0, window_bounds = array<i64: 8, 32>}, {transform_indices = @transform_1, window_bounds = array<i64: 32, 96>}, {transform_indices = @transform_2, window_bounds = array<i64: 8, 1>}, {transform_indices = @transform_3, window_bounds = array<i64: 8, 1>}, {transform_indices = @transform_4, window_bounds = array<i64: 8, 96>}]} {
    %c0_i32 = arith.constant 0 : i32
    %0 = arith.cmpi eq, %arg2, %c0_i32 : i32
    %1 = arith.extui %0 : i1 to i32
    %c0_i32_0 = arith.constant 0 : i32
    %2 = arith.cmpi ne, %1, %c0_i32_0 : i32
    scf.if %2 {
      %cst_10 = arith.constant 0.000000e+00 : f32
      %12 = vector.broadcast %cst_10 : f32 to vector<8x96xf32>
      %c0_11 = arith.constant 0 : index
      %c0_12 = arith.constant 0 : index
      %13 = vector.load %arg8[%c0_11, %c0_12] : memref<8x96xf32, #tpu.memory_space<vmem>>, vector<8x96xf32>
      tpu.vector_store %arg8[%c0_11, %c0_12], %12 {strides = array<i32>} : memref<8x96xf32, #tpu.memory_space<vmem>>, vector<8x96xf32>,
    } else {
    }
    %c0 = arith.constant 0 : index
    %c0_1 = arith.constant 0 : index
    %3 = vector.load %arg8[%c0, %c0_1] : memref<8x96xf32, #tpu.memory_space<vmem>>, vector<8x96xf32>
    %c0_2 = arith.constant 0 : index
    %c0_3 = arith.constant 0 : index
    %4 = vector.load %arg3[%c0_2, %c0_3] : memref<8x32xbf16, #tpu.memory_space<vmem>>, vector<8x32xbf16>
    %c0_4 = arith.constant 0 : index
    %c0_5 = arith.constant 0 : index
    %5 = vector.load %arg4[%c0_4, %c0_5] : memref<32x96xbf16, #tpu.memory_space<vmem>>, vector<32x96xbf16>
    %cst = arith.constant dense<0.000000e+00> : vector<8x96xf32>
    %6 = tpu.matmul %4, %5, %cst {dimension_numbers = #tpu.dot_dimension_numbers<[1], [0], [0], [1], [0, 0, 1, 1], [], []>} : vector<8x32xbf16>, vector<32x96xbf16>, vector<8x96xf32> -> vector<8x96xf32>
    %7 = arith.addf %3, %6 : vector<8x96xf32>
    %c0_6 = arith.constant 0 : index
    %c0_7 = arith.constant 0 : index
    %8 = vector.load %arg8[%c0_6, %c0_7] : memref<8x96xf32, #tpu.memory_space<vmem>>, vector<8x96xf32>
    tpu.vector_store %arg8[%c0_6, %c0_7], %7 {strides = array<i32>} : memref<8x96xf32, #tpu.memory_space<vmem>>, vector<8x96xf32>,
    %c0_i32_8 = arith.constant 0 : i32
    %9 = arith.cmpi eq, %arg2, %c0_i32_8 : i32
    %10 = arith.extui %9 : i1 to i32
    %c0_i32_9 = arith.constant 0 : i32
    %11 = arith.cmpi ne, %10, %c0_i32_9 : i32
    scf.if %11 {
      %c0_10 = arith.constant 0 : index
      %c0_11 = arith.constant 0 : index
      %12 = vector.load %arg8[%c0_10, %c0_11] : memref<8x96xf32, #tpu.memory_space<vmem>>, vector<8x96xf32>
      %c0_12 = arith.constant 0 : index
      %c0_13 = arith.constant 0 : index
      %13 = vector.load %arg5[%c0_12, %c0_13] : memref<8x1xf32, #tpu.memory_space<vmem>>, vector<8x1xf32>
      %14 = vector.broadcast %13 : vector<8x1xf32> to vector<8x96xf32>
      %15 = arith.mulf %12, %14 : vector<8x96xf32>
      %c0_14 = arith.constant 0 : index
      %c0_15 = arith.constant 0 : index
      %16 = vector.load %arg6[%c0_14, %c0_15] : memref<8x1xf32, #tpu.memory_space<vmem>>, vector<8x1xf32>
      %17 = vector.broadcast %16 : vector<8x1xf32> to vector<8x96xf32>
      %18 = arith.addf %15, %17 : vector<8x96xf32>
      %cst_16 = arith.constant 0.000000e+00 : f32
      %19 = vector.broadcast %cst_16 : f32 to vector<8x96xf32>
      %20 = arith.cmpf oge, %18, %19 : vector<8x96xf32>
      %cst_17 = arith.constant 0.00999999977 : f32
      %21 = vector.broadcast %cst_17 : f32 to vector<8x96xf32>
      %22 = arith.mulf %21, %18 : vector<8x96xf32>
      %23 = arith.select %20, %18, %22 : vector<8x96xi1>, vector<8x96xf32>
      %c0_18 = arith.constant 0 : index
      %c0_19 = arith.constant 0 : index
      %24 = vector.load %arg7[%c0_18, %c0_19] : memref<8x96xf32, #tpu.memory_space<vmem>>, vector<8x96xf32>
      tpu.vector_store %arg7[%c0_18, %c0_19], %23 {strides = array<i32>} : memref<8x96xf32, #tpu.memory_space<vmem>>, vector<8x96xf32>,
    } else {
    }
    return
  }
  func.func @transform_0(%arg0: i32, %arg1: i32, %arg2: i32) -> (i32, i32) {
    %c0_i32 = arith.constant 0 : i32
    return %arg0, %arg2 : i32, i32
  }
  func.func @transform_1(%arg0: i32, %arg1: i32, %arg2: i32) -> (i32, i32) {
    %c0_i32 = arith.constant 0 : i32
    return %arg2, %arg1 : i32, i32
  }
  func.func @transform_2(%arg0: i32, %arg1: i32, %arg2: i32) -> (i32, i32) {
    %c0_i32 = arith.constant 0 : i32
    %c0_i32_0 = arith.constant 0 : i32
    return %arg0, %c0_i32 : i32, i32
  }
  func.func @transform_3(%arg0: i32, %arg1: i32, %arg2: i32) -> (i32, i32) {
    %c0_i32 = arith.constant 0 : i32
    %c0_i32_0 = arith.constant 0 : i32
    return %arg0, %c0_i32 : i32, i32
  }
  func.func @transform_4(%arg0: i32, %arg1: i32, %arg2: i32) -> (i32, i32) {
    %c0_i32 = arith.constant 0 : i32
    return %arg0, %arg1 : i32, i32
  }
}

module attributes {stable_mosaic.version = 11 : i64} {
  func.func @_mm_kernel(%arg0: i32, %arg1: i32, %arg2: i32, %arg3: memref<8x16xbf16, #tpu.memory_space<vmem>>, %arg4: memref<16x128xbf16, #tpu.memory_space<vmem>>, %arg5: memref<8x1xf32, #tpu.memory_space<vmem>>, %arg6: memref<8x1xf32, #tpu.memory_space<vmem>>, %arg7: memref<8x128xf32, #tpu.memory_space<vmem>>, %arg8: memref<8x128xf32, #tpu.memory_space<vmem>>) attributes {dimension_semantics = [#tpu.dimension_semantics<parallel>, #tpu.dimension_semantics<parallel>, #tpu.dimension_semantics<arbitrary>], iteration_bounds = array<i64: 1, 1, 1>, scalar_prefetch = 0 : i64, scratch_operands = 1 : i64, tpu.core_type = #tpu.core_type<tc>, window_params = [{transform_indices = @transform_0, window_bounds = array<i64: 8, 16>}, {transform_indices = @transform_1, window_bounds = array<i64: 16, 128>}, {transform_indices = @transform_2, window_bounds = array<i64: 8, 1>}, {transform_indices = @transform_3, window_bounds = array<i64: 8, 1>}, {transform_indices = @transform_4, window_bounds = array<i64: 8, 128>}]} {
    %c0_i32 = arith.constant 0 : i32
    %0 = arith.cmpi eq, %arg2, %c0_i32 : i32
    %1 = arith.extui %0 : i1 to i32
    %c0_i32_0 = arith.constant 0 : i32
    %2 = arith.cmpi ne, %1, %c0_i32_0 : i32
    scf.if %2 {
      %cst_10 = arith.constant 0.000000e+00 : f32
      %12 = vector.broadcast %cst_10 : f32 to vector<8x128xf32>
      %c0_11 = arith.constant 0 : index
      %c0_12 = arith.constant 0 : index
      %13 = vector.load %arg8[%c0_11, %c0_12] : memref<8x128xf32, #tpu.memory_space<vmem>>, vector<8x128xf32>
      tpu.vector_store %arg8[%c0_11, %c0_12], %12 {strides = array<i32>} : memref<8x128xf32, #tpu.memory_space<vmem>>, vector<8x128xf32>,
    } else {
    }
    %c0 = arith.constant 0 : index
    %c0_1 = arith.constant 0 : index
    %3 = vector.load %arg8[%c0, %c0_1] : memref<8x128xf32, #tpu.memory_space<vmem>>, vector<8x128xf32>
    %c0_2 = arith.constant 0 : index
    %c0_3 = arith.constant 0 : index
    %4 = vector.load %arg3[%c0_2, %c0_3] : memref<8x16xbf16, #tpu.memory_space<vmem>>, vector<8x16xbf16>
    %c0_4 = arith.constant 0 : index
    %c0_5 = arith.constant 0 : index
    %5 = vector.load %arg4[%c0_4, %c0_5] : memref<16x128xbf16, #tpu.memory_space<vmem>>, vector<16x128xbf16>
    %cst = arith.constant dense<0.000000e+00> : vector<8x128xf32>
    %6 = tpu.matmul %4, %5, %cst {dimension_numbers = #tpu.dot_dimension_numbers<[1], [0], [0], [1], [0, 0, 1, 1], [], []>} : vector<8x16xbf16>, vector<16x128xbf16>, vector<8x128xf32> -> vector<8x128xf32>
    %7 = arith.addf %3, %6 : vector<8x128xf32>
    %c0_6 = arith.constant 0 : index
    %c0_7 = arith.constant 0 : index
    %8 = vector.load %arg8[%c0_6, %c0_7] : memref<8x128xf32, #tpu.memory_space<vmem>>, vector<8x128xf32>
    tpu.vector_store %arg8[%c0_6, %c0_7], %7 {strides = array<i32>} : memref<8x128xf32, #tpu.memory_space<vmem>>, vector<8x128xf32>,
    %c0_i32_8 = arith.constant 0 : i32
    %9 = arith.cmpi eq, %arg2, %c0_i32_8 : i32
    %10 = arith.extui %9 : i1 to i32
    %c0_i32_9 = arith.constant 0 : i32
    %11 = arith.cmpi ne, %10, %c0_i32_9 : i32
    scf.if %11 {
      %c0_10 = arith.constant 0 : index
      %c0_11 = arith.constant 0 : index
      %12 = vector.load %arg8[%c0_10, %c0_11] : memref<8x128xf32, #tpu.memory_space<vmem>>, vector<8x128xf32>
      %c0_12 = arith.constant 0 : index
      %c0_13 = arith.constant 0 : index
      %13 = vector.load %arg5[%c0_12, %c0_13] : memref<8x1xf32, #tpu.memory_space<vmem>>, vector<8x1xf32>
      %14 = vector.broadcast %13 : vector<8x1xf32> to vector<8x128xf32>
      %15 = arith.mulf %12, %14 : vector<8x128xf32>
      %c0_14 = arith.constant 0 : index
      %c0_15 = arith.constant 0 : index
      %16 = vector.load %arg6[%c0_14, %c0_15] : memref<8x1xf32, #tpu.memory_space<vmem>>, vector<8x1xf32>
      %17 = vector.broadcast %16 : vector<8x1xf32> to vector<8x128xf32>
      %18 = arith.addf %15, %17 : vector<8x128xf32>
      %cst_16 = arith.constant 0.000000e+00 : f32
      %19 = vector.broadcast %cst_16 : f32 to vector<8x128xf32>
      %20 = arith.cmpf oge, %18, %19 : vector<8x128xf32>
      %cst_17 = arith.constant 0.00999999977 : f32
      %21 = vector.broadcast %cst_17 : f32 to vector<8x128xf32>
      %22 = arith.mulf %21, %18 : vector<8x128xf32>
      %23 = arith.select %20, %18, %22 : vector<8x128xi1>, vector<8x128xf32>
      %c0_18 = arith.constant 0 : index
      %c0_19 = arith.constant 0 : index
      %24 = vector.load %arg7[%c0_18, %c0_19] : memref<8x128xf32, #tpu.memory_space<vmem>>, vector<8x128xf32>
      tpu.vector_store %arg7[%c0_18, %c0_19], %23 {strides = array<i32>} : memref<8x128xf32, #tpu.memory_space<vmem>>, vector<8x128xf32>,
    } else {
    }
    return
  }
  func.func @transform_0(%arg0: i32, %arg1: i32, %arg2: i32) -> (i32, i32) {
    %c0_i32 = arith.constant 0 : i32
    return %arg0, %arg2 : i32, i32
  }
  func.func @transform_1(%arg0: i32, %arg1: i32, %arg2: i32) -> (i32, i32) {
    %c0_i32 = arith.constant 0 : i32
    return %arg2, %arg1 : i32, i32
  }
  func.func @transform_2(%arg0: i32, %arg1: i32, %arg2: i32) -> (i32, i32) {
    %c0_i32 = arith.constant 0 : i32
    %c0_i32_0 = arith.constant 0 : i32
    return %arg0, %c0_i32 : i32, i32
  }
  func.func @transform_3(%arg0: i32, %arg1: i32, %arg2: i32) -> (i32, i32) {
    %c0_i32 = arith.constant 0 : i32
    %c0_i32_0 = arith.constant 0 : i32
    return %arg0, %c0_i32 : i32, i32
  }
  func.func @transform_4(%arg0: i32, %arg1: i32, %arg2: i32) -> (i32, i32) {
    %c0_i32 = arith.constant 0 : i32
    return %arg0, %arg1 : i32, i32
  }
}

module attributes {stable_mosaic.version = 11 : i64} {
  func.func @_mm_kernel(%arg0: i32, %arg1: i32, %arg2: i32, %arg3: memref<3x64xbf16, #tpu.memory_space<vmem>>, %arg4: memref<64x432xbf16, #tpu.memory_space<vmem>>, %arg5: memref<3x1xf32, #tpu.memory_space<vmem>>, %arg6: memref<3x1xf32, #tpu.memory_space<vmem>>, %arg7: memref<3x432xf32, #tpu.memory_space<vmem>>, %arg8: memref<3x432xf32, #tpu.memory_space<vmem>>) attributes {dimension_semantics = [#tpu.dimension_semantics<parallel>, #tpu.dimension_semantics<parallel>, #tpu.dimension_semantics<arbitrary>], iteration_bounds = array<i64: 1, 1, 1>, scalar_prefetch = 0 : i64, scratch_operands = 1 : i64, tpu.core_type = #tpu.core_type<tc>, window_params = [{transform_indices = @transform_0, window_bounds = array<i64: 3, 64>}, {transform_indices = @transform_1, window_bounds = array<i64: 64, 432>}, {transform_indices = @transform_2, window_bounds = array<i64: 3, 1>}, {transform_indices = @transform_3, window_bounds = array<i64: 3, 1>}, {transform_indices = @transform_4, window_bounds = array<i64: 3, 432>}]} {
    %c0_i32 = arith.constant 0 : i32
    %0 = arith.cmpi eq, %arg2, %c0_i32 : i32
    %1 = arith.extui %0 : i1 to i32
    %c0_i32_0 = arith.constant 0 : i32
    %2 = arith.cmpi ne, %1, %c0_i32_0 : i32
    scf.if %2 {
      %cst_10 = arith.constant 0.000000e+00 : f32
      %12 = vector.broadcast %cst_10 : f32 to vector<3x432xf32>
      %c0_11 = arith.constant 0 : index
      %c0_12 = arith.constant 0 : index
      %13 = vector.load %arg8[%c0_11, %c0_12] : memref<3x432xf32, #tpu.memory_space<vmem>>, vector<3x432xf32>
      tpu.vector_store %arg8[%c0_11, %c0_12], %12 {strides = array<i32>} : memref<3x432xf32, #tpu.memory_space<vmem>>, vector<3x432xf32>,
    } else {
    }
    %c0 = arith.constant 0 : index
    %c0_1 = arith.constant 0 : index
    %3 = vector.load %arg8[%c0, %c0_1] : memref<3x432xf32, #tpu.memory_space<vmem>>, vector<3x432xf32>
    %c0_2 = arith.constant 0 : index
    %c0_3 = arith.constant 0 : index
    %4 = vector.load %arg3[%c0_2, %c0_3] : memref<3x64xbf16, #tpu.memory_space<vmem>>, vector<3x64xbf16>
    %c0_4 = arith.constant 0 : index
    %c0_5 = arith.constant 0 : index
    %5 = vector.load %arg4[%c0_4, %c0_5] : memref<64x432xbf16, #tpu.memory_space<vmem>>, vector<64x432xbf16>
    %cst = arith.constant dense<0.000000e+00> : vector<3x432xf32>
    %6 = tpu.matmul %4, %5, %cst {dimension_numbers = #tpu.dot_dimension_numbers<[1], [0], [0], [1], [0, 0, 1, 1], [], []>} : vector<3x64xbf16>, vector<64x432xbf16>, vector<3x432xf32> -> vector<3x432xf32>
    %7 = arith.addf %3, %6 : vector<3x432xf32>
    %c0_6 = arith.constant 0 : index
    %c0_7 = arith.constant 0 : index
    %8 = vector.load %arg8[%c0_6, %c0_7] : memref<3x432xf32, #tpu.memory_space<vmem>>, vector<3x432xf32>
    tpu.vector_store %arg8[%c0_6, %c0_7], %7 {strides = array<i32>} : memref<3x432xf32, #tpu.memory_space<vmem>>, vector<3x432xf32>,
    %c0_i32_8 = arith.constant 0 : i32
    %9 = arith.cmpi eq, %arg2, %c0_i32_8 : i32
    %10 = arith.extui %9 : i1 to i32
    %c0_i32_9 = arith.constant 0 : i32
    %11 = arith.cmpi ne, %10, %c0_i32_9 : i32
    scf.if %11 {
      %c0_10 = arith.constant 0 : index
      %c0_11 = arith.constant 0 : index
      %12 = vector.load %arg8[%c0_10, %c0_11] : memref<3x432xf32, #tpu.memory_space<vmem>>, vector<3x432xf32>
      %c0_12 = arith.constant 0 : index
      %c0_13 = arith.constant 0 : index
      %13 = vector.load %arg5[%c0_12, %c0_13] : memref<3x1xf32, #tpu.memory_space<vmem>>, vector<3x1xf32>
      %14 = vector.broadcast %13 : vector<3x1xf32> to vector<3x432xf32>
      %15 = arith.mulf %12, %14 : vector<3x432xf32>
      %c0_14 = arith.constant 0 : index
      %c0_15 = arith.constant 0 : index
      %16 = vector.load %arg6[%c0_14, %c0_15] : memref<3x1xf32, #tpu.memory_space<vmem>>, vector<3x1xf32>
      %17 = vector.broadcast %16 : vector<3x1xf32> to vector<3x432xf32>
      %18 = arith.addf %15, %17 : vector<3x432xf32>
      %19 = arith.negf %18 : vector<3x432xf32>
      %20 = math.exp %19 : vector<3x432xf32>
      %cst_16 = arith.constant 1.000000e+00 : f32
      %21 = vector.broadcast %cst_16 : f32 to vector<3x432xf32>
      %22 = arith.addf %21, %20 : vector<3x432xf32>
      %23 = arith.divf %21, %22 : vector<3x432xf32>
      %c0_17 = arith.constant 0 : index
      %c0_18 = arith.constant 0 : index
      %24 = vector.load %arg7[%c0_17, %c0_18] : memref<3x432xf32, #tpu.memory_space<vmem>>, vector<3x432xf32>
      tpu.vector_store %arg7[%c0_17, %c0_18], %23 {strides = array<i32>} : memref<3x432xf32, #tpu.memory_space<vmem>>, vector<3x432xf32>,
    } else {
    }
    return
  }
  func.func @transform_0(%arg0: i32, %arg1: i32, %arg2: i32) -> (i32, i32) {
    %c0_i32 = arith.constant 0 : i32
    return %arg0, %arg2 : i32, i32
  }
  func.func @transform_1(%arg0: i32, %arg1: i32, %arg2: i32) -> (i32, i32) {
    %c0_i32 = arith.constant 0 : i32
    return %arg2, %arg1 : i32, i32
  }
  func.func @transform_2(%arg0: i32, %arg1: i32, %arg2: i32) -> (i32, i32) {
    %c0_i32 = arith.constant 0 : i32
    %c0_i32_0 = arith.constant 0 : i32
    return %arg0, %c0_i32 : i32, i32
  }
  func.func @transform_3(%arg0: i32, %arg1: i32, %arg2: i32) -> (i32, i32) {
    %c0_i32 = arith.constant 0 : i32
    %c0_i32_0 = arith.constant 0 : i32
    return %arg0, %c0_i32 : i32, i32
  }
  func.func @transform_4(%arg0: i32, %arg1: i32, %arg2: i32) -> (i32, i32) {
    %c0_i32 = arith.constant 0 : i32
    return %arg0, %arg1 : i32, i32
  }
}

module attributes {stable_mosaic.version = 11 : i64} {
  func.func @_mm_kernel(%arg0: i32, %arg1: i32, %arg2: i32, %arg3: memref<3x32xbf16, #tpu.memory_space<vmem>>, %arg4: memref<32x504xbf16, #tpu.memory_space<vmem>>, %arg5: memref<3x1xf32, #tpu.memory_space<vmem>>, %arg6: memref<3x1xf32, #tpu.memory_space<vmem>>, %arg7: memref<3x504xf32, #tpu.memory_space<vmem>>, %arg8: memref<3x504xf32, #tpu.memory_space<vmem>>) attributes {dimension_semantics = [#tpu.dimension_semantics<parallel>, #tpu.dimension_semantics<parallel>, #tpu.dimension_semantics<arbitrary>], iteration_bounds = array<i64: 1, 1, 1>, scalar_prefetch = 0 : i64, scratch_operands = 1 : i64, tpu.core_type = #tpu.core_type<tc>, window_params = [{transform_indices = @transform_0, window_bounds = array<i64: 3, 32>}, {transform_indices = @transform_1, window_bounds = array<i64: 32, 504>}, {transform_indices = @transform_2, window_bounds = array<i64: 3, 1>}, {transform_indices = @transform_3, window_bounds = array<i64: 3, 1>}, {transform_indices = @transform_4, window_bounds = array<i64: 3, 504>}]} {
    %c0_i32 = arith.constant 0 : i32
    %0 = arith.cmpi eq, %arg2, %c0_i32 : i32
    %1 = arith.extui %0 : i1 to i32
    %c0_i32_0 = arith.constant 0 : i32
    %2 = arith.cmpi ne, %1, %c0_i32_0 : i32
    scf.if %2 {
      %cst_10 = arith.constant 0.000000e+00 : f32
      %12 = vector.broadcast %cst_10 : f32 to vector<3x504xf32>
      %c0_11 = arith.constant 0 : index
      %c0_12 = arith.constant 0 : index
      %13 = vector.load %arg8[%c0_11, %c0_12] : memref<3x504xf32, #tpu.memory_space<vmem>>, vector<3x504xf32>
      tpu.vector_store %arg8[%c0_11, %c0_12], %12 {strides = array<i32>} : memref<3x504xf32, #tpu.memory_space<vmem>>, vector<3x504xf32>,
    } else {
    }
    %c0 = arith.constant 0 : index
    %c0_1 = arith.constant 0 : index
    %3 = vector.load %arg8[%c0, %c0_1] : memref<3x504xf32, #tpu.memory_space<vmem>>, vector<3x504xf32>
    %c0_2 = arith.constant 0 : index
    %c0_3 = arith.constant 0 : index
    %4 = vector.load %arg3[%c0_2, %c0_3] : memref<3x32xbf16, #tpu.memory_space<vmem>>, vector<3x32xbf16>
    %c0_4 = arith.constant 0 : index
    %c0_5 = arith.constant 0 : index
    %5 = vector.load %arg4[%c0_4, %c0_5] : memref<32x504xbf16, #tpu.memory_space<vmem>>, vector<32x504xbf16>
    %cst = arith.constant dense<0.000000e+00> : vector<3x504xf32>
    %6 = tpu.matmul %4, %5, %cst {dimension_numbers = #tpu.dot_dimension_numbers<[1], [0], [0], [1], [0, 0, 1, 1], [], []>} : vector<3x32xbf16>, vector<32x504xbf16>, vector<3x504xf32> -> vector<3x504xf32>
    %7 = arith.addf %3, %6 : vector<3x504xf32>
    %c0_6 = arith.constant 0 : index
    %c0_7 = arith.constant 0 : index
    %8 = vector.load %arg8[%c0_6, %c0_7] : memref<3x504xf32, #tpu.memory_space<vmem>>, vector<3x504xf32>
    tpu.vector_store %arg8[%c0_6, %c0_7], %7 {strides = array<i32>} : memref<3x504xf32, #tpu.memory_space<vmem>>, vector<3x504xf32>,
    %c0_i32_8 = arith.constant 0 : i32
    %9 = arith.cmpi eq, %arg2, %c0_i32_8 : i32
    %10 = arith.extui %9 : i1 to i32
    %c0_i32_9 = arith.constant 0 : i32
    %11 = arith.cmpi ne, %10, %c0_i32_9 : i32
    scf.if %11 {
      %c0_10 = arith.constant 0 : index
      %c0_11 = arith.constant 0 : index
      %12 = vector.load %arg8[%c0_10, %c0_11] : memref<3x504xf32, #tpu.memory_space<vmem>>, vector<3x504xf32>
      %c0_12 = arith.constant 0 : index
      %c0_13 = arith.constant 0 : index
      %13 = vector.load %arg5[%c0_12, %c0_13] : memref<3x1xf32, #tpu.memory_space<vmem>>, vector<3x1xf32>
      %14 = vector.broadcast %13 : vector<3x1xf32> to vector<3x504xf32>
      %15 = arith.mulf %12, %14 : vector<3x504xf32>
      %c0_14 = arith.constant 0 : index
      %c0_15 = arith.constant 0 : index
      %16 = vector.load %arg6[%c0_14, %c0_15] : memref<3x1xf32, #tpu.memory_space<vmem>>, vector<3x1xf32>
      %17 = vector.broadcast %16 : vector<3x1xf32> to vector<3x504xf32>
      %18 = arith.addf %15, %17 : vector<3x504xf32>
      %19 = arith.negf %18 : vector<3x504xf32>
      %20 = math.exp %19 : vector<3x504xf32>
      %cst_16 = arith.constant 1.000000e+00 : f32
      %21 = vector.broadcast %cst_16 : f32 to vector<3x504xf32>
      %22 = arith.addf %21, %20 : vector<3x504xf32>
      %23 = arith.divf %21, %22 : vector<3x504xf32>
      %c0_17 = arith.constant 0 : index
      %c0_18 = arith.constant 0 : index
      %24 = vector.load %arg7[%c0_17, %c0_18] : memref<3x504xf32, #tpu.memory_space<vmem>>, vector<3x504xf32>
      tpu.vector_store %arg7[%c0_17, %c0_18], %23 {strides = array<i32>} : memref<3x504xf32, #tpu.memory_space<vmem>>, vector<3x504xf32>,
    } else {
    }
    return
  }
  func.func @transform_0(%arg0: i32, %arg1: i32, %arg2: i32) -> (i32, i32) {
    %c0_i32 = arith.constant 0 : i32
    return %arg0, %arg2 : i32, i32
  }
  func.func @transform_1(%arg0: i32, %arg1: i32, %arg2: i32) -> (i32, i32) {
    %c0_i32 = arith.constant 0 : i32
    return %arg2, %arg1 : i32, i32
  }
  func.func @transform_2(%arg0: i32, %arg1: i32, %arg2: i32) -> (i32, i32) {
    %c0_i32 = arith.constant 0 : i32
    %c0_i32_0 = arith.constant 0 : i32
    return %arg0, %c0_i32 : i32, i32
  }
  func.func @transform_3(%arg0: i32, %arg1: i32, %arg2: i32) -> (i32, i32) {
    %c0_i32 = arith.constant 0 : i32
    %c0_i32_0 = arith.constant 0 : i32
    return %arg0, %c0_i32 : i32, i32
  }
  func.func @transform_4(%arg0: i32, %arg1: i32, %arg2: i32) -> (i32, i32) {
    %c0_i32 = arith.constant 0 : i32
    return %arg0, %arg1 : i32, i32
  }
}

module attributes {stable_mosaic.version = 11 : i64} {
  func.func @_mm_kernel(%arg0: i32, %arg1: i32, %arg2: i32, %arg3: memref<3x16xbf16, #tpu.memory_space<vmem>>, %arg4: memref<16x588xbf16, #tpu.memory_space<vmem>>, %arg5: memref<3x1xf32, #tpu.memory_space<vmem>>, %arg6: memref<3x1xf32, #tpu.memory_space<vmem>>, %arg7: memref<3x588xf32, #tpu.memory_space<vmem>>, %arg8: memref<3x588xf32, #tpu.memory_space<vmem>>) attributes {dimension_semantics = [#tpu.dimension_semantics<parallel>, #tpu.dimension_semantics<parallel>, #tpu.dimension_semantics<arbitrary>], iteration_bounds = array<i64: 1, 1, 1>, scalar_prefetch = 0 : i64, scratch_operands = 1 : i64, tpu.core_type = #tpu.core_type<tc>, window_params = [{transform_indices = @transform_0, window_bounds = array<i64: 3, 16>}, {transform_indices = @transform_1, window_bounds = array<i64: 16, 588>}, {transform_indices = @transform_2, window_bounds = array<i64: 3, 1>}, {transform_indices = @transform_3, window_bounds = array<i64: 3, 1>}, {transform_indices = @transform_4, window_bounds = array<i64: 3, 588>}]} {
    %c0_i32 = arith.constant 0 : i32
    %0 = arith.cmpi eq, %arg2, %c0_i32 : i32
    %1 = arith.extui %0 : i1 to i32
    %c0_i32_0 = arith.constant 0 : i32
    %2 = arith.cmpi ne, %1, %c0_i32_0 : i32
    scf.if %2 {
      %cst_10 = arith.constant 0.000000e+00 : f32
      %12 = vector.broadcast %cst_10 : f32 to vector<3x588xf32>
      %c0_11 = arith.constant 0 : index
      %c0_12 = arith.constant 0 : index
      %13 = vector.load %arg8[%c0_11, %c0_12] : memref<3x588xf32, #tpu.memory_space<vmem>>, vector<3x588xf32>
      tpu.vector_store %arg8[%c0_11, %c0_12], %12 {strides = array<i32>} : memref<3x588xf32, #tpu.memory_space<vmem>>, vector<3x588xf32>,
    } else {
    }
    %c0 = arith.constant 0 : index
    %c0_1 = arith.constant 0 : index
    %3 = vector.load %arg8[%c0, %c0_1] : memref<3x588xf32, #tpu.memory_space<vmem>>, vector<3x588xf32>
    %c0_2 = arith.constant 0 : index
    %c0_3 = arith.constant 0 : index
    %4 = vector.load %arg3[%c0_2, %c0_3] : memref<3x16xbf16, #tpu.memory_space<vmem>>, vector<3x16xbf16>
    %c0_4 = arith.constant 0 : index
    %c0_5 = arith.constant 0 : index
    %5 = vector.load %arg4[%c0_4, %c0_5] : memref<16x588xbf16, #tpu.memory_space<vmem>>, vector<16x588xbf16>
    %cst = arith.constant dense<0.000000e+00> : vector<3x588xf32>
    %6 = tpu.matmul %4, %5, %cst {dimension_numbers = #tpu.dot_dimension_numbers<[1], [0], [0], [1], [0, 0, 1, 1], [], []>} : vector<3x16xbf16>, vector<16x588xbf16>, vector<3x588xf32> -> vector<3x588xf32>
    %7 = arith.addf %3, %6 : vector<3x588xf32>
    %c0_6 = arith.constant 0 : index
    %c0_7 = arith.constant 0 : index
    %8 = vector.load %arg8[%c0_6, %c0_7] : memref<3x588xf32, #tpu.memory_space<vmem>>, vector<3x588xf32>
    tpu.vector_store %arg8[%c0_6, %c0_7], %7 {strides = array<i32>} : memref<3x588xf32, #tpu.memory_space<vmem>>, vector<3x588xf32>,
    %c0_i32_8 = arith.constant 0 : i32
    %9 = arith.cmpi eq, %arg2, %c0_i32_8 : i32
    %10 = arith.extui %9 : i1 to i32
    %c0_i32_9 = arith.constant 0 : i32
    %11 = arith.cmpi ne, %10, %c0_i32_9 : i32
    scf.if %11 {
      %c0_10 = arith.constant 0 : index
      %c0_11 = arith.constant 0 : index
      %12 = vector.load %arg8[%c0_10, %c0_11] : memref<3x588xf32, #tpu.memory_space<vmem>>, vector<3x588xf32>
      %c0_12 = arith.constant 0 : index
      %c0_13 = arith.constant 0 : index
      %13 = vector.load %arg5[%c0_12, %c0_13] : memref<3x1xf32, #tpu.memory_space<vmem>>, vector<3x1xf32>
      %14 = vector.broadcast %13 : vector<3x1xf32> to vector<3x588xf32>
      %15 = arith.mulf %12, %14 : vector<3x588xf32>
      %c0_14 = arith.constant 0 : index
      %c0_15 = arith.constant 0 : index
      %16 = vector.load %arg6[%c0_14, %c0_15] : memref<3x1xf32, #tpu.memory_space<vmem>>, vector<3x1xf32>
      %17 = vector.broadcast %16 : vector<3x1xf32> to vector<3x588xf32>
      %18 = arith.addf %15, %17 : vector<3x588xf32>
      %19 = arith.negf %18 : vector<3x588xf32>
      %20 = math.exp %19 : vector<3x588xf32>
      %cst_16 = arith.constant 1.000000e+00 : f32
      %21 = vector.broadcast %cst_16 : f32 to vector<3x588xf32>
      %22 = arith.addf %21, %20 : vector<3x588xf32>
      %23 = arith.divf %21, %22 : vector<3x588xf32>
      %c0_17 = arith.constant 0 : index
      %c0_18 = arith.constant 0 : index
      %24 = vector.load %arg7[%c0_17, %c0_18] : memref<3x588xf32, #tpu.memory_space<vmem>>, vector<3x588xf32>
      tpu.vector_store %arg7[%c0_17, %c0_18], %23 {strides = array<i32>} : memref<3x588xf32, #tpu.memory_space<vmem>>, vector<3x588xf32>,
    } else {
    }
    return
  }
  func.func @transform_0(%arg0: i32, %arg1: i32, %arg2: i32) -> (i32, i32) {
    %c0_i32 = arith.constant 0 : i32
    return %arg0, %arg2 : i32, i32
  }
  func.func @transform_1(%arg0: i32, %arg1: i32, %arg2: i32) -> (i32, i32) {
    %c0_i32 = arith.constant 0 : i32
    return %arg2, %arg1 : i32, i32
  }
  func.func @transform_2(%arg0: i32, %arg1: i32, %arg2: i32) -> (i32, i32) {
    %c0_i32 = arith.constant 0 : i32
    %c0_i32_0 = arith.constant 0 : i32
    return %arg0, %c0_i32 : i32, i32
  }
  func.func @transform_3(%arg0: i32, %arg1: i32, %arg2: i32) -> (i32, i32) {
    %c0_i32 = arith.constant 0 : i32
    %c0_i32_0 = arith.constant 0 : i32
    return %arg0, %c0_i32 : i32, i32
  }
  func.func @transform_4(%arg0: i32, %arg1: i32, %arg2: i32) -> (i32, i32) {
    %c0_i32 = arith.constant 0 : i32
    return %arg0, %arg1 : i32, i32
  }
}

module attributes {stable_mosaic.version = 11 : i64} {
  func.func @_mm_kernel(%arg0: i32, %arg1: i32, %arg2: i32, %arg3: memref<3x8xbf16, #tpu.memory_space<vmem>>, %arg4: memref<8x686xbf16, #tpu.memory_space<vmem>>, %arg5: memref<3x1xf32, #tpu.memory_space<vmem>>, %arg6: memref<3x1xf32, #tpu.memory_space<vmem>>, %arg7: memref<3x686xf32, #tpu.memory_space<vmem>>, %arg8: memref<3x686xf32, #tpu.memory_space<vmem>>) attributes {dimension_semantics = [#tpu.dimension_semantics<parallel>, #tpu.dimension_semantics<parallel>, #tpu.dimension_semantics<arbitrary>], iteration_bounds = array<i64: 1, 1, 1>, scalar_prefetch = 0 : i64, scratch_operands = 1 : i64, tpu.core_type = #tpu.core_type<tc>, window_params = [{transform_indices = @transform_0, window_bounds = array<i64: 3, 8>}, {transform_indices = @transform_1, window_bounds = array<i64: 8, 686>}, {transform_indices = @transform_2, window_bounds = array<i64: 3, 1>}, {transform_indices = @transform_3, window_bounds = array<i64: 3, 1>}, {transform_indices = @transform_4, window_bounds = array<i64: 3, 686>}]} {
    %c0_i32 = arith.constant 0 : i32
    %0 = arith.cmpi eq, %arg2, %c0_i32 : i32
    %1 = arith.extui %0 : i1 to i32
    %c0_i32_0 = arith.constant 0 : i32
    %2 = arith.cmpi ne, %1, %c0_i32_0 : i32
    scf.if %2 {
      %cst_10 = arith.constant 0.000000e+00 : f32
      %12 = vector.broadcast %cst_10 : f32 to vector<3x686xf32>
      %c0_11 = arith.constant 0 : index
      %c0_12 = arith.constant 0 : index
      %13 = vector.load %arg8[%c0_11, %c0_12] : memref<3x686xf32, #tpu.memory_space<vmem>>, vector<3x686xf32>
      tpu.vector_store %arg8[%c0_11, %c0_12], %12 {strides = array<i32>} : memref<3x686xf32, #tpu.memory_space<vmem>>, vector<3x686xf32>,
    } else {
    }
    %c0 = arith.constant 0 : index
    %c0_1 = arith.constant 0 : index
    %3 = vector.load %arg8[%c0, %c0_1] : memref<3x686xf32, #tpu.memory_space<vmem>>, vector<3x686xf32>
    %c0_2 = arith.constant 0 : index
    %c0_3 = arith.constant 0 : index
    %4 = vector.load %arg3[%c0_2, %c0_3] : memref<3x8xbf16, #tpu.memory_space<vmem>>, vector<3x8xbf16>
    %c0_4 = arith.constant 0 : index
    %c0_5 = arith.constant 0 : index
    %5 = vector.load %arg4[%c0_4, %c0_5] : memref<8x686xbf16, #tpu.memory_space<vmem>>, vector<8x686xbf16>
    %cst = arith.constant dense<0.000000e+00> : vector<3x686xf32>
    %6 = tpu.matmul %4, %5, %cst {dimension_numbers = #tpu.dot_dimension_numbers<[1], [0], [0], [1], [0, 0, 1, 1], [], []>} : vector<3x8xbf16>, vector<8x686xbf16>, vector<3x686xf32> -> vector<3x686xf32>
    %7 = arith.addf %3, %6 : vector<3x686xf32>
    %c0_6 = arith.constant 0 : index
    %c0_7 = arith.constant 0 : index
    %8 = vector.load %arg8[%c0_6, %c0_7] : memref<3x686xf32, #tpu.memory_space<vmem>>, vector<3x686xf32>
    tpu.vector_store %arg8[%c0_6, %c0_7], %7 {strides = array<i32>} : memref<3x686xf32, #tpu.memory_space<vmem>>, vector<3x686xf32>,
    %c0_i32_8 = arith.constant 0 : i32
    %9 = arith.cmpi eq, %arg2, %c0_i32_8 : i32
    %10 = arith.extui %9 : i1 to i32
    %c0_i32_9 = arith.constant 0 : i32
    %11 = arith.cmpi ne, %10, %c0_i32_9 : i32
    scf.if %11 {
      %c0_10 = arith.constant 0 : index
      %c0_11 = arith.constant 0 : index
      %12 = vector.load %arg8[%c0_10, %c0_11] : memref<3x686xf32, #tpu.memory_space<vmem>>, vector<3x686xf32>
      %c0_12 = arith.constant 0 : index
      %c0_13 = arith.constant 0 : index
      %13 = vector.load %arg5[%c0_12, %c0_13] : memref<3x1xf32, #tpu.memory_space<vmem>>, vector<3x1xf32>
      %14 = vector.broadcast %13 : vector<3x1xf32> to vector<3x686xf32>
      %15 = arith.mulf %12, %14 : vector<3x686xf32>
      %c0_14 = arith.constant 0 : index
      %c0_15 = arith.constant 0 : index
      %16 = vector.load %arg6[%c0_14, %c0_15] : memref<3x1xf32, #tpu.memory_space<vmem>>, vector<3x1xf32>
      %17 = vector.broadcast %16 : vector<3x1xf32> to vector<3x686xf32>
      %18 = arith.addf %15, %17 : vector<3x686xf32>
      %19 = arith.negf %18 : vector<3x686xf32>
      %20 = math.exp %19 : vector<3x686xf32>
      %cst_16 = arith.constant 1.000000e+00 : f32
      %21 = vector.broadcast %cst_16 : f32 to vector<3x686xf32>
      %22 = arith.addf %21, %20 : vector<3x686xf32>
      %23 = arith.divf %21, %22 : vector<3x686xf32>
      %c0_17 = arith.constant 0 : index
      %c0_18 = arith.constant 0 : index
      %24 = vector.load %arg7[%c0_17, %c0_18] : memref<3x686xf32, #tpu.memory_space<vmem>>, vector<3x686xf32>
      tpu.vector_store %arg7[%c0_17, %c0_18], %23 {strides = array<i32>} : memref<3x686xf32, #tpu.memory_space<vmem>>, vector<3x686xf32>,
    } else {
    }
    return
  }
  func.func @transform_0(%arg0: i32, %arg1: i32, %arg2: i32) -> (i32, i32) {
    %c0_i32 = arith.constant 0 : i32
    return %arg0, %arg2 : i32, i32
  }
  func.func @transform_1(%arg0: i32, %arg1: i32, %arg2: i32) -> (i32, i32) {
    %c0_i32 = arith.constant 0 : i32
    return %arg2, %arg1 : i32, i32
  }
  func.func @transform_2(%arg0: i32, %arg1: i32, %arg2: i32) -> (i32, i32) {
    %c0_i32 = arith.constant 0 : i32
    %c0_i32_0 = arith.constant 0 : i32
    return %arg0, %c0_i32 : i32, i32
  }
  func.func @transform_3(%arg0: i32, %arg1: i32, %arg2: i32) -> (i32, i32) {
    %c0_i32 = arith.constant 0 : i32
    %c0_i32_0 = arith.constant 0 : i32
    return %arg0, %c0_i32 : i32, i32
  }
  func.func @transform_4(%arg0: i32, %arg1: i32, %arg2: i32) -> (i32, i32) {
    %c0_i32 = arith.constant 0 : i32
    return %arg0, %arg1 : i32, i32
  }
}

</mosaic_0001>

<llo_original>
// kernel: videobert_decoder_forward.43
$region0: #{videobert_decoder_forward.43}
  #allocation0 [shape = 'u32[]', space=smem, size = 0x4, offset = 0x4, fixed_abs, tag = 'smem constant byte address 0x4 - core index']
  #allocation1 [shape = 'u32[144,128]{1,0:T(1,128)}', space=vmem, size = 0x12000, scoped, tag = 'internal scratch']
  #allocation2 [shape = 'f32[8,96]{1,0:T(8,128)}', space=vmem, size = 0x1000, scoped, tag = 'scratch operand']
  %s0 = inlined_call_operand.vmem [shape: bf16[8,32], index: 0, kind: input, shape index: {}]
  %s1 = inlined_call_operand.vmem [shape: bf16[32,96], index: 1, kind: input, shape index: {}]
  %s2 = inlined_call_operand.vmem [shape: f32[1,96], index: 2, kind: input, shape index: {}]
  %s3 = inlined_call_operand.hbm [shape: f32[1,96], index: 3, kind: input, shape index: {}]
  %s4 = inlined_call_operand.vmem [shape: f32[8,96], index: 4, kind: output, shape index: {}]
  %s5 = sld [smem:[#allocation0]]
  $region38: #{videobert_decoder_forward.43} parent=0
    _
  %s7 = ssub.s32 1, %s5
  %s8 = scalar_select 0, %s7, %s5
  $region1: #{videobert_decoder_forward.43} parent=0
    #allocation3 [shape = 'u8[512]{0}', space=vmem, size = 0x400, scoped, tag = 'input window, operand 3, single buffered']
    #allocation4 [shape = 's32[1]{0}', space=sflag, size = 0x4, scoped, tag = 'scoped memory for videobert_decoder_forward.43']
    %9 = vsyncpa [#allocation4], 0
    // Predicated region
    $region2: #{videobert_decoder_forward.43} parent=1 // pred_check
      _
    $region3: #{videobert_decoder_forward.43} parent=1 // pred_check_branch
      %11 = sbr.rel (0) target = $region5
    $region4: #{videobert_decoder_forward.43} parent=1 // pred_region
      _
    $region5: #{videobert_decoder_forward.43} parent=1 // pred_fallthru
      _
    // Predicated region
    $region6: #{videobert_decoder_forward.43} parent=1 // pred_check
      _
    $region7: #{videobert_decoder_forward.43} parent=1 // pred_check_branch
      %13 = sbr.rel (0) target = $region9
    $region8: #{videobert_decoder_forward.43} parent=1 // pred_region
      _
    $region9: #{videobert_decoder_forward.43} parent=1 // pred_fallthru
      _
    // Predicated region
    $region10: #{videobert_decoder_forward.43} parent=1 // pred_check
      _
    $region11: #{videobert_decoder_forward.43} parent=1 // pred_check_branch
      %15 = sbr.rel (0) target = $region13
    $region12: #{videobert_decoder_forward.43} parent=1 // pred_region
      _
    $region13: #{videobert_decoder_forward.43} parent=1 // pred_fallthru
      _
    // Predicated region
    $region14: #{videobert_decoder_forward.43} parent=1 // pred_check
      _
    $region15: #{videobert_decoder_forward.43} parent=1 // pred_check_branch
      %17 = sbr.rel (0) target = $region17
    $region16: #{videobert_decoder_forward.43} parent=1 // pred_region
      %s19 = ssub.s32 16, 16
      %20 = vsyncadd [#allocation4], %s19
      %s22 = sshll.u32 [#allocation3], 4
      %s23 = int_to_ptr.vmem [resolvable:$true] %s22
      %25 = dma.hbm_to_vmem [thread:$0]  %s3, 16, %s23, [#allocation4]
    $region17: #{videobert_decoder_forward.43} parent=1 // pred_fallthru
      _
    // Predicated region
    $region18: #{videobert_decoder_forward.43} parent=1 // pred_check
      _
    $region19: #{videobert_decoder_forward.43} parent=1 // pred_check_branch
      %27 = sbr.rel (0) target = $region21
    $region20: #{videobert_decoder_forward.43} parent=1 // pred_region
      %28 = dma.done [#allocation4], 16
    $region21: #{videobert_decoder_forward.43} parent=1 // pred_fallthru
      _
    %p30 = scmp.eq.s32.totalorder 0, 0
    // Predicated region
    $region22: #{videobert_decoder_forward.43} parent=1 // pred_check
      %p31 = pneg %p30
    $region23: #{videobert_decoder_forward.43} parent=1 // pred_check_branch
      %33 = sbr.rel (%p31) target = $region25
    $region24: #{videobert_decoder_forward.43} parent=1 // pred_region
      %vm34 = vcmask 785408
      %35 = vst.msk [vmem:[#allocation2] sm:$0xff] %vm34, 0.0
    $region25: #{videobert_decoder_forward.43} parent=1 // pred_fallthru
      _
    %v36 = vld [vmem:[#allocation2] sm:$0xff]
    %v37 = vld [vmem:[%s0] sm:$0xf]
    %v38 = vld [vmem:[%s1] sm:$0xf]
    %v39 = vld [vmem:[%s1 + $0x4] sm:$0xf]
    %v40 = vld [vmem:[%s1 + $0x8] sm:$0xf]
    %v41 = vld [vmem:[%s1 + $0xc] sm:$0xf]
    %v46 = vunpack.c.l.b16 %v38
    %v47 = vunpack.c.l.b16 %v39
    %v48 = vunpack.c.l.b16 %v40
    %v49 = vunpack.c.l.b16 %v41
    %v50 = vpack.c.b16 %v47, %v46
    %v51 = vpack.c.b16 %v49, %v48
    %vm54 = vcmask 261120
    %v56 = vsel %vm54, %v37, 0
    %58 = vmatprep.subr.bf16.mxu0 0
    %59 = vmatpush1.bf16.msra.mxu0 %v50
    %60 = vmatprep.subr.bf16.mxu0 0
    %61 = vmatpush1.bf16.msra.mxu0 %v51
    %62 = vmatprep.subr.bf16.mxu0 0
    %63 = vmatpush1.bf16.msra.mxu0 0
    %64 = vmatprep.subr.bf16.mxu0 0
    %65 = vmatpush1.bf16.msra.mxu0 0
    %66 = vmatprep.subr.bf16.mxu0 0
    %67 = vmatpush1.bf16.msra.mxu0 0
    %68 = vmatprep.subr.bf16.mxu0 0
    %69 = vmatpush1.bf16.msra.mxu0 0
    %70 = vmatprep.subr.bf16.mxu0 0
    %71 = vmatpush1.bf16.msra.mxu0 0
    %72 = vmatprep.subr.bf16.mxu0 0
    %73 = vmatpush1.bf16.msra.mxu0 0
    %74 = vmatprep.subr.bf16.mxu0 0
    %75 = vmatpush1.bf16.msra.mxu0 0
    %76 = vmatprep.subr.bf16.mxu0 0
    %77 = vmatpush1.bf16.msra.mxu0 0
    %78 = vmatprep.subr.bf16.mxu0 0
    %79 = vmatpush1.bf16.msra.mxu0 0
    %80 = vmatprep.subr.bf16.mxu0 0
    %81 = vmatpush1.bf16.msra.mxu0 0
    %82 = vmatprep.subr.bf16.mxu0 0
    %83 = vmatpush1.bf16.msra.mxu0 0
    %84 = vmatprep.subr.bf16.mxu0 0
    %85 = vmatpush1.bf16.msra.mxu0 0
    %86 = vmatprep.subr.bf16.mxu0 0
    %87 = vmatpush1.bf16.msra.mxu0 0
    %88 = vmatprep.subr.bf16.mxu0 0
    %89 = vmatpush1.bf16.msra.mxu0 0
    %90 = vmatprep.mubr.bf16.mxu0 0
    %91 = vmatmul.mubr.bf16.gmra.mrb[0].mxu0 %v56
    %v92 = vpop.f32.mrb[0].mxu0
    %v93 = vadd.f32 0.0, %v92
    %v94 = vpop.f32.mrb[0].mxu0
    %v95 = vpop.f32.mrb[0].mxu0
    %v96 = vpop.f32.mrb[0].mxu0
    %97 = vdwg.mxu0
    %v98 = vadd.f32 %v36, %v93
    %vm99 = vcmask 785408
    %100 = vst.msk [vmem:[#allocation2] sm:$0xff] %vm99, %v98
    // Predicated region
    $region26: #{videobert_decoder_forward.43} parent=1 // pred_check
      %p101 = pneg %p30
    $region27: #{videobert_decoder_forward.43} parent=1 // pred_check_branch
      %103 = sbr.rel (%p101) target = $region29
    $region28: #{videobert_decoder_forward.43} parent=1 // pred_region
      %v104 = vld [vmem:[#allocation2] sm:$0xff]
      %v105 = vld [vmem:[%s2] sm:$0x1]
      %v107 = vlaneseq
      %v108 = vshrl.u32 %v107, 7
      %v109 = vsub.s32 0, %v108
      %v110 = vrot.slane %v105, %v109
      %v112 = vmul.f32 %v104, %v110
      %v113 = vld [vmem:[#allocation3] sm:$0x1]
      %v115 = vlaneseq
      %v116 = vshrl.u32 %v115, 7
      %v117 = vsub.s32 0, %v116
      %v118 = vrot.slane %v113, %v117
      %v120 = vadd.f32 %v112, %v118
      %121 = vst.msk [vmem:[%s4] sm:$0xff] %vm99, %v120
    $region29: #{videobert_decoder_forward.43} parent=1 // pred_fallthru
      _
    // Predicated region
    $region30: #{videobert_decoder_forward.43} parent=1 // pred_check
      _
    $region31: #{videobert_decoder_forward.43} parent=1 // pred_check_branch
      %123 = sbr.rel (0) target = $region33
    $region32: #{videobert_decoder_forward.43} parent=1 // pred_region
      _
    $region33: #{videobert_decoder_forward.43} parent=1 // pred_fallthru
      _
    // Predicated region
    $region34: #{videobert_decoder_forward.43} parent=1 // pred_check
      _
    $region35: #{videobert_decoder_forward.43} parent=1 // pred_check_branch
      %125 = sbr.rel (0) target = $region37
    $region36: #{videobert_decoder_forward.43} parent=1 // pred_region
      _
    $region37: #{videobert_decoder_forward.43} parent=1 // pred_fallthru
      _
    %126 = vsyncpa [#allocation4], 1

// kernel: videobert_decoder_forward.42
$region0: #{videobert_decoder_forward.42}
  #allocation0 [shape = 'u32[]', space=smem, size = 0x4, offset = 0x4, fixed_abs, tag = 'smem constant byte address 0x4 - core index']
  #allocation1 [shape = 'u32[144,128]{1,0:T(1,128)}', space=vmem, size = 0x12000, scoped, tag = 'internal scratch']
  #allocation2 [shape = 'f32[2,32]{1,0:T(2,128)}', space=vmem, size = 0x400, scoped, tag = 'scratch operand']
  %s0 = inlined_call_operand.vmem [shape: bf16[2,16], index: 0, kind: input, shape index: {}]
  %s1 = inlined_call_operand.vmem [shape: bf16[16,32], index: 1, kind: input, shape index: {}]
  %s2 = inlined_call_operand.vmem [shape: f32[1,32], index: 2, kind: input, shape index: {}]
  %s3 = inlined_call_operand.hbm [shape: f32[1,32], index: 3, kind: input, shape index: {}]
  %s4 = inlined_call_operand.vmem [shape: f32[2,32], index: 4, kind: output, shape index: {}]
  %s5 = sld [smem:[#allocation0]]
  $region38: #{videobert_decoder_forward.42} parent=0
    _
  %s7 = ssub.s32 1, %s5
  %s8 = scalar_select 0, %s7, %s5
  $region1: #{videobert_decoder_forward.42} parent=0
    #allocation3 [shape = 'u8[512]{0}', space=vmem, size = 0x400, scoped, tag = 'input window, operand 3, single buffered']
    #allocation4 [shape = 's32[1]{0}', space=sflag, size = 0x4, scoped, tag = 'scoped memory for videobert_decoder_forward.42']
    %9 = vsyncpa [#allocation4], 0
    // Predicated region
    $region2: #{videobert_decoder_forward.42} parent=1 // pred_check
      _
    $region3: #{videobert_decoder_forward.42} parent=1 // pred_check_branch
      %11 = sbr.rel (0) target = $region5
    $region4: #{videobert_decoder_forward.42} parent=1 // pred_region
      _
    $region5: #{videobert_decoder_forward.42} parent=1 // pred_fallthru
      _
    // Predicated region
    $region6: #{videobert_decoder_forward.42} parent=1 // pred_check
      _
    $region7: #{videobert_decoder_forward.42} parent=1 // pred_check_branch
      %13 = sbr.rel (0) target = $region9
    $region8: #{videobert_decoder_forward.42} parent=1 // pred_region
      _
    $region9: #{videobert_decoder_forward.42} parent=1 // pred_fallthru
      _
    // Predicated region
    $region10: #{videobert_decoder_forward.42} parent=1 // pred_check
      _
    $region11: #{videobert_decoder_forward.42} parent=1 // pred_check_branch
      %15 = sbr.rel (0) target = $region13
    $region12: #{videobert_decoder_forward.42} parent=1 // pred_region
      _
    $region13: #{videobert_decoder_forward.42} parent=1 // pred_fallthru
      _
    // Predicated region
    $region14: #{videobert_decoder_forward.42} parent=1 // pred_check
      _
    $region15: #{videobert_decoder_forward.42} parent=1 // pred_check_branch
      %17 = sbr.rel (0) target = $region17
    $region16: #{videobert_decoder_forward.42} parent=1 // pred_region
      %s19 = ssub.s32 16, 16
      %20 = vsyncadd [#allocation4], %s19
      %s22 = sshll.u32 [#allocation3], 4
      %s23 = int_to_ptr.vmem [resolvable:$true] %s22
      %25 = dma.hbm_to_vmem [thread:$0]  %s3, 16, %s23, [#allocation4]
    $region17: #{videobert_decoder_forward.42} parent=1 // pred_fallthru
      _
    // Predicated region
    $region18: #{videobert_decoder_forward.42} parent=1 // pred_check
      _
    $region19: #{videobert_decoder_forward.42} parent=1 // pred_check_branch
      %27 = sbr.rel (0) target = $region21
    $region20: #{videobert_decoder_forward.42} parent=1 // pred_region
      %28 = dma.done [#allocation4], 16
    $region21: #{videobert_decoder_forward.42} parent=1 // pred_fallthru
      _
    %p30 = scmp.eq.s32.totalorder 0, 0
    // Predicated region
    $region22: #{videobert_decoder_forward.42} parent=1 // pred_check
      %p31 = pneg %p30
    $region23: #{videobert_decoder_forward.42} parent=1 // pred_check_branch
      %33 = sbr.rel (%p31) target = $region25
    $region24: #{videobert_decoder_forward.42} parent=1 // pred_region
      %vm34 = vcmask 254976
      %35 = vst.msk [vmem:[#allocation2] sm:$0x3] %vm34, 0.0
    $region25: #{videobert_decoder_forward.42} parent=1 // pred_fallthru
      _
    %v36 = vld [vmem:[#allocation2] sm:$0x3]
    %v37 = vld [vmem:[%s0] sm:$0x1]
    %v38 = vld [vmem:[%s1] sm:$0xf]
    %v39 = vld [vmem:[%s1 + $0x4] sm:$0xf]
    %v42 = vunpack.c.l.b16 %v38
    %v43 = vunpack.c.l.b16 %v39
    %v44 = vpack.c.b16 %v43, %v42
    %vm46 = vcmask 130048
    %v48 = vsel %vm46, %v37, 0
    %50 = vmatprep.subr.bf16.mxu0 0
    %51 = vmatpush1.bf16.msra.mxu0 %v44
    %52 = vmatprep.subr.bf16.mxu0 0
    %53 = vmatpush1.bf16.msra.mxu0 0
    %54 = vmatprep.subr.bf16.mxu0 0
    %55 = vmatpush1.bf16.msra.mxu0 0
    %56 = vmatprep.subr.bf16.mxu0 0
    %57 = vmatpush1.bf16.msra.mxu0 0
    %58 = vmatprep.subr.bf16.mxu0 0
    %59 = vmatpush1.bf16.msra.mxu0 0
    %60 = vmatprep.subr.bf16.mxu0 0
    %61 = vmatpush1.bf16.msra.mxu0 0
    %62 = vmatprep.subr.bf16.mxu0 0
    %63 = vmatpush1.bf16.msra.mxu0 0
    %64 = vmatprep.subr.bf16.mxu0 0
    %65 = vmatpush1.bf16.msra.mxu0 0
    %66 = vmatprep.subr.bf16.mxu0 0
    %67 = vmatpush1.bf16.msra.mxu0 0
    %68 = vmatprep.subr.bf16.mxu0 0
    %69 = vmatpush1.bf16.msra.mxu0 0
    %70 = vmatprep.subr.bf16.mxu0 0
    %71 = vmatpush1.bf16.msra.mxu0 0
    %72 = vmatprep.subr.bf16.mxu0 0
    %73 = vmatpush1.bf16.msra.mxu0 0
    %74 = vmatprep.subr.bf16.mxu0 0
    %75 = vmatpush1.bf16.msra.mxu0 0
    %76 = vmatprep.subr.bf16.mxu0 0
    %77 = vmatpush1.bf16.msra.mxu0 0
    %78 = vmatprep.subr.bf16.mxu0 0
    %79 = vmatpush1.bf16.msra.mxu0 0
    %80 = vmatprep.subr.bf16.mxu0 0
    %81 = vmatpush1.bf16.msra.mxu0 0
    %82 = vmatprep.mubr.bf16.mxu0 0
    %83 = vmatmul.mubr.bf16.gmra.mrb[0].mxu0 %v48
    %v84 = vpop.f32.mrb[0].mxu0
    %v85 = vadd.f32 0.0, %v84
    %v86 = vpop.f32.mrb[0].mxu0
    %v87 = vpop.f32.mrb[0].mxu0
    %v88 = vpop.f32.mrb[0].mxu0
    %89 = vdwg.mxu0
    %v90 = vadd.f32 %v36, %v85
    %vm91 = vcmask 254976
    %92 = vst.msk [vmem:[#allocation2] sm:$0x3] %vm91, %v90
    // Predicated region
    $region26: #{videobert_decoder_forward.42} parent=1 // pred_check
      %p93 = pneg %p30
    $region27: #{videobert_decoder_forward.42} parent=1 // pred_check_branch
      %95 = sbr.rel (%p93) target = $region29
    $region28: #{videobert_decoder_forward.42} parent=1 // pred_region
      %v96 = vld [vmem:[#allocation2] sm:$0x3]
      %v97 = vld [vmem:[%s2] sm:$0x1]
      %v99 = vlaneseq
      %v100 = vshrl.u32 %v99, 7
      %v101 = vsub.s32 0, %v100
      %v102 = vrot.slane %v97, %v101
      %v104 = vmul.f32 %v96, %v102
      %v105 = vld [vmem:[#allocation3] sm:$0x1]
      %v107 = vlaneseq
      %v108 = vshrl.u32 %v107, 7
      %v109 = vsub.s32 0, %v108
      %v110 = vrot.slane %v105, %v109
      %v112 = vadd.f32 %v104, %v110
      %vm113 = vcmp.ge.f32.partialorder %v112, 0.0
      %v114 = vmul.f32 %v112, 0.01
      %v115 = vsel %vm113, %v112, %v114
      %116 = vst.msk [vmem:[%s4] sm:$0x3] %vm91, %v115
    $region29: #{videobert_decoder_forward.42} parent=1 // pred_fallthru
      _
    // Predicated region
    $region30: #{videobert_decoder_forward.42} parent=1 // pred_check
      _
    $region31: #{videobert_decoder_forward.42} parent=1 // pred_check_branch
      %118 = sbr.rel (0) target = $region33
    $region32: #{videobert_decoder_forward.42} parent=1 // pred_region
      _
    $region33: #{videobert_decoder_forward.42} parent=1 // pred_fallthru
      _
    // Predicated region
    $region34: #{videobert_decoder_forward.42} parent=1 // pred_check
      _
    $region35: #{videobert_decoder_forward.42} parent=1 // pred_check_branch
      %120 = sbr.rel (0) target = $region37
    $region36: #{videobert_decoder_forward.42} parent=1 // pred_region
      _
    $region37: #{videobert_decoder_forward.42} parent=1 // pred_fallthru
      _
    %121 = vsyncpa [#allocation4], 1

// kernel: videobert_decoder_forward.45
$region0: #{videobert_decoder_forward.45}
  #allocation0 [shape = 'u32[]', space=smem, size = 0x4, offset = 0x4, fixed_abs, tag = 'smem constant byte address 0x4 - core index']
  #allocation1 [shape = 'u32[144,128]{1,0:T(1,128)}', space=vmem, size = 0x12000, scoped, tag = 'internal scratch']
  #allocation2 [shape = 'f32[8,32]{1,0:T(8,128)}', space=vmem, size = 0x1000, scoped, tag = 'scratch operand']
  %s0 = inlined_call_operand.vmem [shape: bf16[8,32], index: 0, kind: input, shape index: {}]
  %s1 = inlined_call_operand.vmem [shape: bf16[32,32], index: 1, kind: input, shape index: {}]
  %s2 = inlined_call_operand.vmem [shape: f32[1,32], index: 2, kind: input, shape index: {}]
  %s3 = inlined_call_operand.hbm [shape: f32[1,32], index: 3, kind: input, shape index: {}]
  %s4 = inlined_call_operand.vmem [shape: f32[8,32], index: 4, kind: output, shape index: {}]
  %s5 = sld [smem:[#allocation0]]
  $region38: #{videobert_decoder_forward.45} parent=0
    _
  %s7 = ssub.s32 1, %s5
  %s8 = scalar_select 0, %s7, %s5
  $region1: #{videobert_decoder_forward.45} parent=0
    #allocation3 [shape = 'u8[512]{0}', space=vmem, size = 0x400, scoped, tag = 'input window, operand 3, single buffered']
    #allocation4 [shape = 's32[1]{0}', space=sflag, size = 0x4, scoped, tag = 'scoped memory for videobert_decoder_forward.45']
    %9 = vsyncpa [#allocation4], 0
    // Predicated region
    $region2: #{videobert_decoder_forward.45} parent=1 // pred_check
      _
    $region3: #{videobert_decoder_forward.45} parent=1 // pred_check_branch
      %11 = sbr.rel (0) target = $region5
    $region4: #{videobert_decoder_forward.45} parent=1 // pred_region
      _
    $region5: #{videobert_decoder_forward.45} parent=1 // pred_fallthru
      _
    // Predicated region
    $region6: #{videobert_decoder_forward.45} parent=1 // pred_check
      _
    $region7: #{videobert_decoder_forward.45} parent=1 // pred_check_branch
      %13 = sbr.rel (0) target = $region9
    $region8: #{videobert_decoder_forward.45} parent=1 // pred_region
      _
    $region9: #{videobert_decoder_forward.45} parent=1 // pred_fallthru
      _
    // Predicated region
    $region10: #{videobert_decoder_forward.45} parent=1 // pred_check
      _
    $region11: #{videobert_decoder_forward.45} parent=1 // pred_check_branch
      %15 = sbr.rel (0) target = $region13
    $region12: #{videobert_decoder_forward.45} parent=1 // pred_region
      _
    $region13: #{videobert_decoder_forward.45} parent=1 // pred_fallthru
      _
    // Predicated region
    $region14: #{videobert_decoder_forward.45} parent=1 // pred_check
      _
    $region15: #{videobert_decoder_forward.45} parent=1 // pred_check_branch
      %17 = sbr.rel (0) target = $region17
    $region16: #{videobert_decoder_forward.45} parent=1 // pred_region
      %s19 = ssub.s32 16, 16
      %20 = vsyncadd [#allocation4], %s19
      %s22 = sshll.u32 [#allocation3], 4
      %s23 = int_to_ptr.vmem [resolvable:$true] %s22
      %25 = dma.hbm_to_vmem [thread:$0]  %s3, 16, %s23, [#allocation4]
    $region17: #{videobert_decoder_forward.45} parent=1 // pred_fallthru
      _
    // Predicated region
    $region18: #{videobert_decoder_forward.45} parent=1 // pred_check
      _
    $region19: #{videobert_decoder_forward.45} parent=1 // pred_check_branch
      %27 = sbr.rel (0) target = $region21
    $region20: #{videobert_decoder_forward.45} parent=1 // pred_region
      %28 = dma.done [#allocation4], 16
    $region21: #{videobert_decoder_forward.45} parent=1 // pred_fallthru
      _
    %p30 = scmp.eq.s32.totalorder 0, 0
    // Predicated region
    $region22: #{videobert_decoder_forward.45} parent=1 // pred_check
      %p31 = pneg %p30
    $region23: #{videobert_decoder_forward.45} parent=1 // pred_check_branch
      %33 = sbr.rel (%p31) target = $region25
    $region24: #{videobert_decoder_forward.45} parent=1 // pred_region
      %vm34 = vcmask 261120
      %35 = vst.msk [vmem:[#allocation2] sm:$0xff] %vm34, 0.0
    $region25: #{videobert_decoder_forward.45} parent=1 // pred_fallthru
      _
    %v36 = vld [vmem:[#allocation2] sm:$0xff]
    %v37 = vld [vmem:[%s0] sm:$0xf]
    %v38 = vld [vmem:[%s1] sm:$0xf]
    %v39 = vld [vmem:[%s1 + $0x4] sm:$0xf]
    %v40 = vld [vmem:[%s1 + $0x8] sm:$0xf]
    %v41 = vld [vmem:[%s1 + $0xc] sm:$0xf]
    %v46 = vunpack.c.l.b16 %v38
    %v47 = vunpack.c.l.b16 %v39
    %v48 = vunpack.c.l.b16 %v40
    %v49 = vunpack.c.l.b16 %v41
    %v50 = vpack.c.b16 %v47, %v46
    %v51 = vpack.c.b16 %v49, %v48
    %vm54 = vcmask 261120
    %v56 = vsel %vm54, %v37, 0
    %58 = vmatprep.subr.bf16.mxu0 0
    %59 = vmatpush1.bf16.msra.mxu0 %v50
    %60 = vmatprep.subr.bf16.mxu0 0
    %61 = vmatpush1.bf16.msra.mxu0 %v51
    %62 = vmatprep.subr.bf16.mxu0 0
    %63 = vmatpush1.bf16.msra.mxu0 0
    %64 = vmatprep.subr.bf16.mxu0 0
    %65 = vmatpush1.bf16.msra.mxu0 0
    %66 = vmatprep.subr.bf16.mxu0 0
    %67 = vmatpush1.bf16.msra.mxu0 0
    %68 = vmatprep.subr.bf16.mxu0 0
    %69 = vmatpush1.bf16.msra.mxu0 0
    %70 = vmatprep.subr.bf16.mxu0 0
    %71 = vmatpush1.bf16.msra.mxu0 0
    %72 = vmatprep.subr.bf16.mxu0 0
    %73 = vmatpush1.bf16.msra.mxu0 0
    %74 = vmatprep.subr.bf16.mxu0 0
    %75 = vmatpush1.bf16.msra.mxu0 0
    %76 = vmatprep.subr.bf16.mxu0 0
    %77 = vmatpush1.bf16.msra.mxu0 0
    %78 = vmatprep.subr.bf16.mxu0 0
    %79 = vmatpush1.bf16.msra.mxu0 0
    %80 = vmatprep.subr.bf16.mxu0 0
    %81 = vmatpush1.bf16.msra.mxu0 0
    %82 = vmatprep.subr.bf16.mxu0 0
    %83 = vmatpush1.bf16.msra.mxu0 0
    %84 = vmatprep.subr.bf16.mxu0 0
    %85 = vmatpush1.bf16.msra.mxu0 0
    %86 = vmatprep.subr.bf16.mxu0 0
    %87 = vmatpush1.bf16.msra.mxu0 0
    %88 = vmatprep.subr.bf16.mxu0 0
    %89 = vmatpush1.bf16.msra.mxu0 0
    %90 = vmatprep.mubr.bf16.mxu0 0
    %91 = vmatmul.mubr.bf16.gmra.mrb[0].mxu0 %v56
    %v92 = vpop.f32.mrb[0].mxu0
    %v93 = vadd.f32 0.0, %v92
    %v94 = vpop.f32.mrb[0].mxu0
    %v95 = vpop.f32.mrb[0].mxu0
    %v96 = vpop.f32.mrb[0].mxu0
    %97 = vdwg.mxu0
    %v98 = vadd.f32 %v36, %v93
    %99 = vst.msk [vmem:[#allocation2] sm:$0xff] %vm54, %v98
    // Predicated region
    $region26: #{videobert_decoder_forward.45} parent=1 // pred_check
      %p100 = pneg %p30
    $region27: #{videobert_decoder_forward.45} parent=1 // pred_check_branch
      %102 = sbr.rel (%p100) target = $region29
    $region28: #{videobert_decoder_forward.45} parent=1 // pred_region
      %v103 = vld [vmem:[#allocation2] sm:$0xff]
      %v104 = vld [vmem:[%s2] sm:$0x1]
      %v106 = vlaneseq
      %v107 = vshrl.u32 %v106, 7
      %v108 = vsub.s32 0, %v107
      %v109 = vrot.slane %v104, %v108
      %v111 = vmul.f32 %v103, %v109
      %v112 = vld [vmem:[#allocation3] sm:$0x1]
      %v114 = vlaneseq
      %v115 = vshrl.u32 %v114, 7
      %v116 = vsub.s32 0, %v115
      %v117 = vrot.slane %v112, %v116
      %v119 = vadd.f32 %v111, %v117
      %120 = vst.msk [vmem:[%s4] sm:$0xff] %vm54, %v119
    $region29: #{videobert_decoder_forward.45} parent=1 // pred_fallthru
      _
    // Predicated region
    $region30: #{videobert_decoder_forward.45} parent=1 // pred_check
      _
    $region31: #{videobert_decoder_forward.45} parent=1 // pred_check_branch
      %122 = sbr.rel (0) target = $region33
    $region32: #{videobert_decoder_forward.45} parent=1 // pred_region
      _
    $region33: #{videobert_decoder_forward.45} parent=1 // pred_fallthru
      _
    // Predicated region
    $region34: #{videobert_decoder_forward.45} parent=1 // pred_check
      _
    $region35: #{videobert_decoder_forward.45} parent=1 // pred_check_branch
      %124 = sbr.rel (0) target = $region37
    $region36: #{videobert_decoder_forward.45} parent=1 // pred_region
      _
    $region37: #{videobert_decoder_forward.45} parent=1 // pred_fallthru
      _
    %125 = vsyncpa [#allocation4], 1

// kernel: videobert_decoder_forward.44
$region0: #{videobert_decoder_forward.44}
  #allocation0 [shape = 'u32[]', space=smem, size = 0x4, offset = 0x4, fixed_abs, tag = 'smem constant byte address 0x4 - core index']
  #allocation1 [shape = 'u32[144,128]{1,0:T(1,128)}', space=vmem, size = 0x12000, scoped, tag = 'internal scratch']
  %s0 = inlined_call_operand.vmem [shape: bf16[2,8,4,4], index: 0, kind: input, shape index: {}]
  %s1 = inlined_call_operand.vmem [shape: bf16[2,8,4,4], index: 1, kind: input, shape index: {}]
  %s2 = inlined_call_operand.vmem [shape: bf16[2,8,4,4], index: 2, kind: input, shape index: {}]
  %s3 = inlined_call_operand.vmem [shape: f32[4,4], index: 3, kind: input, shape index: {}]
  %s4 = inlined_call_operand.vmem [shape: f32[2,8,4,4], index: 4, kind: output, shape index: {}]
  %s5 = sld [smem:[#allocation0]]
  $region49: #{videobert_decoder_forward.44} parent=0
    _
  %s7 = ssub.s32 1, %s5
  %s8 = scalar_select 0, %s7, %s5
  loop: start=0, step=1, limit=4
  $region2: #{videobert_decoder_forward.44} parent=0 // loop_pre_header
    _
  $region3: #{videobert_decoder_forward.44} parent=0 // loop_header
    %s10 = sphi 0, %s14
    %p11 = scmp.ge.s32.totalorder %s10, 4
    %s20 = sphi 0, %s22
    %s23 = sphi 0, %s20
    %s24 = sphi 0, %s23
    %s40 = sphi 0, %s24
    %s46 = sphi 0, %s48
    %s49 = sphi 0, %s46
    %s50 = sphi 0, %s49
    %s66 = sphi 0, %s50
    %s72 = sphi 0, %s74
    %s75 = sphi 0, %s72
    %s76 = sphi 0, %s75
    %s92 = sphi 0, %s76
    %s96 = sphi 0, %s96
    %s98 = sphi 0, %s96
    %s99 = sphi 0, %s98
    %s113 = sphi 0, %s99
    %s119 = sphi 0, %s121
    %s122 = sphi 0, %s119
    %s123 = sphi 0, %s122
    %s139 = sphi 0, %s123
  $region4: #{videobert_decoder_forward.44} parent=0 // loop_header_branch
    %13 = sbr.rel (%p11) target = $region8
  $region5: #{videobert_decoder_forward.44} parent=0 // loop_body
    %s15 = ssub.s32 %s10, 1
    %s16 = ssub.s32 %s10, 2
    %s17 = sadd.s32 %s10, 1
    %s18 = ssub.s32 %s10, %s17
    %p19 = scmp.eq.s32.totalorder %s18, 0
    %s21 = sadd.s32 %s20, 1
    %s22 = scalar_select %p19, %s20, %s21
    %p25 = pneg %p19
    %p26 = scmp.eq.s32.totalorder %s10, 1
    %p27 = por %p25, %p26
    %p28 = scmp.ne.s32.totalorder %s20, %s23
    %p29 = scmp.eq.s32.totalorder %s10, 0
    %p30 = por %p28, %p29
    %p31 = scmp.ne.s32.totalorder %s20, %s23
    %p32 = scmp.eq.s32.totalorder %s15, 1
    %p33 = por %p31, %p32
    %p34 = scmp.ne.s32.totalorder %s23, %s24
    %p35 = scmp.eq.s32.totalorder %s15, 0
    %p36 = por %p34, %p35
    %p37 = scmp.ne.s32.totalorder %s23, %s24
    %p38 = scmp.eq.s32.totalorder %s16, 1
    %p39 = por %p37, %p38
    %p41 = scmp.ne.s32.totalorder %s24, %s40
    %p42 = scmp.eq.s32.totalorder %s16, 0
    %p43 = por %p41, %p42
    %s44 = ssub.s32 %s10, %s17
    %p45 = scmp.eq.s32.totalorder %s44, 0
    %s47 = sadd.s32 %s46, 1
    %s48 = scalar_select %p45, %s46, %s47
    %p51 = pneg %p45
    %p52 = scmp.eq.s32.totalorder %s10, 1
    %p53 = por %p51, %p52
    %p54 = scmp.ne.s32.totalorder %s46, %s49
    %p55 = scmp.eq.s32.totalorder %s10, 0
    %p56 = por %p54, %p55
    %p57 = scmp.ne.s32.totalorder %s46, %s49
    %p58 = scmp.eq.s32.totalorder %s15, 1
    %p59 = por %p57, %p58
    %p60 = scmp.ne.s32.totalorder %s49, %s50
    %p61 = scmp.eq.s32.totalorder %s15, 0
    %p62 = por %p60, %p61
    %p63 = scmp.ne.s32.totalorder %s49, %s50
    %p64 = scmp.eq.s32.totalorder %s16, 1
    %p65 = por %p63, %p64
    %p67 = scmp.ne.s32.totalorder %s50, %s66
    %p68 = scmp.eq.s32.totalorder %s16, 0
    %p69 = por %p67, %p68
    %s70 = ssub.s32 %s10, %s17
    %p71 = scmp.eq.s32.totalorder %s70, 0
    %s73 = sadd.s32 %s72, 1
    %s74 = scalar_select %p71, %s72, %s73
    %p77 = pneg %p71
    %p78 = scmp.eq.s32.totalorder %s10, 1
    %p79 = por %p77, %p78
    %p80 = scmp.ne.s32.totalorder %s72, %s75
    %p81 = scmp.eq.s32.totalorder %s10, 0
    %p82 = por %p80, %p81
    %p83 = scmp.ne.s32.totalorder %s72, %s75
    %p84 = scmp.eq.s32.totalorder %s15, 1
    %p85 = por %p83, %p84
    %p86 = scmp.ne.s32.totalorder %s75, %s76
    %p87 = scmp.eq.s32.totalorder %s15, 0
    %p88 = por %p86, %p87
    %p89 = scmp.ne.s32.totalorder %s75, %s76
    %p90 = scmp.eq.s32.totalorder %s16, 1
    %p91 = por %p89, %p90
    %p93 = scmp.ne.s32.totalorder %s76, %s92
    %p94 = scmp.eq.s32.totalorder %s16, 0
    %p95 = por %p93, %p94
    %s97 = sadd.s32 %s96, 1
    %p100 = scmp.eq.s32.totalorder %s10, 1
    %p101 = scmp.ne.s32.totalorder %s96, %s98
    %p102 = scmp.eq.s32.totalorder %s10, 0
    %p103 = por %p101, %p102
    %p104 = scmp.ne.s32.totalorder %s96, %s98
    %p105 = scmp.eq.s32.totalorder %s15, 1
    %p106 = por %p104, %p105
    %p107 = scmp.ne.s32.totalorder %s98, %s99
    %p108 = scmp.eq.s32.totalorder %s15, 0
    %p109 = por %p107, %p108
    %p110 = scmp.ne.s32.totalorder %s98, %s99
    %p111 = scmp.eq.s32.totalorder %s16, 1
    %p112 = por %p110, %p111
    %p114 = scmp.ne.s32.totalorder %s99, %s113
    %p115 = scmp.eq.s32.totalorder %s16, 0
    %p116 = por %p114, %p115
    %s117 = ssub.s32 %s10, %s17
    %p118 = scmp.eq.s32.totalorder %s117, 0
    %s120 = sadd.s32 %s119, 1
    %s121 = scalar_select %p118, %s119, %s120
    %p124 = pneg %p118
    %p125 = scmp.eq.s32.totalorder %s10, 1
    %p126 = por %p124, %p125
    %p127 = scmp.ne.s32.totalorder %s119, %s122
    %p128 = scmp.eq.s32.totalorder %s10, 0
    %p129 = por %p127, %p128
    %p130 = scmp.ne.s32.totalorder %s119, %s122
    %p131 = scmp.eq.s32.totalorder %s15, 1
    %p132 = por %p130, %p131
    %p133 = scmp.ne.s32.totalorder %s122, %s123
    %p134 = scmp.eq.s32.totalorder %s15, 0
    %p135 = por %p133, %p134
    %p136 = scmp.ne.s32.totalorder %s122, %s123
    %p137 = scmp.eq.s32.totalorder %s16, 1
    %p138 = por %p136, %p137
    %p140 = scmp.ne.s32.totalorder %s123, %s139
    %p141 = scmp.eq.s32.totalorder %s16, 0
    %p142 = por %p140, %p141
    %p143 = scmp.le.s32.totalorder 1, %s10
    %p144 = scmp.lt.s32.totalorder %s10, 3
    %p145 = pnand %p143, %p144
    %p146 = pneg %p145
    // Predicated region
    $region9: #{videobert_decoder_forward.44} parent=5 // pred_check
      _
    $region10: #{videobert_decoder_forward.44} parent=5 // pred_check_branch
      %148 = sbr.rel (%p145) target = $region12
    $region11: #{videobert_decoder_forward.44} parent=5 // pred_region
      %s149 = ssub.s32 %s10, 1
      // Predicated region
      $region13: #{videobert_decoder_forward.44} parent=11 // pred_check
        %p150 = pneg %p109
      $region14: #{videobert_decoder_forward.44} parent=11 // pred_check_branch
        %152 = sbr.rel (%p150) target = $region16
      $region15: #{videobert_decoder_forward.44} parent=11 // pred_region
        _
      $region16: #{videobert_decoder_forward.44} parent=11 // pred_fallthru
        _
    $region12: #{videobert_decoder_forward.44} parent=5 // pred_fallthru
      _
    %p153 = scmp.lt.s32.totalorder %s10, 2
    // Predicated region
    $region17: #{videobert_decoder_forward.44} parent=5 // pred_check
      %p154 = pneg %p153
    $region18: #{videobert_decoder_forward.44} parent=5 // pred_check_branch
      %156 = sbr.rel (%p154) target = $region20
    $region19: #{videobert_decoder_forward.44} parent=5 // pred_region
      // Predicated region
      $region21: #{videobert_decoder_forward.44} parent=19 // pred_check
        %p157 = pneg %p30
      $region22: #{videobert_decoder_forward.44} parent=19 // pred_check_branch
        %159 = sbr.rel (%p157) target = $region24
      $region23: #{videobert_decoder_forward.44} parent=19 // pred_region
        %p160 = scmp.lt.s32.totalorder %s10, 1
        %s161 = scalar_select %p160, %s10, 1
        %s162 = smul.addr %s161, 8
        %s163 = smul.addr %s162, 2
        %s164 = scalar_lea.vmem %s0, %s163
      $region24: #{videobert_decoder_forward.44} parent=19 // pred_fallthru
        _
      // Predicated region
      $region25: #{videobert_decoder_forward.44} parent=19 // pred_check
        %p165 = pneg %p56
      $region26: #{videobert_decoder_forward.44} parent=19 // pred_check_branch
        %167 = sbr.rel (%p165) target = $region28
      $region27: #{videobert_decoder_forward.44} parent=19 // pred_region
        %p168 = scmp.lt.s32.totalorder %s10, 1
        %s169 = scalar_select %p168, %s10, 1
        %s170 = smul.addr %s169, 8
        %s171 = smul.addr %s170, 2
        %s172 = scalar_lea.vmem %s1, %s171
      $region28: #{videobert_decoder_forward.44} parent=19 // pred_fallthru
        _
      // Predicated region
      $region29: #{videobert_decoder_forward.44} parent=19 // pred_check
        %p173 = pneg %p82
      $region30: #{videobert_decoder_forward.44} parent=19 // pred_check_branch
        %175 = sbr.rel (%p173) target = $region32
      $region31: #{videobert_decoder_forward.44} parent=19 // pred_region
        %p176 = scmp.lt.s32.totalorder %s10, 1
        %s177 = scalar_select %p176, %s10, 1
        %s178 = smul.addr %s177, 8
        %s179 = smul.addr %s178, 2
        %s180 = scalar_lea.vmem %s2, %s179
      $region32: #{videobert_decoder_forward.44} parent=19 // pred_fallthru
        _
    $region20: #{videobert_decoder_forward.44} parent=5 // pred_fallthru
      _
    %p181 = scmp.le.s32.totalorder 1, %s10
    %p182 = scmp.lt.s32.totalorder %s10, 3
    %p183 = pnand %p181, %p182
    %p184 = pneg %p183
    // Predicated region
    $region33: #{videobert_decoder_forward.44} parent=5 // pred_check
      _
    $region34: #{videobert_decoder_forward.44} parent=5 // pred_check_branch
      %186 = sbr.rel (%p183) target = $region36
    $region35: #{videobert_decoder_forward.44} parent=5 // pred_region
      %s187 = ssub.s32 %s10, 1
      %p188 = scmp.lt.s32.totalorder %s15, 1
      %s189 = scalar_select %p188, %s15, 1
      %s190 = smul.addr %s189, 8
      %s191 = smul.addr %s190, 2
      %s192 = scalar_lea.vmem %s0, %s191
      %p193 = pneg %p36
      %p194 = pneg %p33
      %p195 = scmp.lt.s32.totalorder %s15, 1
      %s196 = scalar_select %p195, %s15, 1
      %s197 = smul.addr %s196, 8
      %s198 = smul.addr %s197, 2
      %s199 = scalar_lea.vmem %s1, %s198
      %p200 = pneg %p62
      %p201 = pneg %p59
      %p202 = scmp.lt.s32.totalorder %s15, 1
      %s203 = scalar_select %p202, %s15, 1
      %s204 = smul.addr %s203, 8
      %s205 = smul.addr %s204, 2
      %s206 = scalar_lea.vmem %s2, %s205
      %p207 = pneg %p88
      %p208 = pneg %p85
      %p209 = pneg %p109
      %p210 = pneg %p106
      %p211 = pneg %p135
      %p212 = pneg %p132
      %p213 = scmp.lt.s32.totalorder %s15, 1
      %s214 = scalar_select %p213, %s15, 1
      %s215 = smul.addr %s214, 8
      %s216 = smul.addr %s215, 4
      %s217 = scalar_lea.vmem %s4, %s216
      %p218 = scmp.lt.s32.totalorder %s15, 1
      %s219 = scalar_select %p218, %s15, 1
      %s220 = smul.addr %s219, 8
      %s221 = smul.addr %s220, 2
      %s222 = scalar_lea.vmem %s0, %s221
      %p223 = scmp.lt.s32.totalorder %s15, 1
      %s224 = scalar_select %p223, %s15, 1
      %s225 = smul.addr %s224, 8
      %s226 = smul.addr %s225, 2
      %s227 = scalar_lea.vmem %s1, %s226
      %p228 = scmp.lt.s32.totalorder %s15, 1
      %s229 = scalar_select %p228, %s15, 1
      %s230 = smul.addr %s229, 8
      %s231 = smul.addr %s230, 2
      %s232 = scalar_lea.vmem %s2, %s231
      %p233 = scmp.lt.s32.totalorder %s15, 1
      %s234 = scalar_select %p233, %s15, 1
      %s235 = smul.addr %s234, 8
      %s236 = smul.addr %s235, 4
      %s237 = scalar_lea.vmem %s4, %s236
      %v239 = vld [vmem:[%s222] sm:$0x3]
      %v240 = vld [vmem:[%s222 + $0x2] sm:$0x3]
      %v241 = vld [vmem:[%s222 + $0x4] sm:$0x3]
      %v242 = vld [vmem:[%s222 + $0x6] sm:$0x3]
      %v243 = vld [vmem:[%s222 + $0x8] sm:$0x3]
      %v244 = vld [vmem:[%s222 + $0xa] sm:$0x3]
      %v245 = vld [vmem:[%s222 + $0xc] sm:$0x3]
      %v246 = vld [vmem:[%s222 + $0xe] sm:$0x3]
      %v247 = vld [vmem:[%s227] sm:$0x3]
      %v248 = vld [vmem:[%s227 + $0x2] sm:$0x3]
      %v249 = vld [vmem:[%s227 + $0x4] sm:$0x3]
      %v250 = vld [vmem:[%s227 + $0x6] sm:$0x3]
      %v251 = vld [vmem:[%s227 + $0x8] sm:$0x3]
      %v252 = vld [vmem:[%s227 + $0xa] sm:$0x3]
      %v253 = vld [vmem:[%s227 + $0xc] sm:$0x3]
      %v254 = vld [vmem:[%s227 + $0xe] sm:$0x3]
      %v255 = vld [vmem:[%s232] sm:$0x3]
      %v256 = vld [vmem:[%s232 + $0x2] sm:$0x3]
      %v257 = vld [vmem:[%s232 + $0x4] sm:$0x3]
      %v258 = vld [vmem:[%s232 + $0x6] sm:$0x3]
      %v259 = vld [vmem:[%s232 + $0x8] sm:$0x3]
      %v260 = vld [vmem:[%s232 + $0xa] sm:$0x3]
      %v261 = vld [vmem:[%s232 + $0xc] sm:$0x3]
      %v262 = vld [vmem:[%s232 + $0xe] sm:$0x3]
      %vm263 = vcmask 31744
      %v265 = vsel %vm263, %v239, 0
      %v268 = vsel %vm263, %v247, 0
      %270 = vmatprep.subr.bf16.mxu0 0
      %271 = vmatpush1.bf16.xpose.msra.mxu0 %v268
      %272 = vmatprep.subr.bf16.mxu0 0
      %273 = vmatpush1.bf16.xpose.msra.mxu0 0
      %274 = vmatprep.subr.bf16.mxu0 0
      %275 = vmatpush1.bf16.xpose.msra.mxu0 0
      %276 = vmatprep.subr.bf16.mxu0 0
      %277 = vmatpush1.bf16.xpose.msra.mxu0 0
      %278 = vmatprep.subr.bf16.mxu0 0
      %279 = vmatpush1.bf16.xpose.msra.mxu0 0
      %280 = vmatprep.subr.bf16.mxu0 0
      %281 = vmatpush1.bf16.xpose.msra.mxu0 0
      %282 = vmatprep.subr.bf16.mxu0 0
      %283 = vmatpush1.bf16.xpose.msra.mxu0 0
      %284 = vmatprep.subr.bf16.mxu0 0
      %285 = vmatpush1.bf16.xpose.msra.mxu0 0
      %286 = vmatprep.subr.bf16.mxu0 0
      %287 = vmatpush1.bf16.xpose.msra.mxu0 0
      %288 = vmatprep.subr.bf16.mxu0 0
      %289 = vmatpush1.bf16.xpose.msra.mxu0 0
      %290 = vmatprep.subr.bf16.mxu0 0
      %291 = vmatpush1.bf16.xpose.msra.mxu0 0
      %292 = vmatprep.subr.bf16.mxu0 0
      %293 = vmatpush1.bf16.xpose.msra.mxu0 0
      %294 = vmatprep.subr.bf16.mxu0 0
      %295 = vmatpush1.bf16.xpose.msra.mxu0 0
      %296 = vmatprep.subr.bf16.mxu0 0
      %297 = vmatpush1.bf16.xpose.msra.mxu0 0
      %298 = vmatprep.subr.bf16.mxu0 0
      %299 = vmatpush1.bf16.xpose.msra.mxu0 0
      %300 = vmatprep.subr.bf16.mxu0 0
      %301 = vmatpush1.bf16.xpose.msra.mxu0 0
      %302 = vmatprep.mubr.bf16.mxu0 0
      %303 = vmatmul.mubr.bf16.gmra.mrb[0].mxu0 %v265
      %v304 = vpop.f32.mrb[0].mxu0
      %v305 = vadd.f32 0.0, %v304
      %v306 = vpop.f32.mrb[0].mxu0
      %v307 = vpop.f32.mrb[0].mxu0
      %v308 = vpop.f32.mrb[0].mxu0
      %309 = vdwg.mxu0
      %v311 = vsel %vm263, %v240, 0
      %v314 = vsel %vm263, %v248, 0
      %316 = vmatprep.subr.bf16.mxu0 0
      %317 = vmatpush1.bf16.xpose.msra.mxu0 %v314
      %318 = vmatprep.subr.bf16.mxu0 0
      %319 = vmatpush1.bf16.xpose.msra.mxu0 0
      %320 = vmatprep.subr.bf16.mxu0 0
      %321 = vmatpush1.bf16.xpose.msra.mxu0 0
      %322 = vmatprep.subr.bf16.mxu0 0
      %323 = vmatpush1.bf16.xpose.msra.mxu0 0
      %324 = vmatprep.subr.bf16.mxu0 0
      %325 = vmatpush1.bf16.xpose.msra.mxu0 0
      %326 = vmatprep.subr.bf16.mxu0 0
      %327 = vmatpush1.bf16.xpose.msra.mxu0 0
      %328 = vmatprep.subr.bf16.mxu0 0
      %329 = vmatpush1.bf16.xpose.msra.mxu0 0
      %330 = vmatprep.subr.bf16.mxu0 0
      %331 = vmatpush1.bf16.xpose.msra.mxu0 0
      %332 = vmatprep.subr.bf16.mxu0 0
      %333 = vmatpush1.bf16.xpose.msra.mxu0 0
      %334 = vmatprep.subr.bf16.mxu0 0
      %335 = vmatpush1.bf16.xpose.msra.mxu0 0
      %336 = vmatprep.subr.bf16.mxu0 0
      %337 = vmatpush1.bf16.xpose.msra.mxu0 0
      %338 = vmatprep.subr.bf16.mxu0 0
      %339 = vmatpush1.bf16.xpose.msra.mxu0 0
      %340 = vmatprep.subr.bf16.mxu0 0
      %341 = vmatpush1.bf16.xpose.msra.mxu0 0
      %342 = vmatprep.subr.bf16.mxu0 0
      %343 = vmatpush1.bf16.xpose.msra.mxu0 0
      %344 = vmatprep.subr.bf16.mxu0 0
      %345 = vmatpush1.bf16.xpose.msra.mxu0 0
      %346 = vmatprep.subr.bf16.mxu0 0
      %347 = vmatpush1.bf16.xpose.msra.mxu0 0
      %348 = vmatprep.mubr.bf16.mxu0 0
      %349 = vmatmul.mubr.bf16.gmra.mrb[0].mxu0 %v311
      %v350 = vpop.f32.mrb[0].mxu0
      %v351 = vadd.f32 0.0, %v350
      %v352 = vpop.f32.mrb[0].mxu0
      %v353 = vpop.f32.mrb[0].mxu0
      %v354 = vpop.f32.mrb[0].mxu0
      %355 = vdwg.mxu0
      %v357 = vsel %vm263, %v241, 0
      %v360 = vsel %vm263, %v249, 0
      %362 = vmatprep.subr.bf16.mxu0 0
      %363 = vmatpush1.bf16.xpose.msra.mxu0 %v360
      %364 = vmatprep.subr.bf16.mxu0 0
      %365 = vmatpush1.bf16.xpose.msra.mxu0 0
      %366 = vmatprep.subr.bf16.mxu0 0
      %367 = vmatpush1.bf16.xpose.msra.mxu0 0
      %368 = vmatprep.subr.bf16.mxu0 0
      %369 = vmatpush1.bf16.xpose.msra.mxu0 0
      %370 = vmatprep.subr.bf16.mxu0 0
      %371 = vmatpush1.bf16.xpose.msra.mxu0 0
      %372 = vmatprep.subr.bf16.mxu0 0
      %373 = vmatpush1.bf16.xpose.msra.mxu0 0
      %374 = vmatprep.subr.bf16.mxu0 0
      %375 = vmatpush1.bf16.xpose.msra.mxu0 0
      %376 = vmatprep.subr.bf16.mxu0 0
      %377 = vmatpush1.bf16.xpose.msra.mxu0 0
      %378 = vmatprep.subr.bf16.mxu0 0
      %379 = vmatpush1.bf16.xpose.msra.mxu0 0
      %380 = vmatprep.subr.bf16.mxu0 0
      %381 = vmatpush1.bf16.xpose.msra.mxu0 0
      %382 = vmatprep.subr.bf16.mxu0 0
      %383 = vmatpush1.bf16.xpose.msra.mxu0 0
      %384 = vmatprep.subr.bf16.mxu0 0
      %385 = vmatpush1.bf16.xpose.msra.mxu0 0
      %386 = vmatprep.subr.bf16.mxu0 0
      %387 = vmatpush1.bf16.xpose.msra.mxu0 0
      %388 = vmatprep.subr.bf16.mxu0 0
      %389 = vmatpush1.bf16.xpose.msra.mxu0 0
      %390 = vmatprep.subr.bf16.mxu0 0
      %391 = vmatpush1.bf16.xpose.msra.mxu0 0
      %392 = vmatprep.subr.bf16.mxu0 0
      %393 = vmatpush1.bf16.xpose.msra.mxu0 0
      %394 = vmatprep.mubr.bf16.mxu0 0
      %395 = vmatmul.mubr.bf16.gmra.mrb[0].mxu0 %v357
      %v396 = vpop.f32.mrb[0].mxu0
      %v397 = vadd.f32 0.0, %v396
      %v398 = vpop.f32.mrb[0].mxu0
      %v399 = vpop.f32.mrb[0].mxu0
      %v400 = vpop.f32.mrb[0].mxu0
      %401 = vdwg.mxu0
      %v403 = vsel %vm263, %v242, 0
      %v406 = vsel %vm263, %v250, 0
      %408 = vmatprep.subr.bf16.mxu0 0
      %409 = vmatpush1.bf16.xpose.msra.mxu0 %v406
      %410 = vmatprep.subr.bf16.mxu0 0
      %411 = vmatpush1.bf16.xpose.msra.mxu0 0
      %412 = vmatprep.subr.bf16.mxu0 0
      %413 = vmatpush1.bf16.xpose.msra.mxu0 0
      %414 = vmatprep.subr.bf16.mxu0 0
      %415 = vmatpush1.bf16.xpose.msra.mxu0 0
      %416 = vmatprep.subr.bf16.mxu0 0
      %417 = vmatpush1.bf16.xpose.msra.mxu0 0
      %418 = vmatprep.subr.bf16.mxu0 0
      %419 = vmatpush1.bf16.xpose.msra.mxu0 0
      %420 = vmatprep.subr.bf16.mxu0 0
      %421 = vmatpush1.bf16.xpose.msra.mxu0 0
      %422 = vmatprep.subr.bf16.mxu0 0
      %423 = vmatpush1.bf16.xpose.msra.mxu0 0
      %424 = vmatprep.subr.bf16.mxu0 0
      %425 = vmatpush1.bf16.xpose.msra.mxu0 0
      %426 = vmatprep.subr.bf16.mxu0 0
      %427 = vmatpush1.bf16.xpose.msra.mxu0 0
      %428 = vmatprep.subr.bf16.mxu0 0
      %429 = vmatpush1.bf16.xpose.msra.mxu0 0
      %430 = vmatprep.subr.bf16.mxu0 0
      %431 = vmatpush1.bf16.xpose.msra.mxu0 0
      %432 = vmatprep.subr.bf16.mxu0 0
      %433 = vmatpush1.bf16.xpose.msra.mxu0 0
      %434 = vmatprep.subr.bf16.mxu0 0
      %435 = vmatpush1.bf16.xpose.msra.mxu0 0
      %436 = vmatprep.subr.bf16.mxu0 0
      %437 = vmatpush1.bf16.xpose.msra.mxu0 0
      %438 = vmatprep.subr.bf16.mxu0 0
      %439 = vmatpush1.bf16.xpose.msra.mxu0 0
      %440 = vmatprep.mubr.bf16.mxu0 0
      %441 = vmatmul.mubr.bf16.gmra.mrb[0].mxu0 %v403
      %v442 = vpop.f32.mrb[0].mxu0
      %v443 = vadd.f32 0.0, %v442
      %v444 = vpop.f32.mrb[0].mxu0
      %v445 = vpop.f32.mrb[0].mxu0
      %v446 = vpop.f32.mrb[0].mxu0
      %447 = vdwg.mxu0
      %v449 = vsel %vm263, %v243, 0
      %v452 = vsel %vm263, %v251, 0
      %454 = vmatprep.subr.bf16.mxu0 0
      %455 = vmatpush1.bf16.xpose.msra.mxu0 %v452
      %456 = vmatprep.subr.bf16.mxu0 0
      %457 = vmatpush1.bf16.xpose.msra.mxu0 0
      %458 = vmatprep.subr.bf16.mxu0 0
      %459 = vmatpush1.bf16.xpose.msra.mxu0 0
      %460 = vmatprep.subr.bf16.mxu0 0
      %461 = vmatpush1.bf16.xpose.msra.mxu0 0
      %462 = vmatprep.subr.bf16.mxu0 0
      %463 = vmatpush1.bf16.xpose.msra.mxu0 0
      %464 = vmatprep.subr.bf16.mxu0 0
      %465 = vmatpush1.bf16.xpose.msra.mxu0 0
      %466 = vmatprep.subr.bf16.mxu0 0
      %467 = vmatpush1.bf16.xpose.msra.mxu0 0
      %468 = vmatprep.subr.bf16.mxu0 0
      %469 = vmatpush1.bf16.xpose.msra.mxu0 0
      %470 = vmatprep.subr.bf16.mxu0 0
      %471 = vmatpush1.bf16.xpose.msra.mxu0 0
      %472 = vmatprep.subr.bf16.mxu0 0
      %473 = vmatpush1.bf16.xpose.msra.mxu0 0
      %474 = vmatprep.subr.bf16.mxu0 0
      %475 = vmatpush1.bf16.xpose.msra.mxu0 0
      %476 = vmatprep.subr.bf16.mxu0 0
      %477 = vmatpush1.bf16.xpose.msra.mxu0 0
      %478 = vmatprep.subr.bf16.mxu0 0
      %479 = vmatpush1.bf16.xpose.msra.mxu0 0
      %480 = vmatprep.subr.bf16.mxu0 0
      %481 = vmatpush1.bf16.xpose.msra.mxu0 0
      %482 = vmatprep.subr.bf16.mxu0 0
      %483 = vmatpush1.bf16.xpose.msra.mxu0 0
      %484 = vmatprep.subr.bf16.mxu0 0
      %485 = vmatpush1.bf16.xpose.msra.mxu0 0
      %486 = vmatprep.mubr.bf16.mxu0 0
      %487 = vmatmul.mubr.bf16.gmra.mrb[0].mxu0 %v449
      %v488 = vpop.f32.mrb[0].mxu0
      %v489 = vadd.f32 0.0, %v488
      %v490 = vpop.f32.mrb[0].mxu0
      %v491 = vpop.f32.mrb[0].mxu0
      %v492 = vpop.f32.mrb[0].mxu0
      %493 = vdwg.mxu0
      %v495 = vsel %vm263, %v244, 0
      %v498 = vsel %vm263, %v252, 0
      %500 = vmatprep.subr.bf16.mxu0 0
      %501 = vmatpush1.bf16.xpose.msra.mxu0 %v498
      %502 = vmatprep.subr.bf16.mxu0 0
      %503 = vmatpush1.bf16.xpose.msra.mxu0 0
      %504 = vmatprep.subr.bf16.mxu0 0
      %505 = vmatpush1.bf16.xpose.msra.mxu0 0
      %506 = vmatprep.subr.bf16.mxu0 0
      %507 = vmatpush1.bf16.xpose.msra.mxu0 0
      %508 = vmatprep.subr.bf16.mxu0 0
      %509 = vmatpush1.bf16.xpose.msra.mxu0 0
      %510 = vmatprep.subr.bf16.mxu0 0
      %511 = vmatpush1.bf16.xpose.msra.mxu0 0
      %512 = vmatprep.subr.bf16.mxu0 0
      %513 = vmatpush1.bf16.xpose.msra.mxu0 0
      %514 = vmatprep.subr.bf16.mxu0 0
      %515 = vmatpush1.bf16.xpose.msra.mxu0 0
      %516 = vmatprep.subr.bf16.mxu0 0
      %517 = vmatpush1.bf16.xpose.msra.mxu0 0
      %518 = vmatprep.subr.bf16.mxu0 0
      %519 = vmatpush1.bf16.xpose.msra.mxu0 0
      %520 = vmatprep.subr.bf16.mxu0 0
      %521 = vmatpush1.bf16.xpose.msra.mxu0 0
      %522 = vmatprep.subr.bf16.mxu0 0
      %523 = vmatpush1.bf16.xpose.msra.mxu0 0
      %524 = vmatprep.subr.bf16.mxu0 0
      %525 = vmatpush1.bf16.xpose.msra.mxu0 0
      %526 = vmatprep.subr.bf16.mxu0 0
      %527 = vmatpush1.bf16.xpose.msra.mxu0 0
      %528 = vmatprep.subr.bf16.mxu0 0
      %529 = vmatpush1.bf16.xpose.msra.mxu0 0
      %530 = vmatprep.subr.bf16.mxu0 0
      %531 = vmatpush1.bf16.xpose.msra.mxu0 0
      %532 = vmatprep.mubr.bf16.mxu0 0
      %533 = vmatmul.mubr.bf16.gmra.mrb[0].mxu0 %v495
      %v534 = vpop.f32.mrb[0].mxu0
      %v535 = vadd.f32 0.0, %v534
      %v536 = vpop.f32.mrb[0].mxu0
      %v537 = vpop.f32.mrb[0].mxu0
      %v538 = vpop.f32.mrb[0].mxu0
      %539 = vdwg.mxu0
      %v541 = vsel %vm263, %v245, 0
      %v544 = vsel %vm263, %v253, 0
      %546 = vmatprep.subr.bf16.mxu0 0
      %547 = vmatpush1.bf16.xpose.msra.mxu0 %v544
      %548 = vmatprep.subr.bf16.mxu0 0
      %549 = vmatpush1.bf16.xpose.msra.mxu0 0
      %550 = vmatprep.subr.bf16.mxu0 0
      %551 = vmatpush1.bf16.xpose.msra.mxu0 0
      %552 = vmatprep.subr.bf16.mxu0 0
      %553 = vmatpush1.bf16.xpose.msra.mxu0 0
      %554 = vmatprep.subr.bf16.mxu0 0
      %555 = vmatpush1.bf16.xpose.msra.mxu0 0
      %556 = vmatprep.subr.bf16.mxu0 0
      %557 = vmatpush1.bf16.xpose.msra.mxu0 0
      %558 = vmatprep.subr.bf16.mxu0 0
      %559 = vmatpush1.bf16.xpose.msra.mxu0 0
      %560 = vmatprep.subr.bf16.mxu0 0
      %561 = vmatpush1.bf16.xpose.msra.mxu0 0
      %562 = vmatprep.subr.bf16.mxu0 0
      %563 = vmatpush1.bf16.xpose.msra.mxu0 0
      %564 = vmatprep.subr.bf16.mxu0 0
      %565 = vmatpush1.bf16.xpose.msra.mxu0 0
      %566 = vmatprep.subr.bf16.mxu0 0
      %567 = vmatpush1.bf16.xpose.msra.mxu0 0
      %568 = vmatprep.subr.bf16.mxu0 0
      %569 = vmatpush1.bf16.xpose.msra.mxu0 0
      %570 = vmatprep.subr.bf16.mxu0 0
      %571 = vmatpush1.bf16.xpose.msra.mxu0 0
      %572 = vmatprep.subr.bf16.mxu0 0
      %573 = vmatpush1.bf16.xpose.msra.mxu0 0
      %574 = vmatprep.subr.bf16.mxu0 0
      %575 = vmatpush1.bf16.xpose.msra.mxu0 0
      %576 = vmatprep.subr.bf16.mxu0 0
      %577 = vmatpush1.bf16.xpose.msra.mxu0 0
      %578 = vmatprep.mubr.bf16.mxu0 0
      %579 = vmatmul.mubr.bf16.gmra.mrb[0].mxu0 %v541
      %v580 = vpop.f32.mrb[0].mxu0
      %v581 = vadd.f32 0.0, %v580
      %v582 = vpop.f32.mrb[0].mxu0
      %v583 = vpop.f32.mrb[0].mxu0
      %v584 = vpop.f32.mrb[0].mxu0
      %585 = vdwg.mxu0
      %v587 = vsel %vm263, %v246, 0
      %v590 = vsel %vm263, %v254, 0
      %592 = vmatprep.subr.bf16.mxu0 0
      %593 = vmatpush1.bf16.xpose.msra.mxu0 %v590
      %594 = vmatprep.subr.bf16.mxu0 0
      %595 = vmatpush1.bf16.xpose.msra.mxu0 0
      %596 = vmatprep.subr.bf16.mxu0 0
      %597 = vmatpush1.bf16.xpose.msra.mxu0 0
      %598 = vmatprep.subr.bf16.mxu0 0
      %599 = vmatpush1.bf16.xpose.msra.mxu0 0
      %600 = vmatprep.subr.bf16.mxu0 0
      %601 = vmatpush1.bf16.xpose.msra.mxu0 0
      %602 = vmatprep.subr.bf16.mxu0 0
      %603 = vmatpush1.bf16.xpose.msra.mxu0 0
      %604 = vmatprep.subr.bf16.mxu0 0
      %605 = vmatpush1.bf16.xpose.msra.mxu0 0
      %606 = vmatprep.subr.bf16.mxu0 0
      %607 = vmatpush1.bf16.xpose.msra.mxu0 0
      %608 = vmatprep.subr.bf16.mxu0 0
      %609 = vmatpush1.bf16.xpose.msra.mxu0 0
      %610 = vmatprep.subr.bf16.mxu0 0
      %611 = vmatpush1.bf16.xpose.msra.mxu0 0
      %612 = vmatprep.subr.bf16.mxu0 0
      %613 = vmatpush1.bf16.xpose.msra.mxu0 0
      %614 = vmatprep.subr.bf16.mxu0 0
      %615 = vmatpush1.bf16.xpose.msra.mxu0 0
      %616 = vmatprep.subr.bf16.mxu0 0
      %617 = vmatpush1.bf16.xpose.msra.mxu0 0
      %618 = vmatprep.subr.bf16.mxu0 0
      %619 = vmatpush1.bf16.xpose.msra.mxu0 0
      %620 = vmatprep.subr.bf16.mxu0 0
      %621 = vmatpush1.bf16.xpose.msra.mxu0 0
      %622 = vmatprep.subr.bf16.mxu0 0
      %623 = vmatpush1.bf16.xpose.msra.mxu0 0
      %624 = vmatprep.mubr.bf16.mxu0 0
      %625 = vmatmul.mubr.bf16.gmra.mrb[0].mxu0 %v587
      %v626 = vpop.f32.mrb[0].mxu0
      %v627 = vadd.f32 0.0, %v626
      %v628 = vpop.f32.mrb[0].mxu0
      %v629 = vpop.f32.mrb[0].mxu0
      %v630 = vpop.f32.mrb[0].mxu0
      %631 = vdwg.mxu0
      %v632 = vmul.f32 %v305, 0.5
      %v633 = vmul.f32 %v351, 0.5
      %v634 = vmul.f32 %v397, 0.5
      %v635 = vmul.f32 %v443, 0.5
      %v636 = vmul.f32 %v489, 0.5
      %v637 = vmul.f32 %v535, 0.5
      %v638 = vmul.f32 %v581, 0.5
      %v639 = vmul.f32 %v627, 0.5
      %v640 = vld [vmem:[%s3] sm:$0xf]
      %v641 = vadd.f32 %v632, %v640
      %v642 = vadd.f32 %v633, %v640
      %v643 = vadd.f32 %v634, %v640
      %v644 = vadd.f32 %v635, %v640
      %v645 = vadd.f32 %v636, %v640
      %v646 = vadd.f32 %v637, %v640
      %v647 = vadd.f32 %v638, %v640
      %v648 = vadd.f32 %v639, %v640
      %vm649 = vcmask 27648
      %v650 = vsel %vm649, %v641, -inf
      %651 = vmax.xlane.f32.xlu0 %v650
      %v652 = vpop.xlane.xlu0 %651
      %v653 = vsel %vm649, %v642, -inf
      %654 = vmax.xlane.f32.xlu0 %v653
      %v655 = vpop.xlane.xlu0 %654
      %v656 = vsel %vm649, %v643, -inf
      %657 = vmax.xlane.f32.xlu0 %v656
      %v658 = vpop.xlane.xlu0 %657
      %v659 = vsel %vm649, %v644, -inf
      %660 = vmax.xlane.f32.xlu0 %v659
      %v661 = vpop.xlane.xlu0 %660
      %v662 = vsel %vm649, %v645, -inf
      %663 = vmax.xlane.f32.xlu0 %v662
      %v664 = vpop.xlane.xlu0 %663
      %v665 = vsel %vm649, %v646, -inf
      %666 = vmax.xlane.f32.xlu0 %v665
      %v667 = vpop.xlane.xlu0 %666
      %v668 = vsel %vm649, %v647, -inf
      %669 = vmax.xlane.f32.xlu0 %v668
      %v670 = vpop.xlane.xlu0 %669
      %v671 = vsel %vm649, %v648, -inf
      %672 = vmax.xlane.f32.xlu0 %v671
      %v673 = vpop.xlane.xlu0 %672
      %v674 = vsub.f32 %v641, %v652
      %v675 = vsub.f32 %v642, %v655
      %v676 = vsub.f32 %v643, %v658
      %v677 = vsub.f32 %v644, %v661
      %v678 = vsub.f32 %v645, %v664
      %v679 = vsub.f32 %v646, %v667
      %v680 = vsub.f32 %v647, %v670
      %v681 = vsub.f32 %v648, %v673
      %v682 = vmul.f32 %v674, 1.442695
      %v683 = vpow.pop %v682
      %v684 = vmul.f32 %v675, 1.442695
      %v685 = vpow.pop %v684
      %v686 = vmul.f32 %v676, 1.442695
      %v687 = vpow.pop %v686
      %v688 = vmul.f32 %v677, 1.442695
      %v689 = vpow.pop %v688
      %v690 = vmul.f32 %v678, 1.442695
      %v691 = vpow.pop %v690
      %v692 = vmul.f32 %v679, 1.442695
      %v693 = vpow.pop %v692
      %v694 = vmul.f32 %v680, 1.442695
      %v695 = vpow.pop %v694
      %v696 = vmul.f32 %v681, 1.442695
      %v697 = vpow.pop %v696
      %v698 = vsel %vm649, %v683, 0.0
      %699 = vadd.xlane.f32.xlu0 %v698
      %v700 = vpop.xlane.xlu0 %699
      %v701 = vsel %vm649, %v685, 0.0
      %702 = vadd.xlane.f32.xlu0 %v701
      %v703 = vpop.xlane.xlu0 %702
      %v704 = vsel %vm649, %v687, 0.0
      %705 = vadd.xlane.f32.xlu0 %v704
      %v706 = vpop.xlane.xlu0 %705
      %v707 = vsel %vm649, %v689, 0.0
      %708 = vadd.xlane.f32.xlu0 %v707
      %v709 = vpop.xlane.xlu0 %708
      %v710 = vsel %vm649, %v691, 0.0
      %711 = vadd.xlane.f32.xlu0 %v710
      %v712 = vpop.xlane.xlu0 %711
      %v713 = vsel %vm649, %v693, 0.0
      %714 = vadd.xlane.f32.xlu0 %v713
      %v715 = vpop.xlane.xlu0 %714
      %v716 = vsel %vm649, %v695, 0.0
      %717 = vadd.xlane.f32.xlu0 %v716
      %v718 = vpop.xlane.xlu0 %717
      %v719 = vsel %vm649, %v697, 0.0
      %720 = vadd.xlane.f32.xlu0 %v719
      %v721 = vpop.xlane.xlu0 %720
      %v722 = vrcp.pop %v700
      %v723 = vrcp.pop %v703
      %v724 = vrcp.pop %v706
      %v725 = vrcp.pop %v709
      %v726 = vrcp.pop %v712
      %v727 = vrcp.pop %v715
      %v728 = vrcp.pop %v718
      %v729 = vrcp.pop %v721
      %v730 = vmul.f32 %v683, %v722
      %v731 = vmul.f32 %v685, %v723
      %v732 = vmul.f32 %v687, %v724
      %v733 = vmul.f32 %v689, %v725
      %v734 = vmul.f32 %v691, %v726
      %v735 = vmul.f32 %v693, %v727
      %v736 = vmul.f32 %v695, %v728
      %v737 = vmul.f32 %v697, %v729
      %v738 = vpack.c.bf16 %v730, %v730
      %v739 = vpack.c.bf16 %v731, %v731
      %v740 = vpack.c.bf16 %v732, %v732
      %v741 = vpack.c.bf16 %v733, %v733
      %v742 = vpack.c.bf16 %v734, %v734
      %v743 = vpack.c.bf16 %v735, %v735
      %v744 = vpack.c.bf16 %v736, %v736
      %v745 = vpack.c.bf16 %v737, %v737
      %v747 = vsel %vm263, %v738, 0
      %vm749 = vcmask 1041408
      %v751 = vsel %vm749, %v255, 0
      %753 = vmatprep.subr.bf16.mxu0 0
      %754 = vmatpush1.bf16.msra.mxu0 %v751
      %755 = vmatprep.subr.bf16.mxu0 0
      %756 = vmatpush1.bf16.msra.mxu0 0
      %757 = vmatprep.subr.bf16.mxu0 0
      %758 = vmatpush1.bf16.msra.mxu0 0
      %759 = vmatprep.subr.bf16.mxu0 0
      %760 = vmatpush1.bf16.msra.mxu0 0
      %761 = vmatprep.subr.bf16.mxu0 0
      %762 = vmatpush1.bf16.msra.mxu0 0
      %763 = vmatprep.subr.bf16.mxu0 0
      %764 = vmatpush1.bf16.msra.mxu0 0
      %765 = vmatprep.subr.bf16.mxu0 0
      %766 = vmatpush1.bf16.msra.mxu0 0
      %767 = vmatprep.subr.bf16.mxu0 0
      %768 = vmatpush1.bf16.msra.mxu0 0
      %769 = vmatprep.subr.bf16.mxu0 0
      %770 = vmatpush1.bf16.msra.mxu0 0
      %771 = vmatprep.subr.bf16.mxu0 0
      %772 = vmatpush1.bf16.msra.mxu0 0
      %773 = vmatprep.subr.bf16.mxu0 0
      %774 = vmatpush1.bf16.msra.mxu0 0
      %775 = vmatprep.subr.bf16.mxu0 0
      %776 = vmatpush1.bf16.msra.mxu0 0
      %777 = vmatprep.subr.bf16.mxu0 0
      %778 = vmatpush1.bf16.msra.mxu0 0
      %779 = vmatprep.subr.bf16.mxu0 0
      %780 = vmatpush1.bf16.msra.mxu0 0
      %781 = vmatprep.subr.bf16.mxu0 0
      %782 = vmatpush1.bf16.msra.mxu0 0
      %783 = vmatprep.subr.bf16.mxu0 0
      %784 = vmatpush1.bf16.msra.mxu0 0
      %785 = vmatprep.mubr.bf16.mxu0 0
      %786 = vmatmul.mubr.bf16.gmra.mrb[0].mxu0 %v747
      %v787 = vpop.f32.mrb[0].mxu0
      %v788 = vadd.f32 0.0, %v787
      %v789 = vpop.f32.mrb[0].mxu0
      %v790 = vpop.f32.mrb[0].mxu0
      %v791 = vpop.f32.mrb[0].mxu0
      %792 = vdwg.mxu0
      %v794 = vsel %vm263, %v739, 0
      %v797 = vsel %vm749, %v256, 0
      %799 = vmatprep.subr.bf16.mxu0 0
      %800 = vmatpush1.bf16.msra.mxu0 %v797
      %801 = vmatprep.subr.bf16.mxu0 0
      %802 = vmatpush1.bf16.msra.mxu0 0
      %803 = vmatprep.subr.bf16.mxu0 0
      %804 = vmatpush1.bf16.msra.mxu0 0
      %805 = vmatprep.subr.bf16.mxu0 0
      %806 = vmatpush1.bf16.msra.mxu0 0
      %807 = vmatprep.subr.bf16.mxu0 0
      %808 = vmatpush1.bf16.msra.mxu0 0
      %809 = vmatprep.subr.bf16.mxu0 0
      %810 = vmatpush1.bf16.msra.mxu0 0
      %811 = vmatprep.subr.bf16.mxu0 0
      %812 = vmatpush1.bf16.msra.mxu0 0
      %813 = vmatprep.subr.bf16.mxu0 0
      %814 = vmatpush1.bf16.msra.mxu0 0
      %815 = vmatprep.subr.bf16.mxu0 0
      %816 = vmatpush1.bf16.msra.mxu0 0
      %817 = vmatprep.subr.bf16.mxu0 0
      %818 = vmatpush1.bf16.msra.mxu0 0
      %819 = vmatprep.subr.bf16.mxu0 0
      %820 = vmatpush1.bf16.msra.mxu0 0
      %821 = vmatprep.subr.bf16.mxu0 0
      %822 = vmatpush1.bf16.msra.mxu0 0
      %823 = vmatprep.subr.bf16.mxu0 0
      %824 = vmatpush1.bf16.msra.mxu0 0
      %825 = vmatprep.subr.bf16.mxu0 0
      %826 = vmatpush1.bf16.msra.mxu0 0
      %827 = vmatprep.subr.bf16.mxu0 0
      %828 = vmatpush1.bf16.msra.mxu0 0
      %829 = vmatprep.subr.bf16.mxu0 0
      %830 = vmatpush1.bf16.msra.mxu0 0
      %831 = vmatprep.mubr.bf16.mxu0 0
      %832 = vmatmul.mubr.bf16.gmra.mrb[0].mxu0 %v794
      %v833 = vpop.f32.mrb[0].mxu0
      %v834 = vadd.f32 0.0, %v833
      %v835 = vpop.f32.mrb[0].mxu0
      %v836 = vpop.f32.mrb[0].mxu0
      %v837 = vpop.f32.mrb[0].mxu0
      %838 = vdwg.mxu0
      %v840 = vsel %vm263, %v740, 0
      %v843 = vsel %vm749, %v257, 0
      %845 = vmatprep.subr.bf16.mxu0 0
      %846 = vmatpush1.bf16.msra.mxu0 %v843
      %847 = vmatprep.subr.bf16.mxu0 0
      %848 = vmatpush1.bf16.msra.mxu0 0
      %849 = vmatprep.subr.bf16.mxu0 0
      %850 = vmatpush1.bf16.msra.mxu0 0
      %851 = vmatprep.subr.bf16.mxu0 0
      %852 = vmatpush1.bf16.msra.mxu0 0
      %853 = vmatprep.subr.bf16.mxu0 0
      %854 = vmatpush1.bf16.msra.mxu0 0
      %855 = vmatprep.subr.bf16.mxu0 0
      %856 = vmatpush1.bf16.msra.mxu0 0
      %857 = vmatprep.subr.bf16.mxu0 0
      %858 = vmatpush1.bf16.msra.mxu0 0
      %859 = vmatprep.subr.bf16.mxu0 0
      %860 = vmatpush1.bf16.msra.mxu0 0
      %861 = vmatprep.subr.bf16.mxu0 0
      %862 = vmatpush1.bf16.msra.mxu0 0
      %863 = vmatprep.subr.bf16.mxu0 0
      %864 = vmatpush1.bf16.msra.mxu0 0
      %865 = vmatprep.subr.bf16.mxu0 0
      %866 = vmatpush1.bf16.msra.mxu0 0
      %867 = vmatprep.subr.bf16.mxu0 0
      %868 = vmatpush1.bf16.msra.mxu0 0
      %869 = vmatprep.subr.bf16.mxu0 0
      %870 = vmatpush1.bf16.msra.mxu0 0
      %871 = vmatprep.subr.bf16.mxu0 0
      %872 = vmatpush1.bf16.msra.mxu0 0
      %873 = vmatprep.subr.bf16.mxu0 0
      %874 = vmatpush1.bf16.msra.mxu0 0
      %875 = vmatprep.subr.bf16.mxu0 0
      %876 = vmatpush1.bf16.msra.mxu0 0
      %877 = vmatprep.mubr.bf16.mxu0 0
      %878 = vmatmul.mubr.bf16.gmra.mrb[0].mxu0 %v840
      %v879 = vpop.f32.mrb[0].mxu0
      %v880 = vadd.f32 0.0, %v879
      %v881 = vpop.f32.mrb[0].mxu0
      %v882 = vpop.f32.mrb[0].mxu0
      %v883 = vpop.f32.mrb[0].mxu0
      %884 = vdwg.mxu0
      %v886 = vsel %vm263, %v741, 0
      %v889 = vsel %vm749, %v258, 0
      %891 = vmatprep.subr.bf16.mxu0 0
      %892 = vmatpush1.bf16.msra.mxu0 %v889
      %893 = vmatprep.subr.bf16.mxu0 0
      %894 = vmatpush1.bf16.msra.mxu0 0
      %895 = vmatprep.subr.bf16.mxu0 0
      %896 = vmatpush1.bf16.msra.mxu0 0
      %897 = vmatprep.subr.bf16.mxu0 0
      %898 = vmatpush1.bf16.msra.mxu0 0
      %899 = vmatprep.subr.bf16.mxu0 0
      %900 = vmatpush1.bf16.msra.mxu0 0
      %901 = vmatprep.subr.bf16.mxu0 0
      %902 = vmatpush1.bf16.msra.mxu0 0
      %903 = vmatprep.subr.bf16.mxu0 0
      %904 = vmatpush1.bf16.msra.mxu0 0
      %905 = vmatprep.subr.bf16.mxu0 0
      %906 = vmatpush1.bf16.msra.mxu0 0
      %907 = vmatprep.subr.bf16.mxu0 0
      %908 = vmatpush1.bf16.msra.mxu0 0
      %909 = vmatprep.subr.bf16.mxu0 0
      %910 = vmatpush1.bf16.msra.mxu0 0
      %911 = vmatprep.subr.bf16.mxu0 0
      %912 = vmatpush1.bf16.msra.mxu0 0
      %913 = vmatprep.subr.bf16.mxu0 0
      %914 = vmatpush1.bf16.msra.mxu0 0
      %915 = vmatprep.subr.bf16.mxu0 0
      %916 = vmatpush1.bf16.msra.mxu0 0
      %917 = vmatprep.subr.bf16.mxu0 0
      %918 = vmatpush1.bf16.msra.mxu0 0
      %919 = vmatprep.subr.bf16.mxu0 0
      %920 = vmatpush1.bf16.msra.mxu0 0
      %921 = vmatprep.subr.bf16.mxu0 0
      %922 = vmatpush1.bf16.msra.mxu0 0
      %923 = vmatprep.mubr.bf16.mxu0 0
      %924 = vmatmul.mubr.bf16.gmra.mrb[0].mxu0 %v886
      %v925 = vpop.f32.mrb[0].mxu0
      %v926 = vadd.f32 0.0, %v925
      %v927 = vpop.f32.mrb[0].mxu0
      %v928 = vpop.f32.mrb[0].mxu0
      %v929 = vpop.f32.mrb[0].mxu0
      %930 = vdwg.mxu0
      %v932 = vsel %vm263, %v742, 0
      %v935 = vsel %vm749, %v259, 0
      %937 = vmatprep.subr.bf16.mxu0 0
      %938 = vmatpush1.bf16.msra.mxu0 %v935
      %939 = vmatprep.subr.bf16.mxu0 0
      %940 = vmatpush1.bf16.msra.mxu0 0
      %941 = vmatprep.subr.bf16.mxu0 0
      %942 = vmatpush1.bf16.msra.mxu0 0
      %943 = vmatprep.subr.bf16.mxu0 0
      %944 = vmatpush1.bf16.msra.mxu0 0
      %945 = vmatprep.subr.bf16.mxu0 0
      %946 = vmatpush1.bf16.msra.mxu0 0
      %947 = vmatprep.subr.bf16.mxu0 0
      %948 = vmatpush1.bf16.msra.mxu0 0
      %949 = vmatprep.subr.bf16.mxu0 0
      %950 = vmatpush1.bf16.msra.mxu0 0
      %951 = vmatprep.subr.bf16.mxu0 0
      %952 = vmatpush1.bf16.msra.mxu0 0
      %953 = vmatprep.subr.bf16.mxu0 0
      %954 = vmatpush1.bf16.msra.mxu0 0
      %955 = vmatprep.subr.bf16.mxu0 0
      %956 = vmatpush1.bf16.msra.mxu0 0
      %957 = vmatprep.subr.bf16.mxu0 0
      %958 = vmatpush1.bf16.msra.mxu0 0
      %959 = vmatprep.subr.bf16.mxu0 0
      %960 = vmatpush1.bf16.msra.mxu0 0
      %961 = vmatprep.subr.bf16.mxu0 0
      %962 = vmatpush1.bf16.msra.mxu0 0
      %963 = vmatprep.subr.bf16.mxu0 0
      %964 = vmatpush1.bf16.msra.mxu0 0
      %965 = vmatprep.subr.bf16.mxu0 0
      %966 = vmatpush1.bf16.msra.mxu0 0
      %967 = vmatprep.subr.bf16.mxu0 0
      %968 = vmatpush1.bf16.msra.mxu0 0
      %969 = vmatprep.mubr.bf16.mxu0 0
      %970 = vmatmul.mubr.bf16.gmra.mrb[0].mxu0 %v932
      %v971 = vpop.f32.mrb[0].mxu0
      %v972 = vadd.f32 0.0, %v971
      %v973 = vpop.f32.mrb[0].mxu0
      %v974 = vpop.f32.mrb[0].mxu0
      %v975 = vpop.f32.mrb[0].mxu0
      %976 = vdwg.mxu0
      %v978 = vsel %vm263, %v743, 0
      %v981 = vsel %vm749, %v260, 0
      %983 = vmatprep.subr.bf16.mxu0 0
      %984 = vmatpush1.bf16.msra.mxu0 %v981
      %985 = vmatprep.subr.bf16.mxu0 0
      %986 = vmatpush1.bf16.msra.mxu0 0
      %987 = vmatprep.subr.bf16.mxu0 0
      %988 = vmatpush1.bf16.msra.mxu0 0
      %989 = vmatprep.subr.bf16.mxu0 0
      %990 = vmatpush1.bf16.msra.mxu0 0
      %991 = vmatprep.subr.bf16.mxu0 0
      %992 = vmatpush1.bf16.msra.mxu0 0
      %993 = vmatprep.subr.bf16.mxu0 0
      %994 = vmatpush1.bf16.msra.mxu0 0
      %995 = vmatprep.subr.bf16.mxu0 0
      %996 = vmatpush1.bf16.msra.mxu0 0
      %997 = vmatprep.subr.bf16.mxu0 0
      %998 = vmatpush1.bf16.msra.mxu0 0
      %999 = vmatprep.subr.bf16.mxu0 0
      %1000 = vmatpush1.bf16.msra.mxu0 0
      %1001 = vmatprep.subr.bf16.mxu0 0
      %1002 = vmatpush1.bf16.msra.mxu0 0
      %1003 = vmatprep.subr.bf16.mxu0 0
      %1004 = vmatpush1.bf16.msra.mxu0 0
      %1005 = vmatprep.subr.bf16.mxu0 0
      %1006 = vmatpush1.bf16.msra.mxu0 0
      %1007 = vmatprep.subr.bf16.mxu0 0
      %1008 = vmatpush1.bf16.msra.mxu0 0
      %1009 = vmatprep.subr.bf16.mxu0 0
      %1010 = vmatpush1.bf16.msra.mxu0 0
      %1011 = vmatprep.subr.bf16.mxu0 0
      %1012 = vmatpush1.bf16.msra.mxu0 0
      %1013 = vmatprep.subr.bf16.mxu0 0
      %1014 = vmatpush1.bf16.msra.mxu0 0
      %1015 = vmatprep.mubr.bf16.mxu0 0
      %1016 = vmatmul.mubr.bf16.gmra.mrb[0].mxu0 %v978
      %v1017 = vpop.f32.mrb[0].mxu0
      %v1018 = vadd.f32 0.0, %v1017
      %v1019 = vpop.f32.mrb[0].mxu0
      %v1020 = vpop.f32.mrb[0].mxu0
      %v1021 = vpop.f32.mrb[0].mxu0
      %1022 = vdwg.mxu0
      %v1024 = vsel %vm263, %v744, 0
      %v1027 = vsel %vm749, %v261, 0
      %1029 = vmatprep.subr.bf16.mxu0 0
      %1030 = vmatpush1.bf16.msra.mxu0 %v1027
      %1031 = vmatprep.subr.bf16.mxu0 0
      %1032 = vmatpush1.bf16.msra.mxu0 0
      %1033 = vmatprep.subr.bf16.mxu0 0
      %1034 = vmatpush1.bf16.msra.mxu0 0
      %1035 = vmatprep.subr.bf16.mxu0 0
      %1036 = vmatpush1.bf16.msra.mxu0 0
      %1037 = vmatprep.subr.bf16.mxu0 0
      %1038 = vmatpush1.bf16.msra.mxu0 0
      %1039 = vmatprep.subr.bf16.mxu0 0
      %1040 = vmatpush1.bf16.msra.mxu0 0
      %1041 = vmatprep.subr.bf16.mxu0 0
      %1042 = vmatpush1.bf16.msra.mxu0 0
      %1043 = vmatprep.subr.bf16.mxu0 0
      %1044 = vmatpush1.bf16.msra.mxu0 0
      %1045 = vmatprep.subr.bf16.mxu0 0
      %1046 = vmatpush1.bf16.msra.mxu0 0
      %1047 = vmatprep.subr.bf16.mxu0 0
      %1048 = vmatpush1.bf16.msra.mxu0 0
      %1049 = vmatprep.subr.bf16.mxu0 0
      %1050 = vmatpush1.bf16.msra.mxu0 0
      %1051 = vmatprep.subr.bf16.mxu0 0
      %1052 = vmatpush1.bf16.msra.mxu0 0
      %1053 = vmatprep.subr.bf16.mxu0 0
      %1054 = vmatpush1.bf16.msra.mxu0 0
      %1055 = vmatprep.subr.bf16.mxu0 0
      %1056 = vmatpush1.bf16.msra.mxu0 0
      %1057 = vmatprep.subr.bf16.mxu0 0
      %1058 = vmatpush1.bf16.msra.mxu0 0
      %1059 = vmatprep.subr.bf16.mxu0 0
      %1060 = vmatpush1.bf16.msra.mxu0 0
      %1061 = vmatprep.mubr.bf16.mxu0 0
      %1062 = vmatmul.mubr.bf16.gmra.mrb[0].mxu0 %v1024
      %v1063 = vpop.f32.mrb[0].mxu0
      %v1064 = vadd.f32 0.0, %v1063
      %v1065 = vpop.f32.mrb[0].mxu0
      %v1066 = vpop.f32.mrb[0].mxu0
      %v1067 = vpop.f32.mrb[0].mxu0
      %1068 = vdwg.mxu0
      %v1070 = vsel %vm263, %v745, 0
      %v1073 = vsel %vm749, %v262, 0
      %1075 = vmatprep.subr.bf16.mxu0 0
      %1076 = vmatpush1.bf16.msra.mxu0 %v1073
      %1077 = vmatprep.subr.bf16.mxu0 0
      %1078 = vmatpush1.bf16.msra.mxu0 0
      %1079 = vmatprep.subr.bf16.mxu0 0
      %1080 = vmatpush1.bf16.msra.mxu0 0
      %1081 = vmatprep.subr.bf16.mxu0 0
      %1082 = vmatpush1.bf16.msra.mxu0 0
      %1083 = vmatprep.subr.bf16.mxu0 0
      %1084 = vmatpush1.bf16.msra.mxu0 0
      %1085 = vmatprep.subr.bf16.mxu0 0
      %1086 = vmatpush1.bf16.msra.mxu0 0
      %1087 = vmatprep.subr.bf16.mxu0 0
      %1088 = vmatpush1.bf16.msra.mxu0 0
      %1089 = vmatprep.subr.bf16.mxu0 0
      %1090 = vmatpush1.bf16.msra.mxu0 0
      %1091 = vmatprep.subr.bf16.mxu0 0
      %1092 = vmatpush1.bf16.msra.mxu0 0
      %1093 = vmatprep.subr.bf16.mxu0 0
      %1094 = vmatpush1.bf16.msra.mxu0 0
      %1095 = vmatprep.subr.bf16.mxu0 0
      %1096 = vmatpush1.bf16.msra.mxu0 0
      %1097 = vmatprep.subr.bf16.mxu0 0
      %1098 = vmatpush1.bf16.msra.mxu0 0
      %1099 = vmatprep.subr.bf16.mxu0 0
      %1100 = vmatpush1.bf16.msra.mxu0 0
      %1101 = vmatprep.subr.bf16.mxu0 0
      %1102 = vmatpush1.bf16.msra.mxu0 0
      %1103 = vmatprep.subr.bf16.mxu0 0
      %1104 = vmatpush1.bf16.msra.mxu0 0
      %1105 = vmatprep.subr.bf16.mxu0 0
      %1106 = vmatpush1.bf16.msra.mxu0 0
      %1107 = vmatprep.mubr.bf16.mxu0 0
      %1108 = vmatmul.mubr.bf16.gmra.mrb[0].mxu0 %v1070
      %v1109 = vpop.f32.mrb[0].mxu0
      %v1110 = vadd.f32 0.0, %v1109
      %v1111 = vpop.f32.mrb[0].mxu0
      %v1112 = vpop.f32.mrb[0].mxu0
      %v1113 = vpop.f32.mrb[0].mxu0
      %1114 = vdwg.mxu0
      %1115 = vst.msk [vmem:[%s237] sm:$0xf] %vm649, %v788
      %1116 = vst.msk [vmem:[%s237 + $0x4] sm:$0xf] %vm649, %v834
      %1117 = vst.msk [vmem:[%s237 + $0x8] sm:$0xf] %vm649, %v880
      %1118 = vst.msk [vmem:[%s237 + $0xc] sm:$0xf] %vm649, %v926
      %1119 = vst.msk [vmem:[%s237 + $0x10] sm:$0xf] %vm649, %v972
      %1120 = vst.msk [vmem:[%s237 + $0x14] sm:$0xf] %vm649, %v1018
      %1121 = vst.msk [vmem:[%s237 + $0x18] sm:$0xf] %vm649, %v1064
      %1122 = vst.msk [vmem:[%s237 + $0x1c] sm:$0xf] %vm649, %v1110
      %p1123 = scmp.lt.s32.totalorder %s15, 1
      %s1124 = scalar_select %p1123, %s15, 1
      %s1125 = smul.addr %s1124, 8
      %s1126 = smul.addr %s1125, 4
      %s1127 = scalar_lea.vmem %s4, %s1126
      // Predicated region
      $region37: #{videobert_decoder_forward.44} parent=35 // pred_check
        %p1128 = pneg %p132
      $region38: #{videobert_decoder_forward.44} parent=35 // pred_check_branch
        %1130 = sbr.rel (%p1128) target = $region40
      $region39: #{videobert_decoder_forward.44} parent=35 // pred_region
        _
      $region40: #{videobert_decoder_forward.44} parent=35 // pred_fallthru
        _
    $region36: #{videobert_decoder_forward.44} parent=5 // pred_fallthru
      _
    %p1131 = scmp.le.s32.totalorder 2, %s10
    // Predicated region
    $region41: #{videobert_decoder_forward.44} parent=5 // pred_check
      %p1132 = pneg %p1131
    $region42: #{videobert_decoder_forward.44} parent=5 // pred_check_branch
      %1134 = sbr.rel (%p1132) target = $region44
    $region43: #{videobert_decoder_forward.44} parent=5 // pred_region
      %s1135 = ssub.s32 %s10, 2
      // Predicated region
      $region45: #{videobert_decoder_forward.44} parent=43 // pred_check
        %p1136 = pneg %p138
      $region46: #{videobert_decoder_forward.44} parent=43 // pred_check_branch
        %1138 = sbr.rel (%p1136) target = $region48
      $region47: #{videobert_decoder_forward.44} parent=43 // pred_region
        %p1139 = scmp.lt.s32.totalorder %s16, 1
        %s1140 = scalar_select %p1139, %s16, 1
        %s1141 = smul.addr %s1140, 8
        %s1142 = smul.addr %s1141, 4
        %s1143 = scalar_lea.vmem %s4, %s1142
      $region48: #{videobert_decoder_forward.44} parent=43 // pred_fallthru
        _
    $region44: #{videobert_decoder_forward.44} parent=5 // pred_fallthru
      _
  $region6: #{videobert_decoder_forward.44} parent=0 // loop_footer
    %s14 = sadd.s32 1, %s10
  $region7: #{videobert_decoder_forward.44} parent=0 // loop_footer_branch
    %9 = sbr.rel target = $region3
  $region8: #{videobert_decoder_forward.44} parent=0 // loop_exit
    _

// kernel: videobert_decoder_forward.46
$region0: #{videobert_decoder_forward.46}
  #allocation0 [shape = 'u32[]', space=smem, size = 0x4, offset = 0x4, fixed_abs, tag = 'smem constant byte address 0x4 - core index']
  #allocation1 [shape = 'u32[144,128]{1,0:T(1,128)}', space=vmem, size = 0x12000, scoped, tag = 'internal scratch']
  %s0 = inlined_call_operand.vmem [shape: f32[8,32], index: 0, kind: input, shape index: {}]
  %s1 = inlined_call_operand.vmem [shape: f32[8,32], index: 1, kind: input, shape index: {}]
  %s2 = inlined_call_operand.hbm [shape: f32[1,32], index: 2, kind: input, shape index: {}]
  %s3 = inlined_call_operand.hbm [shape: f32[1,32], index: 3, kind: input, shape index: {}]
  %s4 = inlined_call_operand.vmem [shape: f32[8,32], index: 4, kind: output, shape index: {}]
  %s5 = sld [smem:[#allocation0]]
  $region34: #{videobert_decoder_forward.46} parent=0
    _
  %s7 = ssub.s32 1, %s5
  %s8 = scalar_select 0, %s7, %s5
  $region1: #{videobert_decoder_forward.46} parent=0
    #allocation2 [shape = 'u8[512]{0}', space=vmem, size = 0x400, scoped, tag = 'input window, operand 2, single buffered']
    #allocation3 [shape = 's32[1]{0}', space=sflag, size = 0x4, scoped, tag = 'scoped memory for videobert_decoder_forward.46']
    #allocation4 [shape = 'u8[512]{0}', space=vmem, size = 0x400, scoped, tag = 'input window, operand 3, single buffered']
    #allocation5 [shape = 's32[1]{0}', space=sflag, size = 0x4, scoped, tag = 'scoped memory for videobert_decoder_forward.46']
    %9 = vsyncpa [#allocation3], 0
    %10 = vsyncpa [#allocation5], 0
    // Predicated region
    $region2: #{videobert_decoder_forward.46} parent=1 // pred_check
      _
    $region3: #{videobert_decoder_forward.46} parent=1 // pred_check_branch
      %12 = sbr.rel (0) target = $region5
    $region4: #{videobert_decoder_forward.46} parent=1 // pred_region
      _
    $region5: #{videobert_decoder_forward.46} parent=1 // pred_fallthru
      _
    // Predicated region
    $region6: #{videobert_decoder_forward.46} parent=1 // pred_check
      _
    $region7: #{videobert_decoder_forward.46} parent=1 // pred_check_branch
      %14 = sbr.rel (0) target = $region9
    $region8: #{videobert_decoder_forward.46} parent=1 // pred_region
      _
    $region9: #{videobert_decoder_forward.46} parent=1 // pred_fallthru
      _
    // Predicated region
    $region10: #{videobert_decoder_forward.46} parent=1 // pred_check
      _
    $region11: #{videobert_decoder_forward.46} parent=1 // pred_check_branch
      %16 = sbr.rel (0) target = $region13
    $region12: #{videobert_decoder_forward.46} parent=1 // pred_region
      %s18 = ssub.s32 16, 16
      %19 = vsyncadd [#allocation3], %s18
      %s21 = sshll.u32 [#allocation2], 4
      %s22 = int_to_ptr.vmem [resolvable:$true] %s21
      %24 = dma.hbm_to_vmem [thread:$0]  %s2, 16, %s22, [#allocation3]
    $region13: #{videobert_decoder_forward.46} parent=1 // pred_fallthru
      _
    // Predicated region
    $region14: #{videobert_decoder_forward.46} parent=1 // pred_check
      _
    $region15: #{videobert_decoder_forward.46} parent=1 // pred_check_branch
      %26 = sbr.rel (0) target = $region17
    $region16: #{videobert_decoder_forward.46} parent=1 // pred_region
      %s28 = ssub.s32 16, 16
      %29 = vsyncadd [#allocation5], %s28
      %s31 = sshll.u32 [#allocation4], 4
      %s32 = int_to_ptr.vmem [resolvable:$true] %s31
      %34 = dma.hbm_to_vmem [thread:$0]  %s3, 16, %s32, [#allocation5]
    $region17: #{videobert_decoder_forward.46} parent=1 // pred_fallthru
      _
    // Predicated region
    $region18: #{videobert_decoder_forward.46} parent=1 // pred_check
      _
    $region19: #{videobert_decoder_forward.46} parent=1 // pred_check_branch
      %36 = sbr.rel (0) target = $region21
    $region20: #{videobert_decoder_forward.46} parent=1 // pred_region
      %37 = dma.done [#allocation3], 16
    $region21: #{videobert_decoder_forward.46} parent=1 // pred_fallthru
      _
    // Predicated region
    $region22: #{videobert_decoder_forward.46} parent=1 // pred_check
      _
    $region23: #{videobert_decoder_forward.46} parent=1 // pred_check_branch
      %39 = sbr.rel (0) target = $region25
    $region24: #{videobert_decoder_forward.46} parent=1 // pred_region
      %40 = dma.done [#allocation5], 16
    $region25: #{videobert_decoder_forward.46} parent=1 // pred_fallthru
      _
    %v41 = vld [vmem:[%s0] sm:$0xff]
    %v42 = vld [vmem:[%s1] sm:$0xff]
    %v43 = vadd.f32 %v41, %v42
    %vm44 = vcmask 261120
    %v45 = vsel %vm44, %v43, 0.0
    %46 = vadd.xlane.f32.xlu0 %v45
    %v47 = vpop.xlane.xlu0 %46
    %v48 = vrcp.pop 32.0
    %v49 = vmul.f32 %v47, %v48
    %v50 = vsub.f32 %v43, %v49
    %v51 = vmul.f32 %v50, %v50
    %v52 = vsel %vm44, %v51, 0.0
    %53 = vadd.xlane.f32.xlu0 %v52
    %v54 = vpop.xlane.xlu0 %53
    %v55 = vmul.f32 %v54, %v48
    %v56 = vadd.f32 %v55, 1e-05
    %v57 = vrsqrt.pop %v56
    %v58 = vmul.f32 %v50, %v57
    %v59 = vld [vmem:[#allocation2] sm:$0x1]
    %v61 = vlaneseq
    %v62 = vshrl.u32 %v61, 7
    %v63 = vsub.s32 0, %v62
    %v64 = vrot.slane %v59, %v63
    %v66 = vmul.f32 %v58, %v64
    %v67 = vld [vmem:[#allocation4] sm:$0x1]
    %v69 = vlaneseq
    %v70 = vshrl.u32 %v69, 7
    %v71 = vsub.s32 0, %v70
    %v72 = vrot.slane %v67, %v71
    %v74 = vadd.f32 %v66, %v72
    %75 = vst.msk [vmem:[%s4] sm:$0xff] %vm44, %v74
    // Predicated region
    $region26: #{videobert_decoder_forward.46} parent=1 // pred_check
      _
    $region27: #{videobert_decoder_forward.46} parent=1 // pred_check_branch
      %77 = sbr.rel (0) target = $region29
    $region28: #{videobert_decoder_forward.46} parent=1 // pred_region
      _
    $region29: #{videobert_decoder_forward.46} parent=1 // pred_fallthru
      _
    // Predicated region
    $region30: #{videobert_decoder_forward.46} parent=1 // pred_check
      _
    $region31: #{videobert_decoder_forward.46} parent=1 // pred_check_branch
      %79 = sbr.rel (0) target = $region33
    $region32: #{videobert_decoder_forward.46} parent=1 // pred_region
      _
    $region33: #{videobert_decoder_forward.46} parent=1 // pred_fallthru
      _
    %80 = vsyncpa [#allocation3], 1
    %81 = vsyncpa [#allocation5], 1

// kernel: videobert_decoder_forward.48
$region0: #{videobert_decoder_forward.48}
  #allocation0 [shape = 'u32[]', space=smem, size = 0x4, offset = 0x4, fixed_abs, tag = 'smem constant byte address 0x4 - core index']
  #allocation1 [shape = 'u32[144,128]{1,0:T(1,128)}', space=vmem, size = 0x12000, scoped, tag = 'internal scratch']
  #allocation2 [shape = 'f32[12,64]{1,0:T(8,128)}', space=vmem, size = 0x2000, scoped, tag = 'scratch operand']
  %s0 = inlined_call_operand.vmem [shape: bf16[12,32], index: 0, kind: input, shape index: {}]
  %s1 = inlined_call_operand.vmem [shape: bf16[32,64], index: 1, kind: input, shape index: {}]
  %s2 = inlined_call_operand.vmem [shape: f32[1,64], index: 2, kind: input, shape index: {}]
  %s3 = inlined_call_operand.hbm [shape: f32[1,64], index: 3, kind: input, shape index: {}]
  %s4 = inlined_call_operand.vmem [shape: f32[12,64], index: 4, kind: output, shape index: {}]
  %s5 = sld [smem:[#allocation0]]
  $region38: #{videobert_decoder_forward.48} parent=0
    _
  %s7 = ssub.s32 1, %s5
  %s8 = scalar_select 0, %s7, %s5
  $region1: #{videobert_decoder_forward.48} parent=0
    #allocation3 [shape = 'u8[512]{0}', space=vmem, size = 0x400, scoped, tag = 'input window, operand 3, single buffered']
    #allocation4 [shape = 's32[1]{0}', space=sflag, size = 0x4, scoped, tag = 'scoped memory for videobert_decoder_forward.48']
    %9 = vsyncpa [#allocation4], 0
    // Predicated region
    $region2: #{videobert_decoder_forward.48} parent=1 // pred_check
      _
    $region3: #{videobert_decoder_forward.48} parent=1 // pred_check_branch
      %11 = sbr.rel (0) target = $region5
    $region4: #{videobert_decoder_forward.48} parent=1 // pred_region
      _
    $region5: #{videobert_decoder_forward.48} parent=1 // pred_fallthru
      _
    // Predicated region
    $region6: #{videobert_decoder_forward.48} parent=1 // pred_check
      _
    $region7: #{videobert_decoder_forward.48} parent=1 // pred_check_branch
      %13 = sbr.rel (0) target = $region9
    $region8: #{videobert_decoder_forward.48} parent=1 // pred_region
      _
    $region9: #{videobert_decoder_forward.48} parent=1 // pred_fallthru
      _
    // Predicated region
    $region10: #{videobert_decoder_forward.48} parent=1 // pred_check
      _
    $region11: #{videobert_decoder_forward.48} parent=1 // pred_check_branch
      %15 = sbr.rel (0) target = $region13
    $region12: #{videobert_decoder_forward.48} parent=1 // pred_region
      _
    $region13: #{videobert_decoder_forward.48} parent=1 // pred_fallthru
      _
    // Predicated region
    $region14: #{videobert_decoder_forward.48} parent=1 // pred_check
      _
    $region15: #{videobert_decoder_forward.48} parent=1 // pred_check_branch
      %17 = sbr.rel (0) target = $region17
    $region16: #{videobert_decoder_forward.48} parent=1 // pred_region
      %s19 = ssub.s32 16, 16
      %20 = vsyncadd [#allocation4], %s19
      %s22 = sshll.u32 [#allocation3], 4
      %s23 = int_to_ptr.vmem [resolvable:$true] %s22
      %25 = dma.hbm_to_vmem [thread:$0]  %s3, 16, %s23, [#allocation4]
    $region17: #{videobert_decoder_forward.48} parent=1 // pred_fallthru
      _
    // Predicated region
    $region18: #{videobert_decoder_forward.48} parent=1 // pred_check
      _
    $region19: #{videobert_decoder_forward.48} parent=1 // pred_check_branch
      %27 = sbr.rel (0) target = $region21
    $region20: #{videobert_decoder_forward.48} parent=1 // pred_region
      %28 = dma.done [#allocation4], 16
    $region21: #{videobert_decoder_forward.48} parent=1 // pred_fallthru
      _
    %p30 = scmp.eq.s32.totalorder 0, 0
    // Predicated region
    $region22: #{videobert_decoder_forward.48} parent=1 // pred_check
      %p31 = pneg %p30
    $region23: #{videobert_decoder_forward.48} parent=1 // pred_check_branch
      %33 = sbr.rel (%p31) target = $region25
    $region24: #{videobert_decoder_forward.48} parent=1 // pred_region
      %vm34 = vcmask 523264
      %35 = vst.msk [vmem:[#allocation2] sm:$0xff] %vm34, 0.0
      %vm36 = vcmask 519168
      %37 = vst.msk [vmem:[#allocation2 + $0x8] sm:$0xf] %vm36, 0.0
    $region25: #{videobert_decoder_forward.48} parent=1 // pred_fallthru
      _
    %v38 = vld [vmem:[#allocation2] sm:$0xff]
    %v39 = vld [vmem:[#allocation2 + $0x8] sm:$0xf]
    %v40 = vld [vmem:[%s0] sm:$0xf]
    %v41 = vld [vmem:[%s0 + $0x4] sm:$0x3]
    %v42 = vld [vmem:[%s1] sm:$0xf]
    %v43 = vld [vmem:[%s1 + $0x4] sm:$0xf]
    %v44 = vld [vmem:[%s1 + $0x8] sm:$0xf]
    %v45 = vld [vmem:[%s1 + $0xc] sm:$0xf]
    %v48 = vunpack.c.l.b16 %v40
    %v49 = vunpack.c.l.b16 %v41
    %v50 = vpack.c.b16 %v49, %v48
    %v55 = vunpack.c.l.b16 %v42
    %v56 = vunpack.c.l.b16 %v43
    %v57 = vunpack.c.l.b16 %v44
    %v58 = vunpack.c.l.b16 %v45
    %v59 = vpack.c.b16 %v56, %v55
    %v60 = vpack.c.b16 %v58, %v57
    %vm63 = vcmask 261120
    %v65 = vsel %vm63, %v50, 0
    %67 = vmatprep.subr.bf16.mxu0 0
    %68 = vmatpush1.bf16.msra.mxu0 %v59
    %69 = vmatprep.subr.bf16.mxu0 0
    %70 = vmatpush1.bf16.msra.mxu0 %v60
    %71 = vmatprep.subr.bf16.mxu0 0
    %72 = vmatpush1.bf16.msra.mxu0 0
    %73 = vmatprep.subr.bf16.mxu0 0
    %74 = vmatpush1.bf16.msra.mxu0 0
    %75 = vmatprep.subr.bf16.mxu0 0
    %76 = vmatpush1.bf16.msra.mxu0 0
    %77 = vmatprep.subr.bf16.mxu0 0
    %78 = vmatpush1.bf16.msra.mxu0 0
    %79 = vmatprep.subr.bf16.mxu0 0
    %80 = vmatpush1.bf16.msra.mxu0 0
    %81 = vmatprep.subr.bf16.mxu0 0
    %82 = vmatpush1.bf16.msra.mxu0 0
    %83 = vmatprep.subr.bf16.mxu0 0
    %84 = vmatpush1.bf16.msra.mxu0 0
    %85 = vmatprep.subr.bf16.mxu0 0
    %86 = vmatpush1.bf16.msra.mxu0 0
    %87 = vmatprep.subr.bf16.mxu0 0
    %88 = vmatpush1.bf16.msra.mxu0 0
    %89 = vmatprep.subr.bf16.mxu0 0
    %90 = vmatpush1.bf16.msra.mxu0 0
    %91 = vmatprep.subr.bf16.mxu0 0
    %92 = vmatpush1.bf16.msra.mxu0 0
    %93 = vmatprep.subr.bf16.mxu0 0
    %94 = vmatpush1.bf16.msra.mxu0 0
    %95 = vmatprep.subr.bf16.mxu0 0
    %96 = vmatpush1.bf16.msra.mxu0 0
    %97 = vmatprep.subr.bf16.mxu0 0
    %98 = vmatpush1.bf16.msra.mxu0 0
    %99 = vmatprep.mubr.bf16.mxu0 0
    %100 = vmatmul.mubr.bf16.gmra.mrb[0].mxu0 %v65
    %v101 = vpop.f32.mrb[0].mxu0
    %v102 = vadd.f32 0.0, %v101
    %v103 = vpop.f32.mrb[0].mxu0
    %v104 = vpop.f32.mrb[0].mxu0
    %v105 = vadd.f32 0.0, %v104
    %v106 = vpop.f32.mrb[0].mxu0
    %107 = vdwg.mxu0
    %v108 = vadd.f32 %v38, %v102
    %v109 = vadd.f32 %v39, %v105
    %vm110 = vcmask 523264
    %111 = vst.msk [vmem:[#allocation2] sm:$0xff] %vm110, %v108
    %vm112 = vcmask 519168
    %113 = vst.msk [vmem:[#allocation2 + $0x8] sm:$0xf] %vm112, %v109
    // Predicated region
    $region26: #{videobert_decoder_forward.48} parent=1 // pred_check
      %p114 = pneg %p30
    $region27: #{videobert_decoder_forward.48} parent=1 // pred_check_branch
      %116 = sbr.rel (%p114) target = $region29
    $region28: #{videobert_decoder_forward.48} parent=1 // pred_region
      %v117 = vld [vmem:[#allocation2] sm:$0xff]
      %v118 = vld [vmem:[#allocation2 + $0x8] sm:$0xf]
      %v119 = vld [vmem:[%s2] sm:$0x1]
      %v121 = vlaneseq
      %v122 = vshrl.u32 %v121, 7
      %v123 = vsub.s32 0, %v122
      %v124 = vrot.slane %v119, %v123
      %v126 = vmul.f32 %v117, %v124
      %v127 = vmul.f32 %v118, %v124
      %v128 = vld [vmem:[#allocation3] sm:$0x1]
      %v130 = vlaneseq
      %v131 = vshrl.u32 %v130, 7
      %v132 = vsub.s32 0, %v131
      %v133 = vrot.slane %v128, %v132
      %v135 = vadd.f32 %v126, %v133
      %v136 = vadd.f32 %v127, %v133
      %137 = vst.msk [vmem:[%s4] sm:$0xff] %vm110, %v135
      %138 = vst.msk [vmem:[%s4 + $0x8] sm:$0xf] %vm112, %v136
    $region29: #{videobert_decoder_forward.48} parent=1 // pred_fallthru
      _
    // Predicated region
    $region30: #{videobert_decoder_forward.48} parent=1 // pred_check
      _
    $region31: #{videobert_decoder_forward.48} parent=1 // pred_check_branch
      %140 = sbr.rel (0) target = $region33
    $region32: #{videobert_decoder_forward.48} parent=1 // pred_region
      _
    $region33: #{videobert_decoder_forward.48} parent=1 // pred_fallthru
      _
    // Predicated region
    $region34: #{videobert_decoder_forward.48} parent=1 // pred_check
      _
    $region35: #{videobert_decoder_forward.48} parent=1 // pred_check_branch
      %142 = sbr.rel (0) target = $region37
    $region36: #{videobert_decoder_forward.48} parent=1 // pred_region
      _
    $region37: #{videobert_decoder_forward.48} parent=1 // pred_fallthru
      _
    %143 = vsyncpa [#allocation4], 1

// kernel: videobert_decoder_forward.52
$region0: #{videobert_decoder_forward.52}
  #allocation0 [shape = 'u32[]', space=smem, size = 0x4, offset = 0x4, fixed_abs, tag = 'smem constant byte address 0x4 - core index']
  #allocation1 [shape = 'u32[144,128]{1,0:T(1,128)}', space=vmem, size = 0x12000, scoped, tag = 'internal scratch']
  #allocation2 [shape = 'f32[8,256]{1,0:T(8,128)}', space=vmem, size = 0x2000, scoped, tag = 'scratch operand']
  %s0 = inlined_call_operand.vmem [shape: bf16[8,32], index: 0, kind: input, shape index: {}]
  %s1 = inlined_call_operand.vmem [shape: bf16[32,2048], index: 1, kind: input, shape index: {}]
  %s2 = inlined_call_operand.vmem [shape: f32[1,2048], index: 2, kind: input, shape index: {}]
  %s3 = inlined_call_operand.vmem [shape: f32[1,2048], index: 3, kind: input, shape index: {}]
  %s4 = inlined_call_operand.vmem [shape: f32[8,2048], index: 4, kind: output, shape index: {}]
  %s5 = sld [smem:[#allocation0]]
  $region95: #{videobert_decoder_forward.52} parent=0
    _
  %s7 = ssub.s32 1, %s5
  %s8 = scalar_select 0, %s7, %s5
  $region1: #{videobert_decoder_forward.52} parent=0
    #allocation3 [shape = 'u8[32768]{0}', space=vmem, size = 0x8000, scoped, tag = 'input window, operand 1']
    loop: start=0, step=1, limit=10
    $region2: #{videobert_decoder_forward.52} parent=1 // loop_pre_header
      _
    $region3: #{videobert_decoder_forward.52} parent=1 // loop_header
      %s10 = sphi 0, %s14
      %p11 = scmp.ge.s32.totalorder %s10, 10
      %s17 = sphi 0, %s36
      %s18 = sphi 0, %s32
      %s19 = sphi 0, %s28
      %s20 = sphi 0, %s17
      %s21 = sphi 0, %s18
      %s22 = sphi 0, %s19
      %s23 = sphi 0, %s20
      %s24 = sphi 0, %s21
      %s25 = sphi 0, %s22
      %s41 = sphi 0, %s43
      %s44 = sphi 0, %s41
      %s45 = sphi 0, %s44
      %s61 = sphi 0, %s45
      %s69 = sphi 0, %s71
      %s72 = sphi 0, %s69
      %s73 = sphi 0, %s72
      %s89 = sphi 0, %s73
      %s95 = sphi 0, %s97
      %s98 = sphi 0, %s95
      %s99 = sphi 0, %s98
      %s115 = sphi 0, %s99
      %s121 = sphi 0, %s123
      %s124 = sphi 0, %s121
      %s125 = sphi 0, %s124
      %s141 = sphi 0, %s125
      %s149 = sphi 0, %s151
      %s152 = sphi 0, %s149
      %s153 = sphi 0, %s152
      %s169 = sphi 0, %s153
    $region4: #{videobert_decoder_forward.52} parent=1 // loop_header_branch
      %13 = sbr.rel (%p11) target = $region8
    $region5: #{videobert_decoder_forward.52} parent=1 // loop_body
      %s15 = ssub.s32 %s10, 1
      %s16 = ssub.s32 %s10, 2
      %s26 = sadd.s32 1, %s19
      %p27 = scmp.ge.s32.totalorder %s26, 1
      %s28 = scalar_select %p27, 0, %s26
      %s29 = sadd.s32 1, %s18
      %s30 = scalar_select %p27, %s29, %s18
      %p31 = scmp.ge.s32.totalorder %s30, 8
      %s32 = scalar_select %p31, 0, %s30
      %s33 = sadd.s32 1, %s17
      %s34 = scalar_select %p31, %s33, %s17
      %p35 = scmp.ge.s32.totalorder %s34, 1
      %s36 = scalar_select %p35, 0, %s34
      %s37 = ssub.s32 %s17, %s36
      %s38 = ssub.s32 %s19, %s28
      %s39 = sor.u32 %s37, %s38
      %p40 = scmp.eq.s32.totalorder %s39, 0
      %s42 = sadd.s32 %s41, 1
      %s43 = scalar_select %p40, %s41, %s42
      %p46 = pneg %p40
      %p47 = scmp.eq.s32.totalorder %s10, 7
      %p48 = por %p46, %p47
      %p49 = scmp.ne.s32.totalorder %s41, %s44
      %p50 = scmp.eq.s32.totalorder %s10, 0
      %p51 = por %p49, %p50
      %p52 = scmp.ne.s32.totalorder %s41, %s44
      %p53 = scmp.eq.s32.totalorder %s15, 7
      %p54 = por %p52, %p53
      %p55 = scmp.ne.s32.totalorder %s44, %s45
      %p56 = scmp.eq.s32.totalorder %s15, 0
      %p57 = por %p55, %p56
      %p58 = scmp.ne.s32.totalorder %s44, %s45
      %p59 = scmp.eq.s32.totalorder %s16, 7
      %p60 = por %p58, %p59
      %p62 = scmp.ne.s32.totalorder %s45, %s61
      %p63 = scmp.eq.s32.totalorder %s16, 0
      %p64 = por %p62, %p63
      %s65 = ssub.s32 %s19, %s28
      %s66 = ssub.s32 %s18, %s32
      %s67 = sor.u32 %s65, %s66
      %p68 = scmp.eq.s32.totalorder %s67, 0
      %s70 = sadd.s32 %s69, 1
      %s71 = scalar_select %p68, %s69, %s70
      %p74 = pneg %p68
      %p75 = scmp.eq.s32.totalorder %s10, 7
      %p76 = por %p74, %p75
      %p77 = scmp.ne.s32.totalorder %s69, %s72
      %p78 = scmp.eq.s32.totalorder %s10, 0
      %p79 = por %p77, %p78
      %p80 = scmp.ne.s32.totalorder %s69, %s72
      %p81 = scmp.eq.s32.totalorder %s15, 7
      %p82 = por %p80, %p81
      %p83 = scmp.ne.s32.totalorder %s72, %s73
      %p84 = scmp.eq.s32.totalorder %s15, 0
      %p85 = por %p83, %p84
      %p86 = scmp.ne.s32.totalorder %s72, %s73
      %p87 = scmp.eq.s32.totalorder %s16, 7
      %p88 = por %p86, %p87
      %p90 = scmp.ne.s32.totalorder %s73, %s89
      %p91 = scmp.eq.s32.totalorder %s16, 0
      %p92 = por %p90, %p91
      %s93 = ssub.s32 %s18, %s32
      %p94 = scmp.eq.s32.totalorder %s93, 0
      %s96 = sadd.s32 %s95, 1
      %s97 = scalar_select %p94, %s95, %s96
      %p100 = pneg %p94
      %p101 = scmp.eq.s32.totalorder %s10, 7
      %p102 = por %p100, %p101
      %p103 = scmp.ne.s32.totalorder %s95, %s98
      %p104 = scmp.eq.s32.totalorder %s10, 0
      %p105 = por %p103, %p104
      %p106 = scmp.ne.s32.totalorder %s95, %s98
      %p107 = scmp.eq.s32.totalorder %s15, 7
      %p108 = por %p106, %p107
      %p109 = scmp.ne.s32.totalorder %s98, %s99
      %p110 = scmp.eq.s32.totalorder %s15, 0
      %p111 = por %p109, %p110
      %p112 = scmp.ne.s32.totalorder %s98, %s99
      %p113 = scmp.eq.s32.totalorder %s16, 7
      %p114 = por %p112, %p113
      %p116 = scmp.ne.s32.totalorder %s99, %s115
      %p117 = scmp.eq.s32.totalorder %s16, 0
      %p118 = por %p116, %p117
      %s119 = ssub.s32 %s18, %s32
      %p120 = scmp.eq.s32.totalorder %s119, 0
      %s122 = sadd.s32 %s121, 1
      %s123 = scalar_select %p120, %s121, %s122
      %p126 = pneg %p120
      %p127 = scmp.eq.s32.totalorder %s10, 7
      %p128 = por %p126, %p127
      %p129 = scmp.ne.s32.totalorder %s121, %s124
      %p130 = scmp.eq.s32.totalorder %s10, 0
      %p131 = por %p129, %p130
      %p132 = scmp.ne.s32.totalorder %s121, %s124
      %p133 = scmp.eq.s32.totalorder %s15, 7
      %p134 = por %p132, %p133
      %p135 = scmp.ne.s32.totalorder %s124, %s125
      %p136 = scmp.eq.s32.totalorder %s15, 0
      %p137 = por %p135, %p136
      %p138 = scmp.ne.s32.totalorder %s124, %s125
      %p139 = scmp.eq.s32.totalorder %s16, 7
      %p140 = por %p138, %p139
      %p142 = scmp.ne.s32.totalorder %s125, %s141
      %p143 = scmp.eq.s32.totalorder %s16, 0
      %p144 = por %p142, %p143
      %s145 = ssub.s32 %s17, %s36
      %s146 = ssub.s32 %s18, %s32
      %s147 = sor.u32 %s145, %s146
      %p148 = scmp.eq.s32.totalorder %s147, 0
      %s150 = sadd.s32 %s149, 1
      %s151 = scalar_select %p148, %s149, %s150
      %p154 = pneg %p148
      %p155 = scmp.eq.s32.totalorder %s10, 7
      %p156 = por %p154, %p155
      %p157 = scmp.ne.s32.totalorder %s149, %s152
      %p158 = scmp.eq.s32.totalorder %s10, 0
      %p159 = por %p157, %p158
      %p160 = scmp.ne.s32.totalorder %s149, %s152
      %p161 = scmp.eq.s32.totalorder %s15, 7
      %p162 = por %p160, %p161
      %p163 = scmp.ne.s32.totalorder %s152, %s153
      %p164 = scmp.eq.s32.totalorder %s15, 0
      %p165 = por %p163, %p164
      %p166 = scmp.ne.s32.totalorder %s152, %s153
      %p167 = scmp.eq.s32.totalorder %s16, 7
      %p168 = por %p166, %p167
      %p170 = scmp.ne.s32.totalorder %s153, %s169
      %p171 = scmp.eq.s32.totalorder %s16, 0
      %p172 = por %p170, %p171
      %p173 = scmp.le.s32.totalorder 1, %s10
      %p174 = scmp.lt.s32.totalorder %s10, 9
      %p175 = pnand %p173, %p174
      %p176 = pneg %p175
      // Predicated region
      $region9: #{videobert_decoder_forward.52} parent=5 // pred_check
        _
      $region10: #{videobert_decoder_forward.52} parent=5 // pred_check_branch
        %178 = sbr.rel (%p175) target = $region12
      $region11: #{videobert_decoder_forward.52} parent=5 // pred_region
        %s179 = ssub.s32 %s10, 1
        // Predicated region
        $region13: #{videobert_decoder_forward.52} parent=11 // pred_check
          %p180 = pneg %p57
        $region14: #{videobert_decoder_forward.52} parent=11 // pred_check_branch
          %182 = sbr.rel (%p180) target = $region16
        $region15: #{videobert_decoder_forward.52} parent=11 // pred_region
          %p183 = scmp.lt.s32.totalorder %s20, 0
          %s184 = scalar_select %p183, %s20, 0
          %p185 = scmp.lt.s32.totalorder %s22, 0
          %s186 = scalar_select %p185, %s22, 0
          %s187 = sadd.s32 %s186, %s184
          %s188 = smul.addr %s187, 4
          %s189 = scalar_lea.vmem %s0, %s188
        $region16: #{videobert_decoder_forward.52} parent=11 // pred_fallthru
          _
      $region12: #{videobert_decoder_forward.52} parent=5 // pred_fallthru
        _
      %p190 = scmp.lt.s32.totalorder %s10, 8
      // Predicated region
      $region17: #{videobert_decoder_forward.52} parent=5 // pred_check
        %p191 = pneg %p190
      $region18: #{videobert_decoder_forward.52} parent=5 // pred_check_branch
        %193 = sbr.rel (%p191) target = $region20
      $region19: #{videobert_decoder_forward.52} parent=5 // pred_region
        // Predicated region
        $region21: #{videobert_decoder_forward.52} parent=19 // pred_check
          %p194 = pneg %p79
        $region22: #{videobert_decoder_forward.52} parent=19 // pred_check_branch
          %196 = sbr.rel (%p194) target = $region24
        $region23: #{videobert_decoder_forward.52} parent=19 // pred_region
          %s197 = sand.u32 %s69, 1
          %s198 = sand.u32 %s69, 1
          %s199 = smul.addr %s198, 32
          %s200 = scalar_lea.vmem [#allocation3], %s199
          %s201 = smul.u32 4, %s19
          %s202 = smul.u32 2, %s18
          %s203 = smul.addr %s201, 16
          %s204 = sadd.s32 %s202, %s203
          %s205 = smul.addr %s204, 4
          %s206 = scalar_lea.vmem %s1, %s205
          // Predicated region
          $region25: #{videobert_decoder_forward.52} parent=23 // pred_check
            _
          $region26: #{videobert_decoder_forward.52} parent=23 // pred_check_branch
            %208 = sbr.rel (0) target = $region28
          $region27: #{videobert_decoder_forward.52} parent=23 // pred_region
            // Predicated region
            $region29: #{videobert_decoder_forward.52} parent=27 // pred_check
              _
            $region30: #{videobert_decoder_forward.52} parent=27 // pred_check_branch
              %210 = sbr.rel (0) target = $region32
            $region31: #{videobert_decoder_forward.52} parent=27 // pred_region
              // Predicated region
              $region44: #{videobert_decoder_forward.52} parent=31 // pred_check
                _
              $region45: #{videobert_decoder_forward.52} parent=31 // pred_check_branch
                %231 = sbr.rel (0) target = $region47
              $region46: #{videobert_decoder_forward.52} parent=31 // pred_region
                loop: start=0, step=1, limit=1
                $region48: #{videobert_decoder_forward.52} parent=46 // loop_pre_header
                  _
                $region49: #{videobert_decoder_forward.52} parent=46 // loop_header
                  %s233 = sphi 0, %s237
                  %p234 = scmp.ge.s32.totalorder %s233, 1
                  %s238 = sphi %s206, %s206
                  %s239 = sphi %s200, %s200
                $region50: #{videobert_decoder_forward.52} parent=46 // loop_header_branch
                  %236 = sbr.rel (%p234) target = $region54
                $region51: #{videobert_decoder_forward.52} parent=46 // loop_body
                  %v240 = vld [vmem:[%s238] sm:$0xff]
                  %241 = vst [vmem:[%s239] sm:$0xff] %v240
                  %v242 = vld [vmem:[%s238 + $0x40] sm:$0xff]
                  %243 = vst [vmem:[%s239 + $0x8] sm:$0xff] %v242
                  %v244 = vld [vmem:[%s238 + $0x80] sm:$0xff]
                  %245 = vst [vmem:[%s239 + $0x10] sm:$0xff] %v244
                  %v246 = vld [vmem:[%s238 + $0xc0] sm:$0xff]
                  %247 = vst [vmem:[%s239 + $0x18] sm:$0xff] %v246
                $region52: #{videobert_decoder_forward.52} parent=46 // loop_footer
                  %s237 = sadd.s32 1, %s233
                $region53: #{videobert_decoder_forward.52} parent=46 // loop_footer_branch
                  %232 = sbr.rel target = $region49
                $region54: #{videobert_decoder_forward.52} parent=46 // loop_exit
                  _
              $region47: #{videobert_decoder_forward.52} parent=31 // pred_fallthru
                _
              // Predicated region
              $region55: #{videobert_decoder_forward.52} parent=31 // pred_check
                _
              $region56: #{videobert_decoder_forward.52} parent=31 // pred_check_branch
                %249 = sbr.rel target = $region58
              $region57: #{videobert_decoder_forward.52} parent=31 // pred_region
                _
              $region58: #{videobert_decoder_forward.52} parent=31 // pred_fallthru
                _
            $region32: #{videobert_decoder_forward.52} parent=27 // pred_fallthru
              _
            // Predicated region
            $region33: #{videobert_decoder_forward.52} parent=27 // pred_check
              _
            $region34: #{videobert_decoder_forward.52} parent=27 // pred_check_branch
              %212 = sbr.rel target = $region36
            $region35: #{videobert_decoder_forward.52} parent=27 // pred_region
              loop: start=0, step=1, limit=1
              $region37: #{videobert_decoder_forward.52} parent=35 // loop_pre_header
                _
              $region38: #{videobert_decoder_forward.52} parent=35 // loop_header
                %s215 = sphi 0, %s219
                %p216 = scmp.ge.s32.totalorder %s215, 1
                %s220 = sphi %s206, %s206
                %s221 = sphi %s200, %s200
              $region39: #{videobert_decoder_forward.52} parent=35 // loop_header_branch
                %218 = sbr.rel (%p216) target = $region43
              $region40: #{videobert_decoder_forward.52} parent=35 // loop_body
                %v222 = vld [vmem:[%s220] sm:$0xff]
                %223 = vst [vmem:[%s221] sm:$0xff] %v222
                %v224 = vld [vmem:[%s220 + $0x40] sm:$0xff]
                %225 = vst [vmem:[%s221 + $0x8] sm:$0xff] %v224
                %v226 = vld [vmem:[%s220 + $0x80] sm:$0xff]
                %227 = vst [vmem:[%s221 + $0x10] sm:$0xff] %v226
                %v228 = vld [vmem:[%s220 + $0xc0] sm:$0xff]
                %229 = vst [vmem:[%s221 + $0x18] sm:$0xff] %v228
              $region41: #{videobert_decoder_forward.52} parent=35 // loop_footer
                %s219 = sadd.s32 1, %s215
              $region42: #{videobert_decoder_forward.52} parent=35 // loop_footer_branch
                %214 = sbr.rel target = $region38
              $region43: #{videobert_decoder_forward.52} parent=35 // loop_exit
                _
            $region36: #{videobert_decoder_forward.52} parent=27 // pred_fallthru
              _
          $region28: #{videobert_decoder_forward.52} parent=23 // pred_fallthru
            _
          %250 = vnop
        $region24: #{videobert_decoder_forward.52} parent=19 // pred_fallthru
          _
        // Predicated region
        $region59: #{videobert_decoder_forward.52} parent=19 // pred_check
          %p251 = pneg %p105
        $region60: #{videobert_decoder_forward.52} parent=19 // pred_check_branch
          %253 = sbr.rel (%p251) target = $region62
        $region61: #{videobert_decoder_forward.52} parent=19 // pred_region
          %s254 = smul.u32 2, %s18
          %p255 = scmp.lt.s32.totalorder %s254, 15
          %s256 = scalar_select %p255, %s254, 15
          %s257 = scalar_lea.vmem %s2, %s256
          %s258 = smul.u32 2, %s18
        $region62: #{videobert_decoder_forward.52} parent=19 // pred_fallthru
          _
        // Predicated region
        $region63: #{videobert_decoder_forward.52} parent=19 // pred_check
          %p259 = pneg %p131
        $region64: #{videobert_decoder_forward.52} parent=19 // pred_check_branch
          %261 = sbr.rel (%p259) target = $region66
        $region65: #{videobert_decoder_forward.52} parent=19 // pred_region
          %s262 = smul.u32 2, %s18
          %p263 = scmp.lt.s32.totalorder %s262, 15
          %s264 = scalar_select %p263, %s262, 15
          %s265 = scalar_lea.vmem %s3, %s264
          %s266 = smul.u32 2, %s18
        $region66: #{videobert_decoder_forward.52} parent=19 // pred_fallthru
          _
      $region20: #{videobert_decoder_forward.52} parent=5 // pred_fallthru
        _
      %p267 = scmp.le.s32.totalorder 1, %s10
      %p268 = scmp.lt.s32.totalorder %s10, 9
      %p269 = pnand %p267, %p268
      %p270 = pneg %p269
      // Predicated region
      $region67: #{videobert_decoder_forward.52} parent=5 // pred_check
        _
      $region68: #{videobert_decoder_forward.52} parent=5 // pred_check_branch
        %272 = sbr.rel (%p269) target = $region70
      $region69: #{videobert_decoder_forward.52} parent=5 // pred_region
        %s273 = ssub.s32 %s10, 1
        %s274 = sand.u32 %s72, 1
        %s275 = sand.u32 %s72, 1
        %s276 = smul.addr %s275, 32
        %s277 = scalar_lea.vmem [#allocation3], %s276
        // Predicated region
        $region71: #{videobert_decoder_forward.52} parent=69 // pred_check
          %p278 = pneg %p85
        $region72: #{videobert_decoder_forward.52} parent=69 // pred_check_branch
          %280 = sbr.rel (%p278) target = $region74
        $region73: #{videobert_decoder_forward.52} parent=69 // pred_region
          _
        $region74: #{videobert_decoder_forward.52} parent=69 // pred_fallthru
          _
        %p281 = scmp.lt.s32.totalorder %s20, 0
        %s282 = scalar_select %p281, %s20, 0
        %p283 = scmp.lt.s32.totalorder %s22, 0
        %s284 = scalar_select %p283, %s22, 0
        %s285 = sadd.s32 %s284, %s282
        %s286 = smul.addr %s285, 4
        %s287 = scalar_lea.vmem %s0, %s286
        %p288 = pneg %p57
        %p289 = pneg %p54
        %s290 = sand.u32 %s72, 1
        %s291 = sand.u32 %s72, 1
        %s292 = smul.addr %s291, 32
        %s293 = scalar_lea.vmem [#allocation3], %s292
        %p294 = pneg %p85
        %p295 = pneg %p82
        %s296 = smul.u32 2, %s21
        %p297 = scmp.lt.s32.totalorder %s296, 15
        %s298 = scalar_select %p297, %s296, 15
        %s299 = scalar_lea.vmem %s2, %s298
        %p300 = pneg %p111
        %p301 = pneg %p108
        %s302 = smul.u32 2, %s21
        %p303 = scmp.lt.s32.totalorder %s302, 15
        %s304 = scalar_select %p303, %s302, 15
        %s305 = scalar_lea.vmem %s3, %s304
        %p306 = pneg %p137
        %p307 = pneg %p134
        %p308 = pneg %p165
        %p309 = pneg %p162
        %s310 = smul.u32 2, %s21
        %p311 = scmp.lt.s32.totalorder %s20, 0
        %s312 = scalar_select %p311, %s20, 0
        %p313 = scmp.lt.s32.totalorder %s310, 15
        %s314 = scalar_select %p313, %s310, 15
        %s315 = smul.addr %s312, 16
        %s316 = sadd.s32 %s314, %s315
        %s317 = smul.addr %s316, 8
        %s318 = scalar_lea.vmem %s4, %s317
        %p319 = scmp.lt.s32.totalorder %s20, 0
        %s320 = scalar_select %p319, %s20, 0
        %p321 = scmp.lt.s32.totalorder %s22, 0
        %s322 = scalar_select %p321, %s22, 0
        %s323 = sadd.s32 %s322, %s320
        %s324 = smul.addr %s323, 4
        %s325 = scalar_lea.vmem %s0, %s324
        %s326 = smul.u32 4, %s22
        %s327 = smul.u32 2, %s21
        %s328 = smul.u32 2, %s21
        %p329 = scmp.lt.s32.totalorder %s328, 15
        %s330 = scalar_select %p329, %s328, 15
        %s331 = scalar_lea.vmem %s2, %s330
        %s332 = smul.u32 2, %s21
        %s333 = smul.u32 2, %s21
        %p334 = scmp.lt.s32.totalorder %s333, 15
        %s335 = scalar_select %p334, %s333, 15
        %s336 = scalar_lea.vmem %s3, %s335
        %s337 = smul.u32 2, %s21
        %s338 = smul.u32 2, %s21
        %p339 = scmp.lt.s32.totalorder %s20, 0
        %s340 = scalar_select %p339, %s20, 0
        %p341 = scmp.lt.s32.totalorder %s338, 15
        %s342 = scalar_select %p341, %s338, 15
        %s343 = smul.addr %s340, 16
        %s344 = sadd.s32 %s342, %s343
        %s345 = smul.addr %s344, 8
        %s346 = scalar_lea.vmem %s4, %s345
        %s347 = smul.u32 2, %s21
        %p349 = scmp.eq.s32.totalorder %s22, 0
        // Predicated region
        $region75: #{videobert_decoder_forward.52} parent=69 // pred_check
          %p350 = pneg %p349
        $region76: #{videobert_decoder_forward.52} parent=69 // pred_check_branch
          %352 = sbr.rel (%p350) target = $region78
        $region77: #{videobert_decoder_forward.52} parent=69 // pred_region
          %353 = vst [vmem:[#allocation2] sm:$0xff] 0.0
          %354 = vst [vmem:[#allocation2 + $0x8] sm:$0xff] 0.0
        $region78: #{videobert_decoder_forward.52} parent=69 // pred_fallthru
          _
        %v355 = vld [vmem:[#allocation2] sm:$0xff]
        %v356 = vld [vmem:[#allocation2 + $0x8] sm:$0xff]
        %v357 = vld [vmem:[%s325] sm:$0xf]
        %v358 = vld [vmem:[%s277] sm:$0xff]
        %v359 = vld [vmem:[%s277 + $0x8] sm:$0xff]
        %v360 = vld [vmem:[%s277 + $0x10] sm:$0xff]
        %v361 = vld [vmem:[%s277 + $0x18] sm:$0xff]
        %v366 = vunpack.c.l.b16 %v358
        %v367 = vunpack.c.h.b16 %v358
        %v368 = vunpack.c.l.b16 %v359
        %v369 = vunpack.c.h.b16 %v359
        %v370 = vunpack.c.l.b16 %v360
        %v371 = vunpack.c.h.b16 %v360
        %v372 = vunpack.c.l.b16 %v361
        %v373 = vunpack.c.h.b16 %v361
        %v374 = vpack.c.b16 %v368, %v366
        %v375 = vpack.c.b16 %v369, %v367
        %v376 = vpack.c.b16 %v372, %v370
        %v377 = vpack.c.b16 %v373, %v371
        %vm382 = vcmask 261120
        %v384 = vsel %vm382, %v357, 0
        %386 = vmatprep.subr.bf16.mxu0 %v375
        %387 = vmatpush1.bf16.msra.mxu0 %v374
        %388 = vmatprep.subr.bf16.mxu0 %v377
        %389 = vmatpush1.bf16.msra.mxu0 %v376
        %390 = vmatprep.subr.bf16.mxu0 0
        %391 = vmatpush1.bf16.msra.mxu0 0
        %392 = vmatprep.subr.bf16.mxu0 0
        %393 = vmatpush1.bf16.msra.mxu0 0
        %394 = vmatprep.subr.bf16.mxu0 0
        %395 = vmatpush1.bf16.msra.mxu0 0
        %396 = vmatprep.subr.bf16.mxu0 0
        %397 = vmatpush1.bf16.msra.mxu0 0
        %398 = vmatprep.subr.bf16.mxu0 0
        %399 = vmatpush1.bf16.msra.mxu0 0
        %400 = vmatprep.subr.bf16.mxu0 0
        %401 = vmatpush1.bf16.msra.mxu0 0
        %402 = vmatprep.subr.bf16.mxu0 0
        %403 = vmatpush1.bf16.msra.mxu0 0
        %404 = vmatprep.subr.bf16.mxu0 0
        %405 = vmatpush1.bf16.msra.mxu0 0
        %406 = vmatprep.subr.bf16.mxu0 0
        %407 = vmatpush1.bf16.msra.mxu0 0
        %408 = vmatprep.subr.bf16.mxu0 0
        %409 = vmatpush1.bf16.msra.mxu0 0
        %410 = vmatprep.subr.bf16.mxu0 0
        %411 = vmatpush1.bf16.msra.mxu0 0
        %412 = vmatprep.subr.bf16.mxu0 0
        %413 = vmatpush1.bf16.msra.mxu0 0
        %414 = vmatprep.subr.bf16.mxu0 0
        %415 = vmatpush1.bf16.msra.mxu0 0
        %416 = vmatprep.subr.bf16.mxu0 0
        %417 = vmatpush1.bf16.msra.mxu0 0
        %418 = vmatprep.mubr.bf16.mxu0 0
        %419 = vmatmul.mubr.bf16.gmra.mrb[0].mxu0 %v384
        %v420 = vpop.f32.mrb[0].mxu0
        %v421 = vadd.f32 0.0, %v420
        %v422 = vpop.f32.mrb[0].mxu0
        %v423 = vadd.f32 0.0, %v422
        %v424 = vpop.f32.mrb[0].mxu0
        %v425 = vpop.f32.mrb[0].mxu0
        %426 = vdwg.mxu0
        %v427 = vadd.f32 %v355, %v421
        %v428 = vadd.f32 %v356, %v423
        %429 = vst [vmem:[#allocation2] sm:$0xff] %v427
        %430 = vst [vmem:[#allocation2 + $0x8] sm:$0xff] %v428
        // Predicated region
        $region79: #{videobert_decoder_forward.52} parent=69 // pred_check
          %p431 = pneg %p349
        $region80: #{videobert_decoder_forward.52} parent=69 // pred_check_branch
          %433 = sbr.rel (%p431) target = $region82
        $region81: #{videobert_decoder_forward.52} parent=69 // pred_region
          %v434 = vld [vmem:[#allocation2] sm:$0xff]
          %v435 = vld [vmem:[#allocation2 + $0x8] sm:$0xff]
          %v436 = vld [vmem:[%s331] sm:$0x3]
          %v438 = vlaneseq
          %v439 = vshrl.u32 %v438, 7
          %v440 = vsub.s32 0, %v439
          %v441 = vrot.slane %v436, %v440
          %v442 = vlaneseq
          %v443 = vshrl.u32 %v442, 7
          %v444 = vsub.s32 1, %v443
          %v445 = vrot.slane %v436, %v444
          %v448 = vmul.f32 %v434, %v441
          %v449 = vmul.f32 %v435, %v445
          %v450 = vld [vmem:[%s336] sm:$0x3]
          %v452 = vlaneseq
          %v453 = vshrl.u32 %v452, 7
          %v454 = vsub.s32 0, %v453
          %v455 = vrot.slane %v450, %v454
          %v456 = vlaneseq
          %v457 = vshrl.u32 %v456, 7
          %v458 = vsub.s32 1, %v457
          %v459 = vrot.slane %v450, %v458
          %v462 = vadd.f32 %v448, %v455
          %v463 = vadd.f32 %v449, %v459
          %v464 = vmax.f32 %v462, 0.0
          %v465 = vmax.f32 %v463, 0.0
          %466 = vst [vmem:[%s346] sm:$0xff] %v464
          %467 = vst [vmem:[%s346 + $0x8] sm:$0xff] %v465
        $region82: #{videobert_decoder_forward.52} parent=69 // pred_fallthru
          _
        %s468 = smul.u32 2, %s21
        %p469 = scmp.lt.s32.totalorder %s20, 0
        %s470 = scalar_select %p469, %s20, 0
        %p471 = scmp.lt.s32.totalorder %s468, 15
        %s472 = scalar_select %p471, %s468, 15
        %s473 = smul.addr %s470, 16
        %s474 = sadd.s32 %s472, %s473
        %s475 = smul.addr %s474, 8
        %s476 = scalar_lea.vmem %s4, %s475
        // Predicated region
        $region83: #{videobert_decoder_forward.52} parent=69 // pred_check
          %p477 = pneg %p162
        $region84: #{videobert_decoder_forward.52} parent=69 // pred_check_branch
          %479 = sbr.rel (%p477) target = $region86
        $region85: #{videobert_decoder_forward.52} parent=69 // pred_region
          %s480 = smul.u32 2, %s21
        $region86: #{videobert_decoder_forward.52} parent=69 // pred_fallthru
          _
      $region70: #{videobert_decoder_forward.52} parent=5 // pred_fallthru
        _
      %p481 = scmp.le.s32.totalorder 2, %s10
      // Predicated region
      $region87: #{videobert_decoder_forward.52} parent=5 // pred_check
        %p482 = pneg %p481
      $region88: #{videobert_decoder_forward.52} parent=5 // pred_check_branch
        %484 = sbr.rel (%p482) target = $region90
      $region89: #{videobert_decoder_forward.52} parent=5 // pred_region
        %s485 = ssub.s32 %s10, 2
        // Predicated region
        $region91: #{videobert_decoder_forward.52} parent=89 // pred_check
          %p486 = pneg %p168
        $region92: #{videobert_decoder_forward.52} parent=89 // pred_check_branch
          %488 = sbr.rel (%p486) target = $region94
        $region93: #{videobert_decoder_forward.52} parent=89 // pred_region
          %s489 = smul.u32 2, %s24
          %p490 = scmp.lt.s32.totalorder %s23, 0
          %s491 = scalar_select %p490, %s23, 0
          %p492 = scmp.lt.s32.totalorder %s489, 15
          %s493 = scalar_select %p492, %s489, 15
          %s494 = smul.addr %s491, 16
          %s495 = sadd.s32 %s493, %s494
          %s496 = smul.addr %s495, 8
          %s497 = scalar_lea.vmem %s4, %s496
        $region94: #{videobert_decoder_forward.52} parent=89 // pred_fallthru
          _
      $region90: #{videobert_decoder_forward.52} parent=5 // pred_fallthru
        _
    $region6: #{videobert_decoder_forward.52} parent=1 // loop_footer
      %s14 = sadd.s32 1, %s10
    $region7: #{videobert_decoder_forward.52} parent=1 // loop_footer_branch
      %9 = sbr.rel target = $region3
    $region8: #{videobert_decoder_forward.52} parent=1 // loop_exit
      _

// kernel: videobert_decoder_forward.49
$region0: #{videobert_decoder_forward.49}
  #allocation0 [shape = 'u32[]', space=smem, size = 0x4, offset = 0x4, fixed_abs, tag = 'smem constant byte address 0x4 - core index']
  #allocation1 [shape = 'u32[144,128]{1,0:T(1,128)}', space=vmem, size = 0x12000, scoped, tag = 'internal scratch']
  %s0 = inlined_call_operand.vmem [shape: bf16[2,8,4,4], index: 0, kind: input, shape index: {}]
  %s1 = inlined_call_operand.vmem [shape: bf16[2,8,6,4], index: 1, kind: input, shape index: {}]
  %s2 = inlined_call_operand.vmem [shape: bf16[2,8,6,4], index: 2, kind: input, shape index: {}]
  %s3 = inlined_call_operand.vmem [shape: f32[4,6], index: 3, kind: input, shape index: {}]
  %s4 = inlined_call_operand.vmem [shape: f32[2,8,4,4], index: 4, kind: output, shape index: {}]
  %s5 = sld [smem:[#allocation0]]
  $region49: #{videobert_decoder_forward.49} parent=0
    _
  %s7 = ssub.s32 1, %s5
  %s8 = scalar_select 0, %s7, %s5
  loop: start=0, step=1, limit=4
  $region2: #{videobert_decoder_forward.49} parent=0 // loop_pre_header
    _
  $region3: #{videobert_decoder_forward.49} parent=0 // loop_header
    %s10 = sphi 0, %s14
    %p11 = scmp.ge.s32.totalorder %s10, 4
    %s20 = sphi 0, %s22
    %s23 = sphi 0, %s20
    %s24 = sphi 0, %s23
    %s40 = sphi 0, %s24
    %s46 = sphi 0, %s48
    %s49 = sphi 0, %s46
    %s50 = sphi 0, %s49
    %s66 = sphi 0, %s50
    %s72 = sphi 0, %s74
    %s75 = sphi 0, %s72
    %s76 = sphi 0, %s75
    %s92 = sphi 0, %s76
    %s96 = sphi 0, %s96
    %s98 = sphi 0, %s96
    %s99 = sphi 0, %s98
    %s113 = sphi 0, %s99
    %s119 = sphi 0, %s121
    %s122 = sphi 0, %s119
    %s123 = sphi 0, %s122
    %s139 = sphi 0, %s123
  $region4: #{videobert_decoder_forward.49} parent=0 // loop_header_branch
    %13 = sbr.rel (%p11) target = $region8
  $region5: #{videobert_decoder_forward.49} parent=0 // loop_body
    %s15 = ssub.s32 %s10, 1
    %s16 = ssub.s32 %s10, 2
    %s17 = sadd.s32 %s10, 1
    %s18 = ssub.s32 %s10, %s17
    %p19 = scmp.eq.s32.totalorder %s18, 0
    %s21 = sadd.s32 %s20, 1
    %s22 = scalar_select %p19, %s20, %s21
    %p25 = pneg %p19
    %p26 = scmp.eq.s32.totalorder %s10, 1
    %p27 = por %p25, %p26
    %p28 = scmp.ne.s32.totalorder %s20, %s23
    %p29 = scmp.eq.s32.totalorder %s10, 0
    %p30 = por %p28, %p29
    %p31 = scmp.ne.s32.totalorder %s20, %s23
    %p32 = scmp.eq.s32.totalorder %s15, 1
    %p33 = por %p31, %p32
    %p34 = scmp.ne.s32.totalorder %s23, %s24
    %p35 = scmp.eq.s32.totalorder %s15, 0
    %p36 = por %p34, %p35
    %p37 = scmp.ne.s32.totalorder %s23, %s24
    %p38 = scmp.eq.s32.totalorder %s16, 1
    %p39 = por %p37, %p38
    %p41 = scmp.ne.s32.totalorder %s24, %s40
    %p42 = scmp.eq.s32.totalorder %s16, 0
    %p43 = por %p41, %p42
    %s44 = ssub.s32 %s10, %s17
    %p45 = scmp.eq.s32.totalorder %s44, 0
    %s47 = sadd.s32 %s46, 1
    %s48 = scalar_select %p45, %s46, %s47
    %p51 = pneg %p45
    %p52 = scmp.eq.s32.totalorder %s10, 1
    %p53 = por %p51, %p52
    %p54 = scmp.ne.s32.totalorder %s46, %s49
    %p55 = scmp.eq.s32.totalorder %s10, 0
    %p56 = por %p54, %p55
    %p57 = scmp.ne.s32.totalorder %s46, %s49
    %p58 = scmp.eq.s32.totalorder %s15, 1
    %p59 = por %p57, %p58
    %p60 = scmp.ne.s32.totalorder %s49, %s50
    %p61 = scmp.eq.s32.totalorder %s15, 0
    %p62 = por %p60, %p61
    %p63 = scmp.ne.s32.totalorder %s49, %s50
    %p64 = scmp.eq.s32.totalorder %s16, 1
    %p65 = por %p63, %p64
    %p67 = scmp.ne.s32.totalorder %s50, %s66
    %p68 = scmp.eq.s32.totalorder %s16, 0
    %p69 = por %p67, %p68
    %s70 = ssub.s32 %s10, %s17
    %p71 = scmp.eq.s32.totalorder %s70, 0
    %s73 = sadd.s32 %s72, 1
    %s74 = scalar_select %p71, %s72, %s73
    %p77 = pneg %p71
    %p78 = scmp.eq.s32.totalorder %s10, 1
    %p79 = por %p77, %p78
    %p80 = scmp.ne.s32.totalorder %s72, %s75
    %p81 = scmp.eq.s32.totalorder %s10, 0
    %p82 = por %p80, %p81
    %p83 = scmp.ne.s32.totalorder %s72, %s75
    %p84 = scmp.eq.s32.totalorder %s15, 1
    %p85 = por %p83, %p84
    %p86 = scmp.ne.s32.totalorder %s75, %s76
    %p87 = scmp.eq.s32.totalorder %s15, 0
    %p88 = por %p86, %p87
    %p89 = scmp.ne.s32.totalorder %s75, %s76
    %p90 = scmp.eq.s32.totalorder %s16, 1
    %p91 = por %p89, %p90
    %p93 = scmp.ne.s32.totalorder %s76, %s92
    %p94 = scmp.eq.s32.totalorder %s16, 0
    %p95 = por %p93, %p94
    %s97 = sadd.s32 %s96, 1
    %p100 = scmp.eq.s32.totalorder %s10, 1
    %p101 = scmp.ne.s32.totalorder %s96, %s98
    %p102 = scmp.eq.s32.totalorder %s10, 0
    %p103 = por %p101, %p102
    %p104 = scmp.ne.s32.totalorder %s96, %s98
    %p105 = scmp.eq.s32.totalorder %s15, 1
    %p106 = por %p104, %p105
    %p107 = scmp.ne.s32.totalorder %s98, %s99
    %p108 = scmp.eq.s32.totalorder %s15, 0
    %p109 = por %p107, %p108
    %p110 = scmp.ne.s32.totalorder %s98, %s99
    %p111 = scmp.eq.s32.totalorder %s16, 1
    %p112 = por %p110, %p111
    %p114 = scmp.ne.s32.totalorder %s99, %s113
    %p115 = scmp.eq.s32.totalorder %s16, 0
    %p116 = por %p114, %p115
    %s117 = ssub.s32 %s10, %s17
    %p118 = scmp.eq.s32.totalorder %s117, 0
    %s120 = sadd.s32 %s119, 1
    %s121 = scalar_select %p118, %s119, %s120
    %p124 = pneg %p118
    %p125 = scmp.eq.s32.totalorder %s10, 1
    %p126 = por %p124, %p125
    %p127 = scmp.ne.s32.totalorder %s119, %s122
    %p128 = scmp.eq.s32.totalorder %s10, 0
    %p129 = por %p127, %p128
    %p130 = scmp.ne.s32.totalorder %s119, %s122
    %p131 = scmp.eq.s32.totalorder %s15, 1
    %p132 = por %p130, %p131
    %p133 = scmp.ne.s32.totalorder %s122, %s123
    %p134 = scmp.eq.s32.totalorder %s15, 0
    %p135 = por %p133, %p134
    %p136 = scmp.ne.s32.totalorder %s122, %s123
    %p137 = scmp.eq.s32.totalorder %s16, 1
    %p138 = por %p136, %p137
    %p140 = scmp.ne.s32.totalorder %s123, %s139
    %p141 = scmp.eq.s32.totalorder %s16, 0
    %p142 = por %p140, %p141
    %p143 = scmp.le.s32.totalorder 1, %s10
    %p144 = scmp.lt.s32.totalorder %s10, 3
    %p145 = pnand %p143, %p144
    %p146 = pneg %p145
    // Predicated region
    $region9: #{videobert_decoder_forward.49} parent=5 // pred_check
      _
    $region10: #{videobert_decoder_forward.49} parent=5 // pred_check_branch
      %148 = sbr.rel (%p145) target = $region12
    $region11: #{videobert_decoder_forward.49} parent=5 // pred_region
      %s149 = ssub.s32 %s10, 1
      // Predicated region
      $region13: #{videobert_decoder_forward.49} parent=11 // pred_check
        %p150 = pneg %p109
      $region14: #{videobert_decoder_forward.49} parent=11 // pred_check_branch
        %152 = sbr.rel (%p150) target = $region16
      $region15: #{videobert_decoder_forward.49} parent=11 // pred_region
        _
      $region16: #{videobert_decoder_forward.49} parent=11 // pred_fallthru
        _
    $region12: #{videobert_decoder_forward.49} parent=5 // pred_fallthru
      _
    %p153 = scmp.lt.s32.totalorder %s10, 2
    // Predicated region
    $region17: #{videobert_decoder_forward.49} parent=5 // pred_check
      %p154 = pneg %p153
    $region18: #{videobert_decoder_forward.49} parent=5 // pred_check_branch
      %156 = sbr.rel (%p154) target = $region20
    $region19: #{videobert_decoder_forward.49} parent=5 // pred_region
      // Predicated region
      $region21: #{videobert_decoder_forward.49} parent=19 // pred_check
        %p157 = pneg %p30
      $region22: #{videobert_decoder_forward.49} parent=19 // pred_check_branch
        %159 = sbr.rel (%p157) target = $region24
      $region23: #{videobert_decoder_forward.49} parent=19 // pred_region
        %p160 = scmp.lt.s32.totalorder %s10, 1
        %s161 = scalar_select %p160, %s10, 1
        %s162 = smul.addr %s161, 8
        %s163 = smul.addr %s162, 2
        %s164 = scalar_lea.vmem %s0, %s163
      $region24: #{videobert_decoder_forward.49} parent=19 // pred_fallthru
        _
      // Predicated region
      $region25: #{videobert_decoder_forward.49} parent=19 // pred_check
        %p165 = pneg %p56
      $region26: #{videobert_decoder_forward.49} parent=19 // pred_check_branch
        %167 = sbr.rel (%p165) target = $region28
      $region27: #{videobert_decoder_forward.49} parent=19 // pred_region
        %p168 = scmp.lt.s32.totalorder %s10, 1
        %s169 = scalar_select %p168, %s10, 1
        %s170 = smul.addr %s169, 8
        %s171 = smul.addr %s170, 4
        %s172 = scalar_lea.vmem %s1, %s171
      $region28: #{videobert_decoder_forward.49} parent=19 // pred_fallthru
        _
      // Predicated region
      $region29: #{videobert_decoder_forward.49} parent=19 // pred_check
        %p173 = pneg %p82
      $region30: #{videobert_decoder_forward.49} parent=19 // pred_check_branch
        %175 = sbr.rel (%p173) target = $region32
      $region31: #{videobert_decoder_forward.49} parent=19 // pred_region
        %p176 = scmp.lt.s32.totalorder %s10, 1
        %s177 = scalar_select %p176, %s10, 1
        %s178 = smul.addr %s177, 8
        %s179 = smul.addr %s178, 4
        %s180 = scalar_lea.vmem %s2, %s179
      $region32: #{videobert_decoder_forward.49} parent=19 // pred_fallthru
        _
    $region20: #{videobert_decoder_forward.49} parent=5 // pred_fallthru
      _
    %p181 = scmp.le.s32.totalorder 1, %s10
    %p182 = scmp.lt.s32.totalorder %s10, 3
    %p183 = pnand %p181, %p182
    %p184 = pneg %p183
    // Predicated region
    $region33: #{videobert_decoder_forward.49} parent=5 // pred_check
      _
    $region34: #{videobert_decoder_forward.49} parent=5 // pred_check_branch
      %186 = sbr.rel (%p183) target = $region36
    $region35: #{videobert_decoder_forward.49} parent=5 // pred_region
      %s187 = ssub.s32 %s10, 1
      %p188 = scmp.lt.s32.totalorder %s15, 1
      %s189 = scalar_select %p188, %s15, 1
      %s190 = smul.addr %s189, 8
      %s191 = smul.addr %s190, 2
      %s192 = scalar_lea.vmem %s0, %s191
      %p193 = pneg %p36
      %p194 = pneg %p33
      %p195 = scmp.lt.s32.totalorder %s15, 1
      %s196 = scalar_select %p195, %s15, 1
      %s197 = smul.addr %s196, 8
      %s198 = smul.addr %s197, 4
      %s199 = scalar_lea.vmem %s1, %s198
      %p200 = pneg %p62
      %p201 = pneg %p59
      %p202 = scmp.lt.s32.totalorder %s15, 1
      %s203 = scalar_select %p202, %s15, 1
      %s204 = smul.addr %s203, 8
      %s205 = smul.addr %s204, 4
      %s206 = scalar_lea.vmem %s2, %s205
      %p207 = pneg %p88
      %p208 = pneg %p85
      %p209 = pneg %p109
      %p210 = pneg %p106
      %p211 = pneg %p135
      %p212 = pneg %p132
      %p213 = scmp.lt.s32.totalorder %s15, 1
      %s214 = scalar_select %p213, %s15, 1
      %s215 = smul.addr %s214, 8
      %s216 = smul.addr %s215, 4
      %s217 = scalar_lea.vmem %s4, %s216
      %p218 = scmp.lt.s32.totalorder %s15, 1
      %s219 = scalar_select %p218, %s15, 1
      %s220 = smul.addr %s219, 8
      %s221 = smul.addr %s220, 2
      %s222 = scalar_lea.vmem %s0, %s221
      %p223 = scmp.lt.s32.totalorder %s15, 1
      %s224 = scalar_select %p223, %s15, 1
      %s225 = smul.addr %s224, 8
      %s226 = smul.addr %s225, 4
      %s227 = scalar_lea.vmem %s1, %s226
      %p228 = scmp.lt.s32.totalorder %s15, 1
      %s229 = scalar_select %p228, %s15, 1
      %s230 = smul.addr %s229, 8
      %s231 = smul.addr %s230, 4
      %s232 = scalar_lea.vmem %s2, %s231
      %p233 = scmp.lt.s32.totalorder %s15, 1
      %s234 = scalar_select %p233, %s15, 1
      %s235 = smul.addr %s234, 8
      %s236 = smul.addr %s235, 4
      %s237 = scalar_lea.vmem %s4, %s236
      %v239 = vld [vmem:[%s222] sm:$0x3]
      %v240 = vld [vmem:[%s222 + $0x2] sm:$0x3]
      %v241 = vld [vmem:[%s222 + $0x4] sm:$0x3]
      %v242 = vld [vmem:[%s222 + $0x6] sm:$0x3]
      %v243 = vld [vmem:[%s222 + $0x8] sm:$0x3]
      %v244 = vld [vmem:[%s222 + $0xa] sm:$0x3]
      %v245 = vld [vmem:[%s222 + $0xc] sm:$0x3]
      %v246 = vld [vmem:[%s222 + $0xe] sm:$0x3]
      %v247 = vld [vmem:[%s227] sm:$0x7]
      %v248 = vld [vmem:[%s227 + $0x4] sm:$0x7]
      %v249 = vld [vmem:[%s227 + $0x8] sm:$0x7]
      %v250 = vld [vmem:[%s227 + $0xc] sm:$0x7]
      %v251 = vld [vmem:[%s227 + $0x10] sm:$0x7]
      %v252 = vld [vmem:[%s227 + $0x14] sm:$0x7]
      %v253 = vld [vmem:[%s227 + $0x18] sm:$0x7]
      %v254 = vld [vmem:[%s227 + $0x1c] sm:$0x7]
      %v255 = vld [vmem:[%s232] sm:$0x7]
      %v256 = vld [vmem:[%s232 + $0x4] sm:$0x7]
      %v257 = vld [vmem:[%s232 + $0x8] sm:$0x7]
      %v258 = vld [vmem:[%s232 + $0xc] sm:$0x7]
      %v259 = vld [vmem:[%s232 + $0x10] sm:$0x7]
      %v260 = vld [vmem:[%s232 + $0x14] sm:$0x7]
      %v261 = vld [vmem:[%s232 + $0x18] sm:$0x7]
      %v262 = vld [vmem:[%s232 + $0x1c] sm:$0x7]
      %vm263 = vcmask 31744
      %v265 = vsel %vm263, %v239, 0
      %v268 = vsel %vm263, %v247, 0
      %270 = vmatprep.subr.bf16.mxu0 0
      %271 = vmatpush1.bf16.xpose.msra.mxu0 %v268
      %272 = vmatprep.subr.bf16.mxu0 0
      %273 = vmatpush1.bf16.xpose.msra.mxu0 0
      %274 = vmatprep.subr.bf16.mxu0 0
      %275 = vmatpush1.bf16.xpose.msra.mxu0 0
      %276 = vmatprep.subr.bf16.mxu0 0
      %277 = vmatpush1.bf16.xpose.msra.mxu0 0
      %278 = vmatprep.subr.bf16.mxu0 0
      %279 = vmatpush1.bf16.xpose.msra.mxu0 0
      %280 = vmatprep.subr.bf16.mxu0 0
      %281 = vmatpush1.bf16.xpose.msra.mxu0 0
      %282 = vmatprep.subr.bf16.mxu0 0
      %283 = vmatpush1.bf16.xpose.msra.mxu0 0
      %284 = vmatprep.subr.bf16.mxu0 0
      %285 = vmatpush1.bf16.xpose.msra.mxu0 0
      %286 = vmatprep.subr.bf16.mxu0 0
      %287 = vmatpush1.bf16.xpose.msra.mxu0 0
      %288 = vmatprep.subr.bf16.mxu0 0
      %289 = vmatpush1.bf16.xpose.msra.mxu0 0
      %290 = vmatprep.subr.bf16.mxu0 0
      %291 = vmatpush1.bf16.xpose.msra.mxu0 0
      %292 = vmatprep.subr.bf16.mxu0 0
      %293 = vmatpush1.bf16.xpose.msra.mxu0 0
      %294 = vmatprep.subr.bf16.mxu0 0
      %295 = vmatpush1.bf16.xpose.msra.mxu0 0
      %296 = vmatprep.subr.bf16.mxu0 0
      %297 = vmatpush1.bf16.xpose.msra.mxu0 0
      %298 = vmatprep.subr.bf16.mxu0 0
      %299 = vmatpush1.bf16.xpose.msra.mxu0 0
      %300 = vmatprep.subr.bf16.mxu0 0
      %301 = vmatpush1.bf16.xpose.msra.mxu0 0
      %302 = vmatprep.mubr.bf16.mxu0 0
      %303 = vmatmul.mubr.bf16.gmra.mrb[0].mxu0 %v265
      %v304 = vpop.f32.mrb[0].mxu0
      %v305 = vadd.f32 0.0, %v304
      %v306 = vpop.f32.mrb[0].mxu0
      %v307 = vpop.f32.mrb[0].mxu0
      %v308 = vpop.f32.mrb[0].mxu0
      %309 = vdwg.mxu0
      %v311 = vsel %vm263, %v240, 0
      %v314 = vsel %vm263, %v248, 0
      %316 = vmatprep.subr.bf16.mxu0 0
      %317 = vmatpush1.bf16.xpose.msra.mxu0 %v314
      %318 = vmatprep.subr.bf16.mxu0 0
      %319 = vmatpush1.bf16.xpose.msra.mxu0 0
      %320 = vmatprep.subr.bf16.mxu0 0
      %321 = vmatpush1.bf16.xpose.msra.mxu0 0
      %322 = vmatprep.subr.bf16.mxu0 0
      %323 = vmatpush1.bf16.xpose.msra.mxu0 0
      %324 = vmatprep.subr.bf16.mxu0 0
      %325 = vmatpush1.bf16.xpose.msra.mxu0 0
      %326 = vmatprep.subr.bf16.mxu0 0
      %327 = vmatpush1.bf16.xpose.msra.mxu0 0
      %328 = vmatprep.subr.bf16.mxu0 0
      %329 = vmatpush1.bf16.xpose.msra.mxu0 0
      %330 = vmatprep.subr.bf16.mxu0 0
      %331 = vmatpush1.bf16.xpose.msra.mxu0 0
      %332 = vmatprep.subr.bf16.mxu0 0
      %333 = vmatpush1.bf16.xpose.msra.mxu0 0
      %334 = vmatprep.subr.bf16.mxu0 0
      %335 = vmatpush1.bf16.xpose.msra.mxu0 0
      %336 = vmatprep.subr.bf16.mxu0 0
      %337 = vmatpush1.bf16.xpose.msra.mxu0 0
      %338 = vmatprep.subr.bf16.mxu0 0
      %339 = vmatpush1.bf16.xpose.msra.mxu0 0
      %340 = vmatprep.subr.bf16.mxu0 0
      %341 = vmatpush1.bf16.xpose.msra.mxu0 0
      %342 = vmatprep.subr.bf16.mxu0 0
      %343 = vmatpush1.bf16.xpose.msra.mxu0 0
      %344 = vmatprep.subr.bf16.mxu0 0
      %345 = vmatpush1.bf16.xpose.msra.mxu0 0
      %346 = vmatprep.subr.bf16.mxu0 0
      %347 = vmatpush1.bf16.xpose.msra.mxu0 0
      %348 = vmatprep.mubr.bf16.mxu0 0
      %349 = vmatmul.mubr.bf16.gmra.mrb[0].mxu0 %v311
      %v350 = vpop.f32.mrb[0].mxu0
      %v351 = vadd.f32 0.0, %v350
      %v352 = vpop.f32.mrb[0].mxu0
      %v353 = vpop.f32.mrb[0].mxu0
      %v354 = vpop.f32.mrb[0].mxu0
      %355 = vdwg.mxu0
      %v357 = vsel %vm263, %v241, 0
      %v360 = vsel %vm263, %v249, 0
      %362 = vmatprep.subr.bf16.mxu0 0
      %363 = vmatpush1.bf16.xpose.msra.mxu0 %v360
      %364 = vmatprep.subr.bf16.mxu0 0
      %365 = vmatpush1.bf16.xpose.msra.mxu0 0
      %366 = vmatprep.subr.bf16.mxu0 0
      %367 = vmatpush1.bf16.xpose.msra.mxu0 0
      %368 = vmatprep.subr.bf16.mxu0 0
      %369 = vmatpush1.bf16.xpose.msra.mxu0 0
      %370 = vmatprep.subr.bf16.mxu0 0
      %371 = vmatpush1.bf16.xpose.msra.mxu0 0
      %372 = vmatprep.subr.bf16.mxu0 0
      %373 = vmatpush1.bf16.xpose.msra.mxu0 0
      %374 = vmatprep.subr.bf16.mxu0 0
      %375 = vmatpush1.bf16.xpose.msra.mxu0 0
      %376 = vmatprep.subr.bf16.mxu0 0
      %377 = vmatpush1.bf16.xpose.msra.mxu0 0
      %378 = vmatprep.subr.bf16.mxu0 0
      %379 = vmatpush1.bf16.xpose.msra.mxu0 0
      %380 = vmatprep.subr.bf16.mxu0 0
      %381 = vmatpush1.bf16.xpose.msra.mxu0 0
      %382 = vmatprep.subr.bf16.mxu0 0
      %383 = vmatpush1.bf16.xpose.msra.mxu0 0
      %384 = vmatprep.subr.bf16.mxu0 0
      %385 = vmatpush1.bf16.xpose.msra.mxu0 0
      %386 = vmatprep.subr.bf16.mxu0 0
      %387 = vmatpush1.bf16.xpose.msra.mxu0 0
      %388 = vmatprep.subr.bf16.mxu0 0
      %389 = vmatpush1.bf16.xpose.msra.mxu0 0
      %390 = vmatprep.subr.bf16.mxu0 0
      %391 = vmatpush1.bf16.xpose.msra.mxu0 0
      %392 = vmatprep.subr.bf16.mxu0 0
      %393 = vmatpush1.bf16.xpose.msra.mxu0 0
      %394 = vmatprep.mubr.bf16.mxu0 0
      %395 = vmatmul.mubr.bf16.gmra.mrb[0].mxu0 %v357
      %v396 = vpop.f32.mrb[0].mxu0
      %v397 = vadd.f32 0.0, %v396
      %v398 = vpop.f32.mrb[0].mxu0
      %v399 = vpop.f32.mrb[0].mxu0
      %v400 = vpop.f32.mrb[0].mxu0
      %401 = vdwg.mxu0
      %v403 = vsel %vm263, %v242, 0
      %v406 = vsel %vm263, %v250, 0
      %408 = vmatprep.subr.bf16.mxu0 0
      %409 = vmatpush1.bf16.xpose.msra.mxu0 %v406
      %410 = vmatprep.subr.bf16.mxu0 0
      %411 = vmatpush1.bf16.xpose.msra.mxu0 0
      %412 = vmatprep.subr.bf16.mxu0 0
      %413 = vmatpush1.bf16.xpose.msra.mxu0 0
      %414 = vmatprep.subr.bf16.mxu0 0
      %415 = vmatpush1.bf16.xpose.msra.mxu0 0
      %416 = vmatprep.subr.bf16.mxu0 0
      %417 = vmatpush1.bf16.xpose.msra.mxu0 0
      %418 = vmatprep.subr.bf16.mxu0 0
      %419 = vmatpush1.bf16.xpose.msra.mxu0 0
      %420 = vmatprep.subr.bf16.mxu0 0
      %421 = vmatpush1.bf16.xpose.msra.mxu0 0
      %422 = vmatprep.subr.bf16.mxu0 0
      %423 = vmatpush1.bf16.xpose.msra.mxu0 0
      %424 = vmatprep.subr.bf16.mxu0 0
      %425 = vmatpush1.bf16.xpose.msra.mxu0 0
      %426 = vmatprep.subr.bf16.mxu0 0
      %427 = vmatpush1.bf16.xpose.msra.mxu0 0
      %428 = vmatprep.subr.bf16.mxu0 0
      %429 = vmatpush1.bf16.xpose.msra.mxu0 0
      %430 = vmatprep.subr.bf16.mxu0 0
      %431 = vmatpush1.bf16.xpose.msra.mxu0 0
      %432 = vmatprep.subr.bf16.mxu0 0
      %433 = vmatpush1.bf16.xpose.msra.mxu0 0
      %434 = vmatprep.subr.bf16.mxu0 0
      %435 = vmatpush1.bf16.xpose.msra.mxu0 0
      %436 = vmatprep.subr.bf16.mxu0 0
      %437 = vmatpush1.bf16.xpose.msra.mxu0 0
      %438 = vmatprep.subr.bf16.mxu0 0
      %439 = vmatpush1.bf16.xpose.msra.mxu0 0
      %440 = vmatprep.mubr.bf16.mxu0 0
      %441 = vmatmul.mubr.bf16.gmra.mrb[0].mxu0 %v403
      %v442 = vpop.f32.mrb[0].mxu0
      %v443 = vadd.f32 0.0, %v442
      %v444 = vpop.f32.mrb[0].mxu0
      %v445 = vpop.f32.mrb[0].mxu0
      %v446 = vpop.f32.mrb[0].mxu0
      %447 = vdwg.mxu0
      %v449 = vsel %vm263, %v243, 0
      %v452 = vsel %vm263, %v251, 0
      %454 = vmatprep.subr.bf16.mxu0 0
      %455 = vmatpush1.bf16.xpose.msra.mxu0 %v452
      %456 = vmatprep.subr.bf16.mxu0 0
      %457 = vmatpush1.bf16.xpose.msra.mxu0 0
      %458 = vmatprep.subr.bf16.mxu0 0
      %459 = vmatpush1.bf16.xpose.msra.mxu0 0
      %460 = vmatprep.subr.bf16.mxu0 0
      %461 = vmatpush1.bf16.xpose.msra.mxu0 0
      %462 = vmatprep.subr.bf16.mxu0 0
      %463 = vmatpush1.bf16.xpose.msra.mxu0 0
      %464 = vmatprep.subr.bf16.mxu0 0
      %465 = vmatpush1.bf16.xpose.msra.mxu0 0
      %466 = vmatprep.subr.bf16.mxu0 0
      %467 = vmatpush1.bf16.xpose.msra.mxu0 0
      %468 = vmatprep.subr.bf16.mxu0 0
      %469 = vmatpush1.bf16.xpose.msra.mxu0 0
      %470 = vmatprep.subr.bf16.mxu0 0
      %471 = vmatpush1.bf16.xpose.msra.mxu0 0
      %472 = vmatprep.subr.bf16.mxu0 0
      %473 = vmatpush1.bf16.xpose.msra.mxu0 0
      %474 = vmatprep.subr.bf16.mxu0 0
      %475 = vmatpush1.bf16.xpose.msra.mxu0 0
      %476 = vmatprep.subr.bf16.mxu0 0
      %477 = vmatpush1.bf16.xpose.msra.mxu0 0
      %478 = vmatprep.subr.bf16.mxu0 0
      %479 = vmatpush1.bf16.xpose.msra.mxu0 0
      %480 = vmatprep.subr.bf16.mxu0 0
      %481 = vmatpush1.bf16.xpose.msra.mxu0 0
      %482 = vmatprep.subr.bf16.mxu0 0
      %483 = vmatpush1.bf16.xpose.msra.mxu0 0
      %484 = vmatprep.subr.bf16.mxu0 0
      %485 = vmatpush1.bf16.xpose.msra.mxu0 0
      %486 = vmatprep.mubr.bf16.mxu0 0
      %487 = vmatmul.mubr.bf16.gmra.mrb[0].mxu0 %v449
      %v488 = vpop.f32.mrb[0].mxu0
      %v489 = vadd.f32 0.0, %v488
      %v490 = vpop.f32.mrb[0].mxu0
      %v491 = vpop.f32.mrb[0].mxu0
      %v492 = vpop.f32.mrb[0].mxu0
      %493 = vdwg.mxu0
      %v495 = vsel %vm263, %v244, 0
      %v498 = vsel %vm263, %v252, 0
      %500 = vmatprep.subr.bf16.mxu0 0
      %501 = vmatpush1.bf16.xpose.msra.mxu0 %v498
      %502 = vmatprep.subr.bf16.mxu0 0
      %503 = vmatpush1.bf16.xpose.msra.mxu0 0
      %504 = vmatprep.subr.bf16.mxu0 0
      %505 = vmatpush1.bf16.xpose.msra.mxu0 0
      %506 = vmatprep.subr.bf16.mxu0 0
      %507 = vmatpush1.bf16.xpose.msra.mxu0 0
      %508 = vmatprep.subr.bf16.mxu0 0
      %509 = vmatpush1.bf16.xpose.msra.mxu0 0
      %510 = vmatprep.subr.bf16.mxu0 0
      %511 = vmatpush1.bf16.xpose.msra.mxu0 0
      %512 = vmatprep.subr.bf16.mxu0 0
      %513 = vmatpush1.bf16.xpose.msra.mxu0 0
      %514 = vmatprep.subr.bf16.mxu0 0
      %515 = vmatpush1.bf16.xpose.msra.mxu0 0
      %516 = vmatprep.subr.bf16.mxu0 0
      %517 = vmatpush1.bf16.xpose.msra.mxu0 0
      %518 = vmatprep.subr.bf16.mxu0 0
      %519 = vmatpush1.bf16.xpose.msra.mxu0 0
      %520 = vmatprep.subr.bf16.mxu0 0
      %521 = vmatpush1.bf16.xpose.msra.mxu0 0
      %522 = vmatprep.subr.bf16.mxu0 0
      %523 = vmatpush1.bf16.xpose.msra.mxu0 0
      %524 = vmatprep.subr.bf16.mxu0 0
      %525 = vmatpush1.bf16.xpose.msra.mxu0 0
      %526 = vmatprep.subr.bf16.mxu0 0
      %527 = vmatpush1.bf16.xpose.msra.mxu0 0
      %528 = vmatprep.subr.bf16.mxu0 0
      %529 = vmatpush1.bf16.xpose.msra.mxu0 0
      %530 = vmatprep.subr.bf16.mxu0 0
      %531 = vmatpush1.bf16.xpose.msra.mxu0 0
      %532 = vmatprep.mubr.bf16.mxu0 0
      %533 = vmatmul.mubr.bf16.gmra.mrb[0].mxu0 %v495
      %v534 = vpop.f32.mrb[0].mxu0
      %v535 = vadd.f32 0.0, %v534
      %v536 = vpop.f32.mrb[0].mxu0
      %v537 = vpop.f32.mrb[0].mxu0
      %v538 = vpop.f32.mrb[0].mxu0
      %539 = vdwg.mxu0
      %v541 = vsel %vm263, %v245, 0
      %v544 = vsel %vm263, %v253, 0
      %546 = vmatprep.subr.bf16.mxu0 0
      %547 = vmatpush1.bf16.xpose.msra.mxu0 %v544
      %548 = vmatprep.subr.bf16.mxu0 0
      %549 = vmatpush1.bf16.xpose.msra.mxu0 0
      %550 = vmatprep.subr.bf16.mxu0 0
      %551 = vmatpush1.bf16.xpose.msra.mxu0 0
      %552 = vmatprep.subr.bf16.mxu0 0
      %553 = vmatpush1.bf16.xpose.msra.mxu0 0
      %554 = vmatprep.subr.bf16.mxu0 0
      %555 = vmatpush1.bf16.xpose.msra.mxu0 0
      %556 = vmatprep.subr.bf16.mxu0 0
      %557 = vmatpush1.bf16.xpose.msra.mxu0 0
      %558 = vmatprep.subr.bf16.mxu0 0
      %559 = vmatpush1.bf16.xpose.msra.mxu0 0
      %560 = vmatprep.subr.bf16.mxu0 0
      %561 = vmatpush1.bf16.xpose.msra.mxu0 0
      %562 = vmatprep.subr.bf16.mxu0 0
      %563 = vmatpush1.bf16.xpose.msra.mxu0 0
      %564 = vmatprep.subr.bf16.mxu0 0
      %565 = vmatpush1.bf16.xpose.msra.mxu0 0
      %566 = vmatprep.subr.bf16.mxu0 0
      %567 = vmatpush1.bf16.xpose.msra.mxu0 0
      %568 = vmatprep.subr.bf16.mxu0 0
      %569 = vmatpush1.bf16.xpose.msra.mxu0 0
      %570 = vmatprep.subr.bf16.mxu0 0
      %571 = vmatpush1.bf16.xpose.msra.mxu0 0
      %572 = vmatprep.subr.bf16.mxu0 0
      %573 = vmatpush1.bf16.xpose.msra.mxu0 0
      %574 = vmatprep.subr.bf16.mxu0 0
      %575 = vmatpush1.bf16.xpose.msra.mxu0 0
      %576 = vmatprep.subr.bf16.mxu0 0
      %577 = vmatpush1.bf16.xpose.msra.mxu0 0
      %578 = vmatprep.mubr.bf16.mxu0 0
      %579 = vmatmul.mubr.bf16.gmra.mrb[0].mxu0 %v541
      %v580 = vpop.f32.mrb[0].mxu0
      %v581 = vadd.f32 0.0, %v580
      %v582 = vpop.f32.mrb[0].mxu0
      %v583 = vpop.f32.mrb[0].mxu0
      %v584 = vpop.f32.mrb[0].mxu0
      %585 = vdwg.mxu0
      %v587 = vsel %vm263, %v246, 0
      %v590 = vsel %vm263, %v254, 0
      %592 = vmatprep.subr.bf16.mxu0 0
      %593 = vmatpush1.bf16.xpose.msra.mxu0 %v590
      %594 = vmatprep.subr.bf16.mxu0 0
      %595 = vmatpush1.bf16.xpose.msra.mxu0 0
      %596 = vmatprep.subr.bf16.mxu0 0
      %597 = vmatpush1.bf16.xpose.msra.mxu0 0
      %598 = vmatprep.subr.bf16.mxu0 0
      %599 = vmatpush1.bf16.xpose.msra.mxu0 0
      %600 = vmatprep.subr.bf16.mxu0 0
      %601 = vmatpush1.bf16.xpose.msra.mxu0 0
      %602 = vmatprep.subr.bf16.mxu0 0
      %603 = vmatpush1.bf16.xpose.msra.mxu0 0
      %604 = vmatprep.subr.bf16.mxu0 0
      %605 = vmatpush1.bf16.xpose.msra.mxu0 0
      %606 = vmatprep.subr.bf16.mxu0 0
      %607 = vmatpush1.bf16.xpose.msra.mxu0 0
      %608 = vmatprep.subr.bf16.mxu0 0
      %609 = vmatpush1.bf16.xpose.msra.mxu0 0
      %610 = vmatprep.subr.bf16.mxu0 0
      %611 = vmatpush1.bf16.xpose.msra.mxu0 0
      %612 = vmatprep.subr.bf16.mxu0 0
      %613 = vmatpush1.bf16.xpose.msra.mxu0 0
      %614 = vmatprep.subr.bf16.mxu0 0
      %615 = vmatpush1.bf16.xpose.msra.mxu0 0
      %616 = vmatprep.subr.bf16.mxu0 0
      %617 = vmatpush1.bf16.xpose.msra.mxu0 0
      %618 = vmatprep.subr.bf16.mxu0 0
      %619 = vmatpush1.bf16.xpose.msra.mxu0 0
      %620 = vmatprep.subr.bf16.mxu0 0
      %621 = vmatpush1.bf16.xpose.msra.mxu0 0
      %622 = vmatprep.subr.bf16.mxu0 0
      %623 = vmatpush1.bf16.xpose.msra.mxu0 0
      %624 = vmatprep.mubr.bf16.mxu0 0
      %625 = vmatmul.mubr.bf16.gmra.mrb[0].mxu0 %v587
      %v626 = vpop.f32.mrb[0].mxu0
      %v627 = vadd.f32 0.0, %v626
      %v628 = vpop.f32.mrb[0].mxu0
      %v629 = vpop.f32.mrb[0].mxu0
      %v630 = vpop.f32.mrb[0].mxu0
      %631 = vdwg.mxu0
      %v632 = vmul.f32 %v305, 0.5
      %v633 = vmul.f32 %v351, 0.5
      %v634 = vmul.f32 %v397, 0.5
      %v635 = vmul.f32 %v443, 0.5
      %v636 = vmul.f32 %v489, 0.5
      %v637 = vmul.f32 %v535, 0.5
      %v638 = vmul.f32 %v581, 0.5
      %v639 = vmul.f32 %v627, 0.5
      %v640 = vld [vmem:[%s3] sm:$0xf]
      %v641 = vadd.f32 %v632, %v640
      %v642 = vadd.f32 %v633, %v640
      %v643 = vadd.f32 %v634, %v640
      %v644 = vadd.f32 %v635, %v640
      %v645 = vadd.f32 %v636, %v640
      %v646 = vadd.f32 %v637, %v640
      %v647 = vadd.f32 %v638, %v640
      %v648 = vadd.f32 %v639, %v640
      %vm649 = vcmask 44032
      %v650 = vsel %vm649, %v641, -inf
      %651 = vmax.xlane.f32.xlu0 %v650
      %v652 = vpop.xlane.xlu0 %651
      %v653 = vsel %vm649, %v642, -inf
      %654 = vmax.xlane.f32.xlu0 %v653
      %v655 = vpop.xlane.xlu0 %654
      %v656 = vsel %vm649, %v643, -inf
      %657 = vmax.xlane.f32.xlu0 %v656
      %v658 = vpop.xlane.xlu0 %657
      %v659 = vsel %vm649, %v644, -inf
      %660 = vmax.xlane.f32.xlu0 %v659
      %v661 = vpop.xlane.xlu0 %660
      %v662 = vsel %vm649, %v645, -inf
      %663 = vmax.xlane.f32.xlu0 %v662
      %v664 = vpop.xlane.xlu0 %663
      %v665 = vsel %vm649, %v646, -inf
      %666 = vmax.xlane.f32.xlu0 %v665
      %v667 = vpop.xlane.xlu0 %666
      %v668 = vsel %vm649, %v647, -inf
      %669 = vmax.xlane.f32.xlu0 %v668
      %v670 = vpop.xlane.xlu0 %669
      %v671 = vsel %vm649, %v648, -inf
      %672 = vmax.xlane.f32.xlu0 %v671
      %v673 = vpop.xlane.xlu0 %672
      %v674 = vsub.f32 %v641, %v652
      %v675 = vsub.f32 %v642, %v655
      %v676 = vsub.f32 %v643, %v658
      %v677 = vsub.f32 %v644, %v661
      %v678 = vsub.f32 %v645, %v664
      %v679 = vsub.f32 %v646, %v667
      %v680 = vsub.f32 %v647, %v670
      %v681 = vsub.f32 %v648, %v673
      %v682 = vmul.f32 %v674, 1.442695
      %v683 = vpow.pop %v682
      %v684 = vmul.f32 %v675, 1.442695
      %v685 = vpow.pop %v684
      %v686 = vmul.f32 %v676, 1.442695
      %v687 = vpow.pop %v686
      %v688 = vmul.f32 %v677, 1.442695
      %v689 = vpow.pop %v688
      %v690 = vmul.f32 %v678, 1.442695
      %v691 = vpow.pop %v690
      %v692 = vmul.f32 %v679, 1.442695
      %v693 = vpow.pop %v692
      %v694 = vmul.f32 %v680, 1.442695
      %v695 = vpow.pop %v694
      %v696 = vmul.f32 %v681, 1.442695
      %v697 = vpow.pop %v696
      %v698 = vsel %vm649, %v683, 0.0
      %699 = vadd.xlane.f32.xlu0 %v698
      %v700 = vpop.xlane.xlu0 %699
      %v701 = vsel %vm649, %v685, 0.0
      %702 = vadd.xlane.f32.xlu0 %v701
      %v703 = vpop.xlane.xlu0 %702
      %v704 = vsel %vm649, %v687, 0.0
      %705 = vadd.xlane.f32.xlu0 %v704
      %v706 = vpop.xlane.xlu0 %705
      %v707 = vsel %vm649, %v689, 0.0
      %708 = vadd.xlane.f32.xlu0 %v707
      %v709 = vpop.xlane.xlu0 %708
      %v710 = vsel %vm649, %v691, 0.0
      %711 = vadd.xlane.f32.xlu0 %v710
      %v712 = vpop.xlane.xlu0 %711
      %v713 = vsel %vm649, %v693, 0.0
      %714 = vadd.xlane.f32.xlu0 %v713
      %v715 = vpop.xlane.xlu0 %714
      %v716 = vsel %vm649, %v695, 0.0
      %717 = vadd.xlane.f32.xlu0 %v716
      %v718 = vpop.xlane.xlu0 %717
      %v719 = vsel %vm649, %v697, 0.0
      %720 = vadd.xlane.f32.xlu0 %v719
      %v721 = vpop.xlane.xlu0 %720
      %v722 = vrcp.pop %v700
      %v723 = vrcp.pop %v703
      %v724 = vrcp.pop %v706
      %v725 = vrcp.pop %v709
      %v726 = vrcp.pop %v712
      %v727 = vrcp.pop %v715
      %v728 = vrcp.pop %v718
      %v729 = vrcp.pop %v721
      %v730 = vmul.f32 %v683, %v722
      %v731 = vmul.f32 %v685, %v723
      %v732 = vmul.f32 %v687, %v724
      %v733 = vmul.f32 %v689, %v725
      %v734 = vmul.f32 %v691, %v726
      %v735 = vmul.f32 %v693, %v727
      %v736 = vmul.f32 %v695, %v728
      %v737 = vmul.f32 %v697, %v729
      %v738 = vpack.c.bf16 %v730, %v730
      %v739 = vpack.c.bf16 %v731, %v731
      %v740 = vpack.c.bf16 %v732, %v732
      %v741 = vpack.c.bf16 %v733, %v733
      %v742 = vpack.c.bf16 %v734, %v734
      %v743 = vpack.c.bf16 %v735, %v735
      %v744 = vpack.c.bf16 %v736, %v736
      %v745 = vpack.c.bf16 %v737, %v737
      %vm746 = vcmask 48128
      %v748 = vsel %vm746, %v738, 0
      %vm750 = vcmask 1042432
      %v752 = vsel %vm750, %v255, 0
      %754 = vmatprep.subr.bf16.mxu0 0
      %755 = vmatpush1.bf16.msra.mxu0 %v752
      %756 = vmatprep.subr.bf16.mxu0 0
      %757 = vmatpush1.bf16.msra.mxu0 0
      %758 = vmatprep.subr.bf16.mxu0 0
      %759 = vmatpush1.bf16.msra.mxu0 0
      %760 = vmatprep.subr.bf16.mxu0 0
      %761 = vmatpush1.bf16.msra.mxu0 0
      %762 = vmatprep.subr.bf16.mxu0 0
      %763 = vmatpush1.bf16.msra.mxu0 0
      %764 = vmatprep.subr.bf16.mxu0 0
      %765 = vmatpush1.bf16.msra.mxu0 0
      %766 = vmatprep.subr.bf16.mxu0 0
      %767 = vmatpush1.bf16.msra.mxu0 0
      %768 = vmatprep.subr.bf16.mxu0 0
      %769 = vmatpush1.bf16.msra.mxu0 0
      %770 = vmatprep.subr.bf16.mxu0 0
      %771 = vmatpush1.bf16.msra.mxu0 0
      %772 = vmatprep.subr.bf16.mxu0 0
      %773 = vmatpush1.bf16.msra.mxu0 0
      %774 = vmatprep.subr.bf16.mxu0 0
      %775 = vmatpush1.bf16.msra.mxu0 0
      %776 = vmatprep.subr.bf16.mxu0 0
      %777 = vmatpush1.bf16.msra.mxu0 0
      %778 = vmatprep.subr.bf16.mxu0 0
      %779 = vmatpush1.bf16.msra.mxu0 0
      %780 = vmatprep.subr.bf16.mxu0 0
      %781 = vmatpush1.bf16.msra.mxu0 0
      %782 = vmatprep.subr.bf16.mxu0 0
      %783 = vmatpush1.bf16.msra.mxu0 0
      %784 = vmatprep.subr.bf16.mxu0 0
      %785 = vmatpush1.bf16.msra.mxu0 0
      %786 = vmatprep.mubr.bf16.mxu0 0
      %787 = vmatmul.mubr.bf16.gmra.mrb[0].mxu0 %v748
      %v788 = vpop.f32.mrb[0].mxu0
      %v789 = vadd.f32 0.0, %v788
      %v790 = vpop.f32.mrb[0].mxu0
      %v791 = vpop.f32.mrb[0].mxu0
      %v792 = vpop.f32.mrb[0].mxu0
      %793 = vdwg.mxu0
      %v795 = vsel %vm746, %v739, 0
      %v798 = vsel %vm750, %v256, 0
      %800 = vmatprep.subr.bf16.mxu0 0
      %801 = vmatpush1.bf16.msra.mxu0 %v798
      %802 = vmatprep.subr.bf16.mxu0 0
      %803 = vmatpush1.bf16.msra.mxu0 0
      %804 = vmatprep.subr.bf16.mxu0 0
      %805 = vmatpush1.bf16.msra.mxu0 0
      %806 = vmatprep.subr.bf16.mxu0 0
      %807 = vmatpush1.bf16.msra.mxu0 0
      %808 = vmatprep.subr.bf16.mxu0 0
      %809 = vmatpush1.bf16.msra.mxu0 0
      %810 = vmatprep.subr.bf16.mxu0 0
      %811 = vmatpush1.bf16.msra.mxu0 0
      %812 = vmatprep.subr.bf16.mxu0 0
      %813 = vmatpush1.bf16.msra.mxu0 0
      %814 = vmatprep.subr.bf16.mxu0 0
      %815 = vmatpush1.bf16.msra.mxu0 0
      %816 = vmatprep.subr.bf16.mxu0 0
      %817 = vmatpush1.bf16.msra.mxu0 0
      %818 = vmatprep.subr.bf16.mxu0 0
      %819 = vmatpush1.bf16.msra.mxu0 0
      %820 = vmatprep.subr.bf16.mxu0 0
      %821 = vmatpush1.bf16.msra.mxu0 0
      %822 = vmatprep.subr.bf16.mxu0 0
      %823 = vmatpush1.bf16.msra.mxu0 0
      %824 = vmatprep.subr.bf16.mxu0 0
      %825 = vmatpush1.bf16.msra.mxu0 0
      %826 = vmatprep.subr.bf16.mxu0 0
      %827 = vmatpush1.bf16.msra.mxu0 0
      %828 = vmatprep.subr.bf16.mxu0 0
      %829 = vmatpush1.bf16.msra.mxu0 0
      %830 = vmatprep.subr.bf16.mxu0 0
      %831 = vmatpush1.bf16.msra.mxu0 0
      %832 = vmatprep.mubr.bf16.mxu0 0
      %833 = vmatmul.mubr.bf16.gmra.mrb[0].mxu0 %v795
      %v834 = vpop.f32.mrb[0].mxu0
      %v835 = vadd.f32 0.0, %v834
      %v836 = vpop.f32.mrb[0].mxu0
      %v837 = vpop.f32.mrb[0].mxu0
      %v838 = vpop.f32.mrb[0].mxu0
      %839 = vdwg.mxu0
      %v841 = vsel %vm746, %v740, 0
      %v844 = vsel %vm750, %v257, 0
      %846 = vmatprep.subr.bf16.mxu0 0
      %847 = vmatpush1.bf16.msra.mxu0 %v844
      %848 = vmatprep.subr.bf16.mxu0 0
      %849 = vmatpush1.bf16.msra.mxu0 0
      %850 = vmatprep.subr.bf16.mxu0 0
      %851 = vmatpush1.bf16.msra.mxu0 0
      %852 = vmatprep.subr.bf16.mxu0 0
      %853 = vmatpush1.bf16.msra.mxu0 0
      %854 = vmatprep.subr.bf16.mxu0 0
      %855 = vmatpush1.bf16.msra.mxu0 0
      %856 = vmatprep.subr.bf16.mxu0 0
      %857 = vmatpush1.bf16.msra.mxu0 0
      %858 = vmatprep.subr.bf16.mxu0 0
      %859 = vmatpush1.bf16.msra.mxu0 0
      %860 = vmatprep.subr.bf16.mxu0 0
      %861 = vmatpush1.bf16.msra.mxu0 0
      %862 = vmatprep.subr.bf16.mxu0 0
      %863 = vmatpush1.bf16.msra.mxu0 0
      %864 = vmatprep.subr.bf16.mxu0 0
      %865 = vmatpush1.bf16.msra.mxu0 0
      %866 = vmatprep.subr.bf16.mxu0 0
      %867 = vmatpush1.bf16.msra.mxu0 0
      %868 = vmatprep.subr.bf16.mxu0 0
      %869 = vmatpush1.bf16.msra.mxu0 0
      %870 = vmatprep.subr.bf16.mxu0 0
      %871 = vmatpush1.bf16.msra.mxu0 0
      %872 = vmatprep.subr.bf16.mxu0 0
      %873 = vmatpush1.bf16.msra.mxu0 0
      %874 = vmatprep.subr.bf16.mxu0 0
      %875 = vmatpush1.bf16.msra.mxu0 0
      %876 = vmatprep.subr.bf16.mxu0 0
      %877 = vmatpush1.bf16.msra.mxu0 0
      %878 = vmatprep.mubr.bf16.mxu0 0
      %879 = vmatmul.mubr.bf16.gmra.mrb[0].mxu0 %v841
      %v880 = vpop.f32.mrb[0].mxu0
      %v881 = vadd.f32 0.0, %v880
      %v882 = vpop.f32.mrb[0].mxu0
      %v883 = vpop.f32.mrb[0].mxu0
      %v884 = vpop.f32.mrb[0].mxu0
      %885 = vdwg.mxu0
      %v887 = vsel %vm746, %v741, 0
      %v890 = vsel %vm750, %v258, 0
      %892 = vmatprep.subr.bf16.mxu0 0
      %893 = vmatpush1.bf16.msra.mxu0 %v890
      %894 = vmatprep.subr.bf16.mxu0 0
      %895 = vmatpush1.bf16.msra.mxu0 0
      %896 = vmatprep.subr.bf16.mxu0 0
      %897 = vmatpush1.bf16.msra.mxu0 0
      %898 = vmatprep.subr.bf16.mxu0 0
      %899 = vmatpush1.bf16.msra.mxu0 0
      %900 = vmatprep.subr.bf16.mxu0 0
      %901 = vmatpush1.bf16.msra.mxu0 0
      %902 = vmatprep.subr.bf16.mxu0 0
      %903 = vmatpush1.bf16.msra.mxu0 0
      %904 = vmatprep.subr.bf16.mxu0 0
      %905 = vmatpush1.bf16.msra.mxu0 0
      %906 = vmatprep.subr.bf16.mxu0 0
      %907 = vmatpush1.bf16.msra.mxu0 0
      %908 = vmatprep.subr.bf16.mxu0 0
      %909 = vmatpush1.bf16.msra.mxu0 0
      %910 = vmatprep.subr.bf16.mxu0 0
      %911 = vmatpush1.bf16.msra.mxu0 0
      %912 = vmatprep.subr.bf16.mxu0 0
      %913 = vmatpush1.bf16.msra.mxu0 0
      %914 = vmatprep.subr.bf16.mxu0 0
      %915 = vmatpush1.bf16.msra.mxu0 0
      %916 = vmatprep.subr.bf16.mxu0 0
      %917 = vmatpush1.bf16.msra.mxu0 0
      %918 = vmatprep.subr.bf16.mxu0 0
      %919 = vmatpush1.bf16.msra.mxu0 0
      %920 = vmatprep.subr.bf16.mxu0 0
      %921 = vmatpush1.bf16.msra.mxu0 0
      %922 = vmatprep.subr.bf16.mxu0 0
      %923 = vmatpush1.bf16.msra.mxu0 0
      %924 = vmatprep.mubr.bf16.mxu0 0
      %925 = vmatmul.mubr.bf16.gmra.mrb[0].mxu0 %v887
      %v926 = vpop.f32.mrb[0].mxu0
      %v927 = vadd.f32 0.0, %v926
      %v928 = vpop.f32.mrb[0].mxu0
      %v929 = vpop.f32.mrb[0].mxu0
      %v930 = vpop.f32.mrb[0].mxu0
      %931 = vdwg.mxu0
      %v933 = vsel %vm746, %v742, 0
      %v936 = vsel %vm750, %v259, 0
      %938 = vmatprep.subr.bf16.mxu0 0
      %939 = vmatpush1.bf16.msra.mxu0 %v936
      %940 = vmatprep.subr.bf16.mxu0 0
      %941 = vmatpush1.bf16.msra.mxu0 0
      %942 = vmatprep.subr.bf16.mxu0 0
      %943 = vmatpush1.bf16.msra.mxu0 0
      %944 = vmatprep.subr.bf16.mxu0 0
      %945 = vmatpush1.bf16.msra.mxu0 0
      %946 = vmatprep.subr.bf16.mxu0 0
      %947 = vmatpush1.bf16.msra.mxu0 0
      %948 = vmatprep.subr.bf16.mxu0 0
      %949 = vmatpush1.bf16.msra.mxu0 0
      %950 = vmatprep.subr.bf16.mxu0 0
      %951 = vmatpush1.bf16.msra.mxu0 0
      %952 = vmatprep.subr.bf16.mxu0 0
      %953 = vmatpush1.bf16.msra.mxu0 0
      %954 = vmatprep.subr.bf16.mxu0 0
      %955 = vmatpush1.bf16.msra.mxu0 0
      %956 = vmatprep.subr.bf16.mxu0 0
      %957 = vmatpush1.bf16.msra.mxu0 0
      %958 = vmatprep.subr.bf16.mxu0 0
      %959 = vmatpush1.bf16.msra.mxu0 0
      %960 = vmatprep.subr.bf16.mxu0 0
      %961 = vmatpush1.bf16.msra.mxu0 0
      %962 = vmatprep.subr.bf16.mxu0 0
      %963 = vmatpush1.bf16.msra.mxu0 0
      %964 = vmatprep.subr.bf16.mxu0 0
      %965 = vmatpush1.bf16.msra.mxu0 0
      %966 = vmatprep.subr.bf16.mxu0 0
      %967 = vmatpush1.bf16.msra.mxu0 0
      %968 = vmatprep.subr.bf16.mxu0 0
      %969 = vmatpush1.bf16.msra.mxu0 0
      %970 = vmatprep.mubr.bf16.mxu0 0
      %971 = vmatmul.mubr.bf16.gmra.mrb[0].mxu0 %v933
      %v972 = vpop.f32.mrb[0].mxu0
      %v973 = vadd.f32 0.0, %v972
      %v974 = vpop.f32.mrb[0].mxu0
      %v975 = vpop.f32.mrb[0].mxu0
      %v976 = vpop.f32.mrb[0].mxu0
      %977 = vdwg.mxu0
      %v979 = vsel %vm746, %v743, 0
      %v982 = vsel %vm750, %v260, 0
      %984 = vmatprep.subr.bf16.mxu0 0
      %985 = vmatpush1.bf16.msra.mxu0 %v982
      %986 = vmatprep.subr.bf16.mxu0 0
      %987 = vmatpush1.bf16.msra.mxu0 0
      %988 = vmatprep.subr.bf16.mxu0 0
      %989 = vmatpush1.bf16.msra.mxu0 0
      %990 = vmatprep.subr.bf16.mxu0 0
      %991 = vmatpush1.bf16.msra.mxu0 0
      %992 = vmatprep.subr.bf16.mxu0 0
      %993 = vmatpush1.bf16.msra.mxu0 0
      %994 = vmatprep.subr.bf16.mxu0 0
      %995 = vmatpush1.bf16.msra.mxu0 0
      %996 = vmatprep.subr.bf16.mxu0 0
      %997 = vmatpush1.bf16.msra.mxu0 0
      %998 = vmatprep.subr.bf16.mxu0 0
      %999 = vmatpush1.bf16.msra.mxu0 0
      %1000 = vmatprep.subr.bf16.mxu0 0
      %1001 = vmatpush1.bf16.msra.mxu0 0
      %1002 = vmatprep.subr.bf16.mxu0 0
      %1003 = vmatpush1.bf16.msra.mxu0 0
      %1004 = vmatprep.subr.bf16.mxu0 0
      %1005 = vmatpush1.bf16.msra.mxu0 0
      %1006 = vmatprep.subr.bf16.mxu0 0
      %1007 = vmatpush1.bf16.msra.mxu0 0
      %1008 = vmatprep.subr.bf16.mxu0 0
      %1009 = vmatpush1.bf16.msra.mxu0 0
      %1010 = vmatprep.subr.bf16.mxu0 0
      %1011 = vmatpush1.bf16.msra.mxu0 0
      %1012 = vmatprep.subr.bf16.mxu0 0
      %1013 = vmatpush1.bf16.msra.mxu0 0
      %1014 = vmatprep.subr.bf16.mxu0 0
      %1015 = vmatpush1.bf16.msra.mxu0 0
      %1016 = vmatprep.mubr.bf16.mxu0 0
      %1017 = vmatmul.mubr.bf16.gmra.mrb[0].mxu0 %v979
      %v1018 = vpop.f32.mrb[0].mxu0
      %v1019 = vadd.f32 0.0, %v1018
      %v1020 = vpop.f32.mrb[0].mxu0
      %v1021 = vpop.f32.mrb[0].mxu0
      %v1022 = vpop.f32.mrb[0].mxu0
      %1023 = vdwg.mxu0
      %v1025 = vsel %vm746, %v744, 0
      %v1028 = vsel %vm750, %v261, 0
      %1030 = vmatprep.subr.bf16.mxu0 0
      %1031 = vmatpush1.bf16.msra.mxu0 %v1028
      %1032 = vmatprep.subr.bf16.mxu0 0
      %1033 = vmatpush1.bf16.msra.mxu0 0
      %1034 = vmatprep.subr.bf16.mxu0 0
      %1035 = vmatpush1.bf16.msra.mxu0 0
      %1036 = vmatprep.subr.bf16.mxu0 0
      %1037 = vmatpush1.bf16.msra.mxu0 0
      %1038 = vmatprep.subr.bf16.mxu0 0
      %1039 = vmatpush1.bf16.msra.mxu0 0
      %1040 = vmatprep.subr.bf16.mxu0 0
      %1041 = vmatpush1.bf16.msra.mxu0 0
      %1042 = vmatprep.subr.bf16.mxu0 0
      %1043 = vmatpush1.bf16.msra.mxu0 0
      %1044 = vmatprep.subr.bf16.mxu0 0
      %1045 = vmatpush1.bf16.msra.mxu0 0
      %1046 = vmatprep.subr.bf16.mxu0 0
      %1047 = vmatpush1.bf16.msra.mxu0 0
      %1048 = vmatprep.subr.bf16.mxu0 0
      %1049 = vmatpush1.bf16.msra.mxu0 0
      %1050 = vmatprep.subr.bf16.mxu0 0
      %1051 = vmatpush1.bf16.msra.mxu0 0
      %1052 = vmatprep.subr.bf16.mxu0 0
      %1053 = vmatpush1.bf16.msra.mxu0 0
      %1054 = vmatprep.subr.bf16.mxu0 0
      %1055 = vmatpush1.bf16.msra.mxu0 0
      %1056 = vmatprep.subr.bf16.mxu0 0
      %1057 = vmatpush1.bf16.msra.mxu0 0
      %1058 = vmatprep.subr.bf16.mxu0 0
      %1059 = vmatpush1.bf16.msra.mxu0 0
      %1060 = vmatprep.subr.bf16.mxu0 0
      %1061 = vmatpush1.bf16.msra.mxu0 0
      %1062 = vmatprep.mubr.bf16.mxu0 0
      %1063 = vmatmul.mubr.bf16.gmra.mrb[0].mxu0 %v1025
      %v1064 = vpop.f32.mrb[0].mxu0
      %v1065 = vadd.f32 0.0, %v1064
      %v1066 = vpop.f32.mrb[0].mxu0
      %v1067 = vpop.f32.mrb[0].mxu0
      %v1068 = vpop.f32.mrb[0].mxu0
      %1069 = vdwg.mxu0
      %v1071 = vsel %vm746, %v745, 0
      %v1074 = vsel %vm750, %v262, 0
      %1076 = vmatprep.subr.bf16.mxu0 0
      %1077 = vmatpush1.bf16.msra.mxu0 %v1074
      %1078 = vmatprep.subr.bf16.mxu0 0
      %1079 = vmatpush1.bf16.msra.mxu0 0
      %1080 = vmatprep.subr.bf16.mxu0 0
      %1081 = vmatpush1.bf16.msra.mxu0 0
      %1082 = vmatprep.subr.bf16.mxu0 0
      %1083 = vmatpush1.bf16.msra.mxu0 0
      %1084 = vmatprep.subr.bf16.mxu0 0
      %1085 = vmatpush1.bf16.msra.mxu0 0
      %1086 = vmatprep.subr.bf16.mxu0 0
      %1087 = vmatpush1.bf16.msra.mxu0 0
      %1088 = vmatprep.subr.bf16.mxu0 0
      %1089 = vmatpush1.bf16.msra.mxu0 0
      %1090 = vmatprep.subr.bf16.mxu0 0
      %1091 = vmatpush1.bf16.msra.mxu0 0
      %1092 = vmatprep.subr.bf16.mxu0 0
      %1093 = vmatpush1.bf16.msra.mxu0 0
      %1094 = vmatprep.subr.bf16.mxu0 0
      %1095 = vmatpush1.bf16.msra.mxu0 0
      %1096 = vmatprep.subr.bf16.mxu0 0
      %1097 = vmatpush1.bf16.msra.mxu0 0
      %1098 = vmatprep.subr.bf16.mxu0 0
      %1099 = vmatpush1.bf16.msra.mxu0 0
      %1100 = vmatprep.subr.bf16.mxu0 0
      %1101 = vmatpush1.bf16.msra.mxu0 0
      %1102 = vmatprep.subr.bf16.mxu0 0
      %1103 = vmatpush1.bf16.msra.mxu0 0
      %1104 = vmatprep.subr.bf16.mxu0 0
      %1105 = vmatpush1.bf16.msra.mxu0 0
      %1106 = vmatprep.subr.bf16.mxu0 0
      %1107 = vmatpush1.bf16.msra.mxu0 0
      %1108 = vmatprep.mubr.bf16.mxu0 0
      %1109 = vmatmul.mubr.bf16.gmra.mrb[0].mxu0 %v1071
      %v1110 = vpop.f32.mrb[0].mxu0
      %v1111 = vadd.f32 0.0, %v1110
      %v1112 = vpop.f32.mrb[0].mxu0
      %v1113 = vpop.f32.mrb[0].mxu0
      %v1114 = vpop.f32.mrb[0].mxu0
      %1115 = vdwg.mxu0
      %vm1116 = vcmask 27648
      %1117 = vst.msk [vmem:[%s237] sm:$0xf] %vm1116, %v789
      %1118 = vst.msk [vmem:[%s237 + $0x4] sm:$0xf] %vm1116, %v835
      %1119 = vst.msk [vmem:[%s237 + $0x8] sm:$0xf] %vm1116, %v881
      %1120 = vst.msk [vmem:[%s237 + $0xc] sm:$0xf] %vm1116, %v927
      %1121 = vst.msk [vmem:[%s237 + $0x10] sm:$0xf] %vm1116, %v973
      %1122 = vst.msk [vmem:[%s237 + $0x14] sm:$0xf] %vm1116, %v1019
      %1123 = vst.msk [vmem:[%s237 + $0x18] sm:$0xf] %vm1116, %v1065
      %1124 = vst.msk [vmem:[%s237 + $0x1c] sm:$0xf] %vm1116, %v1111
      %p1125 = scmp.lt.s32.totalorder %s15, 1
      %s1126 = scalar_select %p1125, %s15, 1
      %s1127 = smul.addr %s1126, 8
      %s1128 = smul.addr %s1127, 4
      %s1129 = scalar_lea.vmem %s4, %s1128
      // Predicated region
      $region37: #{videobert_decoder_forward.49} parent=35 // pred_check
        %p1130 = pneg %p132
      $region38: #{videobert_decoder_forward.49} parent=35 // pred_check_branch
        %1132 = sbr.rel (%p1130) target = $region40
      $region39: #{videobert_decoder_forward.49} parent=35 // pred_region
        _
      $region40: #{videobert_decoder_forward.49} parent=35 // pred_fallthru
        _
    $region36: #{videobert_decoder_forward.49} parent=5 // pred_fallthru
      _
    %p1133 = scmp.le.s32.totalorder 2, %s10
    // Predicated region
    $region41: #{videobert_decoder_forward.49} parent=5 // pred_check
      %p1134 = pneg %p1133
    $region42: #{videobert_decoder_forward.49} parent=5 // pred_check_branch
      %1136 = sbr.rel (%p1134) target = $region44
    $region43: #{videobert_decoder_forward.49} parent=5 // pred_region
      %s1137 = ssub.s32 %s10, 2
      // Predicated region
      $region45: #{videobert_decoder_forward.49} parent=43 // pred_check
        %p1138 = pneg %p138
      $region46: #{videobert_decoder_forward.49} parent=43 // pred_check_branch
        %1140 = sbr.rel (%p1138) target = $region48
      $region47: #{videobert_decoder_forward.49} parent=43 // pred_region
        %p1141 = scmp.lt.s32.totalorder %s16, 1
        %s1142 = scalar_select %p1141, %s16, 1
        %s1143 = smul.addr %s1142, 8
        %s1144 = smul.addr %s1143, 4
        %s1145 = scalar_lea.vmem %s4, %s1144
      $region48: #{videobert_decoder_forward.49} parent=43 // pred_fallthru
        _
    $region44: #{videobert_decoder_forward.49} parent=5 // pred_fallthru
      _
  $region6: #{videobert_decoder_forward.49} parent=0 // loop_footer
    %s14 = sadd.s32 1, %s10
  $region7: #{videobert_decoder_forward.49} parent=0 // loop_footer_branch
    %9 = sbr.rel target = $region3
  $region8: #{videobert_decoder_forward.49} parent=0 // loop_exit
    _

// kernel: videobert_decoder_forward.53
$region0: #{videobert_decoder_forward.53}
  #allocation0 [shape = 'u32[]', space=smem, size = 0x4, offset = 0x4, fixed_abs, tag = 'smem constant byte address 0x4 - core index']
  #allocation1 [shape = 'u32[144,128]{1,0:T(1,128)}', space=vmem, size = 0x12000, scoped, tag = 'internal scratch']
  #allocation2 [shape = 'f32[8,32]{1,0:T(8,128)}', space=vmem, size = 0x1000, scoped, tag = 'scratch operand']
  %s0 = inlined_call_operand.vmem [shape: bf16[8,2048], index: 0, kind: input, shape index: {}]
  %s1 = inlined_call_operand.vmem [shape: bf16[2048,32], index: 1, kind: input, shape index: {}]
  %s2 = inlined_call_operand.vmem [shape: f32[1,32], index: 2, kind: input, shape index: {}]
  %s3 = inlined_call_operand.vmem [shape: f32[1,32], index: 3, kind: input, shape index: {}]
  %s4 = inlined_call_operand.vmem [shape: f32[8,32], index: 4, kind: output, shape index: {}]
  %s5 = sld [smem:[#allocation0]]
  $region57: #{videobert_decoder_forward.53} parent=0
    _
  %s7 = ssub.s32 1, %s5
  %s8 = scalar_select 0, %s7, %s5
  loop: start=0, step=1, limit=6
  $region2: #{videobert_decoder_forward.53} parent=0 // loop_pre_header
    _
  $region3: #{videobert_decoder_forward.53} parent=0 // loop_header
    %s10 = sphi 0, %s14
    %p11 = scmp.ge.s32.totalorder %s10, 6
    %s17 = sphi 0, %s36
    %s18 = sphi 0, %s32
    %s19 = sphi 0, %s28
    %s20 = sphi 0, %s17
    %s21 = sphi 0, %s18
    %s22 = sphi 0, %s19
    %s23 = sphi 0, %s20
    %s24 = sphi 0, %s21
    %s25 = sphi 0, %s22
    %s41 = sphi 0, %s43
    %s44 = sphi 0, %s41
    %s45 = sphi 0, %s44
    %s61 = sphi 0, %s45
    %s69 = sphi 0, %s71
    %s72 = sphi 0, %s69
    %s73 = sphi 0, %s72
    %s89 = sphi 0, %s73
    %s95 = sphi 0, %s97
    %s98 = sphi 0, %s95
    %s99 = sphi 0, %s98
    %s115 = sphi 0, %s99
    %s121 = sphi 0, %s123
    %s124 = sphi 0, %s121
    %s125 = sphi 0, %s124
    %s141 = sphi 0, %s125
    %s149 = sphi 0, %s151
    %s152 = sphi 0, %s149
    %s153 = sphi 0, %s152
    %s169 = sphi 0, %s153
  $region4: #{videobert_decoder_forward.53} parent=0 // loop_header_branch
    %13 = sbr.rel (%p11) target = $region8
  $region5: #{videobert_decoder_forward.53} parent=0 // loop_body
    %s15 = ssub.s32 %s10, 1
    %s16 = ssub.s32 %s10, 2
    %s26 = sadd.s32 1, %s19
    %p27 = scmp.ge.s32.totalorder %s26, 4
    %s28 = scalar_select %p27, 0, %s26
    %s29 = sadd.s32 1, %s18
    %s30 = scalar_select %p27, %s29, %s18
    %p31 = scmp.ge.s32.totalorder %s30, 1
    %s32 = scalar_select %p31, 0, %s30
    %s33 = sadd.s32 1, %s17
    %s34 = scalar_select %p31, %s33, %s17
    %p35 = scmp.ge.s32.totalorder %s34, 1
    %s36 = scalar_select %p35, 0, %s34
    %s37 = ssub.s32 %s17, %s36
    %s38 = ssub.s32 %s19, %s28
    %s39 = sor.u32 %s37, %s38
    %p40 = scmp.eq.s32.totalorder %s39, 0
    %s42 = sadd.s32 %s41, 1
    %s43 = scalar_select %p40, %s41, %s42
    %p46 = pneg %p40
    %p47 = scmp.eq.s32.totalorder %s10, 3
    %p48 = por %p46, %p47
    %p49 = scmp.ne.s32.totalorder %s41, %s44
    %p50 = scmp.eq.s32.totalorder %s10, 0
    %p51 = por %p49, %p50
    %p52 = scmp.ne.s32.totalorder %s41, %s44
    %p53 = scmp.eq.s32.totalorder %s15, 3
    %p54 = por %p52, %p53
    %p55 = scmp.ne.s32.totalorder %s44, %s45
    %p56 = scmp.eq.s32.totalorder %s15, 0
    %p57 = por %p55, %p56
    %p58 = scmp.ne.s32.totalorder %s44, %s45
    %p59 = scmp.eq.s32.totalorder %s16, 3
    %p60 = por %p58, %p59
    %p62 = scmp.ne.s32.totalorder %s45, %s61
    %p63 = scmp.eq.s32.totalorder %s16, 0
    %p64 = por %p62, %p63
    %s65 = ssub.s32 %s19, %s28
    %s66 = ssub.s32 %s18, %s32
    %s67 = sor.u32 %s65, %s66
    %p68 = scmp.eq.s32.totalorder %s67, 0
    %s70 = sadd.s32 %s69, 1
    %s71 = scalar_select %p68, %s69, %s70
    %p74 = pneg %p68
    %p75 = scmp.eq.s32.totalorder %s10, 3
    %p76 = por %p74, %p75
    %p77 = scmp.ne.s32.totalorder %s69, %s72
    %p78 = scmp.eq.s32.totalorder %s10, 0
    %p79 = por %p77, %p78
    %p80 = scmp.ne.s32.totalorder %s69, %s72
    %p81 = scmp.eq.s32.totalorder %s15, 3
    %p82 = por %p80, %p81
    %p83 = scmp.ne.s32.totalorder %s72, %s73
    %p84 = scmp.eq.s32.totalorder %s15, 0
    %p85 = por %p83, %p84
    %p86 = scmp.ne.s32.totalorder %s72, %s73
    %p87 = scmp.eq.s32.totalorder %s16, 3
    %p88 = por %p86, %p87
    %p90 = scmp.ne.s32.totalorder %s73, %s89
    %p91 = scmp.eq.s32.totalorder %s16, 0
    %p92 = por %p90, %p91
    %s93 = ssub.s32 %s18, %s32
    %p94 = scmp.eq.s32.totalorder %s93, 0
    %s96 = sadd.s32 %s95, 1
    %s97 = scalar_select %p94, %s95, %s96
    %p100 = pneg %p94
    %p101 = scmp.eq.s32.totalorder %s10, 3
    %p102 = por %p100, %p101
    %p103 = scmp.ne.s32.totalorder %s95, %s98
    %p104 = scmp.eq.s32.totalorder %s10, 0
    %p105 = por %p103, %p104
    %p106 = scmp.ne.s32.totalorder %s95, %s98
    %p107 = scmp.eq.s32.totalorder %s15, 3
    %p108 = por %p106, %p107
    %p109 = scmp.ne.s32.totalorder %s98, %s99
    %p110 = scmp.eq.s32.totalorder %s15, 0
    %p111 = por %p109, %p110
    %p112 = scmp.ne.s32.totalorder %s98, %s99
    %p113 = scmp.eq.s32.totalorder %s16, 3
    %p114 = por %p112, %p113
    %p116 = scmp.ne.s32.totalorder %s99, %s115
    %p117 = scmp.eq.s32.totalorder %s16, 0
    %p118 = por %p116, %p117
    %s119 = ssub.s32 %s18, %s32
    %p120 = scmp.eq.s32.totalorder %s119, 0
    %s122 = sadd.s32 %s121, 1
    %s123 = scalar_select %p120, %s121, %s122
    %p126 = pneg %p120
    %p127 = scmp.eq.s32.totalorder %s10, 3
    %p128 = por %p126, %p127
    %p129 = scmp.ne.s32.totalorder %s121, %s124
    %p130 = scmp.eq.s32.totalorder %s10, 0
    %p131 = por %p129, %p130
    %p132 = scmp.ne.s32.totalorder %s121, %s124
    %p133 = scmp.eq.s32.totalorder %s15, 3
    %p134 = por %p132, %p133
    %p135 = scmp.ne.s32.totalorder %s124, %s125
    %p136 = scmp.eq.s32.totalorder %s15, 0
    %p137 = por %p135, %p136
    %p138 = scmp.ne.s32.totalorder %s124, %s125
    %p139 = scmp.eq.s32.totalorder %s16, 3
    %p140 = por %p138, %p139
    %p142 = scmp.ne.s32.totalorder %s125, %s141
    %p143 = scmp.eq.s32.totalorder %s16, 0
    %p144 = por %p142, %p143
    %s145 = ssub.s32 %s17, %s36
    %s146 = ssub.s32 %s18, %s32
    %s147 = sor.u32 %s145, %s146
    %p148 = scmp.eq.s32.totalorder %s147, 0
    %s150 = sadd.s32 %s149, 1
    %s151 = scalar_select %p148, %s149, %s150
    %p154 = pneg %p148
    %p155 = scmp.eq.s32.totalorder %s10, 3
    %p156 = por %p154, %p155
    %p157 = scmp.ne.s32.totalorder %s149, %s152
    %p158 = scmp.eq.s32.totalorder %s10, 0
    %p159 = por %p157, %p158
    %p160 = scmp.ne.s32.totalorder %s149, %s152
    %p161 = scmp.eq.s32.totalorder %s15, 3
    %p162 = por %p160, %p161
    %p163 = scmp.ne.s32.totalorder %s152, %s153
    %p164 = scmp.eq.s32.totalorder %s15, 0
    %p165 = por %p163, %p164
    %p166 = scmp.ne.s32.totalorder %s152, %s153
    %p167 = scmp.eq.s32.totalorder %s16, 3
    %p168 = por %p166, %p167
    %p170 = scmp.ne.s32.totalorder %s153, %s169
    %p171 = scmp.eq.s32.totalorder %s16, 0
    %p172 = por %p170, %p171
    %p173 = scmp.le.s32.totalorder 1, %s10
    %p174 = scmp.lt.s32.totalorder %s10, 5
    %p175 = pnand %p173, %p174
    %p176 = pneg %p175
    // Predicated region
    $region9: #{videobert_decoder_forward.53} parent=5 // pred_check
      _
    $region10: #{videobert_decoder_forward.53} parent=5 // pred_check_branch
      %178 = sbr.rel (%p175) target = $region12
    $region11: #{videobert_decoder_forward.53} parent=5 // pred_region
      %s179 = ssub.s32 %s10, 1
      // Predicated region
      $region13: #{videobert_decoder_forward.53} parent=11 // pred_check
        %p180 = pneg %p111
      $region14: #{videobert_decoder_forward.53} parent=11 // pred_check_branch
        %182 = sbr.rel (%p180) target = $region16
      $region15: #{videobert_decoder_forward.53} parent=11 // pred_region
        %p183 = scmp.lt.s32.totalorder %s21, 0
        %s184 = scalar_select %p183, %s21, 0
        %s185 = scalar_lea.vmem %s2, %s184
      $region16: #{videobert_decoder_forward.53} parent=11 // pred_fallthru
        _
      // Predicated region
      $region17: #{videobert_decoder_forward.53} parent=11 // pred_check
        %p186 = pneg %p137
      $region18: #{videobert_decoder_forward.53} parent=11 // pred_check_branch
        %188 = sbr.rel (%p186) target = $region20
      $region19: #{videobert_decoder_forward.53} parent=11 // pred_region
        %p189 = scmp.lt.s32.totalorder %s21, 0
        %s190 = scalar_select %p189, %s21, 0
        %s191 = scalar_lea.vmem %s3, %s190
      $region20: #{videobert_decoder_forward.53} parent=11 // pred_fallthru
        _
    $region12: #{videobert_decoder_forward.53} parent=5 // pred_fallthru
      _
    %p192 = scmp.lt.s32.totalorder %s10, 4
    // Predicated region
    $region21: #{videobert_decoder_forward.53} parent=5 // pred_check
      %p193 = pneg %p192
    $region22: #{videobert_decoder_forward.53} parent=5 // pred_check_branch
      %195 = sbr.rel (%p193) target = $region24
    $region23: #{videobert_decoder_forward.53} parent=5 // pred_region
      // Predicated region
      $region25: #{videobert_decoder_forward.53} parent=23 // pred_check
        %p196 = pneg %p51
      $region26: #{videobert_decoder_forward.53} parent=23 // pred_check_branch
        %198 = sbr.rel (%p196) target = $region28
      $region27: #{videobert_decoder_forward.53} parent=23 // pred_region
        %s199 = smul.u32 4, %s19
        %p200 = scmp.lt.s32.totalorder %s17, 0
        %s201 = scalar_select %p200, %s17, 0
        %p202 = scmp.lt.s32.totalorder %s199, 15
        %s203 = scalar_select %p202, %s199, 15
        %s204 = smul.addr %s201, 16
        %s205 = sadd.s32 %s203, %s204
        %s206 = smul.addr %s205, 4
        %s207 = scalar_lea.vmem %s0, %s206
        %s208 = smul.u32 4, %s19
      $region28: #{videobert_decoder_forward.53} parent=23 // pred_fallthru
        _
      // Predicated region
      $region29: #{videobert_decoder_forward.53} parent=23 // pred_check
        %p209 = pneg %p79
      $region30: #{videobert_decoder_forward.53} parent=23 // pred_check_branch
        %211 = sbr.rel (%p209) target = $region32
      $region31: #{videobert_decoder_forward.53} parent=23 // pred_region
        %s212 = smul.u32 64, %s19
        %p213 = scmp.lt.s32.totalorder %s212, 255
        %s214 = scalar_select %p213, %s212, 255
        %p215 = scmp.lt.s32.totalorder %s18, 0
        %s216 = scalar_select %p215, %s18, 0
        %s217 = sadd.s32 %s216, %s214
        %s218 = smul.addr %s217, 4
        %s219 = scalar_lea.vmem %s1, %s218
        %s220 = smul.u32 64, %s19
      $region32: #{videobert_decoder_forward.53} parent=23 // pred_fallthru
        _
    $region24: #{videobert_decoder_forward.53} parent=5 // pred_fallthru
      _
    %p221 = scmp.le.s32.totalorder 1, %s10
    %p222 = scmp.lt.s32.totalorder %s10, 5
    %p223 = pnand %p221, %p222
    %p224 = pneg %p223
    // Predicated region
    $region33: #{videobert_decoder_forward.53} parent=5 // pred_check
      _
    $region34: #{videobert_decoder_forward.53} parent=5 // pred_check_branch
      %226 = sbr.rel (%p223) target = $region36
    $region35: #{videobert_decoder_forward.53} parent=5 // pred_region
      %s227 = ssub.s32 %s10, 1
      %s228 = smul.u32 4, %s22
      %p229 = scmp.lt.s32.totalorder %s20, 0
      %s230 = scalar_select %p229, %s20, 0
      %p231 = scmp.lt.s32.totalorder %s228, 15
      %s232 = scalar_select %p231, %s228, 15
      %s233 = smul.addr %s230, 16
      %s234 = sadd.s32 %s232, %s233
      %s235 = smul.addr %s234, 4
      %s236 = scalar_lea.vmem %s0, %s235
      %p237 = pneg %p57
      %p238 = pneg %p54
      %s239 = smul.u32 64, %s22
      %p240 = scmp.lt.s32.totalorder %s239, 255
      %s241 = scalar_select %p240, %s239, 255
      %p242 = scmp.lt.s32.totalorder %s21, 0
      %s243 = scalar_select %p242, %s21, 0
      %s244 = sadd.s32 %s243, %s241
      %s245 = smul.addr %s244, 4
      %s246 = scalar_lea.vmem %s1, %s245
      %p247 = pneg %p85
      %p248 = pneg %p82
      %p249 = scmp.lt.s32.totalorder %s21, 0
      %s250 = scalar_select %p249, %s21, 0
      %s251 = scalar_lea.vmem %s2, %s250
      %p252 = pneg %p111
      %p253 = pneg %p108
      %p254 = scmp.lt.s32.totalorder %s21, 0
      %s255 = scalar_select %p254, %s21, 0
      %s256 = scalar_lea.vmem %s3, %s255
      %p257 = pneg %p137
      %p258 = pneg %p134
      %p259 = pneg %p165
      %p260 = pneg %p162
      %p261 = scmp.lt.s32.totalorder %s20, 0
      %s262 = scalar_select %p261, %s20, 0
      %p263 = scmp.lt.s32.totalorder %s21, 0
      %s264 = scalar_select %p263, %s21, 0
      %s265 = sadd.s32 %s264, %s262
      %s266 = smul.addr %s265, 8
      %s267 = scalar_lea.vmem %s4, %s266
      %s268 = smul.u32 4, %s22
      %p269 = scmp.lt.s32.totalorder %s20, 0
      %s270 = scalar_select %p269, %s20, 0
      %p271 = scmp.lt.s32.totalorder %s268, 15
      %s272 = scalar_select %p271, %s268, 15
      %s273 = smul.addr %s270, 16
      %s274 = sadd.s32 %s272, %s273
      %s275 = smul.addr %s274, 4
      %s276 = scalar_lea.vmem %s0, %s275
      %s277 = smul.u32 4, %s22
      %s278 = smul.u32 64, %s22
      %p279 = scmp.lt.s32.totalorder %s278, 255
      %s280 = scalar_select %p279, %s278, 255
      %p281 = scmp.lt.s32.totalorder %s21, 0
      %s282 = scalar_select %p281, %s21, 0
      %s283 = sadd.s32 %s282, %s280
      %s284 = smul.addr %s283, 4
      %s285 = scalar_lea.vmem %s1, %s284
      %s286 = smul.u32 64, %s22
      %p287 = scmp.lt.s32.totalorder %s21, 0
      %s288 = scalar_select %p287, %s21, 0
      %s289 = scalar_lea.vmem %s2, %s288
      %p290 = scmp.lt.s32.totalorder %s21, 0
      %s291 = scalar_select %p290, %s21, 0
      %s292 = scalar_lea.vmem %s3, %s291
      %p293 = scmp.lt.s32.totalorder %s20, 0
      %s294 = scalar_select %p293, %s20, 0
      %p295 = scmp.lt.s32.totalorder %s21, 0
      %s296 = scalar_select %p295, %s21, 0
      %s297 = sadd.s32 %s296, %s294
      %s298 = smul.addr %s297, 8
      %s299 = scalar_lea.vmem %s4, %s298
      %p301 = scmp.eq.s32.totalorder %s22, 0
      // Predicated region
      $region37: #{videobert_decoder_forward.53} parent=35 // pred_check
        %p302 = pneg %p301
      $region38: #{videobert_decoder_forward.53} parent=35 // pred_check_branch
        %304 = sbr.rel (%p302) target = $region40
      $region39: #{videobert_decoder_forward.53} parent=35 // pred_region
        %vm305 = vcmask 261120
        %306 = vst.msk [vmem:[#allocation2] sm:$0xff] %vm305, 0.0
      $region40: #{videobert_decoder_forward.53} parent=35 // pred_fallthru
        _
      %v307 = vld [vmem:[#allocation2] sm:$0xff]
      %v308 = vld [vmem:[%s276] sm:$0xff]
      %v309 = vld [vmem:[%s276 + $0x8] sm:$0xff]
      %v310 = vld [vmem:[%s285] sm:$0xf]
      %v311 = vld [vmem:[%s285 + $0x4] sm:$0xf]
      %v312 = vld [vmem:[%s285 + $0x8] sm:$0xf]
      %v313 = vld [vmem:[%s285 + $0xc] sm:$0xf]
      %v314 = vld [vmem:[%s285 + $0x10] sm:$0xf]
      %v315 = vld [vmem:[%s285 + $0x14] sm:$0xf]
      %v316 = vld [vmem:[%s285 + $0x18] sm:$0xf]
      %v317 = vld [vmem:[%s285 + $0x1c] sm:$0xf]
      %v318 = vld [vmem:[%s285 + $0x20] sm:$0xf]
      %v319 = vld [vmem:[%s285 + $0x24] sm:$0xf]
      %v320 = vld [vmem:[%s285 + $0x28] sm:$0xf]
      %v321 = vld [vmem:[%s285 + $0x2c] sm:$0xf]
      %v322 = vld [vmem:[%s285 + $0x30] sm:$0xf]
      %v323 = vld [vmem:[%s285 + $0x34] sm:$0xf]
      %v324 = vld [vmem:[%s285 + $0x38] sm:$0xf]
      %v325 = vld [vmem:[%s285 + $0x3c] sm:$0xf]
      %v326 = vld [vmem:[%s285 + $0x40] sm:$0xf]
      %v327 = vld [vmem:[%s285 + $0x44] sm:$0xf]
      %v328 = vld [vmem:[%s285 + $0x48] sm:$0xf]
      %v329 = vld [vmem:[%s285 + $0x4c] sm:$0xf]
      %v330 = vld [vmem:[%s285 + $0x50] sm:$0xf]
      %v331 = vld [vmem:[%s285 + $0x54] sm:$0xf]
      %v332 = vld [vmem:[%s285 + $0x58] sm:$0xf]
      %v333 = vld [vmem:[%s285 + $0x5c] sm:$0xf]
      %v334 = vld [vmem:[%s285 + $0x60] sm:$0xf]
      %v335 = vld [vmem:[%s285 + $0x64] sm:$0xf]
      %v336 = vld [vmem:[%s285 + $0x68] sm:$0xf]
      %v337 = vld [vmem:[%s285 + $0x6c] sm:$0xf]
      %v338 = vld [vmem:[%s285 + $0x70] sm:$0xf]
      %v339 = vld [vmem:[%s285 + $0x74] sm:$0xf]
      %v340 = vld [vmem:[%s285 + $0x78] sm:$0xf]
      %v341 = vld [vmem:[%s285 + $0x7c] sm:$0xf]
      %v342 = vld [vmem:[%s285 + $0x80] sm:$0xf]
      %v343 = vld [vmem:[%s285 + $0x84] sm:$0xf]
      %v344 = vld [vmem:[%s285 + $0x88] sm:$0xf]
      %v345 = vld [vmem:[%s285 + $0x8c] sm:$0xf]
      %v346 = vld [vmem:[%s285 + $0x90] sm:$0xf]
      %v347 = vld [vmem:[%s285 + $0x94] sm:$0xf]
      %v348 = vld [vmem:[%s285 + $0x98] sm:$0xf]
      %v349 = vld [vmem:[%s285 + $0x9c] sm:$0xf]
      %v350 = vld [vmem:[%s285 + $0xa0] sm:$0xf]
      %v351 = vld [vmem:[%s285 + $0xa4] sm:$0xf]
      %v352 = vld [vmem:[%s285 + $0xa8] sm:$0xf]
      %v353 = vld [vmem:[%s285 + $0xac] sm:$0xf]
      %v354 = vld [vmem:[%s285 + $0xb0] sm:$0xf]
      %v355 = vld [vmem:[%s285 + $0xb4] sm:$0xf]
      %v356 = vld [vmem:[%s285 + $0xb8] sm:$0xf]
      %v357 = vld [vmem:[%s285 + $0xbc] sm:$0xf]
      %v358 = vld [vmem:[%s285 + $0xc0] sm:$0xf]
      %v359 = vld [vmem:[%s285 + $0xc4] sm:$0xf]
      %v360 = vld [vmem:[%s285 + $0xc8] sm:$0xf]
      %v361 = vld [vmem:[%s285 + $0xcc] sm:$0xf]
      %v362 = vld [vmem:[%s285 + $0xd0] sm:$0xf]
      %v363 = vld [vmem:[%s285 + $0xd4] sm:$0xf]
      %v364 = vld [vmem:[%s285 + $0xd8] sm:$0xf]
      %v365 = vld [vmem:[%s285 + $0xdc] sm:$0xf]
      %v366 = vld [vmem:[%s285 + $0xe0] sm:$0xf]
      %v367 = vld [vmem:[%s285 + $0xe4] sm:$0xf]
      %v368 = vld [vmem:[%s285 + $0xe8] sm:$0xf]
      %v369 = vld [vmem:[%s285 + $0xec] sm:$0xf]
      %v370 = vld [vmem:[%s285 + $0xf0] sm:$0xf]
      %v371 = vld [vmem:[%s285 + $0xf4] sm:$0xf]
      %v372 = vld [vmem:[%s285 + $0xf8] sm:$0xf]
      %v373 = vld [vmem:[%s285 + $0xfc] sm:$0xf]
      %v376 = vunpack.c.l.b16 %v308
      %v377 = vunpack.c.h.b16 %v308
      %v378 = vunpack.c.l.b16 %v309
      %v379 = vunpack.c.h.b16 %v309
      %v380 = vpack.c.b16 %v376, %v376
      %v381 = vpack.c.b16 %v377, %v377
      %v382 = vpack.c.b16 %v378, %v378
      %v383 = vpack.c.b16 %v379, %v379
      %v452 = vunpack.c.l.b16 %v310
      %v453 = vunpack.c.l.b16 %v311
      %v454 = vunpack.c.l.b16 %v312
      %v455 = vunpack.c.l.b16 %v313
      %v456 = vunpack.c.l.b16 %v314
      %v457 = vunpack.c.l.b16 %v315
      %v458 = vunpack.c.l.b16 %v316
      %v459 = vunpack.c.l.b16 %v317
      %v460 = vunpack.c.l.b16 %v318
      %v461 = vunpack.c.l.b16 %v319
      %v462 = vunpack.c.l.b16 %v320
      %v463 = vunpack.c.l.b16 %v321
      %v464 = vunpack.c.l.b16 %v322
      %v465 = vunpack.c.l.b16 %v323
      %v466 = vunpack.c.l.b16 %v324
      %v467 = vunpack.c.l.b16 %v325
      %v468 = vunpack.c.l.b16 %v326
      %v469 = vunpack.c.l.b16 %v327
      %v470 = vunpack.c.l.b16 %v328
      %v471 = vunpack.c.l.b16 %v329
      %v472 = vunpack.c.l.b16 %v330
      %v473 = vunpack.c.l.b16 %v331
      %v474 = vunpack.c.l.b16 %v332
      %v475 = vunpack.c.l.b16 %v333
      %v476 = vunpack.c.l.b16 %v334
      %v477 = vunpack.c.l.b16 %v335
      %v478 = vunpack.c.l.b16 %v336
      %v479 = vunpack.c.l.b16 %v337
      %v480 = vunpack.c.l.b16 %v338
      %v481 = vunpack.c.l.b16 %v339
      %v482 = vunpack.c.l.b16 %v340
      %v483 = vunpack.c.l.b16 %v341
      %v484 = vunpack.c.l.b16 %v342
      %v485 = vunpack.c.l.b16 %v343
      %v486 = vunpack.c.l.b16 %v344
      %v487 = vunpack.c.l.b16 %v345
      %v488 = vunpack.c.l.b16 %v346
      %v489 = vunpack.c.l.b16 %v347
      %v490 = vunpack.c.l.b16 %v348
      %v491 = vunpack.c.l.b16 %v349
      %v492 = vunpack.c.l.b16 %v350
      %v493 = vunpack.c.l.b16 %v351
      %v494 = vunpack.c.l.b16 %v352
      %v495 = vunpack.c.l.b16 %v353
      %v496 = vunpack.c.l.b16 %v354
      %v497 = vunpack.c.l.b16 %v355
      %v498 = vunpack.c.l.b16 %v356
      %v499 = vunpack.c.l.b16 %v357
      %v500 = vunpack.c.l.b16 %v358
      %v501 = vunpack.c.l.b16 %v359
      %v502 = vunpack.c.l.b16 %v360
      %v503 = vunpack.c.l.b16 %v361
      %v504 = vunpack.c.l.b16 %v362
      %v505 = vunpack.c.l.b16 %v363
      %v506 = vunpack.c.l.b16 %v364
      %v507 = vunpack.c.l.b16 %v365
      %v508 = vunpack.c.l.b16 %v366
      %v509 = vunpack.c.l.b16 %v367
      %v510 = vunpack.c.l.b16 %v368
      %v511 = vunpack.c.l.b16 %v369
      %v512 = vunpack.c.l.b16 %v370
      %v513 = vunpack.c.l.b16 %v371
      %v514 = vunpack.c.l.b16 %v372
      %v515 = vunpack.c.l.b16 %v373
      %v516 = vpack.c.b16 %v453, %v452
      %v517 = vpack.c.b16 %v455, %v454
      %v518 = vpack.c.b16 %v457, %v456
      %v519 = vpack.c.b16 %v459, %v458
      %v520 = vpack.c.b16 %v461, %v460
      %v521 = vpack.c.b16 %v463, %v462
      %v522 = vpack.c.b16 %v465, %v464
      %v523 = vpack.c.b16 %v467, %v466
      %v524 = vpack.c.b16 %v469, %v468
      %v525 = vpack.c.b16 %v471, %v470
      %v526 = vpack.c.b16 %v473, %v472
      %v527 = vpack.c.b16 %v475, %v474
      %v528 = vpack.c.b16 %v477, %v476
      %v529 = vpack.c.b16 %v479, %v478
      %v530 = vpack.c.b16 %v481, %v480
      %v531 = vpack.c.b16 %v483, %v482
      %v532 = vpack.c.b16 %v485, %v484
      %v533 = vpack.c.b16 %v487, %v486
      %v534 = vpack.c.b16 %v489, %v488
      %v535 = vpack.c.b16 %v491, %v490
      %v536 = vpack.c.b16 %v493, %v492
      %v537 = vpack.c.b16 %v495, %v494
      %v538 = vpack.c.b16 %v497, %v496
      %v539 = vpack.c.b16 %v499, %v498
      %v540 = vpack.c.b16 %v501, %v500
      %v541 = vpack.c.b16 %v503, %v502
      %v542 = vpack.c.b16 %v505, %v504
      %v543 = vpack.c.b16 %v507, %v506
      %v544 = vpack.c.b16 %v509, %v508
      %v545 = vpack.c.b16 %v511, %v510
      %v546 = vpack.c.b16 %v513, %v512
      %v547 = vpack.c.b16 %v515, %v514
      %580 = vmatprep.subr.bf16.mxu0 0
      %581 = vmatpush1.bf16.msra.mxu0 %v516
      %582 = vmatprep.subr.bf16.mxu0 0
      %583 = vmatpush1.bf16.msra.mxu0 %v517
      %584 = vmatprep.subr.bf16.mxu0 0
      %585 = vmatpush1.bf16.msra.mxu0 %v518
      %586 = vmatprep.subr.bf16.mxu0 0
      %587 = vmatpush1.bf16.msra.mxu0 %v519
      %588 = vmatprep.subr.bf16.mxu0 0
      %589 = vmatpush1.bf16.msra.mxu0 %v520
      %590 = vmatprep.subr.bf16.mxu0 0
      %591 = vmatpush1.bf16.msra.mxu0 %v521
      %592 = vmatprep.subr.bf16.mxu0 0
      %593 = vmatpush1.bf16.msra.mxu0 %v522
      %594 = vmatprep.subr.bf16.mxu0 0
      %595 = vmatpush1.bf16.msra.mxu0 %v523
      %596 = vmatprep.subr.bf16.mxu0 0
      %597 = vmatpush1.bf16.msra.mxu0 %v524
      %598 = vmatprep.subr.bf16.mxu0 0
      %599 = vmatpush1.bf16.msra.mxu0 %v525
      %600 = vmatprep.subr.bf16.mxu0 0
      %601 = vmatpush1.bf16.msra.mxu0 %v526
      %602 = vmatprep.subr.bf16.mxu0 0
      %603 = vmatpush1.bf16.msra.mxu0 %v527
      %604 = vmatprep.subr.bf16.mxu0 0
      %605 = vmatpush1.bf16.msra.mxu0 %v528
      %606 = vmatprep.subr.bf16.mxu0 0
      %607 = vmatpush1.bf16.msra.mxu0 %v529
      %608 = vmatprep.subr.bf16.mxu0 0
      %609 = vmatpush1.bf16.msra.mxu0 %v530
      %610 = vmatprep.subr.bf16.mxu0 0
      %611 = vmatpush1.bf16.msra.mxu0 %v531
      %612 = vmatprep.mubr.bf16.mxu0 %v381
      %613 = vmatmul.mubr.bf16.gmra.mrb[0].mxu0 %v380
      %v614 = vpop.f32.mrb[0].mxu0
      %v615 = vadd.f32 0.0, %v614
      %v616 = vpop.f32.mrb[0].mxu0
      %v617 = vpop.f32.mrb[0].mxu0
      %v618 = vpop.f32.mrb[0].mxu0
      %619 = vdwg.mxu0
      %620 = vmatprep.subr.bf16.mxu0 0
      %621 = vmatpush1.bf16.msra.mxu0 %v532
      %622 = vmatprep.subr.bf16.mxu0 0
      %623 = vmatpush1.bf16.msra.mxu0 %v533
      %624 = vmatprep.subr.bf16.mxu0 0
      %625 = vmatpush1.bf16.msra.mxu0 %v534
      %626 = vmatprep.subr.bf16.mxu0 0
      %627 = vmatpush1.bf16.msra.mxu0 %v535
      %628 = vmatprep.subr.bf16.mxu0 0
      %629 = vmatpush1.bf16.msra.mxu0 %v536
      %630 = vmatprep.subr.bf16.mxu0 0
      %631 = vmatpush1.bf16.msra.mxu0 %v537
      %632 = vmatprep.subr.bf16.mxu0 0
      %633 = vmatpush1.bf16.msra.mxu0 %v538
      %634 = vmatprep.subr.bf16.mxu0 0
      %635 = vmatpush1.bf16.msra.mxu0 %v539
      %636 = vmatprep.subr.bf16.mxu0 0
      %637 = vmatpush1.bf16.msra.mxu0 %v540
      %638 = vmatprep.subr.bf16.mxu0 0
      %639 = vmatpush1.bf16.msra.mxu0 %v541
      %640 = vmatprep.subr.bf16.mxu0 0
      %641 = vmatpush1.bf16.msra.mxu0 %v542
      %642 = vmatprep.subr.bf16.mxu0 0
      %643 = vmatpush1.bf16.msra.mxu0 %v543
      %644 = vmatprep.subr.bf16.mxu0 0
      %645 = vmatpush1.bf16.msra.mxu0 %v544
      %646 = vmatprep.subr.bf16.mxu0 0
      %647 = vmatpush1.bf16.msra.mxu0 %v545
      %648 = vmatprep.subr.bf16.mxu0 0
      %649 = vmatpush1.bf16.msra.mxu0 %v546
      %650 = vmatprep.subr.bf16.mxu0 0
      %651 = vmatpush1.bf16.msra.mxu0 %v547
      %652 = vmatprep.mubr.bf16.mxu0 %v383
      %653 = vmatmul.mubr.bf16.gmra.mrb[0].mxu0 %v382
      %v654 = vpop.f32.mrb[0].mxu0
      %v655 = vadd.f32 %v615, %v654
      %v656 = vpop.f32.mrb[0].mxu0
      %v657 = vpop.f32.mrb[0].mxu0
      %v658 = vpop.f32.mrb[0].mxu0
      %659 = vdwg.mxu0
      %v660 = vadd.f32 %v307, %v655
      %vm661 = vcmask 261120
      %662 = vst.msk [vmem:[#allocation2] sm:$0xff] %vm661, %v660
      %p663 = scmp.eq.s32.totalorder %s22, 3
      // Predicated region
      $region41: #{videobert_decoder_forward.53} parent=35 // pred_check
        %p664 = pneg %p663
      $region42: #{videobert_decoder_forward.53} parent=35 // pred_check_branch
        %666 = sbr.rel (%p664) target = $region44
      $region43: #{videobert_decoder_forward.53} parent=35 // pred_region
        %v667 = vld [vmem:[#allocation2] sm:$0xff]
        %v668 = vld [vmem:[%s289] sm:$0x1]
        %v670 = vlaneseq
        %v671 = vshrl.u32 %v670, 7
        %v672 = vsub.s32 0, %v671
        %v673 = vrot.slane %v668, %v672
        %v675 = vmul.f32 %v667, %v673
        %v676 = vld [vmem:[%s292] sm:$0x1]
        %v678 = vlaneseq
        %v679 = vshrl.u32 %v678, 7
        %v680 = vsub.s32 0, %v679
        %v681 = vrot.slane %v676, %v680
        %v683 = vadd.f32 %v675, %v681
        %684 = vst.msk [vmem:[%s299] sm:$0xff] %vm661, %v683
      $region44: #{videobert_decoder_forward.53} parent=35 // pred_fallthru
        _
      %p685 = scmp.lt.s32.totalorder %s20, 0
      %s686 = scalar_select %p685, %s20, 0
      %p687 = scmp.lt.s32.totalorder %s21, 0
      %s688 = scalar_select %p687, %s21, 0
      %s689 = sadd.s32 %s688, %s686
      %s690 = smul.addr %s689, 8
      %s691 = scalar_lea.vmem %s4, %s690
      // Predicated region
      $region45: #{videobert_decoder_forward.53} parent=35 // pred_check
        %p692 = pneg %p162
      $region46: #{videobert_decoder_forward.53} parent=35 // pred_check_branch
        %694 = sbr.rel (%p692) target = $region48
      $region47: #{videobert_decoder_forward.53} parent=35 // pred_region
        _
      $region48: #{videobert_decoder_forward.53} parent=35 // pred_fallthru
        _
      // Predicated region
      $region49: #{videobert_decoder_forward.53} parent=35 // pred_check
        %p695 = pneg %p162
      $region50: #{videobert_decoder_forward.53} parent=35 // pred_check_branch
        %697 = sbr.rel (%p695) target = $region52
      $region51: #{videobert_decoder_forward.53} parent=35 // pred_region
        %p698 = scmp.lt.s32.totalorder %s20, 0
        %s699 = scalar_select %p698, %s20, 0
        %p700 = scmp.lt.s32.totalorder %s21, 0
        %s701 = scalar_select %p700, %s21, 0
        %s702 = sadd.s32 %s701, %s699
        %s703 = smul.addr %s702, 8
        %s704 = scalar_lea.vmem %s4, %s703
      $region52: #{videobert_decoder_forward.53} parent=35 // pred_fallthru
        _
    $region36: #{videobert_decoder_forward.53} parent=5 // pred_fallthru
      _
    %p705 = scmp.le.s32.totalorder 2, %s10
    // Predicated region
    $region53: #{videobert_decoder_forward.53} parent=5 // pred_check
      %p706 = pneg %p705
    $region54: #{videobert_decoder_forward.53} parent=5 // pred_check_branch
      %708 = sbr.rel (%p706) target = $region56
    $region55: #{videobert_decoder_forward.53} parent=5 // pred_region
      %s709 = ssub.s32 %s10, 2
    $region56: #{videobert_decoder_forward.53} parent=5 // pred_fallthru
      _
  $region6: #{videobert_decoder_forward.53} parent=0 // loop_footer
    %s14 = sadd.s32 1, %s10
  $region7: #{videobert_decoder_forward.53} parent=0 // loop_footer_branch
    %9 = sbr.rel target = $region3
  $region8: #{videobert_decoder_forward.53} parent=0 // loop_exit
    _

// kernel: videobert_decoder_forward.54
$region0: #{videobert_decoder_forward.54}
  #allocation0 [shape = 'u32[]', space=smem, size = 0x4, offset = 0x4, fixed_abs, tag = 'smem constant byte address 0x4 - core index']
  #allocation1 [shape = 'u32[144,128]{1,0:T(1,128)}', space=vmem, size = 0x12000, scoped, tag = 'internal scratch']
  %s0 = inlined_call_operand.vmem [shape: f32[8,32], index: 0, kind: input, shape index: {}]
  %s1 = inlined_call_operand.vmem [shape: f32[8,32], index: 1, kind: input, shape index: {}]
  %s2 = inlined_call_operand.vmem [shape: f32[1,32], index: 2, kind: input, shape index: {}]
  %s3 = inlined_call_operand.vmem [shape: f32[1,32], index: 3, kind: input, shape index: {}]
  %s4 = inlined_call_operand.vmem [shape: f32[8,32], index: 4, kind: output, shape index: {}]
  %s5 = sld [smem:[#allocation0]]
  $region26: #{videobert_decoder_forward.54} parent=0
    _
  %s7 = ssub.s32 1, %s5
  %s8 = scalar_select 0, %s7, %s5
  // Predicated region
  $region2: #{videobert_decoder_forward.54} parent=0 // pred_check
    _
  $region3: #{videobert_decoder_forward.54} parent=0 // pred_check_branch
    %10 = sbr.rel (0) target = $region5
  $region4: #{videobert_decoder_forward.54} parent=0 // pred_region
    _
  $region5: #{videobert_decoder_forward.54} parent=0 // pred_fallthru
    _
  // Predicated region
  $region6: #{videobert_decoder_forward.54} parent=0 // pred_check
    _
  $region7: #{videobert_decoder_forward.54} parent=0 // pred_check_branch
    %12 = sbr.rel (0) target = $region9
  $region8: #{videobert_decoder_forward.54} parent=0 // pred_region
    _
  $region9: #{videobert_decoder_forward.54} parent=0 // pred_fallthru
    _
  // Predicated region
  $region10: #{videobert_decoder_forward.54} parent=0 // pred_check
    _
  $region11: #{videobert_decoder_forward.54} parent=0 // pred_check_branch
    %14 = sbr.rel (0) target = $region13
  $region12: #{videobert_decoder_forward.54} parent=0 // pred_region
    _
  $region13: #{videobert_decoder_forward.54} parent=0 // pred_fallthru
    _
  // Predicated region
  $region14: #{videobert_decoder_forward.54} parent=0 // pred_check
    _
  $region15: #{videobert_decoder_forward.54} parent=0 // pred_check_branch
    %16 = sbr.rel (0) target = $region17
  $region16: #{videobert_decoder_forward.54} parent=0 // pred_region
    _
  $region17: #{videobert_decoder_forward.54} parent=0 // pred_fallthru
    _
  %v17 = vld [vmem:[%s0] sm:$0xff]
  %v18 = vld [vmem:[%s1] sm:$0xff]
  %v19 = vadd.f32 %v17, %v18
  %vm20 = vcmask 261120
  %v21 = vsel %vm20, %v19, 0.0
  %22 = vadd.xlane.f32.xlu0 %v21
  %v23 = vpop.xlane.xlu0 %22
  %v24 = vrcp.pop 32.0
  %v25 = vmul.f32 %v23, %v24
  %v26 = vsub.f32 %v19, %v25
  %v27 = vmul.f32 %v26, %v26
  %v28 = vsel %vm20, %v27, 0.0
  %29 = vadd.xlane.f32.xlu0 %v28
  %v30 = vpop.xlane.xlu0 %29
  %v31 = vmul.f32 %v30, %v24
  %v32 = vadd.f32 %v31, 1e-05
  %v33 = vrsqrt.pop %v32
  %v34 = vmul.f32 %v26, %v33
  %v35 = vld [vmem:[%s2] sm:$0x1]
  %v37 = vlaneseq
  %v38 = vshrl.u32 %v37, 7
  %v39 = vsub.s32 0, %v38
  %v40 = vrot.slane %v35, %v39
  %v42 = vmul.f32 %v34, %v40
  %v43 = vld [vmem:[%s3] sm:$0x1]
  %v45 = vlaneseq
  %v46 = vshrl.u32 %v45, 7
  %v47 = vsub.s32 0, %v46
  %v48 = vrot.slane %v43, %v47
  %v50 = vadd.f32 %v42, %v48
  %51 = vst.msk [vmem:[%s4] sm:$0xff] %vm20, %v50
  // Predicated region
  $region18: #{videobert_decoder_forward.54} parent=0 // pred_check
    _
  $region19: #{videobert_decoder_forward.54} parent=0 // pred_check_branch
    %53 = sbr.rel (0) target = $region21
  $region20: #{videobert_decoder_forward.54} parent=0 // pred_region
    _
  $region21: #{videobert_decoder_forward.54} parent=0 // pred_fallthru
    _
  // Predicated region
  $region22: #{videobert_decoder_forward.54} parent=0 // pred_check
    _
  $region23: #{videobert_decoder_forward.54} parent=0 // pred_check_branch
    %55 = sbr.rel (0) target = $region25
  $region24: #{videobert_decoder_forward.54} parent=0 // pred_region
    _
  $region25: #{videobert_decoder_forward.54} parent=0 // pred_fallthru
    _

// kernel: videobert_decoder_forward.55
$region0: #{videobert_decoder_forward.55}
  #allocation0 [shape = 'u32[]', space=smem, size = 0x4, offset = 0x4, fixed_abs, tag = 'smem constant byte address 0x4 - core index']
  #allocation1 [shape = 'u32[144,128]{1,0:T(1,128)}', space=vmem, size = 0x12000, scoped, tag = 'internal scratch']
  #allocation2 [shape = 'f32[8,96]{1,0:T(8,128)}', space=vmem, size = 0x1000, scoped, tag = 'scratch operand']
  %s0 = inlined_call_operand.vmem [shape: bf16[8,32], index: 0, kind: input, shape index: {}]
  %s1 = inlined_call_operand.vmem [shape: bf16[32,96], index: 1, kind: input, shape index: {}]
  %s2 = inlined_call_operand.vmem [shape: f32[1,96], index: 2, kind: input, shape index: {}]
  %s3 = inlined_call_operand.vmem [shape: f32[1,96], index: 3, kind: input, shape index: {}]
  %s4 = inlined_call_operand.vmem [shape: f32[8,96], index: 4, kind: output, shape index: {}]
  %s5 = sld [smem:[#allocation0]]
  $region34: #{videobert_decoder_forward.55} parent=0
    _
  %s7 = ssub.s32 1, %s5
  %s8 = scalar_select 0, %s7, %s5
  // Predicated region
  $region2: #{videobert_decoder_forward.55} parent=0 // pred_check
    _
  $region3: #{videobert_decoder_forward.55} parent=0 // pred_check_branch
    %10 = sbr.rel (0) target = $region5
  $region4: #{videobert_decoder_forward.55} parent=0 // pred_region
    _
  $region5: #{videobert_decoder_forward.55} parent=0 // pred_fallthru
    _
  // Predicated region
  $region6: #{videobert_decoder_forward.55} parent=0 // pred_check
    _
  $region7: #{videobert_decoder_forward.55} parent=0 // pred_check_branch
    %12 = sbr.rel (0) target = $region9
  $region8: #{videobert_decoder_forward.55} parent=0 // pred_region
    _
  $region9: #{videobert_decoder_forward.55} parent=0 // pred_fallthru
    _
  // Predicated region
  $region10: #{videobert_decoder_forward.55} parent=0 // pred_check
    _
  $region11: #{videobert_decoder_forward.55} parent=0 // pred_check_branch
    %14 = sbr.rel (0) target = $region13
  $region12: #{videobert_decoder_forward.55} parent=0 // pred_region
    _
  $region13: #{videobert_decoder_forward.55} parent=0 // pred_fallthru
    _
  // Predicated region
  $region14: #{videobert_decoder_forward.55} parent=0 // pred_check
    _
  $region15: #{videobert_decoder_forward.55} parent=0 // pred_check_branch
    %16 = sbr.rel (0) target = $region17
  $region16: #{videobert_decoder_forward.55} parent=0 // pred_region
    _
  $region17: #{videobert_decoder_forward.55} parent=0 // pred_fallthru
    _
  %p18 = scmp.eq.s32.totalorder 0, 0
  // Predicated region
  $region18: #{videobert_decoder_forward.55} parent=0 // pred_check
    %p19 = pneg %p18
  $region19: #{videobert_decoder_forward.55} parent=0 // pred_check_branch
    %21 = sbr.rel (%p19) target = $region21
  $region20: #{videobert_decoder_forward.55} parent=0 // pred_region
    %vm22 = vcmask 785408
    %23 = vst.msk [vmem:[#allocation2] sm:$0xff] %vm22, 0.0
  $region21: #{videobert_decoder_forward.55} parent=0 // pred_fallthru
    _
  %v24 = vld [vmem:[#allocation2] sm:$0xff]
  %v25 = vld [vmem:[%s0] sm:$0xf]
  %v26 = vld [vmem:[%s1] sm:$0xf]
  %v27 = vld [vmem:[%s1 + $0x4] sm:$0xf]
  %v28 = vld [vmem:[%s1 + $0x8] sm:$0xf]
  %v29 = vld [vmem:[%s1 + $0xc] sm:$0xf]
  %v34 = vunpack.c.l.b16 %v26
  %v35 = vunpack.c.l.b16 %v27
  %v36 = vunpack.c.l.b16 %v28
  %v37 = vunpack.c.l.b16 %v29
  %v38 = vpack.c.b16 %v35, %v34
  %v39 = vpack.c.b16 %v37, %v36
  %vm42 = vcmask 261120
  %v44 = vsel %vm42, %v25, 0
  %46 = vmatprep.subr.bf16.mxu0 0
  %47 = vmatpush1.bf16.msra.mxu0 %v38
  %48 = vmatprep.subr.bf16.mxu0 0
  %49 = vmatpush1.bf16.msra.mxu0 %v39
  %50 = vmatprep.subr.bf16.mxu0 0
  %51 = vmatpush1.bf16.msra.mxu0 0
  %52 = vmatprep.subr.bf16.mxu0 0
  %53 = vmatpush1.bf16.msra.mxu0 0
  %54 = vmatprep.subr.bf16.mxu0 0
  %55 = vmatpush1.bf16.msra.mxu0 0
  %56 = vmatprep.subr.bf16.mxu0 0
  %57 = vmatpush1.bf16.msra.mxu0 0
  %58 = vmatprep.subr.bf16.mxu0 0
  %59 = vmatpush1.bf16.msra.mxu0 0
  %60 = vmatprep.subr.bf16.mxu0 0
  %61 = vmatpush1.bf16.msra.mxu0 0
  %62 = vmatprep.subr.bf16.mxu0 0
  %63 = vmatpush1.bf16.msra.mxu0 0
  %64 = vmatprep.subr.bf16.mxu0 0
  %65 = vmatpush1.bf16.msra.mxu0 0
  %66 = vmatprep.subr.bf16.mxu0 0
  %67 = vmatpush1.bf16.msra.mxu0 0
  %68 = vmatprep.subr.bf16.mxu0 0
  %69 = vmatpush1.bf16.msra.mxu0 0
  %70 = vmatprep.subr.bf16.mxu0 0
  %71 = vmatpush1.bf16.msra.mxu0 0
  %72 = vmatprep.subr.bf16.mxu0 0
  %73 = vmatpush1.bf16.msra.mxu0 0
  %74 = vmatprep.subr.bf16.mxu0 0
  %75 = vmatpush1.bf16.msra.mxu0 0
  %76 = vmatprep.subr.bf16.mxu0 0
  %77 = vmatpush1.bf16.msra.mxu0 0
  %78 = vmatprep.mubr.bf16.mxu0 0
  %79 = vmatmul.mubr.bf16.gmra.mrb[0].mxu0 %v44
  %v80 = vpop.f32.mrb[0].mxu0
  %v81 = vadd.f32 0.0, %v80
  %v82 = vpop.f32.mrb[0].mxu0
  %v83 = vpop.f32.mrb[0].mxu0
  %v84 = vpop.f32.mrb[0].mxu0
  %85 = vdwg.mxu0
  %v86 = vadd.f32 %v24, %v81
  %vm87 = vcmask 785408
  %88 = vst.msk [vmem:[#allocation2] sm:$0xff] %vm87, %v86
  // Predicated region
  $region22: #{videobert_decoder_forward.55} parent=0 // pred_check
    %p89 = pneg %p18
  $region23: #{videobert_decoder_forward.55} parent=0 // pred_check_branch
    %91 = sbr.rel (%p89) target = $region25
  $region24: #{videobert_decoder_forward.55} parent=0 // pred_region
    %v92 = vld [vmem:[#allocation2] sm:$0xff]
    %v93 = vld [vmem:[%s2] sm:$0x1]
    %v95 = vlaneseq
    %v96 = vshrl.u32 %v95, 7
    %v97 = vsub.s32 0, %v96
    %v98 = vrot.slane %v93, %v97
    %v100 = vmul.f32 %v92, %v98
    %v101 = vld [vmem:[%s3] sm:$0x1]
    %v103 = vlaneseq
    %v104 = vshrl.u32 %v103, 7
    %v105 = vsub.s32 0, %v104
    %v106 = vrot.slane %v101, %v105
    %v108 = vadd.f32 %v100, %v106
    %109 = vst.msk [vmem:[%s4] sm:$0xff] %vm87, %v108
  $region25: #{videobert_decoder_forward.55} parent=0 // pred_fallthru
    _
  // Predicated region
  $region26: #{videobert_decoder_forward.55} parent=0 // pred_check
    _
  $region27: #{videobert_decoder_forward.55} parent=0 // pred_check_branch
    %111 = sbr.rel (0) target = $region29
  $region28: #{videobert_decoder_forward.55} parent=0 // pred_region
    _
  $region29: #{videobert_decoder_forward.55} parent=0 // pred_fallthru
    _
  // Predicated region
  $region30: #{videobert_decoder_forward.55} parent=0 // pred_check
    _
  $region31: #{videobert_decoder_forward.55} parent=0 // pred_check_branch
    %113 = sbr.rel (0) target = $region33
  $region32: #{videobert_decoder_forward.55} parent=0 // pred_region
    _
  $region33: #{videobert_decoder_forward.55} parent=0 // pred_fallthru
    _

// kernel: videobert_decoder_forward.57
$region0: #{videobert_decoder_forward.57}
  #allocation0 [shape = 'u32[]', space=smem, size = 0x4, offset = 0x4, fixed_abs, tag = 'smem constant byte address 0x4 - core index']
  #allocation1 [shape = 'u32[144,128]{1,0:T(1,128)}', space=vmem, size = 0x12000, scoped, tag = 'internal scratch']
  #allocation2 [shape = 'f32[8,32]{1,0:T(8,128)}', space=vmem, size = 0x1000, scoped, tag = 'scratch operand']
  %s0 = inlined_call_operand.vmem [shape: bf16[8,32], index: 0, kind: input, shape index: {}]
  %s1 = inlined_call_operand.vmem [shape: bf16[32,32], index: 1, kind: input, shape index: {}]
  %s2 = inlined_call_operand.vmem [shape: f32[1,32], index: 2, kind: input, shape index: {}]
  %s3 = inlined_call_operand.vmem [shape: f32[1,32], index: 3, kind: input, shape index: {}]
  %s4 = inlined_call_operand.vmem [shape: f32[8,32], index: 4, kind: output, shape index: {}]
  %s5 = sld [smem:[#allocation0]]
  $region34: #{videobert_decoder_forward.57} parent=0
    _
  %s7 = ssub.s32 1, %s5
  %s8 = scalar_select 0, %s7, %s5
  // Predicated region
  $region2: #{videobert_decoder_forward.57} parent=0 // pred_check
    _
  $region3: #{videobert_decoder_forward.57} parent=0 // pred_check_branch
    %10 = sbr.rel (0) target = $region5
  $region4: #{videobert_decoder_forward.57} parent=0 // pred_region
    _
  $region5: #{videobert_decoder_forward.57} parent=0 // pred_fallthru
    _
  // Predicated region
  $region6: #{videobert_decoder_forward.57} parent=0 // pred_check
    _
  $region7: #{videobert_decoder_forward.57} parent=0 // pred_check_branch
    %12 = sbr.rel (0) target = $region9
  $region8: #{videobert_decoder_forward.57} parent=0 // pred_region
    _
  $region9: #{videobert_decoder_forward.57} parent=0 // pred_fallthru
    _
  // Predicated region
  $region10: #{videobert_decoder_forward.57} parent=0 // pred_check
    _
  $region11: #{videobert_decoder_forward.57} parent=0 // pred_check_branch
    %14 = sbr.rel (0) target = $region13
  $region12: #{videobert_decoder_forward.57} parent=0 // pred_region
    _
  $region13: #{videobert_decoder_forward.57} parent=0 // pred_fallthru
    _
  // Predicated region
  $region14: #{videobert_decoder_forward.57} parent=0 // pred_check
    _
  $region15: #{videobert_decoder_forward.57} parent=0 // pred_check_branch
    %16 = sbr.rel (0) target = $region17
  $region16: #{videobert_decoder_forward.57} parent=0 // pred_region
    _
  $region17: #{videobert_decoder_forward.57} parent=0 // pred_fallthru
    _
  %p18 = scmp.eq.s32.totalorder 0, 0
  // Predicated region
  $region18: #{videobert_decoder_forward.57} parent=0 // pred_check
    %p19 = pneg %p18
  $region19: #{videobert_decoder_forward.57} parent=0 // pred_check_branch
    %21 = sbr.rel (%p19) target = $region21
  $region20: #{videobert_decoder_forward.57} parent=0 // pred_region
    %vm22 = vcmask 261120
    %23 = vst.msk [vmem:[#allocation2] sm:$0xff] %vm22, 0.0
  $region21: #{videobert_decoder_forward.57} parent=0 // pred_fallthru
    _
  %v24 = vld [vmem:[#allocation2] sm:$0xff]
  %v25 = vld [vmem:[%s0] sm:$0xf]
  %v26 = vld [vmem:[%s1] sm:$0xf]
  %v27 = vld [vmem:[%s1 + $0x4] sm:$0xf]
  %v28 = vld [vmem:[%s1 + $0x8] sm:$0xf]
  %v29 = vld [vmem:[%s1 + $0xc] sm:$0xf]
  %v34 = vunpack.c.l.b16 %v26
  %v35 = vunpack.c.l.b16 %v27
  %v36 = vunpack.c.l.b16 %v28
  %v37 = vunpack.c.l.b16 %v29
  %v38 = vpack.c.b16 %v35, %v34
  %v39 = vpack.c.b16 %v37, %v36
  %vm42 = vcmask 261120
  %v44 = vsel %vm42, %v25, 0
  %46 = vmatprep.subr.bf16.mxu0 0
  %47 = vmatpush1.bf16.msra.mxu0 %v38
  %48 = vmatprep.subr.bf16.mxu0 0
  %49 = vmatpush1.bf16.msra.mxu0 %v39
  %50 = vmatprep.subr.bf16.mxu0 0
  %51 = vmatpush1.bf16.msra.mxu0 0
  %52 = vmatprep.subr.bf16.mxu0 0
  %53 = vmatpush1.bf16.msra.mxu0 0
  %54 = vmatprep.subr.bf16.mxu0 0
  %55 = vmatpush1.bf16.msra.mxu0 0
  %56 = vmatprep.subr.bf16.mxu0 0
  %57 = vmatpush1.bf16.msra.mxu0 0
  %58 = vmatprep.subr.bf16.mxu0 0
  %59 = vmatpush1.bf16.msra.mxu0 0
  %60 = vmatprep.subr.bf16.mxu0 0
  %61 = vmatpush1.bf16.msra.mxu0 0
  %62 = vmatprep.subr.bf16.mxu0 0
  %63 = vmatpush1.bf16.msra.mxu0 0
  %64 = vmatprep.subr.bf16.mxu0 0
  %65 = vmatpush1.bf16.msra.mxu0 0
  %66 = vmatprep.subr.bf16.mxu0 0
  %67 = vmatpush1.bf16.msra.mxu0 0
  %68 = vmatprep.subr.bf16.mxu0 0
  %69 = vmatpush1.bf16.msra.mxu0 0
  %70 = vmatprep.subr.bf16.mxu0 0
  %71 = vmatpush1.bf16.msra.mxu0 0
  %72 = vmatprep.subr.bf16.mxu0 0
  %73 = vmatpush1.bf16.msra.mxu0 0
  %74 = vmatprep.subr.bf16.mxu0 0
  %75 = vmatpush1.bf16.msra.mxu0 0
  %76 = vmatprep.subr.bf16.mxu0 0
  %77 = vmatpush1.bf16.msra.mxu0 0
  %78 = vmatprep.mubr.bf16.mxu0 0
  %79 = vmatmul.mubr.bf16.gmra.mrb[0].mxu0 %v44
  %v80 = vpop.f32.mrb[0].mxu0
  %v81 = vadd.f32 0.0, %v80
  %v82 = vpop.f32.mrb[0].mxu0
  %v83 = vpop.f32.mrb[0].mxu0
  %v84 = vpop.f32.mrb[0].mxu0
  %85 = vdwg.mxu0
  %v86 = vadd.f32 %v24, %v81
  %87 = vst.msk [vmem:[#allocation2] sm:$0xff] %vm42, %v86
  // Predicated region
  $region22: #{videobert_decoder_forward.57} parent=0 // pred_check
    %p88 = pneg %p18
  $region23: #{videobert_decoder_forward.57} parent=0 // pred_check_branch
    %90 = sbr.rel (%p88) target = $region25
  $region24: #{videobert_decoder_forward.57} parent=0 // pred_region
    %v91 = vld [vmem:[#allocation2] sm:$0xff]
    %v92 = vld [vmem:[%s2] sm:$0x1]
    %v94 = vlaneseq
    %v95 = vshrl.u32 %v94, 7
    %v96 = vsub.s32 0, %v95
    %v97 = vrot.slane %v92, %v96
    %v99 = vmul.f32 %v91, %v97
    %v100 = vld [vmem:[%s3] sm:$0x1]
    %v102 = vlaneseq
    %v103 = vshrl.u32 %v102, 7
    %v104 = vsub.s32 0, %v103
    %v105 = vrot.slane %v100, %v104
    %v107 = vadd.f32 %v99, %v105
    %108 = vst.msk [vmem:[%s4] sm:$0xff] %vm42, %v107
  $region25: #{videobert_decoder_forward.57} parent=0 // pred_fallthru
    _
  // Predicated region
  $region26: #{videobert_decoder_forward.57} parent=0 // pred_check
    _
  $region27: #{videobert_decoder_forward.57} parent=0 // pred_check_branch
    %110 = sbr.rel (0) target = $region29
  $region28: #{videobert_decoder_forward.57} parent=0 // pred_region
    _
  $region29: #{videobert_decoder_forward.57} parent=0 // pred_fallthru
    _
  // Predicated region
  $region30: #{videobert_decoder_forward.57} parent=0 // pred_check
    _
  $region31: #{videobert_decoder_forward.57} parent=0 // pred_check_branch
    %112 = sbr.rel (0) target = $region33
  $region32: #{videobert_decoder_forward.57} parent=0 // pred_region
    _
  $region33: #{videobert_decoder_forward.57} parent=0 // pred_fallthru
    _

// kernel: videobert_decoder_forward.60
$region0: #{videobert_decoder_forward.60}
  #allocation0 [shape = 'u32[]', space=smem, size = 0x4, offset = 0x4, fixed_abs, tag = 'smem constant byte address 0x4 - core index']
  #allocation1 [shape = 'u32[144,128]{1,0:T(1,128)}', space=vmem, size = 0x12000, scoped, tag = 'internal scratch']
  #allocation2 [shape = 'f32[12,64]{1,0:T(8,128)}', space=vmem, size = 0x2000, scoped, tag = 'scratch operand']
  %s0 = inlined_call_operand.vmem [shape: bf16[12,32], index: 0, kind: input, shape index: {}]
  %s1 = inlined_call_operand.vmem [shape: bf16[32,64], index: 1, kind: input, shape index: {}]
  %s2 = inlined_call_operand.vmem [shape: f32[1,64], index: 2, kind: input, shape index: {}]
  %s3 = inlined_call_operand.vmem [shape: f32[1,64], index: 3, kind: input, shape index: {}]
  %s4 = inlined_call_operand.vmem [shape: f32[12,64], index: 4, kind: output, shape index: {}]
  %s5 = sld [smem:[#allocation0]]
  $region34: #{videobert_decoder_forward.60} parent=0
    _
  %s7 = ssub.s32 1, %s5
  %s8 = scalar_select 0, %s7, %s5
  // Predicated region
  $region2: #{videobert_decoder_forward.60} parent=0 // pred_check
    _
  $region3: #{videobert_decoder_forward.60} parent=0 // pred_check_branch
    %10 = sbr.rel (0) target = $region5
  $region4: #{videobert_decoder_forward.60} parent=0 // pred_region
    _
  $region5: #{videobert_decoder_forward.60} parent=0 // pred_fallthru
    _
  // Predicated region
  $region6: #{videobert_decoder_forward.60} parent=0 // pred_check
    _
  $region7: #{videobert_decoder_forward.60} parent=0 // pred_check_branch
    %12 = sbr.rel (0) target = $region9
  $region8: #{videobert_decoder_forward.60} parent=0 // pred_region
    _
  $region9: #{videobert_decoder_forward.60} parent=0 // pred_fallthru
    _
  // Predicated region
  $region10: #{videobert_decoder_forward.60} parent=0 // pred_check
    _
  $region11: #{videobert_decoder_forward.60} parent=0 // pred_check_branch
    %14 = sbr.rel (0) target = $region13
  $region12: #{videobert_decoder_forward.60} parent=0 // pred_region
    _
  $region13: #{videobert_decoder_forward.60} parent=0 // pred_fallthru
    _
  // Predicated region
  $region14: #{videobert_decoder_forward.60} parent=0 // pred_check
    _
  $region15: #{videobert_decoder_forward.60} parent=0 // pred_check_branch
    %16 = sbr.rel (0) target = $region17
  $region16: #{videobert_decoder_forward.60} parent=0 // pred_region
    _
  $region17: #{videobert_decoder_forward.60} parent=0 // pred_fallthru
    _
  %p18 = scmp.eq.s32.totalorder 0, 0
  // Predicated region
  $region18: #{videobert_decoder_forward.60} parent=0 // pred_check
    %p19 = pneg %p18
  $region19: #{videobert_decoder_forward.60} parent=0 // pred_check_branch
    %21 = sbr.rel (%p19) target = $region21
  $region20: #{videobert_decoder_forward.60} parent=0 // pred_region
    %vm22 = vcmask 523264
    %23 = vst.msk [vmem:[#allocation2] sm:$0xff] %vm22, 0.0
    %vm24 = vcmask 519168
    %25 = vst.msk [vmem:[#allocation2 + $0x8] sm:$0xf] %vm24, 0.0
  $region21: #{videobert_decoder_forward.60} parent=0 // pred_fallthru
    _
  %v26 = vld [vmem:[#allocation2] sm:$0xff]
  %v27 = vld [vmem:[#allocation2 + $0x8] sm:$0xf]
  %v28 = vld [vmem:[%s0] sm:$0xf]
  %v29 = vld [vmem:[%s0 + $0x4] sm:$0x3]
  %v30 = vld [vmem:[%s1] sm:$0xf]
  %v31 = vld [vmem:[%s1 + $0x4] sm:$0xf]
  %v32 = vld [vmem:[%s1 + $0x8] sm:$0xf]
  %v33 = vld [vmem:[%s1 + $0xc] sm:$0xf]
  %v36 = vunpack.c.l.b16 %v28
  %v37 = vunpack.c.l.b16 %v29
  %v38 = vpack.c.b16 %v37, %v36
  %v43 = vunpack.c.l.b16 %v30
  %v44 = vunpack.c.l.b16 %v31
  %v45 = vunpack.c.l.b16 %v32
  %v46 = vunpack.c.l.b16 %v33
  %v47 = vpack.c.b16 %v44, %v43
  %v48 = vpack.c.b16 %v46, %v45
  %vm51 = vcmask 261120
  %v53 = vsel %vm51, %v38, 0
  %55 = vmatprep.subr.bf16.mxu0 0
  %56 = vmatpush1.bf16.msra.mxu0 %v47
  %57 = vmatprep.subr.bf16.mxu0 0
  %58 = vmatpush1.bf16.msra.mxu0 %v48
  %59 = vmatprep.subr.bf16.mxu0 0
  %60 = vmatpush1.bf16.msra.mxu0 0
  %61 = vmatprep.subr.bf16.mxu0 0
  %62 = vmatpush1.bf16.msra.mxu0 0
  %63 = vmatprep.subr.bf16.mxu0 0
  %64 = vmatpush1.bf16.msra.mxu0 0
  %65 = vmatprep.subr.bf16.mxu0 0
  %66 = vmatpush1.bf16.msra.mxu0 0
  %67 = vmatprep.subr.bf16.mxu0 0
  %68 = vmatpush1.bf16.msra.mxu0 0
  %69 = vmatprep.subr.bf16.mxu0 0
  %70 = vmatpush1.bf16.msra.mxu0 0
  %71 = vmatprep.subr.bf16.mxu0 0
  %72 = vmatpush1.bf16.msra.mxu0 0
  %73 = vmatprep.subr.bf16.mxu0 0
  %74 = vmatpush1.bf16.msra.mxu0 0
  %75 = vmatprep.subr.bf16.mxu0 0
  %76 = vmatpush1.bf16.msra.mxu0 0
  %77 = vmatprep.subr.bf16.mxu0 0
  %78 = vmatpush1.bf16.msra.mxu0 0
  %79 = vmatprep.subr.bf16.mxu0 0
  %80 = vmatpush1.bf16.msra.mxu0 0
  %81 = vmatprep.subr.bf16.mxu0 0
  %82 = vmatpush1.bf16.msra.mxu0 0
  %83 = vmatprep.subr.bf16.mxu0 0
  %84 = vmatpush1.bf16.msra.mxu0 0
  %85 = vmatprep.subr.bf16.mxu0 0
  %86 = vmatpush1.bf16.msra.mxu0 0
  %87 = vmatprep.mubr.bf16.mxu0 0
  %88 = vmatmul.mubr.bf16.gmra.mrb[0].mxu0 %v53
  %v89 = vpop.f32.mrb[0].mxu0
  %v90 = vadd.f32 0.0, %v89
  %v91 = vpop.f32.mrb[0].mxu0
  %v92 = vpop.f32.mrb[0].mxu0
  %v93 = vadd.f32 0.0, %v92
  %v94 = vpop.f32.mrb[0].mxu0
  %95 = vdwg.mxu0
  %v96 = vadd.f32 %v26, %v90
  %v97 = vadd.f32 %v27, %v93
  %vm98 = vcmask 523264
  %99 = vst.msk [vmem:[#allocation2] sm:$0xff] %vm98, %v96
  %vm100 = vcmask 519168
  %101 = vst.msk [vmem:[#allocation2 + $0x8] sm:$0xf] %vm100, %v97
  // Predicated region
  $region22: #{videobert_decoder_forward.60} parent=0 // pred_check
    %p102 = pneg %p18
  $region23: #{videobert_decoder_forward.60} parent=0 // pred_check_branch
    %104 = sbr.rel (%p102) target = $region25
  $region24: #{videobert_decoder_forward.60} parent=0 // pred_region
    %v105 = vld [vmem:[#allocation2] sm:$0xff]
    %v106 = vld [vmem:[#allocation2 + $0x8] sm:$0xf]
    %v107 = vld [vmem:[%s2] sm:$0x1]
    %v109 = vlaneseq
    %v110 = vshrl.u32 %v109, 7
    %v111 = vsub.s32 0, %v110
    %v112 = vrot.slane %v107, %v111
    %v114 = vmul.f32 %v105, %v112
    %v115 = vmul.f32 %v106, %v112
    %v116 = vld [vmem:[%s3] sm:$0x1]
    %v118 = vlaneseq
    %v119 = vshrl.u32 %v118, 7
    %v120 = vsub.s32 0, %v119
    %v121 = vrot.slane %v116, %v120
    %v123 = vadd.f32 %v114, %v121
    %v124 = vadd.f32 %v115, %v121
    %125 = vst.msk [vmem:[%s4] sm:$0xff] %vm98, %v123
    %126 = vst.msk [vmem:[%s4 + $0x8] sm:$0xf] %vm100, %v124
  $region25: #{videobert_decoder_forward.60} parent=0 // pred_fallthru
    _
  // Predicated region
  $region26: #{videobert_decoder_forward.60} parent=0 // pred_check
    _
  $region27: #{videobert_decoder_forward.60} parent=0 // pred_check_branch
    %128 = sbr.rel (0) target = $region29
  $region28: #{videobert_decoder_forward.60} parent=0 // pred_region
    _
  $region29: #{videobert_decoder_forward.60} parent=0 // pred_fallthru
    _
  // Predicated region
  $region30: #{videobert_decoder_forward.60} parent=0 // pred_check
    _
  $region31: #{videobert_decoder_forward.60} parent=0 // pred_check_branch
    %130 = sbr.rel (0) target = $region33
  $region32: #{videobert_decoder_forward.60} parent=0 // pred_region
    _
  $region33: #{videobert_decoder_forward.60} parent=0 // pred_fallthru
    _

// kernel: videobert_decoder_forward.67
$region0: #{videobert_decoder_forward.67}
  #allocation0 [shape = 'u32[]', space=smem, size = 0x4, offset = 0x4, fixed_abs, tag = 'smem constant byte address 0x4 - core index']
  #allocation1 [shape = 'u32[144,128]{1,0:T(1,128)}', space=vmem, size = 0x12000, scoped, tag = 'internal scratch']
  #allocation2 [shape = 'f32[8,256]{1,0:T(8,128)}', space=vmem, size = 0x2000, scoped, tag = 'scratch operand']
  %s0 = inlined_call_operand.vmem [shape: bf16[8,32], index: 0, kind: input, shape index: {}]
  %s1 = inlined_call_operand.vmem [shape: bf16[32,256], index: 1, kind: input, shape index: {}]
  %s2 = inlined_call_operand.vmem [shape: f32[1,256], index: 2, kind: input, shape index: {}]
  %s3 = inlined_call_operand.vmem [shape: f32[1,256], index: 3, kind: input, shape index: {}]
  %s4 = inlined_call_operand.vmem [shape: f32[8,256], index: 4, kind: output, shape index: {}]
  %s5 = sld [smem:[#allocation0]]
  $region34: #{videobert_decoder_forward.67} parent=0
    _
  %s7 = ssub.s32 1, %s5
  %s8 = scalar_select 0, %s7, %s5
  // Predicated region
  $region2: #{videobert_decoder_forward.67} parent=0 // pred_check
    _
  $region3: #{videobert_decoder_forward.67} parent=0 // pred_check_branch
    %10 = sbr.rel (0) target = $region5
  $region4: #{videobert_decoder_forward.67} parent=0 // pred_region
    _
  $region5: #{videobert_decoder_forward.67} parent=0 // pred_fallthru
    _
  // Predicated region
  $region6: #{videobert_decoder_forward.67} parent=0 // pred_check
    _
  $region7: #{videobert_decoder_forward.67} parent=0 // pred_check_branch
    %12 = sbr.rel (0) target = $region9
  $region8: #{videobert_decoder_forward.67} parent=0 // pred_region
    _
  $region9: #{videobert_decoder_forward.67} parent=0 // pred_fallthru
    _
  // Predicated region
  $region10: #{videobert_decoder_forward.67} parent=0 // pred_check
    _
  $region11: #{videobert_decoder_forward.67} parent=0 // pred_check_branch
    %14 = sbr.rel (0) target = $region13
  $region12: #{videobert_decoder_forward.67} parent=0 // pred_region
    _
  $region13: #{videobert_decoder_forward.67} parent=0 // pred_fallthru
    _
  // Predicated region
  $region14: #{videobert_decoder_forward.67} parent=0 // pred_check
    _
  $region15: #{videobert_decoder_forward.67} parent=0 // pred_check_branch
    %16 = sbr.rel (0) target = $region17
  $region16: #{videobert_decoder_forward.67} parent=0 // pred_region
    _
  $region17: #{videobert_decoder_forward.67} parent=0 // pred_fallthru
    _
  %p18 = scmp.eq.s32.totalorder 0, 0
  // Predicated region
  $region18: #{videobert_decoder_forward.67} parent=0 // pred_check
    %p19 = pneg %p18
  $region19: #{videobert_decoder_forward.67} parent=0 // pred_check_branch
    %21 = sbr.rel (%p19) target = $region21
  $region20: #{videobert_decoder_forward.67} parent=0 // pred_region
    %22 = vst [vmem:[#allocation2] sm:$0xff] 0.0
    %23 = vst [vmem:[#allocation2 + $0x8] sm:$0xff] 0.0
  $region21: #{videobert_decoder_forward.67} parent=0 // pred_fallthru
    _
  %v24 = vld [vmem:[#allocation2] sm:$0xff]
  %v25 = vld [vmem:[#allocation2 + $0x8] sm:$0xff]
  %v26 = vld [vmem:[%s0] sm:$0xf]
  %v27 = vld [vmem:[%s1] sm:$0xff]
  %v28 = vld [vmem:[%s1 + $0x8] sm:$0xff]
  %v29 = vld [vmem:[%s1 + $0x10] sm:$0xff]
  %v30 = vld [vmem:[%s1 + $0x18] sm:$0xff]
  %v35 = vunpack.c.l.b16 %v27
  %v36 = vunpack.c.h.b16 %v27
  %v37 = vunpack.c.l.b16 %v28
  %v38 = vunpack.c.h.b16 %v28
  %v39 = vunpack.c.l.b16 %v29
  %v40 = vunpack.c.h.b16 %v29
  %v41 = vunpack.c.l.b16 %v30
  %v42 = vunpack.c.h.b16 %v30
  %v43 = vpack.c.b16 %v37, %v35
  %v44 = vpack.c.b16 %v38, %v36
  %v45 = vpack.c.b16 %v41, %v39
  %v46 = vpack.c.b16 %v42, %v40
  %vm51 = vcmask 261120
  %v53 = vsel %vm51, %v26, 0
  %55 = vmatprep.subr.bf16.mxu0 %v44
  %56 = vmatpush1.bf16.msra.mxu0 %v43
  %57 = vmatprep.subr.bf16.mxu0 %v46
  %58 = vmatpush1.bf16.msra.mxu0 %v45
  %59 = vmatprep.subr.bf16.mxu0 0
  %60 = vmatpush1.bf16.msra.mxu0 0
  %61 = vmatprep.subr.bf16.mxu0 0
  %62 = vmatpush1.bf16.msra.mxu0 0
  %63 = vmatprep.subr.bf16.mxu0 0
  %64 = vmatpush1.bf16.msra.mxu0 0
  %65 = vmatprep.subr.bf16.mxu0 0
  %66 = vmatpush1.bf16.msra.mxu0 0
  %67 = vmatprep.subr.bf16.mxu0 0
  %68 = vmatpush1.bf16.msra.mxu0 0
  %69 = vmatprep.subr.bf16.mxu0 0
  %70 = vmatpush1.bf16.msra.mxu0 0
  %71 = vmatprep.subr.bf16.mxu0 0
  %72 = vmatpush1.bf16.msra.mxu0 0
  %73 = vmatprep.subr.bf16.mxu0 0
  %74 = vmatpush1.bf16.msra.mxu0 0
  %75 = vmatprep.subr.bf16.mxu0 0
  %76 = vmatpush1.bf16.msra.mxu0 0
  %77 = vmatprep.subr.bf16.mxu0 0
  %78 = vmatpush1.bf16.msra.mxu0 0
  %79 = vmatprep.subr.bf16.mxu0 0
  %80 = vmatpush1.bf16.msra.mxu0 0
  %81 = vmatprep.subr.bf16.mxu0 0
  %82 = vmatpush1.bf16.msra.mxu0 0
  %83 = vmatprep.subr.bf16.mxu0 0
  %84 = vmatpush1.bf16.msra.mxu0 0
  %85 = vmatprep.subr.bf16.mxu0 0
  %86 = vmatpush1.bf16.msra.mxu0 0
  %87 = vmatprep.mubr.bf16.mxu0 0
  %88 = vmatmul.mubr.bf16.gmra.mrb[0].mxu0 %v53
  %v89 = vpop.f32.mrb[0].mxu0
  %v90 = vadd.f32 0.0, %v89
  %v91 = vpop.f32.mrb[0].mxu0
  %v92 = vadd.f32 0.0, %v91
  %v93 = vpop.f32.mrb[0].mxu0
  %v94 = vpop.f32.mrb[0].mxu0
  %95 = vdwg.mxu0
  %v96 = vadd.f32 %v24, %v90
  %v97 = vadd.f32 %v25, %v92
  %98 = vst [vmem:[#allocation2] sm:$0xff] %v96
  %99 = vst [vmem:[#allocation2 + $0x8] sm:$0xff] %v97
  // Predicated region
  $region22: #{videobert_decoder_forward.67} parent=0 // pred_check
    %p100 = pneg %p18
  $region23: #{videobert_decoder_forward.67} parent=0 // pred_check_branch
    %102 = sbr.rel (%p100) target = $region25
  $region24: #{videobert_decoder_forward.67} parent=0 // pred_region
    %v103 = vld [vmem:[#allocation2] sm:$0xff]
    %v104 = vld [vmem:[#allocation2 + $0x8] sm:$0xff]
    %v105 = vld [vmem:[%s2] sm:$0x3]
    %v107 = vlaneseq
    %v108 = vshrl.u32 %v107, 7
    %v109 = vsub.s32 0, %v108
    %v110 = vrot.slane %v105, %v109
    %v111 = vlaneseq
    %v112 = vshrl.u32 %v111, 7
    %v113 = vsub.s32 1, %v112
    %v114 = vrot.slane %v105, %v113
    %v117 = vmul.f32 %v103, %v110
    %v118 = vmul.f32 %v104, %v114
    %v119 = vld [vmem:[%s3] sm:$0x3]
    %v121 = vlaneseq
    %v122 = vshrl.u32 %v121, 7
    %v123 = vsub.s32 0, %v122
    %v124 = vrot.slane %v119, %v123
    %v125 = vlaneseq
    %v126 = vshrl.u32 %v125, 7
    %v127 = vsub.s32 1, %v126
    %v128 = vrot.slane %v119, %v127
    %v131 = vadd.f32 %v117, %v124
    %v132 = vadd.f32 %v118, %v128
    %vm133 = vcmp.ge.f32.partialorder %v131, 0.0
    %vm134 = vcmp.ge.f32.partialorder %v132, 0.0
    %v135 = vmul.f32 %v131, 0.01
    %v136 = vmul.f32 %v132, 0.01
    %v137 = vsel %vm133, %v131, %v135
    %v138 = vsel %vm134, %v132, %v136
    %139 = vst [vmem:[%s4] sm:$0xff] %v137
    %140 = vst [vmem:[%s4 + $0x8] sm:$0xff] %v138
  $region25: #{videobert_decoder_forward.67} parent=0 // pred_fallthru
    _
  // Predicated region
  $region26: #{videobert_decoder_forward.67} parent=0 // pred_check
    _
  $region27: #{videobert_decoder_forward.67} parent=0 // pred_check_branch
    %142 = sbr.rel (0) target = $region29
  $region28: #{videobert_decoder_forward.67} parent=0 // pred_region
    _
  $region29: #{videobert_decoder_forward.67} parent=0 // pred_fallthru
    _
  // Predicated region
  $region30: #{videobert_decoder_forward.67} parent=0 // pred_check
    _
  $region31: #{videobert_decoder_forward.67} parent=0 // pred_check_branch
    %144 = sbr.rel (0) target = $region33
  $region32: #{videobert_decoder_forward.67} parent=0 // pred_region
    _
  $region33: #{videobert_decoder_forward.67} parent=0 // pred_fallthru
    _

// kernel: videobert_decoder_forward.68
$region0: #{videobert_decoder_forward.68}
  #allocation0 [shape = 'u32[]', space=smem, size = 0x4, offset = 0x4, fixed_abs, tag = 'smem constant byte address 0x4 - core index']
  #allocation1 [shape = 'u32[144,128]{1,0:T(1,128)}', space=vmem, size = 0x12000, scoped, tag = 'internal scratch']
  #allocation2 [shape = 'f32[8,54]{1,0:T(8,128)}', space=vmem, size = 0x1000, scoped, tag = 'scratch operand']
  %s0 = inlined_call_operand.vmem [shape: bf16[8,128], index: 0, kind: input, shape index: {}]
  %s1 = inlined_call_operand.vmem [shape: bf16[128,54], index: 1, kind: input, shape index: {}]
  %s2 = inlined_call_operand.vmem [shape: f32[8,1], index: 2, kind: input, shape index: {}]
  %s3 = inlined_call_operand.vmem [shape: f32[8,1], index: 3, kind: input, shape index: {}]
  %s4 = inlined_call_operand.vmem [shape: f32[8,54], index: 4, kind: output, shape index: {}]
  %s5 = sld [smem:[#allocation0]]
  $region34: #{videobert_decoder_forward.68} parent=0
    _
  %s7 = ssub.s32 1, %s5
  %s8 = scalar_select 0, %s7, %s5
  // Predicated region
  $region2: #{videobert_decoder_forward.68} parent=0 // pred_check
    _
  $region3: #{videobert_decoder_forward.68} parent=0 // pred_check_branch
    %10 = sbr.rel (0) target = $region5
  $region4: #{videobert_decoder_forward.68} parent=0 // pred_region
    _
  $region5: #{videobert_decoder_forward.68} parent=0 // pred_fallthru
    _
  // Predicated region
  $region6: #{videobert_decoder_forward.68} parent=0 // pred_check
    _
  $region7: #{videobert_decoder_forward.68} parent=0 // pred_check_branch
    %12 = sbr.rel (0) target = $region9
  $region8: #{videobert_decoder_forward.68} parent=0 // pred_region
    _
  $region9: #{videobert_decoder_forward.68} parent=0 // pred_fallthru
    _
  // Predicated region
  $region10: #{videobert_decoder_forward.68} parent=0 // pred_check
    _
  $region11: #{videobert_decoder_forward.68} parent=0 // pred_check_branch
    %14 = sbr.rel (0) target = $region13
  $region12: #{videobert_decoder_forward.68} parent=0 // pred_region
    _
  $region13: #{videobert_decoder_forward.68} parent=0 // pred_fallthru
    _
  // Predicated region
  $region14: #{videobert_decoder_forward.68} parent=0 // pred_check
    _
  $region15: #{videobert_decoder_forward.68} parent=0 // pred_check_branch
    %16 = sbr.rel (0) target = $region17
  $region16: #{videobert_decoder_forward.68} parent=0 // pred_region
    _
  $region17: #{videobert_decoder_forward.68} parent=0 // pred_fallthru
    _
  %p18 = scmp.eq.s32.totalorder 0, 0
  // Predicated region
  $region18: #{videobert_decoder_forward.68} parent=0 // pred_check
    %p19 = pneg %p18
  $region19: #{videobert_decoder_forward.68} parent=0 // pred_check_branch
    %21 = sbr.rel (%p19) target = $region21
  $region20: #{videobert_decoder_forward.68} parent=0 // pred_region
    %vm22 = vcmask 441344
    %23 = vst.msk [vmem:[#allocation2] sm:$0xff] %vm22, 0.0
  $region21: #{videobert_decoder_forward.68} parent=0 // pred_fallthru
    _
  %v24 = vld [vmem:[#allocation2] sm:$0xff]
  %v25 = vld [vmem:[%s0] sm:$0xf]
  %v26 = vld [vmem:[%s1] sm:$0xf]
  %v27 = vld [vmem:[%s1 + $0x4] sm:$0xf]
  %v28 = vld [vmem:[%s1 + $0x8] sm:$0xf]
  %v29 = vld [vmem:[%s1 + $0xc] sm:$0xf]
  %v30 = vld [vmem:[%s1 + $0x10] sm:$0xf]
  %v31 = vld [vmem:[%s1 + $0x14] sm:$0xf]
  %v32 = vld [vmem:[%s1 + $0x18] sm:$0xf]
  %v33 = vld [vmem:[%s1 + $0x1c] sm:$0xf]
  %v34 = vld [vmem:[%s1 + $0x20] sm:$0xf]
  %v35 = vld [vmem:[%s1 + $0x24] sm:$0xf]
  %v36 = vld [vmem:[%s1 + $0x28] sm:$0xf]
  %v37 = vld [vmem:[%s1 + $0x2c] sm:$0xf]
  %v38 = vld [vmem:[%s1 + $0x30] sm:$0xf]
  %v39 = vld [vmem:[%s1 + $0x34] sm:$0xf]
  %v40 = vld [vmem:[%s1 + $0x38] sm:$0xf]
  %v41 = vld [vmem:[%s1 + $0x3c] sm:$0xf]
  %v58 = vunpack.c.l.b16 %v26
  %v59 = vunpack.c.l.b16 %v27
  %v60 = vunpack.c.l.b16 %v28
  %v61 = vunpack.c.l.b16 %v29
  %v62 = vunpack.c.l.b16 %v30
  %v63 = vunpack.c.l.b16 %v31
  %v64 = vunpack.c.l.b16 %v32
  %v65 = vunpack.c.l.b16 %v33
  %v66 = vunpack.c.l.b16 %v34
  %v67 = vunpack.c.l.b16 %v35
  %v68 = vunpack.c.l.b16 %v36
  %v69 = vunpack.c.l.b16 %v37
  %v70 = vunpack.c.l.b16 %v38
  %v71 = vunpack.c.l.b16 %v39
  %v72 = vunpack.c.l.b16 %v40
  %v73 = vunpack.c.l.b16 %v41
  %v74 = vpack.c.b16 %v59, %v58
  %v75 = vpack.c.b16 %v61, %v60
  %v76 = vpack.c.b16 %v63, %v62
  %v77 = vpack.c.b16 %v65, %v64
  %v78 = vpack.c.b16 %v67, %v66
  %v79 = vpack.c.b16 %v69, %v68
  %v80 = vpack.c.b16 %v71, %v70
  %v81 = vpack.c.b16 %v73, %v72
  %90 = vmatprep.subr.bf16.mxu0 0
  %91 = vmatpush1.bf16.msra.mxu0 %v74
  %92 = vmatprep.subr.bf16.mxu0 0
  %93 = vmatpush1.bf16.msra.mxu0 %v75
  %94 = vmatprep.subr.bf16.mxu0 0
  %95 = vmatpush1.bf16.msra.mxu0 %v76
  %96 = vmatprep.subr.bf16.mxu0 0
  %97 = vmatpush1.bf16.msra.mxu0 %v77
  %98 = vmatprep.subr.bf16.mxu0 0
  %99 = vmatpush1.bf16.msra.mxu0 %v78
  %100 = vmatprep.subr.bf16.mxu0 0
  %101 = vmatpush1.bf16.msra.mxu0 %v79
  %102 = vmatprep.subr.bf16.mxu0 0
  %103 = vmatpush1.bf16.msra.mxu0 %v80
  %104 = vmatprep.subr.bf16.mxu0 0
  %105 = vmatpush1.bf16.msra.mxu0 %v81
  %106 = vmatprep.subr.bf16.mxu0 0
  %107 = vmatpush1.bf16.msra.mxu0 0
  %108 = vmatprep.subr.bf16.mxu0 0
  %109 = vmatpush1.bf16.msra.mxu0 0
  %110 = vmatprep.subr.bf16.mxu0 0
  %111 = vmatpush1.bf16.msra.mxu0 0
  %112 = vmatprep.subr.bf16.mxu0 0
  %113 = vmatpush1.bf16.msra.mxu0 0
  %114 = vmatprep.subr.bf16.mxu0 0
  %115 = vmatpush1.bf16.msra.mxu0 0
  %116 = vmatprep.subr.bf16.mxu0 0
  %117 = vmatpush1.bf16.msra.mxu0 0
  %118 = vmatprep.subr.bf16.mxu0 0
  %119 = vmatpush1.bf16.msra.mxu0 0
  %120 = vmatprep.subr.bf16.mxu0 0
  %121 = vmatpush1.bf16.msra.mxu0 0
  %122 = vmatprep.mubr.bf16.mxu0 0
  %123 = vmatmul.mubr.bf16.gmra.mrb[0].mxu0 %v25
  %v124 = vpop.f32.mrb[0].mxu0
  %v125 = vadd.f32 0.0, %v124
  %v126 = vpop.f32.mrb[0].mxu0
  %v127 = vpop.f32.mrb[0].mxu0
  %v128 = vpop.f32.mrb[0].mxu0
  %129 = vdwg.mxu0
  %v130 = vadd.f32 %v24, %v125
  %vm131 = vcmask 441344
  %132 = vst.msk [vmem:[#allocation2] sm:$0xff] %vm131, %v130
  // Predicated region
  $region22: #{videobert_decoder_forward.68} parent=0 // pred_check
    %p133 = pneg %p18
  $region23: #{videobert_decoder_forward.68} parent=0 // pred_check_branch
    %135 = sbr.rel (%p133) target = $region25
  $region24: #{videobert_decoder_forward.68} parent=0 // pred_region
    %v136 = vld [vmem:[#allocation2] sm:$0xff]
    %v137 = vld [vmem:[%s2] sm:$0xff]
    %139 = vset.pattern.permute.xlu0 0
    %140 = vperm.xlu0 %139, %v137
    %v141 = vpop.permute.xlu0 %140
    %v143 = vmul.f32 %v136, %v141
    %v144 = vld [vmem:[%s3] sm:$0xff]
    %146 = vset.pattern.permute.xlu0 0
    %147 = vperm.xlu0 %146, %v144
    %v148 = vpop.permute.xlu0 %147
    %v150 = vadd.f32 %v143, %v148
    %vm151 = vcmp.ge.f32.partialorder %v150, 0.0
    %v152 = vmul.f32 %v150, 0.01
    %v153 = vsel %vm151, %v150, %v152
    %154 = vst.msk [vmem:[%s4] sm:$0xff] %vm131, %v153
  $region25: #{videobert_decoder_forward.68} parent=0 // pred_fallthru
    _
  // Predicated region
  $region26: #{videobert_decoder_forward.68} parent=0 // pred_check
    _
  $region27: #{videobert_decoder_forward.68} parent=0 // pred_check_branch
    %156 = sbr.rel (0) target = $region29
  $region28: #{videobert_decoder_forward.68} parent=0 // pred_region
    _
  $region29: #{videobert_decoder_forward.68} parent=0 // pred_fallthru
    _
  // Predicated region
  $region30: #{videobert_decoder_forward.68} parent=0 // pred_check
    _
  $region31: #{videobert_decoder_forward.68} parent=0 // pred_check_branch
    %158 = sbr.rel (0) target = $region33
  $region32: #{videobert_decoder_forward.68} parent=0 // pred_region
    _
  $region33: #{videobert_decoder_forward.68} parent=0 // pred_fallthru
    _

// kernel: videobert_decoder_forward.69
$region0: #{videobert_decoder_forward.69}
  #allocation0 [shape = 'u32[]', space=smem, size = 0x4, offset = 0x4, fixed_abs, tag = 'smem constant byte address 0x4 - core index']
  #allocation1 [shape = 'u32[144,128]{1,0:T(1,128)}', space=vmem, size = 0x12000, scoped, tag = 'internal scratch']
  #allocation2 [shape = 'f32[8,72]{1,0:T(8,128)}', space=vmem, size = 0x1000, scoped, tag = 'scratch operand']
  %s0 = inlined_call_operand.vmem [shape: bf16[8,64], index: 0, kind: input, shape index: {}]
  %s1 = inlined_call_operand.vmem [shape: bf16[64,72], index: 1, kind: input, shape index: {}]
  %s2 = inlined_call_operand.vmem [shape: f32[8,1], index: 2, kind: input, shape index: {}]
  %s3 = inlined_call_operand.vmem [shape: f32[8,1], index: 3, kind: input, shape index: {}]
  %s4 = inlined_call_operand.vmem [shape: f32[8,72], index: 4, kind: output, shape index: {}]
  %s5 = sld [smem:[#allocation0]]
  $region34: #{videobert_decoder_forward.69} parent=0
    _
  %s7 = ssub.s32 1, %s5
  %s8 = scalar_select 0, %s7, %s5
  // Predicated region
  $region2: #{videobert_decoder_forward.69} parent=0 // pred_check
    _
  $region3: #{videobert_decoder_forward.69} parent=0 // pred_check_branch
    %10 = sbr.rel (0) target = $region5
  $region4: #{videobert_decoder_forward.69} parent=0 // pred_region
    _
  $region5: #{videobert_decoder_forward.69} parent=0 // pred_fallthru
    _
  // Predicated region
  $region6: #{videobert_decoder_forward.69} parent=0 // pred_check
    _
  $region7: #{videobert_decoder_forward.69} parent=0 // pred_check_branch
    %12 = sbr.rel (0) target = $region9
  $region8: #{videobert_decoder_forward.69} parent=0 // pred_region
    _
  $region9: #{videobert_decoder_forward.69} parent=0 // pred_fallthru
    _
  // Predicated region
  $region10: #{videobert_decoder_forward.69} parent=0 // pred_check
    _
  $region11: #{videobert_decoder_forward.69} parent=0 // pred_check_branch
    %14 = sbr.rel (0) target = $region13
  $region12: #{videobert_decoder_forward.69} parent=0 // pred_region
    _
  $region13: #{videobert_decoder_forward.69} parent=0 // pred_fallthru
    _
  // Predicated region
  $region14: #{videobert_decoder_forward.69} parent=0 // pred_check
    _
  $region15: #{videobert_decoder_forward.69} parent=0 // pred_check_branch
    %16 = sbr.rel (0) target = $region17
  $region16: #{videobert_decoder_forward.69} parent=0 // pred_region
    _
  $region17: #{videobert_decoder_forward.69} parent=0 // pred_fallthru
    _
  %p18 = scmp.eq.s32.totalorder 0, 0
  // Predicated region
  $region18: #{videobert_decoder_forward.69} parent=0 // pred_check
    %p19 = pneg %p18
  $region19: #{videobert_decoder_forward.69} parent=0 // pred_check_branch
    %21 = sbr.rel (%p19) target = $region21
  $region20: #{videobert_decoder_forward.69} parent=0 // pred_region
    %vm22 = vcmask 588800
    %23 = vst.msk [vmem:[#allocation2] sm:$0xff] %vm22, 0.0
  $region21: #{videobert_decoder_forward.69} parent=0 // pred_fallthru
    _
  %v24 = vld [vmem:[#allocation2] sm:$0xff]
  %v25 = vld [vmem:[%s0] sm:$0xf]
  %v26 = vld [vmem:[%s1] sm:$0xf]
  %v27 = vld [vmem:[%s1 + $0x4] sm:$0xf]
  %v28 = vld [vmem:[%s1 + $0x8] sm:$0xf]
  %v29 = vld [vmem:[%s1 + $0xc] sm:$0xf]
  %v30 = vld [vmem:[%s1 + $0x10] sm:$0xf]
  %v31 = vld [vmem:[%s1 + $0x14] sm:$0xf]
  %v32 = vld [vmem:[%s1 + $0x18] sm:$0xf]
  %v33 = vld [vmem:[%s1 + $0x1c] sm:$0xf]
  %v42 = vunpack.c.l.b16 %v26
  %v43 = vunpack.c.l.b16 %v27
  %v44 = vunpack.c.l.b16 %v28
  %v45 = vunpack.c.l.b16 %v29
  %v46 = vunpack.c.l.b16 %v30
  %v47 = vunpack.c.l.b16 %v31
  %v48 = vunpack.c.l.b16 %v32
  %v49 = vunpack.c.l.b16 %v33
  %v50 = vpack.c.b16 %v43, %v42
  %v51 = vpack.c.b16 %v45, %v44
  %v52 = vpack.c.b16 %v47, %v46
  %v53 = vpack.c.b16 %v49, %v48
  %vm58 = vcmask 523264
  %v60 = vsel %vm58, %v25, 0
  %62 = vmatprep.subr.bf16.mxu0 0
  %63 = vmatpush1.bf16.msra.mxu0 %v50
  %64 = vmatprep.subr.bf16.mxu0 0
  %65 = vmatpush1.bf16.msra.mxu0 %v51
  %66 = vmatprep.subr.bf16.mxu0 0
  %67 = vmatpush1.bf16.msra.mxu0 %v52
  %68 = vmatprep.subr.bf16.mxu0 0
  %69 = vmatpush1.bf16.msra.mxu0 %v53
  %70 = vmatprep.subr.bf16.mxu0 0
  %71 = vmatpush1.bf16.msra.mxu0 0
  %72 = vmatprep.subr.bf16.mxu0 0
  %73 = vmatpush1.bf16.msra.mxu0 0
  %74 = vmatprep.subr.bf16.mxu0 0
  %75 = vmatpush1.bf16.msra.mxu0 0
  %76 = vmatprep.subr.bf16.mxu0 0
  %77 = vmatpush1.bf16.msra.mxu0 0
  %78 = vmatprep.subr.bf16.mxu0 0
  %79 = vmatpush1.bf16.msra.mxu0 0
  %80 = vmatprep.subr.bf16.mxu0 0
  %81 = vmatpush1.bf16.msra.mxu0 0
  %82 = vmatprep.subr.bf16.mxu0 0
  %83 = vmatpush1.bf16.msra.mxu0 0
  %84 = vmatprep.subr.bf16.mxu0 0
  %85 = vmatpush1.bf16.msra.mxu0 0
  %86 = vmatprep.subr.bf16.mxu0 0
  %87 = vmatpush1.bf16.msra.mxu0 0
  %88 = vmatprep.subr.bf16.mxu0 0
  %89 = vmatpush1.bf16.msra.mxu0 0
  %90 = vmatprep.subr.bf16.mxu0 0
  %91 = vmatpush1.bf16.msra.mxu0 0
  %92 = vmatprep.subr.bf16.mxu0 0
  %93 = vmatpush1.bf16.msra.mxu0 0
  %94 = vmatprep.mubr.bf16.mxu0 0
  %95 = vmatmul.mubr.bf16.gmra.mrb[0].mxu0 %v60
  %v96 = vpop.f32.mrb[0].mxu0
  %v97 = vadd.f32 0.0, %v96
  %v98 = vpop.f32.mrb[0].mxu0
  %v99 = vpop.f32.mrb[0].mxu0
  %v100 = vpop.f32.mrb[0].mxu0
  %101 = vdwg.mxu0
  %v102 = vadd.f32 %v24, %v97
  %vm103 = vcmask 588800
  %104 = vst.msk [vmem:[#allocation2] sm:$0xff] %vm103, %v102
  // Predicated region
  $region22: #{videobert_decoder_forward.69} parent=0 // pred_check
    %p105 = pneg %p18
  $region23: #{videobert_decoder_forward.69} parent=0 // pred_check_branch
    %107 = sbr.rel (%p105) target = $region25
  $region24: #{videobert_decoder_forward.69} parent=0 // pred_region
    %v108 = vld [vmem:[#allocation2] sm:$0xff]
    %v109 = vld [vmem:[%s2] sm:$0xff]
    %111 = vset.pattern.permute.xlu0 0
    %112 = vperm.xlu0 %111, %v109
    %v113 = vpop.permute.xlu0 %112
    %v115 = vmul.f32 %v108, %v113
    %v116 = vld [vmem:[%s3] sm:$0xff]
    %118 = vset.pattern.permute.xlu0 0
    %119 = vperm.xlu0 %118, %v116
    %v120 = vpop.permute.xlu0 %119
    %v122 = vadd.f32 %v115, %v120
    %vm123 = vcmp.ge.f32.partialorder %v122, 0.0
    %v124 = vmul.f32 %v122, 0.01
    %v125 = vsel %vm123, %v122, %v124
    %126 = vst.msk [vmem:[%s4] sm:$0xff] %vm103, %v125
  $region25: #{videobert_decoder_forward.69} parent=0 // pred_fallthru
    _
  // Predicated region
  $region26: #{videobert_decoder_forward.69} parent=0 // pred_check
    _
  $region27: #{videobert_decoder_forward.69} parent=0 // pred_check_branch
    %128 = sbr.rel (0) target = $region29
  $region28: #{videobert_decoder_forward.69} parent=0 // pred_region
    _
  $region29: #{videobert_decoder_forward.69} parent=0 // pred_fallthru
    _
  // Predicated region
  $region30: #{videobert_decoder_forward.69} parent=0 // pred_check
    _
  $region31: #{videobert_decoder_forward.69} parent=0 // pred_check_branch
    %130 = sbr.rel (0) target = $region33
  $region32: #{videobert_decoder_forward.69} parent=0 // pred_region
    _
  $region33: #{videobert_decoder_forward.69} parent=0 // pred_fallthru
    _

// kernel: videobert_decoder_forward.71
$region0: #{videobert_decoder_forward.71}
  #allocation0 [shape = 'u32[]', space=smem, size = 0x4, offset = 0x4, fixed_abs, tag = 'smem constant byte address 0x4 - core index']
  #allocation1 [shape = 'u32[144,128]{1,0:T(1,128)}', space=vmem, size = 0x12000, scoped, tag = 'internal scratch']
  #allocation2 [shape = 'f32[8,96]{1,0:T(8,128)}', space=vmem, size = 0x1000, scoped, tag = 'scratch operand']
  %s0 = inlined_call_operand.vmem [shape: bf16[8,32], index: 0, kind: input, shape index: {}]
  %s1 = inlined_call_operand.vmem [shape: bf16[32,96], index: 1, kind: input, shape index: {}]
  %s2 = inlined_call_operand.vmem [shape: f32[8,1], index: 2, kind: input, shape index: {}]
  %s3 = inlined_call_operand.vmem [shape: f32[8,1], index: 3, kind: input, shape index: {}]
  %s4 = inlined_call_operand.vmem [shape: f32[8,96], index: 4, kind: output, shape index: {}]
  %s5 = sld [smem:[#allocation0]]
  $region34: #{videobert_decoder_forward.71} parent=0
    _
  %s7 = ssub.s32 1, %s5
  %s8 = scalar_select 0, %s7, %s5
  // Predicated region
  $region2: #{videobert_decoder_forward.71} parent=0 // pred_check
    _
  $region3: #{videobert_decoder_forward.71} parent=0 // pred_check_branch
    %10 = sbr.rel (0) target = $region5
  $region4: #{videobert_decoder_forward.71} parent=0 // pred_region
    _
  $region5: #{videobert_decoder_forward.71} parent=0 // pred_fallthru
    _
  // Predicated region
  $region6: #{videobert_decoder_forward.71} parent=0 // pred_check
    _
  $region7: #{videobert_decoder_forward.71} parent=0 // pred_check_branch
    %12 = sbr.rel (0) target = $region9
  $region8: #{videobert_decoder_forward.71} parent=0 // pred_region
    _
  $region9: #{videobert_decoder_forward.71} parent=0 // pred_fallthru
    _
  // Predicated region
  $region10: #{videobert_decoder_forward.71} parent=0 // pred_check
    _
  $region11: #{videobert_decoder_forward.71} parent=0 // pred_check_branch
    %14 = sbr.rel (0) target = $region13
  $region12: #{videobert_decoder_forward.71} parent=0 // pred_region
    _
  $region13: #{videobert_decoder_forward.71} parent=0 // pred_fallthru
    _
  // Predicated region
  $region14: #{videobert_decoder_forward.71} parent=0 // pred_check
    _
  $region15: #{videobert_decoder_forward.71} parent=0 // pred_check_branch
    %16 = sbr.rel (0) target = $region17
  $region16: #{videobert_decoder_forward.71} parent=0 // pred_region
    _
  $region17: #{videobert_decoder_forward.71} parent=0 // pred_fallthru
    _
  %p18 = scmp.eq.s32.totalorder 0, 0
  // Predicated region
  $region18: #{videobert_decoder_forward.71} parent=0 // pred_check
    %p19 = pneg %p18
  $region19: #{videobert_decoder_forward.71} parent=0 // pred_check_branch
    %21 = sbr.rel (%p19) target = $region21
  $region20: #{videobert_decoder_forward.71} parent=0 // pred_region
    %vm22 = vcmask 785408
    %23 = vst.msk [vmem:[#allocation2] sm:$0xff] %vm22, 0.0
  $region21: #{videobert_decoder_forward.71} parent=0 // pred_fallthru
    _
  %v24 = vld [vmem:[#allocation2] sm:$0xff]
  %v25 = vld [vmem:[%s0] sm:$0xf]
  %v26 = vld [vmem:[%s1] sm:$0xf]
  %v27 = vld [vmem:[%s1 + $0x4] sm:$0xf]
  %v28 = vld [vmem:[%s1 + $0x8] sm:$0xf]
  %v29 = vld [vmem:[%s1 + $0xc] sm:$0xf]
  %v34 = vunpack.c.l.b16 %v26
  %v35 = vunpack.c.l.b16 %v27
  %v36 = vunpack.c.l.b16 %v28
  %v37 = vunpack.c.l.b16 %v29
  %v38 = vpack.c.b16 %v35, %v34
  %v39 = vpack.c.b16 %v37, %v36
  %vm42 = vcmask 261120
  %v44 = vsel %vm42, %v25, 0
  %46 = vmatprep.subr.bf16.mxu0 0
  %47 = vmatpush1.bf16.msra.mxu0 %v38
  %48 = vmatprep.subr.bf16.mxu0 0
  %49 = vmatpush1.bf16.msra.mxu0 %v39
  %50 = vmatprep.subr.bf16.mxu0 0
  %51 = vmatpush1.bf16.msra.mxu0 0
  %52 = vmatprep.subr.bf16.mxu0 0
  %53 = vmatpush1.bf16.msra.mxu0 0
  %54 = vmatprep.subr.bf16.mxu0 0
  %55 = vmatpush1.bf16.msra.mxu0 0
  %56 = vmatprep.subr.bf16.mxu0 0
  %57 = vmatpush1.bf16.msra.mxu0 0
  %58 = vmatprep.subr.bf16.mxu0 0
  %59 = vmatpush1.bf16.msra.mxu0 0
  %60 = vmatprep.subr.bf16.mxu0 0
  %61 = vmatpush1.bf16.msra.mxu0 0
  %62 = vmatprep.subr.bf16.mxu0 0
  %63 = vmatpush1.bf16.msra.mxu0 0
  %64 = vmatprep.subr.bf16.mxu0 0
  %65 = vmatpush1.bf16.msra.mxu0 0
  %66 = vmatprep.subr.bf16.mxu0 0
  %67 = vmatpush1.bf16.msra.mxu0 0
  %68 = vmatprep.subr.bf16.mxu0 0
  %69 = vmatpush1.bf16.msra.mxu0 0
  %70 = vmatprep.subr.bf16.mxu0 0
  %71 = vmatpush1.bf16.msra.mxu0 0
  %72 = vmatprep.subr.bf16.mxu0 0
  %73 = vmatpush1.bf16.msra.mxu0 0
  %74 = vmatprep.subr.bf16.mxu0 0
  %75 = vmatpush1.bf16.msra.mxu0 0
  %76 = vmatprep.subr.bf16.mxu0 0
  %77 = vmatpush1.bf16.msra.mxu0 0
  %78 = vmatprep.mubr.bf16.mxu0 0
  %79 = vmatmul.mubr.bf16.gmra.mrb[0].mxu0 %v44
  %v80 = vpop.f32.mrb[0].mxu0
  %v81 = vadd.f32 0.0, %v80
  %v82 = vpop.f32.mrb[0].mxu0
  %v83 = vpop.f32.mrb[0].mxu0
  %v84 = vpop.f32.mrb[0].mxu0
  %85 = vdwg.mxu0
  %v86 = vadd.f32 %v24, %v81
  %vm87 = vcmask 785408
  %88 = vst.msk [vmem:[#allocation2] sm:$0xff] %vm87, %v86
  // Predicated region
  $region22: #{videobert_decoder_forward.71} parent=0 // pred_check
    %p89 = pneg %p18
  $region23: #{videobert_decoder_forward.71} parent=0 // pred_check_branch
    %91 = sbr.rel (%p89) target = $region25
  $region24: #{videobert_decoder_forward.71} parent=0 // pred_region
    %v92 = vld [vmem:[#allocation2] sm:$0xff]
    %v93 = vld [vmem:[%s2] sm:$0xff]
    %95 = vset.pattern.permute.xlu0 0
    %96 = vperm.xlu0 %95, %v93
    %v97 = vpop.permute.xlu0 %96
    %v99 = vmul.f32 %v92, %v97
    %v100 = vld [vmem:[%s3] sm:$0xff]
    %102 = vset.pattern.permute.xlu0 0
    %103 = vperm.xlu0 %102, %v100
    %v104 = vpop.permute.xlu0 %103
    %v106 = vadd.f32 %v99, %v104
    %vm107 = vcmp.ge.f32.partialorder %v106, 0.0
    %v108 = vmul.f32 %v106, 0.01
    %v109 = vsel %vm107, %v106, %v108
    %110 = vst.msk [vmem:[%s4] sm:$0xff] %vm87, %v109
  $region25: #{videobert_decoder_forward.71} parent=0 // pred_fallthru
    _
  // Predicated region
  $region26: #{videobert_decoder_forward.71} parent=0 // pred_check
    _
  $region27: #{videobert_decoder_forward.71} parent=0 // pred_check_branch
    %112 = sbr.rel (0) target = $region29
  $region28: #{videobert_decoder_forward.71} parent=0 // pred_region
    _
  $region29: #{videobert_decoder_forward.71} parent=0 // pred_fallthru
    _
  // Predicated region
  $region30: #{videobert_decoder_forward.71} parent=0 // pred_check
    _
  $region31: #{videobert_decoder_forward.71} parent=0 // pred_check_branch
    %114 = sbr.rel (0) target = $region33
  $region32: #{videobert_decoder_forward.71} parent=0 // pred_region
    _
  $region33: #{videobert_decoder_forward.71} parent=0 // pred_fallthru
    _

// kernel: videobert_decoder_forward.75
$region0: #{videobert_decoder_forward.75}
  #allocation0 [shape = 'u32[]', space=smem, size = 0x4, offset = 0x4, fixed_abs, tag = 'smem constant byte address 0x4 - core index']
  #allocation1 [shape = 'u32[144,128]{1,0:T(1,128)}', space=vmem, size = 0x12000, scoped, tag = 'internal scratch']
  #allocation2 [shape = 'f32[8,128]{1,0:T(8,128)}', space=vmem, size = 0x1000, scoped, tag = 'scratch operand']
  %s0 = inlined_call_operand.vmem [shape: bf16[8,16], index: 0, kind: input, shape index: {}]
  %s1 = inlined_call_operand.vmem [shape: bf16[16,128], index: 1, kind: input, shape index: {}]
  %s2 = inlined_call_operand.vmem [shape: f32[8,1], index: 2, kind: input, shape index: {}]
  %s3 = inlined_call_operand.vmem [shape: f32[8,1], index: 3, kind: input, shape index: {}]
  %s4 = inlined_call_operand.vmem [shape: f32[8,128], index: 4, kind: output, shape index: {}]
  %s5 = sld [smem:[#allocation0]]
  $region34: #{videobert_decoder_forward.75} parent=0
    _
  %s7 = ssub.s32 1, %s5
  %s8 = scalar_select 0, %s7, %s5
  // Predicated region
  $region2: #{videobert_decoder_forward.75} parent=0 // pred_check
    _
  $region3: #{videobert_decoder_forward.75} parent=0 // pred_check_branch
    %10 = sbr.rel (0) target = $region5
  $region4: #{videobert_decoder_forward.75} parent=0 // pred_region
    _
  $region5: #{videobert_decoder_forward.75} parent=0 // pred_fallthru
    _
  // Predicated region
  $region6: #{videobert_decoder_forward.75} parent=0 // pred_check
    _
  $region7: #{videobert_decoder_forward.75} parent=0 // pred_check_branch
    %12 = sbr.rel (0) target = $region9
  $region8: #{videobert_decoder_forward.75} parent=0 // pred_region
    _
  $region9: #{videobert_decoder_forward.75} parent=0 // pred_fallthru
    _
  // Predicated region
  $region10: #{videobert_decoder_forward.75} parent=0 // pred_check
    _
  $region11: #{videobert_decoder_forward.75} parent=0 // pred_check_branch
    %14 = sbr.rel (0) target = $region13
  $region12: #{videobert_decoder_forward.75} parent=0 // pred_region
    _
  $region13: #{videobert_decoder_forward.75} parent=0 // pred_fallthru
    _
  // Predicated region
  $region14: #{videobert_decoder_forward.75} parent=0 // pred_check
    _
  $region15: #{videobert_decoder_forward.75} parent=0 // pred_check_branch
    %16 = sbr.rel (0) target = $region17
  $region16: #{videobert_decoder_forward.75} parent=0 // pred_region
    _
  $region17: #{videobert_decoder_forward.75} parent=0 // pred_fallthru
    _
  %p18 = scmp.eq.s32.totalorder 0, 0
  // Predicated region
  $region18: #{videobert_decoder_forward.75} parent=0 // pred_check
    %p19 = pneg %p18
  $region19: #{videobert_decoder_forward.75} parent=0 // pred_check_branch
    %21 = sbr.rel (%p19) target = $region21
  $region20: #{videobert_decoder_forward.75} parent=0 // pred_region
    %22 = vst [vmem:[#allocation2] sm:$0xff] 0.0
  $region21: #{videobert_decoder_forward.75} parent=0 // pred_fallthru
    _
  %v23 = vld [vmem:[#allocation2] sm:$0xff]
  %v24 = vld [vmem:[%s0] sm:$0xf]
  %v25 = vld [vmem:[%s1] sm:$0xf]
  %v26 = vld [vmem:[%s1 + $0x4] sm:$0xf]
  %v29 = vunpack.c.l.b16 %v25
  %v30 = vunpack.c.l.b16 %v26
  %v31 = vpack.c.b16 %v30, %v29
  %vm33 = vcmask 130048
  %v35 = vsel %vm33, %v24, 0
  %37 = vmatprep.subr.bf16.mxu0 0
  %38 = vmatpush1.bf16.msra.mxu0 %v31
  %39 = vmatprep.subr.bf16.mxu0 0
  %40 = vmatpush1.bf16.msra.mxu0 0
  %41 = vmatprep.subr.bf16.mxu0 0
  %42 = vmatpush1.bf16.msra.mxu0 0
  %43 = vmatprep.subr.bf16.mxu0 0
  %44 = vmatpush1.bf16.msra.mxu0 0
  %45 = vmatprep.subr.bf16.mxu0 0
  %46 = vmatpush1.bf16.msra.mxu0 0
  %47 = vmatprep.subr.bf16.mxu0 0
  %48 = vmatpush1.bf16.msra.mxu0 0
  %49 = vmatprep.subr.bf16.mxu0 0
  %50 = vmatpush1.bf16.msra.mxu0 0
  %51 = vmatprep.subr.bf16.mxu0 0
  %52 = vmatpush1.bf16.msra.mxu0 0
  %53 = vmatprep.subr.bf16.mxu0 0
  %54 = vmatpush1.bf16.msra.mxu0 0
  %55 = vmatprep.subr.bf16.mxu0 0
  %56 = vmatpush1.bf16.msra.mxu0 0
  %57 = vmatprep.subr.bf16.mxu0 0
  %58 = vmatpush1.bf16.msra.mxu0 0
  %59 = vmatprep.subr.bf16.mxu0 0
  %60 = vmatpush1.bf16.msra.mxu0 0
  %61 = vmatprep.subr.bf16.mxu0 0
  %62 = vmatpush1.bf16.msra.mxu0 0
  %63 = vmatprep.subr.bf16.mxu0 0
  %64 = vmatpush1.bf16.msra.mxu0 0
  %65 = vmatprep.subr.bf16.mxu0 0
  %66 = vmatpush1.bf16.msra.mxu0 0
  %67 = vmatprep.subr.bf16.mxu0 0
  %68 = vmatpush1.bf16.msra.mxu0 0
  %69 = vmatprep.mubr.bf16.mxu0 0
  %70 = vmatmul.mubr.bf16.gmra.mrb[0].mxu0 %v35
  %v71 = vpop.f32.mrb[0].mxu0
  %v72 = vadd.f32 0.0, %v71
  %v73 = vpop.f32.mrb[0].mxu0
  %v74 = vpop.f32.mrb[0].mxu0
  %v75 = vpop.f32.mrb[0].mxu0
  %76 = vdwg.mxu0
  %v77 = vadd.f32 %v23, %v72
  %78 = vst [vmem:[#allocation2] sm:$0xff] %v77
  // Predicated region
  $region22: #{videobert_decoder_forward.75} parent=0 // pred_check
    %p79 = pneg %p18
  $region23: #{videobert_decoder_forward.75} parent=0 // pred_check_branch
    %81 = sbr.rel (%p79) target = $region25
  $region24: #{videobert_decoder_forward.75} parent=0 // pred_region
    %v82 = vld [vmem:[#allocation2] sm:$0xff]
    %v83 = vld [vmem:[%s2] sm:$0xff]
    %85 = vset.pattern.permute.xlu0 0
    %86 = vperm.xlu0 %85, %v83
    %v87 = vpop.permute.xlu0 %86
    %v89 = vmul.f32 %v82, %v87
    %v90 = vld [vmem:[%s3] sm:$0xff]
    %92 = vset.pattern.permute.xlu0 0
    %93 = vperm.xlu0 %92, %v90
    %v94 = vpop.permute.xlu0 %93
    %v96 = vadd.f32 %v89, %v94
    %vm97 = vcmp.ge.f32.partialorder %v96, 0.0
    %v98 = vmul.f32 %v96, 0.01
    %v99 = vsel %vm97, %v96, %v98
    %100 = vst [vmem:[%s4] sm:$0xff] %v99
  $region25: #{videobert_decoder_forward.75} parent=0 // pred_fallthru
    _
  // Predicated region
  $region26: #{videobert_decoder_forward.75} parent=0 // pred_check
    _
  $region27: #{videobert_decoder_forward.75} parent=0 // pred_check_branch
    %102 = sbr.rel (0) target = $region29
  $region28: #{videobert_decoder_forward.75} parent=0 // pred_region
    _
  $region29: #{videobert_decoder_forward.75} parent=0 // pred_fallthru
    _
  // Predicated region
  $region30: #{videobert_decoder_forward.75} parent=0 // pred_check
    _
  $region31: #{videobert_decoder_forward.75} parent=0 // pred_check_branch
    %104 = sbr.rel (0) target = $region33
  $region32: #{videobert_decoder_forward.75} parent=0 // pred_region
    _
  $region33: #{videobert_decoder_forward.75} parent=0 // pred_fallthru
    _

// kernel: videobert_decoder_forward.76
$region0: #{videobert_decoder_forward.76}
  #allocation0 [shape = 'u32[]', space=smem, size = 0x4, offset = 0x4, fixed_abs, tag = 'smem constant byte address 0x4 - core index']
  #allocation1 [shape = 'u32[144,128]{1,0:T(1,128)}', space=vmem, size = 0x12000, scoped, tag = 'internal scratch']
  #allocation2 [shape = 'f32[3,432]{1,0:T(4,128)}', space=vmem, size = 0x2000, scoped, tag = 'scratch operand']
  %s0 = inlined_call_operand.vmem [shape: bf16[3,64], index: 0, kind: input, shape index: {}]
  %s1 = inlined_call_operand.vmem [shape: bf16[64,432], index: 1, kind: input, shape index: {}]
  %s2 = inlined_call_operand.vmem [shape: f32[3,1], index: 2, kind: input, shape index: {}]
  %s3 = inlined_call_operand.vmem [shape: f32[3,1], index: 3, kind: input, shape index: {}]
  %s4 = inlined_call_operand.vmem [shape: f32[3,432], index: 4, kind: output, shape index: {}]
  %s5 = sld [smem:[#allocation0]]
  $region34: #{videobert_decoder_forward.76} parent=0
    _
  %s7 = ssub.s32 1, %s5
  %s8 = scalar_select 0, %s7, %s5
  // Predicated region
  $region2: #{videobert_decoder_forward.76} parent=0 // pred_check
    _
  $region3: #{videobert_decoder_forward.76} parent=0 // pred_check_branch
    %10 = sbr.rel (0) target = $region5
  $region4: #{videobert_decoder_forward.76} parent=0 // pred_region
    _
  $region5: #{videobert_decoder_forward.76} parent=0 // pred_fallthru
    _
  // Predicated region
  $region6: #{videobert_decoder_forward.76} parent=0 // pred_check
    _
  $region7: #{videobert_decoder_forward.76} parent=0 // pred_check_branch
    %12 = sbr.rel (0) target = $region9
  $region8: #{videobert_decoder_forward.76} parent=0 // pred_region
    _
  $region9: #{videobert_decoder_forward.76} parent=0 // pred_fallthru
    _
  // Predicated region
  $region10: #{videobert_decoder_forward.76} parent=0 // pred_check
    _
  $region11: #{videobert_decoder_forward.76} parent=0 // pred_check_branch
    %14 = sbr.rel (0) target = $region13
  $region12: #{videobert_decoder_forward.76} parent=0 // pred_region
    _
  $region13: #{videobert_decoder_forward.76} parent=0 // pred_fallthru
    _
  // Predicated region
  $region14: #{videobert_decoder_forward.76} parent=0 // pred_check
    _
  $region15: #{videobert_decoder_forward.76} parent=0 // pred_check_branch
    %16 = sbr.rel (0) target = $region17
  $region16: #{videobert_decoder_forward.76} parent=0 // pred_region
    _
  $region17: #{videobert_decoder_forward.76} parent=0 // pred_fallthru
    _
  %p18 = scmp.eq.s32.totalorder 0, 0
  // Predicated region
  $region18: #{videobert_decoder_forward.76} parent=0 // pred_check
    %p19 = pneg %p18
  $region19: #{videobert_decoder_forward.76} parent=0 // pred_check_branch
    %21 = sbr.rel (%p19) target = $region21
  $region20: #{videobert_decoder_forward.76} parent=0 // pred_region
    %22 = vst [vmem:[#allocation2] sm:$0x77] 0.0
    %vm23 = vcmask 1042432
    %vm24 = vcmask 391172
    %vm25 = vmor %vm24, %vm23
    %26 = vst.msk [vmem:[#allocation2 + $0x8] sm:$0x77] %vm25, 0.0
  $region21: #{videobert_decoder_forward.76} parent=0 // pred_fallthru
    _
  %v27 = vld [vmem:[#allocation2] sm:$0x77]
  %v28 = vld [vmem:[#allocation2 + $0x8] sm:$0x77]
  %v29 = vld [vmem:[%s0] sm:$0x3]
  %v30 = vld [vmem:[%s1] sm:$0xff]
  %v31 = vld [vmem:[%s1 + $0x8] sm:$0xff]
  %v32 = vld [vmem:[%s1 + $0x10] sm:$0xff]
  %v33 = vld [vmem:[%s1 + $0x18] sm:$0xff]
  %v34 = vld [vmem:[%s1 + $0x20] sm:$0xff]
  %v35 = vld [vmem:[%s1 + $0x28] sm:$0xff]
  %v36 = vld [vmem:[%s1 + $0x30] sm:$0xff]
  %v37 = vld [vmem:[%s1 + $0x38] sm:$0xff]
  %v38 = vld [vmem:[%s1 + $0x40] sm:$0xff]
  %v39 = vld [vmem:[%s1 + $0x48] sm:$0xff]
  %v40 = vld [vmem:[%s1 + $0x50] sm:$0xff]
  %v41 = vld [vmem:[%s1 + $0x58] sm:$0xff]
  %v42 = vld [vmem:[%s1 + $0x60] sm:$0xff]
  %v43 = vld [vmem:[%s1 + $0x68] sm:$0xff]
  %v44 = vld [vmem:[%s1 + $0x70] sm:$0xff]
  %v45 = vld [vmem:[%s1 + $0x78] sm:$0xff]
  %v62 = vunpack.c.l.b16 %v30
  %v63 = vunpack.c.h.b16 %v30
  %v64 = vunpack.c.l.b16 %v31
  %v65 = vunpack.c.h.b16 %v31
  %v66 = vunpack.c.l.b16 %v32
  %v67 = vunpack.c.h.b16 %v32
  %v68 = vunpack.c.l.b16 %v33
  %v69 = vunpack.c.h.b16 %v33
  %v70 = vunpack.c.l.b16 %v34
  %v71 = vunpack.c.h.b16 %v34
  %v72 = vunpack.c.l.b16 %v35
  %v73 = vunpack.c.h.b16 %v35
  %v74 = vunpack.c.l.b16 %v36
  %v75 = vunpack.c.h.b16 %v36
  %v76 = vunpack.c.l.b16 %v37
  %v77 = vunpack.c.h.b16 %v37
  %v78 = vunpack.c.l.b16 %v38
  %v79 = vunpack.c.h.b16 %v38
  %v80 = vunpack.c.l.b16 %v39
  %v81 = vunpack.c.h.b16 %v39
  %v82 = vunpack.c.l.b16 %v40
  %v83 = vunpack.c.h.b16 %v40
  %v84 = vunpack.c.l.b16 %v41
  %v85 = vunpack.c.h.b16 %v41
  %v86 = vunpack.c.l.b16 %v42
  %v87 = vunpack.c.h.b16 %v42
  %v88 = vunpack.c.l.b16 %v43
  %v89 = vunpack.c.h.b16 %v43
  %v90 = vunpack.c.l.b16 %v44
  %v91 = vunpack.c.h.b16 %v44
  %v92 = vunpack.c.l.b16 %v45
  %v93 = vunpack.c.h.b16 %v45
  %v94 = vpack.c.b16 %v66, %v62
  %v95 = vpack.c.b16 %v67, %v63
  %v96 = vpack.c.b16 %v68, %v64
  %v97 = vpack.c.b16 %v69, %v65
  %v98 = vpack.c.b16 %v74, %v70
  %v99 = vpack.c.b16 %v75, %v71
  %v100 = vpack.c.b16 %v76, %v72
  %v101 = vpack.c.b16 %v77, %v73
  %v102 = vpack.c.b16 %v82, %v78
  %v103 = vpack.c.b16 %v83, %v79
  %v104 = vpack.c.b16 %v84, %v80
  %v105 = vpack.c.b16 %v85, %v81
  %v106 = vpack.c.b16 %v90, %v86
  %v107 = vpack.c.b16 %v91, %v87
  %v108 = vpack.c.b16 %v92, %v88
  %v109 = vpack.c.b16 %v93, %v89
  %vm126 = vcmask 523264
  %v128 = vsel %vm126, %v29, 0
  %130 = vmatprep.subr.bf16.mxu0 %v95
  %131 = vmatpush1.bf16.msra.mxu0 %v94
  %132 = vmatprep.subr.bf16.mxu0 %v99
  %133 = vmatpush1.bf16.msra.mxu0 %v98
  %134 = vmatprep.subr.bf16.mxu0 %v103
  %135 = vmatpush1.bf16.msra.mxu0 %v102
  %136 = vmatprep.subr.bf16.mxu0 %v107
  %137 = vmatpush1.bf16.msra.mxu0 %v106
  %138 = vmatprep.subr.bf16.mxu0 0
  %139 = vmatpush1.bf16.msra.mxu0 0
  %140 = vmatprep.subr.bf16.mxu0 0
  %141 = vmatpush1.bf16.msra.mxu0 0
  %142 = vmatprep.subr.bf16.mxu0 0
  %143 = vmatpush1.bf16.msra.mxu0 0
  %144 = vmatprep.subr.bf16.mxu0 0
  %145 = vmatpush1.bf16.msra.mxu0 0
  %146 = vmatprep.subr.bf16.mxu0 0
  %147 = vmatpush1.bf16.msra.mxu0 0
  %148 = vmatprep.subr.bf16.mxu0 0
  %149 = vmatpush1.bf16.msra.mxu0 0
  %150 = vmatprep.subr.bf16.mxu0 0
  %151 = vmatpush1.bf16.msra.mxu0 0
  %152 = vmatprep.subr.bf16.mxu0 0
  %153 = vmatpush1.bf16.msra.mxu0 0
  %154 = vmatprep.subr.bf16.mxu0 0
  %155 = vmatpush1.bf16.msra.mxu0 0
  %156 = vmatprep.subr.bf16.mxu0 0
  %157 = vmatpush1.bf16.msra.mxu0 0
  %158 = vmatprep.subr.bf16.mxu0 0
  %159 = vmatpush1.bf16.msra.mxu0 0
  %160 = vmatprep.subr.bf16.mxu0 0
  %161 = vmatpush1.bf16.msra.mxu0 0
  %162 = vmatprep.mubr.bf16.mxu0 0
  %163 = vmatmul.mubr.bf16.gmra.mrb[0].mxu0 %v128
  %v164 = vpop.f32.mrb[0].mxu0
  %v165 = vadd.f32 0.0, %v164
  %v166 = vpop.f32.mrb[0].mxu0
  %v167 = vadd.f32 0.0, %v166
  %v168 = vpop.f32.mrb[0].mxu0
  %v169 = vpop.f32.mrb[0].mxu0
  %170 = vdwg.mxu0
  %171 = vmatprep.subr.bf16.mxu0 %v97
  %172 = vmatpush1.bf16.msra.mxu0 %v96
  %173 = vmatprep.subr.bf16.mxu0 %v101
  %174 = vmatpush1.bf16.msra.mxu0 %v100
  %175 = vmatprep.subr.bf16.mxu0 %v105
  %176 = vmatpush1.bf16.msra.mxu0 %v104
  %177 = vmatprep.subr.bf16.mxu0 %v109
  %178 = vmatpush1.bf16.msra.mxu0 %v108
  %179 = vmatprep.subr.bf16.mxu0 0
  %180 = vmatpush1.bf16.msra.mxu0 0
  %181 = vmatprep.subr.bf16.mxu0 0
  %182 = vmatpush1.bf16.msra.mxu0 0
  %183 = vmatprep.subr.bf16.mxu0 0
  %184 = vmatpush1.bf16.msra.mxu0 0
  %185 = vmatprep.subr.bf16.mxu0 0
  %186 = vmatpush1.bf16.msra.mxu0 0
  %187 = vmatprep.subr.bf16.mxu0 0
  %188 = vmatpush1.bf16.msra.mxu0 0
  %189 = vmatprep.subr.bf16.mxu0 0
  %190 = vmatpush1.bf16.msra.mxu0 0
  %191 = vmatprep.subr.bf16.mxu0 0
  %192 = vmatpush1.bf16.msra.mxu0 0
  %193 = vmatprep.subr.bf16.mxu0 0
  %194 = vmatpush1.bf16.msra.mxu0 0
  %195 = vmatprep.subr.bf16.mxu0 0
  %196 = vmatpush1.bf16.msra.mxu0 0
  %197 = vmatprep.subr.bf16.mxu0 0
  %198 = vmatpush1.bf16.msra.mxu0 0
  %199 = vmatprep.subr.bf16.mxu0 0
  %200 = vmatpush1.bf16.msra.mxu0 0
  %201 = vmatprep.subr.bf16.mxu0 0
  %202 = vmatpush1.bf16.msra.mxu0 0
  %203 = vmatprep.mubr.bf16.mxu0 0
  %204 = vmatmul.mubr.bf16.gmra.mrb[0].mxu0 %v128
  %v205 = vpop.f32.mrb[0].mxu0
  %v206 = vadd.f32 0.0, %v205
  %v207 = vpop.f32.mrb[0].mxu0
  %v208 = vadd.f32 0.0, %v207
  %v209 = vpop.f32.mrb[0].mxu0
  %v210 = vpop.f32.mrb[0].mxu0
  %211 = vdwg.mxu0
  %v216 = vcombine.low %v165, %v167
  %v217 = vcombine.low %v206, %v208
  %v220 = vadd.f32 %v27, %v216
  %v221 = vadd.f32 %v28, %v217
  %222 = vst [vmem:[#allocation2] sm:$0x77] %v220
  %vm223 = vcmask 1042432
  %vm224 = vcmask 391172
  %vm225 = vmor %vm224, %vm223
  %226 = vst.msk [vmem:[#allocation2 + $0x8] sm:$0x77] %vm225, %v221
  // Predicated region
  $region22: #{videobert_decoder_forward.76} parent=0 // pred_check
    %p227 = pneg %p18
  $region23: #{videobert_decoder_forward.76} parent=0 // pred_check_branch
    %229 = sbr.rel (%p227) target = $region25
  $region24: #{videobert_decoder_forward.76} parent=0 // pred_region
    %v230 = vld [vmem:[#allocation2] sm:$0x77]
    %v231 = vld [vmem:[#allocation2 + $0x8] sm:$0x77]
    %v232 = vld [vmem:[%s2] sm:$0x7]
    %234 = vset.pattern.permute.xlu0 0
    %235 = vperm.xlu0 %234, %v232
    %v236 = vpop.permute.xlu0 %235
    %v238 = vunpack.c.l.s4 839922192
    %v239 = vunpack.c.0.s8 %v238
    %v240 = vlaneseq
    %v241 = vshrl.u32 %v240, 7
    %v242 = vsub.s32 %v239, %v241
    %v243 = vrot.slane %v236, %v242
    %v245 = vmul.f32 %v230, %v243
    %v246 = vmul.f32 %v231, %v243
    %v247 = vld [vmem:[%s3] sm:$0x7]
    %249 = vset.pattern.permute.xlu0 0
    %250 = vperm.xlu0 %249, %v247
    %v251 = vpop.permute.xlu0 %250
    %v253 = vunpack.c.l.s4 839922192
    %v254 = vunpack.c.0.s8 %v253
    %v255 = vlaneseq
    %v256 = vshrl.u32 %v255, 7
    %v257 = vsub.s32 %v254, %v256
    %v258 = vrot.slane %v251, %v257
    %v260 = vadd.f32 %v245, %v258
    %v261 = vadd.f32 %v246, %v258
    %v262 = vxor.u32 %v260, 2147483648
    %v263 = vxor.u32 %v261, 2147483648
    %v264 = vmul.f32 %v262, 1.442695
    %v265 = vpow.pop %v264
    %v266 = vmul.f32 %v263, 1.442695
    %v267 = vpow.pop %v266
    %v268 = vadd.f32 %v265, 1.0
    %v269 = vadd.f32 %v267, 1.0
    %v270 = vrcp.pop %v268
    %v271 = vmul.f32 1.0, %v270
    %v272 = vrcp.pop %v269
    %v273 = vmul.f32 1.0, %v272
    %274 = vst [vmem:[%s4] sm:$0x77] %v271
    %275 = vst.msk [vmem:[%s4 + $0x8] sm:$0x77] %vm225, %v273
  $region25: #{videobert_decoder_forward.76} parent=0 // pred_fallthru
    _
  // Predicated region
  $region26: #{videobert_decoder_forward.76} parent=0 // pred_check
    _
  $region27: #{videobert_decoder_forward.76} parent=0 // pred_check_branch
    %277 = sbr.rel (0) target = $region29
  $region28: #{videobert_decoder_forward.76} parent=0 // pred_region
    _
  $region29: #{videobert_decoder_forward.76} parent=0 // pred_fallthru
    _
  // Predicated region
  $region30: #{videobert_decoder_forward.76} parent=0 // pred_check
    _
  $region31: #{videobert_decoder_forward.76} parent=0 // pred_check_branch
    %279 = sbr.rel (0) target = $region33
  $region32: #{videobert_decoder_forward.76} parent=0 // pred_region
    _
  $region33: #{videobert_decoder_forward.76} parent=0 // pred_fallthru
    _

// kernel: videobert_decoder_forward.77
$region0: #{videobert_decoder_forward.77}
  #allocation0 [shape = 'u32[]', space=smem, size = 0x4, offset = 0x4, fixed_abs, tag = 'smem constant byte address 0x4 - core index']
  #allocation1 [shape = 'u32[144,128]{1,0:T(1,128)}', space=vmem, size = 0x12000, scoped, tag = 'internal scratch']
  #allocation2 [shape = 'f32[3,504]{1,0:T(4,128)}', space=vmem, size = 0x2000, scoped, tag = 'scratch operand']
  %s0 = inlined_call_operand.vmem [shape: bf16[3,32], index: 0, kind: input, shape index: {}]
  %s1 = inlined_call_operand.vmem [shape: bf16[32,504], index: 1, kind: input, shape index: {}]
  %s2 = inlined_call_operand.vmem [shape: f32[3,1], index: 2, kind: input, shape index: {}]
  %s3 = inlined_call_operand.vmem [shape: f32[3,1], index: 3, kind: input, shape index: {}]
  %s4 = inlined_call_operand.vmem [shape: f32[3,504], index: 4, kind: output, shape index: {}]
  %s5 = sld [smem:[#allocation0]]
  $region34: #{videobert_decoder_forward.77} parent=0
    _
  %s7 = ssub.s32 1, %s5
  %s8 = scalar_select 0, %s7, %s5
  // Predicated region
  $region2: #{videobert_decoder_forward.77} parent=0 // pred_check
    _
  $region3: #{videobert_decoder_forward.77} parent=0 // pred_check_branch
    %10 = sbr.rel (0) target = $region5
  $region4: #{videobert_decoder_forward.77} parent=0 // pred_region
    _
  $region5: #{videobert_decoder_forward.77} parent=0 // pred_fallthru
    _
  // Predicated region
  $region6: #{videobert_decoder_forward.77} parent=0 // pred_check
    _
  $region7: #{videobert_decoder_forward.77} parent=0 // pred_check_branch
    %12 = sbr.rel (0) target = $region9
  $region8: #{videobert_decoder_forward.77} parent=0 // pred_region
    _
  $region9: #{videobert_decoder_forward.77} parent=0 // pred_fallthru
    _
  // Predicated region
  $region10: #{videobert_decoder_forward.77} parent=0 // pred_check
    _
  $region11: #{videobert_decoder_forward.77} parent=0 // pred_check_branch
    %14 = sbr.rel (0) target = $region13
  $region12: #{videobert_decoder_forward.77} parent=0 // pred_region
    _
  $region13: #{videobert_decoder_forward.77} parent=0 // pred_fallthru
    _
  // Predicated region
  $region14: #{videobert_decoder_forward.77} parent=0 // pred_check
    _
  $region15: #{videobert_decoder_forward.77} parent=0 // pred_check_branch
    %16 = sbr.rel (0) target = $region17
  $region16: #{videobert_decoder_forward.77} parent=0 // pred_region
    _
  $region17: #{videobert_decoder_forward.77} parent=0 // pred_fallthru
    _
  %p18 = scmp.eq.s32.totalorder 0, 0
  // Predicated region
  $region18: #{videobert_decoder_forward.77} parent=0 // pred_check
    %p19 = pneg %p18
  $region19: #{videobert_decoder_forward.77} parent=0 // pred_check_branch
    %21 = sbr.rel (%p19) target = $region21
  $region20: #{videobert_decoder_forward.77} parent=0 // pred_region
    %22 = vst [vmem:[#allocation2] sm:$0x77] 0.0
    %vm23 = vcmask 1042432
    %vm24 = vcmask 980996
    %vm25 = vmor %vm24, %vm23
    %26 = vst.msk [vmem:[#allocation2 + $0x8] sm:$0x77] %vm25, 0.0
  $region21: #{videobert_decoder_forward.77} parent=0 // pred_fallthru
    _
  %v27 = vld [vmem:[#allocation2] sm:$0x77]
  %v28 = vld [vmem:[#allocation2 + $0x8] sm:$0x77]
  %v29 = vld [vmem:[%s0] sm:$0x3]
  %v30 = vld [vmem:[%s1] sm:$0xff]
  %v31 = vld [vmem:[%s1 + $0x8] sm:$0xff]
  %v32 = vld [vmem:[%s1 + $0x10] sm:$0xff]
  %v33 = vld [vmem:[%s1 + $0x18] sm:$0xff]
  %v34 = vld [vmem:[%s1 + $0x20] sm:$0xff]
  %v35 = vld [vmem:[%s1 + $0x28] sm:$0xff]
  %v36 = vld [vmem:[%s1 + $0x30] sm:$0xff]
  %v37 = vld [vmem:[%s1 + $0x38] sm:$0xff]
  %v46 = vunpack.c.l.b16 %v30
  %v47 = vunpack.c.h.b16 %v30
  %v48 = vunpack.c.l.b16 %v31
  %v49 = vunpack.c.h.b16 %v31
  %v50 = vunpack.c.l.b16 %v32
  %v51 = vunpack.c.h.b16 %v32
  %v52 = vunpack.c.l.b16 %v33
  %v53 = vunpack.c.h.b16 %v33
  %v54 = vunpack.c.l.b16 %v34
  %v55 = vunpack.c.h.b16 %v34
  %v56 = vunpack.c.l.b16 %v35
  %v57 = vunpack.c.h.b16 %v35
  %v58 = vunpack.c.l.b16 %v36
  %v59 = vunpack.c.h.b16 %v36
  %v60 = vunpack.c.l.b16 %v37
  %v61 = vunpack.c.h.b16 %v37
  %v62 = vpack.c.b16 %v50, %v46
  %v63 = vpack.c.b16 %v51, %v47
  %v64 = vpack.c.b16 %v52, %v48
  %v65 = vpack.c.b16 %v53, %v49
  %v66 = vpack.c.b16 %v58, %v54
  %v67 = vpack.c.b16 %v59, %v55
  %v68 = vpack.c.b16 %v60, %v56
  %v69 = vpack.c.b16 %v61, %v57
  %vm78 = vcmask 261120
  %v80 = vsel %vm78, %v29, 0
  %82 = vmatprep.subr.bf16.mxu0 %v63
  %83 = vmatpush1.bf16.msra.mxu0 %v62
  %84 = vmatprep.subr.bf16.mxu0 %v67
  %85 = vmatpush1.bf16.msra.mxu0 %v66
  %86 = vmatprep.subr.bf16.mxu0 0
  %87 = vmatpush1.bf16.msra.mxu0 0
  %88 = vmatprep.subr.bf16.mxu0 0
  %89 = vmatpush1.bf16.msra.mxu0 0
  %90 = vmatprep.subr.bf16.mxu0 0
  %91 = vmatpush1.bf16.msra.mxu0 0
  %92 = vmatprep.subr.bf16.mxu0 0
  %93 = vmatpush1.bf16.msra.mxu0 0
  %94 = vmatprep.subr.bf16.mxu0 0
  %95 = vmatpush1.bf16.msra.mxu0 0
  %96 = vmatprep.subr.bf16.mxu0 0
  %97 = vmatpush1.bf16.msra.mxu0 0
  %98 = vmatprep.subr.bf16.mxu0 0
  %99 = vmatpush1.bf16.msra.mxu0 0
  %100 = vmatprep.subr.bf16.mxu0 0
  %101 = vmatpush1.bf16.msra.mxu0 0
  %102 = vmatprep.subr.bf16.mxu0 0
  %103 = vmatpush1.bf16.msra.mxu0 0
  %104 = vmatprep.subr.bf16.mxu0 0
  %105 = vmatpush1.bf16.msra.mxu0 0
  %106 = vmatprep.subr.bf16.mxu0 0
  %107 = vmatpush1.bf16.msra.mxu0 0
  %108 = vmatprep.subr.bf16.mxu0 0
  %109 = vmatpush1.bf16.msra.mxu0 0
  %110 = vmatprep.subr.bf16.mxu0 0
  %111 = vmatpush1.bf16.msra.mxu0 0
  %112 = vmatprep.subr.bf16.mxu0 0
  %113 = vmatpush1.bf16.msra.mxu0 0
  %114 = vmatprep.mubr.bf16.mxu0 0
  %115 = vmatmul.mubr.bf16.gmra.mrb[0].mxu0 %v80
  %v116 = vpop.f32.mrb[0].mxu0
  %v117 = vadd.f32 0.0, %v116
  %v118 = vpop.f32.mrb[0].mxu0
  %v119 = vadd.f32 0.0, %v118
  %v120 = vpop.f32.mrb[0].mxu0
  %v121 = vpop.f32.mrb[0].mxu0
  %122 = vdwg.mxu0
  %123 = vmatprep.subr.bf16.mxu0 %v65
  %124 = vmatpush1.bf16.msra.mxu0 %v64
  %125 = vmatprep.subr.bf16.mxu0 %v69
  %126 = vmatpush1.bf16.msra.mxu0 %v68
  %127 = vmatprep.subr.bf16.mxu0 0
  %128 = vmatpush1.bf16.msra.mxu0 0
  %129 = vmatprep.subr.bf16.mxu0 0
  %130 = vmatpush1.bf16.msra.mxu0 0
  %131 = vmatprep.subr.bf16.mxu0 0
  %132 = vmatpush1.bf16.msra.mxu0 0
  %133 = vmatprep.subr.bf16.mxu0 0
  %134 = vmatpush1.bf16.msra.mxu0 0
  %135 = vmatprep.subr.bf16.mxu0 0
  %136 = vmatpush1.bf16.msra.mxu0 0
  %137 = vmatprep.subr.bf16.mxu0 0
  %138 = vmatpush1.bf16.msra.mxu0 0
  %139 = vmatprep.subr.bf16.mxu0 0
  %140 = vmatpush1.bf16.msra.mxu0 0
  %141 = vmatprep.subr.bf16.mxu0 0
  %142 = vmatpush1.bf16.msra.mxu0 0
  %143 = vmatprep.subr.bf16.mxu0 0
  %144 = vmatpush1.bf16.msra.mxu0 0
  %145 = vmatprep.subr.bf16.mxu0 0
  %146 = vmatpush1.bf16.msra.mxu0 0
  %147 = vmatprep.subr.bf16.mxu0 0
  %148 = vmatpush1.bf16.msra.mxu0 0
  %149 = vmatprep.subr.bf16.mxu0 0
  %150 = vmatpush1.bf16.msra.mxu0 0
  %151 = vmatprep.subr.bf16.mxu0 0
  %152 = vmatpush1.bf16.msra.mxu0 0
  %153 = vmatprep.subr.bf16.mxu0 0
  %154 = vmatpush1.bf16.msra.mxu0 0
  %155 = vmatprep.mubr.bf16.mxu0 0
  %156 = vmatmul.mubr.bf16.gmra.mrb[0].mxu0 %v80
  %v157 = vpop.f32.mrb[0].mxu0
  %v158 = vadd.f32 0.0, %v157
  %v159 = vpop.f32.mrb[0].mxu0
  %v160 = vadd.f32 0.0, %v159
  %v161 = vpop.f32.mrb[0].mxu0
  %v162 = vpop.f32.mrb[0].mxu0
  %163 = vdwg.mxu0
  %v168 = vcombine.low %v117, %v119
  %v169 = vcombine.low %v158, %v160
  %v172 = vadd.f32 %v27, %v168
  %v173 = vadd.f32 %v28, %v169
  %174 = vst [vmem:[#allocation2] sm:$0x77] %v172
  %vm175 = vcmask 1042432
  %vm176 = vcmask 980996
  %vm177 = vmor %vm176, %vm175
  %178 = vst.msk [vmem:[#allocation2 + $0x8] sm:$0x77] %vm177, %v173
  // Predicated region
  $region22: #{videobert_decoder_forward.77} parent=0 // pred_check
    %p179 = pneg %p18
  $region23: #{videobert_decoder_forward.77} parent=0 // pred_check_branch
    %181 = sbr.rel (%p179) target = $region25
  $region24: #{videobert_decoder_forward.77} parent=0 // pred_region
    %v182 = vld [vmem:[#allocation2] sm:$0x77]
    %v183 = vld [vmem:[#allocation2 + $0x8] sm:$0x77]
    %v184 = vld [vmem:[%s2] sm:$0x7]
    %186 = vset.pattern.permute.xlu0 0
    %187 = vperm.xlu0 %186, %v184
    %v188 = vpop.permute.xlu0 %187
    %v190 = vunpack.c.l.s4 839922192
    %v191 = vunpack.c.0.s8 %v190
    %v192 = vlaneseq
    %v193 = vshrl.u32 %v192, 7
    %v194 = vsub.s32 %v191, %v193
    %v195 = vrot.slane %v188, %v194
    %v197 = vmul.f32 %v182, %v195
    %v198 = vmul.f32 %v183, %v195
    %v199 = vld [vmem:[%s3] sm:$0x7]
    %201 = vset.pattern.permute.xlu0 0
    %202 = vperm.xlu0 %201, %v199
    %v203 = vpop.permute.xlu0 %202
    %v205 = vunpack.c.l.s4 839922192
    %v206 = vunpack.c.0.s8 %v205
    %v207 = vlaneseq
    %v208 = vshrl.u32 %v207, 7
    %v209 = vsub.s32 %v206, %v208
    %v210 = vrot.slane %v203, %v209
    %v212 = vadd.f32 %v197, %v210
    %v213 = vadd.f32 %v198, %v210
    %v214 = vxor.u32 %v212, 2147483648
    %v215 = vxor.u32 %v213, 2147483648
    %v216 = vmul.f32 %v214, 1.442695
    %v217 = vpow.pop %v216
    %v218 = vmul.f32 %v215, 1.442695
    %v219 = vpow.pop %v218
    %v220 = vadd.f32 %v217, 1.0
    %v221 = vadd.f32 %v219, 1.0
    %v222 = vrcp.pop %v220
    %v223 = vmul.f32 1.0, %v222
    %v224 = vrcp.pop %v221
    %v225 = vmul.f32 1.0, %v224
    %226 = vst [vmem:[%s4] sm:$0x77] %v223
    %227 = vst.msk [vmem:[%s4 + $0x8] sm:$0x77] %vm177, %v225
  $region25: #{videobert_decoder_forward.77} parent=0 // pred_fallthru
    _
  // Predicated region
  $region26: #{videobert_decoder_forward.77} parent=0 // pred_check
    _
  $region27: #{videobert_decoder_forward.77} parent=0 // pred_check_branch
    %229 = sbr.rel (0) target = $region29
  $region28: #{videobert_decoder_forward.77} parent=0 // pred_region
    _
  $region29: #{videobert_decoder_forward.77} parent=0 // pred_fallthru
    _
  // Predicated region
  $region30: #{videobert_decoder_forward.77} parent=0 // pred_check
    _
  $region31: #{videobert_decoder_forward.77} parent=0 // pred_check_branch
    %231 = sbr.rel (0) target = $region33
  $region32: #{videobert_decoder_forward.77} parent=0 // pred_region
    _
  $region33: #{videobert_decoder_forward.77} parent=0 // pred_fallthru
    _

// kernel: videobert_decoder_forward.79
$region0: #{videobert_decoder_forward.79}
  #allocation0 [shape = 'u32[]', space=smem, size = 0x4, offset = 0x4, fixed_abs, tag = 'smem constant byte address 0x4 - core index']
  #allocation1 [shape = 'u32[144,128]{1,0:T(1,128)}', space=vmem, size = 0x12000, scoped, tag = 'internal scratch']
  #allocation2 [shape = 'f32[3,588]{1,0:T(4,128)}', space=vmem, size = 0x2800, scoped, tag = 'scratch operand']
  %s0 = inlined_call_operand.vmem [shape: bf16[3,16], index: 0, kind: input, shape index: {}]
  %s1 = inlined_call_operand.vmem [shape: bf16[16,588], index: 1, kind: input, shape index: {}]
  %s2 = inlined_call_operand.vmem [shape: f32[3,1], index: 2, kind: input, shape index: {}]
  %s3 = inlined_call_operand.vmem [shape: f32[3,1], index: 3, kind: input, shape index: {}]
  %s4 = inlined_call_operand.vmem [shape: f32[3,588], index: 4, kind: output, shape index: {}]
  %s5 = sld [smem:[#allocation0]]
  $region34: #{videobert_decoder_forward.79} parent=0
    _
  %s7 = ssub.s32 1, %s5
  %s8 = scalar_select 0, %s7, %s5
  // Predicated region
  $region2: #{videobert_decoder_forward.79} parent=0 // pred_check
    _
  $region3: #{videobert_decoder_forward.79} parent=0 // pred_check_branch
    %10 = sbr.rel (0) target = $region5
  $region4: #{videobert_decoder_forward.79} parent=0 // pred_region
    _
  $region5: #{videobert_decoder_forward.79} parent=0 // pred_fallthru
    _
  // Predicated region
  $region6: #{videobert_decoder_forward.79} parent=0 // pred_check
    _
  $region7: #{videobert_decoder_forward.79} parent=0 // pred_check_branch
    %12 = sbr.rel (0) target = $region9
  $region8: #{videobert_decoder_forward.79} parent=0 // pred_region
    _
  $region9: #{videobert_decoder_forward.79} parent=0 // pred_fallthru
    _
  // Predicated region
  $region10: #{videobert_decoder_forward.79} parent=0 // pred_check
    _
  $region11: #{videobert_decoder_forward.79} parent=0 // pred_check_branch
    %14 = sbr.rel (0) target = $region13
  $region12: #{videobert_decoder_forward.79} parent=0 // pred_region
    _
  $region13: #{videobert_decoder_forward.79} parent=0 // pred_fallthru
    _
  // Predicated region
  $region14: #{videobert_decoder_forward.79} parent=0 // pred_check
    _
  $region15: #{videobert_decoder_forward.79} parent=0 // pred_check_branch
    %16 = sbr.rel (0) target = $region17
  $region16: #{videobert_decoder_forward.79} parent=0 // pred_region
    _
  $region17: #{videobert_decoder_forward.79} parent=0 // pred_fallthru
    _
  %p18 = scmp.eq.s32.totalorder 0, 0
  // Predicated region
  $region18: #{videobert_decoder_forward.79} parent=0 // pred_check
    %p19 = pneg %p18
  $region19: #{videobert_decoder_forward.79} parent=0 // pred_check_branch
    %21 = sbr.rel (%p19) target = $region21
  $region20: #{videobert_decoder_forward.79} parent=0 // pred_region
    %22 = vst [vmem:[#allocation2] sm:$0x77] 0.0
    %23 = vst [vmem:[#allocation2 + $0x8] sm:$0x77] 0.0
    %vm24 = vcmask 616448
    %25 = vst.msk [vmem:[#allocation2 + $0x10] sm:$0x7] %vm24, 0.0
  $region21: #{videobert_decoder_forward.79} parent=0 // pred_fallthru
    _
  %v26 = vld [vmem:[#allocation2] sm:$0x77]
  %v27 = vld [vmem:[#allocation2 + $0x8] sm:$0x77]
  %v28 = vld [vmem:[#allocation2 + $0x10] sm:$0x7]
  %v29 = vld [vmem:[%s0] sm:$0x3]
  %v30 = vld [vmem:[%s1] sm:$0xff]
  %v31 = vld [vmem:[%s1 + $0x8] sm:$0xff]
  %v32 = vld [vmem:[%s1 + $0x10] sm:$0xf]
  %v33 = vld [vmem:[%s1 + $0x14] sm:$0xff]
  %v34 = vld [vmem:[%s1 + $0x1c] sm:$0xff]
  %v35 = vld [vmem:[%s1 + $0x24] sm:$0xf]
  %v42 = vunpack.c.l.b16 %v30
  %v43 = vunpack.c.h.b16 %v30
  %v44 = vunpack.c.l.b16 %v31
  %v45 = vunpack.c.h.b16 %v31
  %v46 = vunpack.c.l.b16 %v32
  %v47 = vunpack.c.l.b16 %v33
  %v48 = vunpack.c.h.b16 %v33
  %v49 = vunpack.c.l.b16 %v34
  %v50 = vunpack.c.h.b16 %v34
  %v51 = vunpack.c.l.b16 %v35
  %v52 = vpack.c.b16 %v47, %v42
  %v53 = vpack.c.b16 %v48, %v43
  %v54 = vpack.c.b16 %v49, %v44
  %v55 = vpack.c.b16 %v50, %v45
  %v56 = vpack.c.b16 %v51, %v46
  %vm62 = vcmask 130048
  %v64 = vsel %vm62, %v29, 0
  %66 = vmatprep.subr.bf16.mxu0 %v53
  %67 = vmatpush1.bf16.msra.mxu0 %v52
  %68 = vmatprep.subr.bf16.mxu0 0
  %69 = vmatpush1.bf16.msra.mxu0 0
  %70 = vmatprep.subr.bf16.mxu0 0
  %71 = vmatpush1.bf16.msra.mxu0 0
  %72 = vmatprep.subr.bf16.mxu0 0
  %73 = vmatpush1.bf16.msra.mxu0 0
  %74 = vmatprep.subr.bf16.mxu0 0
  %75 = vmatpush1.bf16.msra.mxu0 0
  %76 = vmatprep.subr.bf16.mxu0 0
  %77 = vmatpush1.bf16.msra.mxu0 0
  %78 = vmatprep.subr.bf16.mxu0 0
  %79 = vmatpush1.bf16.msra.mxu0 0
  %80 = vmatprep.subr.bf16.mxu0 0
  %81 = vmatpush1.bf16.msra.mxu0 0
  %82 = vmatprep.subr.bf16.mxu0 0
  %83 = vmatpush1.bf16.msra.mxu0 0
  %84 = vmatprep.subr.bf16.mxu0 0
  %85 = vmatpush1.bf16.msra.mxu0 0
  %86 = vmatprep.subr.bf16.mxu0 0
  %87 = vmatpush1.bf16.msra.mxu0 0
  %88 = vmatprep.subr.bf16.mxu0 0
  %89 = vmatpush1.bf16.msra.mxu0 0
  %90 = vmatprep.subr.bf16.mxu0 0
  %91 = vmatpush1.bf16.msra.mxu0 0
  %92 = vmatprep.subr.bf16.mxu0 0
  %93 = vmatpush1.bf16.msra.mxu0 0
  %94 = vmatprep.subr.bf16.mxu0 0
  %95 = vmatpush1.bf16.msra.mxu0 0
  %96 = vmatprep.subr.bf16.mxu0 0
  %97 = vmatpush1.bf16.msra.mxu0 0
  %98 = vmatprep.mubr.bf16.mxu0 0
  %99 = vmatmul.mubr.bf16.gmra.mrb[0].mxu0 %v64
  %v100 = vpop.f32.mrb[0].mxu0
  %v101 = vadd.f32 0.0, %v100
  %v102 = vpop.f32.mrb[0].mxu0
  %v103 = vadd.f32 0.0, %v102
  %v104 = vpop.f32.mrb[0].mxu0
  %v105 = vpop.f32.mrb[0].mxu0
  %106 = vdwg.mxu0
  %107 = vmatprep.subr.bf16.mxu0 %v55
  %108 = vmatpush1.bf16.msra.mxu0 %v54
  %109 = vmatprep.subr.bf16.mxu0 0
  %110 = vmatpush1.bf16.msra.mxu0 0
  %111 = vmatprep.subr.bf16.mxu0 0
  %112 = vmatpush1.bf16.msra.mxu0 0
  %113 = vmatprep.subr.bf16.mxu0 0
  %114 = vmatpush1.bf16.msra.mxu0 0
  %115 = vmatprep.subr.bf16.mxu0 0
  %116 = vmatpush1.bf16.msra.mxu0 0
  %117 = vmatprep.subr.bf16.mxu0 0
  %118 = vmatpush1.bf16.msra.mxu0 0
  %119 = vmatprep.subr.bf16.mxu0 0
  %120 = vmatpush1.bf16.msra.mxu0 0
  %121 = vmatprep.subr.bf16.mxu0 0
  %122 = vmatpush1.bf16.msra.mxu0 0
  %123 = vmatprep.subr.bf16.mxu0 0
  %124 = vmatpush1.bf16.msra.mxu0 0
  %125 = vmatprep.subr.bf16.mxu0 0
  %126 = vmatpush1.bf16.msra.mxu0 0
  %127 = vmatprep.subr.bf16.mxu0 0
  %128 = vmatpush1.bf16.msra.mxu0 0
  %129 = vmatprep.subr.bf16.mxu0 0
  %130 = vmatpush1.bf16.msra.mxu0 0
  %131 = vmatprep.subr.bf16.mxu0 0
  %132 = vmatpush1.bf16.msra.mxu0 0
  %133 = vmatprep.subr.bf16.mxu0 0
  %134 = vmatpush1.bf16.msra.mxu0 0
  %135 = vmatprep.subr.bf16.mxu0 0
  %136 = vmatpush1.bf16.msra.mxu0 0
  %137 = vmatprep.subr.bf16.mxu0 0
  %138 = vmatpush1.bf16.msra.mxu0 0
  %139 = vmatprep.mubr.bf16.mxu0 0
  %140 = vmatmul.mubr.bf16.gmra.mrb[0].mxu0 %v64
  %v141 = vpop.f32.mrb[0].mxu0
  %v142 = vadd.f32 0.0, %v141
  %v143 = vpop.f32.mrb[0].mxu0
  %v144 = vadd.f32 0.0, %v143
  %v145 = vpop.f32.mrb[0].mxu0
  %v146 = vpop.f32.mrb[0].mxu0
  %147 = vdwg.mxu0
  %148 = vmatprep.subr.bf16.mxu0 0
  %149 = vmatpush1.bf16.msra.mxu0 %v56
  %150 = vmatprep.subr.bf16.mxu0 0
  %151 = vmatpush1.bf16.msra.mxu0 0
  %152 = vmatprep.subr.bf16.mxu0 0
  %153 = vmatpush1.bf16.msra.mxu0 0
  %154 = vmatprep.subr.bf16.mxu0 0
  %155 = vmatpush1.bf16.msra.mxu0 0
  %156 = vmatprep.subr.bf16.mxu0 0
  %157 = vmatpush1.bf16.msra.mxu0 0
  %158 = vmatprep.subr.bf16.mxu0 0
  %159 = vmatpush1.bf16.msra.mxu0 0
  %160 = vmatprep.subr.bf16.mxu0 0
  %161 = vmatpush1.bf16.msra.mxu0 0
  %162 = vmatprep.subr.bf16.mxu0 0
  %163 = vmatpush1.bf16.msra.mxu0 0
  %164 = vmatprep.subr.bf16.mxu0 0
  %165 = vmatpush1.bf16.msra.mxu0 0
  %166 = vmatprep.subr.bf16.mxu0 0
  %167 = vmatpush1.bf16.msra.mxu0 0
  %168 = vmatprep.subr.bf16.mxu0 0
  %169 = vmatpush1.bf16.msra.mxu0 0
  %170 = vmatprep.subr.bf16.mxu0 0
  %171 = vmatpush1.bf16.msra.mxu0 0
  %172 = vmatprep.subr.bf16.mxu0 0
  %173 = vmatpush1.bf16.msra.mxu0 0
  %174 = vmatprep.subr.bf16.mxu0 0
  %175 = vmatpush1.bf16.msra.mxu0 0
  %176 = vmatprep.subr.bf16.mxu0 0
  %177 = vmatpush1.bf16.msra.mxu0 0
  %178 = vmatprep.subr.bf16.mxu0 0
  %179 = vmatpush1.bf16.msra.mxu0 0
  %180 = vmatprep.mubr.bf16.mxu0 0
  %181 = vmatmul.mubr.bf16.gmra.mrb[0].mxu0 %v64
  %v182 = vpop.f32.mrb[0].mxu0
  %v183 = vadd.f32 0.0, %v182
  %v184 = vpop.f32.mrb[0].mxu0
  %v185 = vpop.f32.mrb[0].mxu0
  %v186 = vpop.f32.mrb[0].mxu0
  %187 = vdwg.mxu0
  %v192 = vcombine.low %v101, %v103
  %v193 = vcombine.low %v142, %v144
  %v196 = vadd.f32 %v26, %v192
  %v197 = vadd.f32 %v27, %v193
  %v198 = vadd.f32 %v28, %v183
  %199 = vst [vmem:[#allocation2] sm:$0x77] %v196
  %200 = vst [vmem:[#allocation2 + $0x8] sm:$0x77] %v197
  %vm201 = vcmask 616448
  %202 = vst.msk [vmem:[#allocation2 + $0x10] sm:$0x7] %vm201, %v198
  // Predicated region
  $region22: #{videobert_decoder_forward.79} parent=0 // pred_check
    %p203 = pneg %p18
  $region23: #{videobert_decoder_forward.79} parent=0 // pred_check_branch
    %205 = sbr.rel (%p203) target = $region25
  $region24: #{videobert_decoder_forward.79} parent=0 // pred_region
    %v206 = vld [vmem:[#allocation2] sm:$0x77]
    %v207 = vld [vmem:[#allocation2 + $0x8] sm:$0x77]
    %v208 = vld [vmem:[#allocation2 + $0x10] sm:$0x7]
    %v209 = vld [vmem:[%s2] sm:$0x7]
    %211 = vset.pattern.permute.xlu0 0
    %212 = vperm.xlu0 %211, %v209
    %v213 = vpop.permute.xlu0 %212
    %v215 = vunpack.c.l.s4 839922192
    %v216 = vunpack.c.0.s8 %v215
    %v217 = vlaneseq
    %v218 = vshrl.u32 %v217, 7
    %v219 = vsub.s32 %v216, %v218
    %v220 = vrot.slane %v213, %v219
    %v222 = vmul.f32 %v206, %v220
    %v223 = vmul.f32 %v207, %v220
    %v224 = vmul.f32 %v208, %v220
    %v225 = vld [vmem:[%s3] sm:$0x7]
    %227 = vset.pattern.permute.xlu0 0
    %228 = vperm.xlu0 %227, %v225
    %v229 = vpop.permute.xlu0 %228
    %v231 = vunpack.c.l.s4 839922192
    %v232 = vunpack.c.0.s8 %v231
    %v233 = vlaneseq
    %v234 = vshrl.u32 %v233, 7
    %v235 = vsub.s32 %v232, %v234
    %v236 = vrot.slane %v229, %v235
    %v238 = vadd.f32 %v222, %v236
    %v239 = vadd.f32 %v223, %v236
    %v240 = vadd.f32 %v224, %v236
    %v241 = vxor.u32 %v238, 2147483648
    %v242 = vxor.u32 %v239, 2147483648
    %v243 = vxor.u32 %v240, 2147483648
    %v244 = vmul.f32 %v241, 1.442695
    %v245 = vpow.pop %v244
    %v246 = vmul.f32 %v242, 1.442695
    %v247 = vpow.pop %v246
    %v248 = vmul.f32 %v243, 1.442695
    %v249 = vpow.pop %v248
    %v250 = vadd.f32 %v245, 1.0
    %v251 = vadd.f32 %v247, 1.0
    %v252 = vadd.f32 %v249, 1.0
    %v253 = vrcp.pop %v250
    %v254 = vmul.f32 1.0, %v253
    %v255 = vrcp.pop %v251
    %v256 = vmul.f32 1.0, %v255
    %v257 = vrcp.pop %v252
    %v258 = vmul.f32 1.0, %v257
    %259 = vst [vmem:[%s4] sm:$0x77] %v254
    %260 = vst [vmem:[%s4 + $0x8] sm:$0x77] %v256
    %261 = vst.msk [vmem:[%s4 + $0x10] sm:$0x7] %vm201, %v258
  $region25: #{videobert_decoder_forward.79} parent=0 // pred_fallthru
    _
  // Predicated region
  $region26: #{videobert_decoder_forward.79} parent=0 // pred_check
    _
  $region27: #{videobert_decoder_forward.79} parent=0 // pred_check_branch
    %263 = sbr.rel (0) target = $region29
  $region28: #{videobert_decoder_forward.79} parent=0 // pred_region
    _
  $region29: #{videobert_decoder_forward.79} parent=0 // pred_fallthru
    _
  // Predicated region
  $region30: #{videobert_decoder_forward.79} parent=0 // pred_check
    _
  $region31: #{videobert_decoder_forward.79} parent=0 // pred_check_branch
    %265 = sbr.rel (0) target = $region33
  $region32: #{videobert_decoder_forward.79} parent=0 // pred_region
    _
  $region33: #{videobert_decoder_forward.79} parent=0 // pred_fallthru
    _

// kernel: videobert_decoder_forward.83
$region0: #{videobert_decoder_forward.83}
  #allocation0 [shape = 'u32[]', space=smem, size = 0x4, offset = 0x4, fixed_abs, tag = 'smem constant byte address 0x4 - core index']
  #allocation1 [shape = 'u32[144,128]{1,0:T(1,128)}', space=vmem, size = 0x12000, scoped, tag = 'internal scratch']
  #allocation2 [shape = 'f32[3,686]{1,0:T(4,128)}', space=vmem, size = 0x3000, scoped, tag = 'scratch operand']
  %s0 = inlined_call_operand.vmem [shape: bf16[3,8], index: 0, kind: input, shape index: {}]
  %s1 = inlined_call_operand.vmem [shape: bf16[8,686], index: 1, kind: input, shape index: {}]
  %s2 = inlined_call_operand.vmem [shape: f32[3,1], index: 2, kind: input, shape index: {}]
  %s3 = inlined_call_operand.vmem [shape: f32[3,1], index: 3, kind: input, shape index: {}]
  %s4 = inlined_call_operand.vmem [shape: f32[3,686], index: 4, kind: output, shape index: {}]
  %s5 = sld [smem:[#allocation0]]
  $region34: #{videobert_decoder_forward.83} parent=0
    _
  %s7 = ssub.s32 1, %s5
  %s8 = scalar_select 0, %s7, %s5
  // Predicated region
  $region2: #{videobert_decoder_forward.83} parent=0 // pred_check
    _
  $region3: #{videobert_decoder_forward.83} parent=0 // pred_check_branch
    %10 = sbr.rel (0) target = $region5
  $region4: #{videobert_decoder_forward.83} parent=0 // pred_region
    _
  $region5: #{videobert_decoder_forward.83} parent=0 // pred_fallthru
    _
  // Predicated region
  $region6: #{videobert_decoder_forward.83} parent=0 // pred_check
    _
  $region7: #{videobert_decoder_forward.83} parent=0 // pred_check_branch
    %12 = sbr.rel (0) target = $region9
  $region8: #{videobert_decoder_forward.83} parent=0 // pred_region
    _
  $region9: #{videobert_decoder_forward.83} parent=0 // pred_fallthru
    _
  // Predicated region
  $region10: #{videobert_decoder_forward.83} parent=0 // pred_check
    _
  $region11: #{videobert_decoder_forward.83} parent=0 // pred_check_branch
    %14 = sbr.rel (0) target = $region13
  $region12: #{videobert_decoder_forward.83} parent=0 // pred_region
    _
  $region13: #{videobert_decoder_forward.83} parent=0 // pred_fallthru
    _
  // Predicated region
  $region14: #{videobert_decoder_forward.83} parent=0 // pred_check
    _
  $region15: #{videobert_decoder_forward.83} parent=0 // pred_check_branch
    %16 = sbr.rel (0) target = $region17
  $region16: #{videobert_decoder_forward.83} parent=0 // pred_region
    _
  $region17: #{videobert_decoder_forward.83} parent=0 // pred_fallthru
    _
  %p18 = scmp.eq.s32.totalorder 0, 0
  // Predicated region
  $region18: #{videobert_decoder_forward.83} parent=0 // pred_check
    %p19 = pneg %p18
  $region19: #{videobert_decoder_forward.83} parent=0 // pred_check_branch
    %21 = sbr.rel (%p19) target = $region21
  $region20: #{videobert_decoder_forward.83} parent=0 // pred_region
    %22 = vst [vmem:[#allocation2] sm:$0x77] 0.0
    %23 = vst [vmem:[#allocation2 + $0x8] sm:$0x77] 0.0
    %vm24 = vcmask 1042432
    %vm25 = vcmask 374788
    %vm26 = vmor %vm25, %vm24
    %27 = vst.msk [vmem:[#allocation2 + $0x10] sm:$0x77] %vm26, 0.0
  $region21: #{videobert_decoder_forward.83} parent=0 // pred_fallthru
    _
  %v28 = vld [vmem:[#allocation2] sm:$0x77]
  %v29 = vld [vmem:[#allocation2 + $0x8] sm:$0x77]
  %v30 = vld [vmem:[#allocation2 + $0x10] sm:$0x77]
  %v31 = vld [vmem:[%s0] sm:$0x3]
  %v32 = vld [vmem:[%s1] sm:$0xff]
  %v33 = vld [vmem:[%s1 + $0x8] sm:$0xff]
  %v34 = vld [vmem:[%s1 + $0x10] sm:$0xff]
  %v38 = vunpack.c.l.b16 %v32
  %v39 = vunpack.c.h.b16 %v32
  %v40 = vunpack.c.l.b16 %v33
  %v41 = vunpack.c.h.b16 %v33
  %v42 = vunpack.c.l.b16 %v34
  %v43 = vunpack.c.h.b16 %v34
  %v44 = vpack.c.b16 %v38, %v38
  %v45 = vpack.c.b16 %v39, %v39
  %v46 = vpack.c.b16 %v40, %v40
  %v47 = vpack.c.b16 %v41, %v41
  %v48 = vpack.c.b16 %v42, %v42
  %v49 = vpack.c.b16 %v43, %v43
  %vm50 = vcmask 64512
  %v52 = vsel %vm50, %v31, 0
  %vm54 = vcmask 1043456
  %v56 = vsel %vm54, %v44, 0
  %v59 = vsel %vm54, %v45, 0
  %v62 = vsel %vm54, %v46, 0
  %v65 = vsel %vm54, %v47, 0
  %v68 = vsel %vm54, %v48, 0
  %v71 = vsel %vm54, %v49, 0
  %73 = vmatprep.subr.bf16.mxu0 %v59
  %74 = vmatpush1.bf16.msra.mxu0 %v56
  %75 = vmatprep.subr.bf16.mxu0 0
  %76 = vmatpush1.bf16.msra.mxu0 0
  %77 = vmatprep.subr.bf16.mxu0 0
  %78 = vmatpush1.bf16.msra.mxu0 0
  %79 = vmatprep.subr.bf16.mxu0 0
  %80 = vmatpush1.bf16.msra.mxu0 0
  %81 = vmatprep.subr.bf16.mxu0 0
  %82 = vmatpush1.bf16.msra.mxu0 0
  %83 = vmatprep.subr.bf16.mxu0 0
  %84 = vmatpush1.bf16.msra.mxu0 0
  %85 = vmatprep.subr.bf16.mxu0 0
  %86 = vmatpush1.bf16.msra.mxu0 0
  %87 = vmatprep.subr.bf16.mxu0 0
  %88 = vmatpush1.bf16.msra.mxu0 0
  %89 = vmatprep.subr.bf16.mxu0 0
  %90 = vmatpush1.bf16.msra.mxu0 0
  %91 = vmatprep.subr.bf16.mxu0 0
  %92 = vmatpush1.bf16.msra.mxu0 0
  %93 = vmatprep.subr.bf16.mxu0 0
  %94 = vmatpush1.bf16.msra.mxu0 0
  %95 = vmatprep.subr.bf16.mxu0 0
  %96 = vmatpush1.bf16.msra.mxu0 0
  %97 = vmatprep.subr.bf16.mxu0 0
  %98 = vmatpush1.bf16.msra.mxu0 0
  %99 = vmatprep.subr.bf16.mxu0 0
  %100 = vmatpush1.bf16.msra.mxu0 0
  %101 = vmatprep.subr.bf16.mxu0 0
  %102 = vmatpush1.bf16.msra.mxu0 0
  %103 = vmatprep.subr.bf16.mxu0 0
  %104 = vmatpush1.bf16.msra.mxu0 0
  %105 = vmatprep.mubr.bf16.mxu0 0
  %106 = vmatmul.mubr.bf16.gmra.mrb[0].mxu0 %v52
  %v107 = vpop.f32.mrb[0].mxu0
  %v108 = vadd.f32 0.0, %v107
  %v109 = vpop.f32.mrb[0].mxu0
  %v110 = vadd.f32 0.0, %v109
  %v111 = vpop.f32.mrb[0].mxu0
  %v112 = vpop.f32.mrb[0].mxu0
  %113 = vdwg.mxu0
  %114 = vmatprep.subr.bf16.mxu0 %v65
  %115 = vmatpush1.bf16.msra.mxu0 %v62
  %116 = vmatprep.subr.bf16.mxu0 0
  %117 = vmatpush1.bf16.msra.mxu0 0
  %118 = vmatprep.subr.bf16.mxu0 0
  %119 = vmatpush1.bf16.msra.mxu0 0
  %120 = vmatprep.subr.bf16.mxu0 0
  %121 = vmatpush1.bf16.msra.mxu0 0
  %122 = vmatprep.subr.bf16.mxu0 0
  %123 = vmatpush1.bf16.msra.mxu0 0
  %124 = vmatprep.subr.bf16.mxu0 0
  %125 = vmatpush1.bf16.msra.mxu0 0
  %126 = vmatprep.subr.bf16.mxu0 0
  %127 = vmatpush1.bf16.msra.mxu0 0
  %128 = vmatprep.subr.bf16.mxu0 0
  %129 = vmatpush1.bf16.msra.mxu0 0
  %130 = vmatprep.subr.bf16.mxu0 0
  %131 = vmatpush1.bf16.msra.mxu0 0
  %132 = vmatprep.subr.bf16.mxu0 0
  %133 = vmatpush1.bf16.msra.mxu0 0
  %134 = vmatprep.subr.bf16.mxu0 0
  %135 = vmatpush1.bf16.msra.mxu0 0
  %136 = vmatprep.subr.bf16.mxu0 0
  %137 = vmatpush1.bf16.msra.mxu0 0
  %138 = vmatprep.subr.bf16.mxu0 0
  %139 = vmatpush1.bf16.msra.mxu0 0
  %140 = vmatprep.subr.bf16.mxu0 0
  %141 = vmatpush1.bf16.msra.mxu0 0
  %142 = vmatprep.subr.bf16.mxu0 0
  %143 = vmatpush1.bf16.msra.mxu0 0
  %144 = vmatprep.subr.bf16.mxu0 0
  %145 = vmatpush1.bf16.msra.mxu0 0
  %146 = vmatprep.mubr.bf16.mxu0 0
  %147 = vmatmul.mubr.bf16.gmra.mrb[0].mxu0 %v52
  %v148 = vpop.f32.mrb[0].mxu0
  %v149 = vadd.f32 0.0, %v148
  %v150 = vpop.f32.mrb[0].mxu0
  %v151 = vadd.f32 0.0, %v150
  %v152 = vpop.f32.mrb[0].mxu0
  %v153 = vpop.f32.mrb[0].mxu0
  %154 = vdwg.mxu0
  %155 = vmatprep.subr.bf16.mxu0 %v71
  %156 = vmatpush1.bf16.msra.mxu0 %v68
  %157 = vmatprep.subr.bf16.mxu0 0
  %158 = vmatpush1.bf16.msra.mxu0 0
  %159 = vmatprep.subr.bf16.mxu0 0
  %160 = vmatpush1.bf16.msra.mxu0 0
  %161 = vmatprep.subr.bf16.mxu0 0
  %162 = vmatpush1.bf16.msra.mxu0 0
  %163 = vmatprep.subr.bf16.mxu0 0
  %164 = vmatpush1.bf16.msra.mxu0 0
  %165 = vmatprep.subr.bf16.mxu0 0
  %166 = vmatpush1.bf16.msra.mxu0 0
  %167 = vmatprep.subr.bf16.mxu0 0
  %168 = vmatpush1.bf16.msra.mxu0 0
  %169 = vmatprep.subr.bf16.mxu0 0
  %170 = vmatpush1.bf16.msra.mxu0 0
  %171 = vmatprep.subr.bf16.mxu0 0
  %172 = vmatpush1.bf16.msra.mxu0 0
  %173 = vmatprep.subr.bf16.mxu0 0
  %174 = vmatpush1.bf16.msra.mxu0 0
  %175 = vmatprep.subr.bf16.mxu0 0
  %176 = vmatpush1.bf16.msra.mxu0 0
  %177 = vmatprep.subr.bf16.mxu0 0
  %178 = vmatpush1.bf16.msra.mxu0 0
  %179 = vmatprep.subr.bf16.mxu0 0
  %180 = vmatpush1.bf16.msra.mxu0 0
  %181 = vmatprep.subr.bf16.mxu0 0
  %182 = vmatpush1.bf16.msra.mxu0 0
  %183 = vmatprep.subr.bf16.mxu0 0
  %184 = vmatpush1.bf16.msra.mxu0 0
  %185 = vmatprep.subr.bf16.mxu0 0
  %186 = vmatpush1.bf16.msra.mxu0 0
  %187 = vmatprep.mubr.bf16.mxu0 0
  %188 = vmatmul.mubr.bf16.gmra.mrb[0].mxu0 %v52
  %v189 = vpop.f32.mrb[0].mxu0
  %v190 = vadd.f32 0.0, %v189
  %v191 = vpop.f32.mrb[0].mxu0
  %v192 = vadd.f32 0.0, %v191
  %v193 = vpop.f32.mrb[0].mxu0
  %v194 = vpop.f32.mrb[0].mxu0
  %195 = vdwg.mxu0
  %v202 = vcombine.low %v108, %v110
  %v203 = vcombine.low %v149, %v151
  %v204 = vcombine.low %v190, %v192
  %v208 = vadd.f32 %v28, %v202
  %v209 = vadd.f32 %v29, %v203
  %v210 = vadd.f32 %v30, %v204
  %211 = vst [vmem:[#allocation2] sm:$0x77] %v208
  %212 = vst [vmem:[#allocation2 + $0x8] sm:$0x77] %v209
  %vm213 = vcmask 1042432
  %vm214 = vcmask 374788
  %vm215 = vmor %vm214, %vm213
  %216 = vst.msk [vmem:[#allocation2 + $0x10] sm:$0x77] %vm215, %v210
  // Predicated region
  $region22: #{videobert_decoder_forward.83} parent=0 // pred_check
    %p217 = pneg %p18
  $region23: #{videobert_decoder_forward.83} parent=0 // pred_check_branch
    %219 = sbr.rel (%p217) target = $region25
  $region24: #{videobert_decoder_forward.83} parent=0 // pred_region
    %v220 = vld [vmem:[#allocation2] sm:$0x77]
    %v221 = vld [vmem:[#allocation2 + $0x8] sm:$0x77]
    %v222 = vld [vmem:[#allocation2 + $0x10] sm:$0x77]
    %v223 = vld [vmem:[%s2] sm:$0x7]
    %225 = vset.pattern.permute.xlu0 0
    %226 = vperm.xlu0 %225, %v223
    %v227 = vpop.permute.xlu0 %226
    %v229 = vunpack.c.l.s4 839922192
    %v230 = vunpack.c.0.s8 %v229
    %v231 = vlaneseq
    %v232 = vshrl.u32 %v231, 7
    %v233 = vsub.s32 %v230, %v232
    %v234 = vrot.slane %v227, %v233
    %v236 = vmul.f32 %v220, %v234
    %v237 = vmul.f32 %v221, %v234
    %v238 = vmul.f32 %v222, %v234
    %v239 = vld [vmem:[%s3] sm:$0x7]
    %241 = vset.pattern.permute.xlu0 0
    %242 = vperm.xlu0 %241, %v239
    %v243 = vpop.permute.xlu0 %242
    %v245 = vunpack.c.l.s4 839922192
    %v246 = vunpack.c.0.s8 %v245
    %v247 = vlaneseq
    %v248 = vshrl.u32 %v247, 7
    %v249 = vsub.s32 %v246, %v248
    %v250 = vrot.slane %v243, %v249
    %v252 = vadd.f32 %v236, %v250
    %v253 = vadd.f32 %v237, %v250
    %v254 = vadd.f32 %v238, %v250
    %v255 = vxor.u32 %v252, 2147483648
    %v256 = vxor.u32 %v253, 2147483648
    %v257 = vxor.u32 %v254, 2147483648
    %v258 = vmul.f32 %v255, 1.442695
    %v259 = vpow.pop %v258
    %v260 = vmul.f32 %v256, 1.442695
    %v261 = vpow.pop %v260
    %v262 = vmul.f32 %v257, 1.442695
    %v263 = vpow.pop %v262
    %v264 = vadd.f32 %v259, 1.0
    %v265 = vadd.f32 %v261, 1.0
    %v266 = vadd.f32 %v263, 1.0
    %v267 = vrcp.pop %v264
    %v268 = vmul.f32 1.0, %v267
    %v269 = vrcp.pop %v265
    %v270 = vmul.f32 1.0, %v269
    %v271 = vrcp.pop %v266
    %v272 = vmul.f32 1.0, %v271
    %273 = vst [vmem:[%s4] sm:$0x77] %v268
    %274 = vst [vmem:[%s4 + $0x8] sm:$0x77] %v270
    %275 = vst.msk [vmem:[%s4 + $0x10] sm:$0x77] %vm215, %v272
  $region25: #{videobert_decoder_forward.83} parent=0 // pred_fallthru
    _
  // Predicated region
  $region26: #{videobert_decoder_forward.83} parent=0 // pred_check
    _
  $region27: #{videobert_decoder_forward.83} parent=0 // pred_check_branch
    %277 = sbr.rel (0) target = $region29
  $region28: #{videobert_decoder_forward.83} parent=0 // pred_region
    _
  $region29: #{videobert_decoder_forward.83} parent=0 // pred_fallthru
    _
  // Predicated region
  $region30: #{videobert_decoder_forward.83} parent=0 // pred_check
    _
  $region31: #{videobert_decoder_forward.83} parent=0 // pred_check_branch
    %279 = sbr.rel (0) target = $region33
  $region32: #{videobert_decoder_forward.83} parent=0 // pred_region
    _
  $region33: #{videobert_decoder_forward.83} parent=0 // pred_fallthru
    _

</llo_original>
